<compile_context>
chip_gen: v7x
topology: tpu7x:2x2x1
jax: 0.10.0
libtpu: 0.0.40
codegen_flags: <defaults>
</compile_context>

<pallas_src>
import math

import jax
import jax.numpy as jnp
from jax import lax
from jax.experimental import pallas as pl
from jax.experimental.pallas import tpu as pltpu


# --------------------------- pass 1: hoisted input projection ---------------------------
def _input_proj_kernel(x_ref, w_ref, b_ref, gf_ref, gb_ref):
    # x: (tm, E) f32, w: (E, 6H) bf16, b: (1, 6H) f32 -> gi halves stored bf16
    gi = jnp.dot(x_ref[...].astype(jnp.bfloat16), w_ref[...],
                 preferred_element_type=jnp.float32) + b_ref[...]
    g3 = gf_ref.shape[-1]
    gf_ref[...] = gi[:, :g3].astype(gf_ref.dtype)
    gb_ref[...] = gi[:, g3:].astype(gb_ref.dtype)


# --------------------------- pass 2: serial bidirectional GRU ---------------------------
def _bigru_kernel(len_ref, gif_ref, gib_ref, whh_ref, bhh_ref, wfc_ref, bfc_ref,
                  out_f_ref, out_b_ref, hid_ref, h_s):
    i = pl.program_id(0)
    NB = pl.num_programs(0)
    TT = gif_ref.shape[0]          # timesteps per grid step (static)
    H = out_f_ref.shape[2]
    G = 3 * H

    @pl.when(i == 0)
    def _():
        h_s[...] = jnp.zeros_like(h_s)

    lens = len_ref[...]            # (B, 1) int32
    bhh = bhh_ref[...]             # (1, 6H) f32
    h_cat = h_s[...]               # (B, 2H) f32 fused carry: [h_fwd | h_bwd]

    def gates(gi, gh, h_prev):     # gi, gh: (B, 3H) f32 ; gate order r, z, n (PyTorch)
        r = jax.nn.sigmoid(gi[:, :H] + gh[:, :H])
        z = jax.nn.sigmoid(gi[:, H:2 * H] + gh[:, H:2 * H])
        n = jnp.tanh(gi[:, 2 * H:] + r * gh[:, 2 * H:])
        return (1.0 - z) * n + z * h_prev

    # fully unrolled time loop (static j -> static row indexing, LLO visibility)
    for j in range(TT):
        t_f = i * TT + j                              # forward global time
        t_b = (NB - 1 - i) * TT + (TT - 1 - j)        # backward global time

        # one fused MXU push for BOTH directions (block-diagonal W_hh, bf16 in / f32 acc)
        gh = jnp.dot(h_cat.astype(jnp.bfloat16), whh_ref[...],
                     preferred_element_type=jnp.float32) + bhh       # (B, 6H)
        gi_f = gif_ref[j].astype(jnp.float32)                        # (B, 3H)
        gi_b = gib_ref[TT - 1 - j].astype(jnp.float32)               # (B, 3H)

        hf_prev = h_cat[:, :H]
        hb_prev = h_cat[:, H:]
        hf_new = gates(gi_f, gh[:, :G], hf_prev)
        hb_new = gates(gi_b, gh[:, G:], hb_prev)

        valid_f = t_f < lens       # packed-sequence masking
        valid_b = t_b < lens
        hf = jnp.where(valid_f, hf_new, hf_prev)
        hb = jnp.where(valid_b, hb_new, hb_prev)
        out_f_ref[j] = jnp.where(valid_f, hf, 0.0)
        out_b_ref[TT - 1 - j] = jnp.where(valid_b, hb, 0.0)
        h_cat = jnp.concatenate([hf, hb], axis=-1)

    h_s[...] = h_cat

    # final: hidden = tanh(fc([h_fwd_final ; h_bwd_final]))  (resident output, written once;
    # correct because the grid axis is "arbitrary"/serial)
    @pl.when(i == NB - 1)
    def _():
        proj = jnp.dot(h_cat, wfc_ref[...], preferred_element_type=jnp.float32) + bfc_ref[...]
        hid_ref[...] = jnp.tanh(proj)


# ----------------------------------- wrapper -----------------------------------
def _pick_divisor(n, cap, mult=1):
    for d in range(min(n, cap), 0, -1):
        if n % d == 0 and (d % mult == 0 or d == n):
            return d
    return n


def encoder_forward(text, text_len, params):
    emb_table = params["embedding"]
    T, B = text.shape
    E = emb_table.shape[1]
    H = params["whh_f"].shape[0]
    D = params["bfc"].shape[1]
    G = 3 * H
    Dp = max(128, -(-D // 128) * 128)        # lane-dense padded FC width

    f32, bf16 = jnp.float32, jnp.bfloat16

    # glue: embedding gather (+ eval-mode dropout identity). Gather left to XLA.
    embedded = emb_table[text]                                           # (T, B, E) f32

    # fused / padded parameters (tiny; would be precomputed once in a real model)
    wih_cat = jnp.concatenate([params["wih_f"], params["wih_b"]], axis=1).astype(bf16)   # (E, 6H)
    bih_cat = jnp.concatenate([params["bih_f"], params["bih_b"]], axis=1)                # (1, 6H)
    zeros = jnp.zeros((H, G), f32)
    whh_cat = jnp.concatenate(
        [jnp.concatenate([params["whh_f"], zeros], axis=1),
         jnp.concatenate([zeros, params["whh_b"]], axis=1)], axis=0).astype(bf16)        # (2H, 6H)
    bhh_cat = jnp.concatenate([params["bhh_f"], params["bhh_b"]], axis=1)                # (1, 6H)
    wfc_pad = jnp.pad(jnp.concatenate([params["wfc_f"], params["wfc_b"]], axis=0),
                      ((0, 0), (0, Dp - D)))                                             # (2H, Dp)
    bfc_pad = jnp.pad(params["bfc"], ((0, 0), (0, Dp - D)))                              # (1, Dp)

    # ---------- pass 1: one big input-projection matmul (parallel grid) ----------
    M = T * B
    tm = _pick_divisor(M, 512, mult=8)
    x2 = embedded.reshape(M, E)
    gi_f_flat, gi_b_flat = pl.pallas_call(
        _input_proj_kernel,
        out_shape=(jax.ShapeDtypeStruct((M, G), bf16),
                   jax.ShapeDtypeStruct((M, G), bf16)),
        grid_spec=pltpu.PrefetchScalarGridSpec(
            num_scalar_prefetch=0,
            grid=(M // tm,),
            in_specs=[pl.BlockSpec((tm, E), lambda i: (i, 0)),
                      pl.BlockSpec((E, 2 * G), lambda i: (0, 0)),
                      pl.BlockSpec((1, 2 * G), lambda i: (0, 0))],
            out_specs=[pl.BlockSpec((tm, G), lambda i: (i, 0)),
                       pl.BlockSpec((tm, G), lambda i: (i, 0))],
        ),
        compiler_params=pltpu.CompilerParams(dimension_semantics=("parallel",)),
    )(x2, wih_cat, bih_cat)
    gi_f = gi_f_flat.reshape(T, B, G)
    gi_b = gi_b_flat.reshape(T, B, G)

    # ---------- pass 2: serial recurrence over time blocks ----------
    TT = _pick_divisor(T, 8)
    NB = T // TT
    lens2d = text_len.astype(jnp.int32).reshape(B, 1)

    out_f, out_b, hid_pad = pl.pallas_call(
        _bigru_kernel,
        out_shape=(jax.ShapeDtypeStruct((T, B, H), f32),
                   jax.ShapeDtypeStruct((T, B, H), f32),
                   jax.ShapeDtypeStruct((B, Dp), f32)),
        grid_spec=pltpu.PrefetchScalarGridSpec(
            num_scalar_prefetch=0,
            grid=(NB,),
            in_specs=[
                pl.BlockSpec((B, 1), lambda i: (0, 0)),                    # lengths
                pl.BlockSpec((TT, B, G), lambda i: (i, 0, 0)),             # gi fwd, time block i
                pl.BlockSpec((TT, B, G), lambda i: (NB - 1 - i, 0, 0)),    # gi bwd, reversed blocks
                pl.BlockSpec((2 * H, 2 * G), lambda i: (0, 0)),            # block-diag W_hh (bf16)
                pl.BlockSpec((1, 2 * G), lambda i: (0, 0)),                # b_hh [fwd|bwd]
                pl.BlockSpec((2 * H, Dp), lambda i: (0, 0)),               # fc W [fwd;bwd], lane-padded
                pl.BlockSpec((1, Dp), lambda i: (0, 0)),                   # fc bias, lane-padded
            ],
            out_specs=[
                pl.BlockSpec((TT, B, H), lambda i: (i, 0, 0)),             # fwd outputs
                pl.BlockSpec((TT, B, H), lambda i: (NB - 1 - i, 0, 0)),    # bwd outputs (reversed)
                pl.BlockSpec((B, Dp), lambda i: (0, 0)),                   # final hidden (resident)
            ],
            scratch_shapes=[pltpu.VMEM((B, 2 * H), f32)],                  # fused [h_f | h_b] carry
        ),
        compiler_params=pltpu.CompilerParams(dimension_semantics=("arbitrary",)),
    )(lens2d, gi_f, gi_b, whh_cat, bhh_cat, wfc_pad, bfc_pad)

    # Module API requires (T, B, 2H). NOTE: downstream consumers could take
    # (out_f, out_b) directly and skip this extra full-output HBM pass.
    outputs = jnp.concatenate([out_f, out_b], axis=-1)
    hidden = hid_pad[:, :D]
    return outputs, hidden


# ----------------------- pure-JAX reference (sanity check) -----------------------
def encoder_reference(text, text_len, p, matmul_dtype=jnp.float32,
                      gi_store_dtype=jnp.float32):
    """f32 reference; with bf16 args it mirrors the kernel's mixed precision exactly."""
    T, B = text.shape
    H = p["whh_f"].shape[0]
    emb = p["embedding"][text]
    lens = text_len[:, None]

    def proj(wih, bih):
        gi = jnp.dot(emb.reshape(T * B, -1).astype(matmul_dtype), wih.astype(matmul_dtype),
                     preferred_element_type=jnp.float32) + bih
        return gi.astype(gi_store_dtype).astype(jnp.float32).reshape(T, B, 3 * H)

    gi_f = proj(p["wih_f"], p["bih_f"])
    gi_b = proj(p["wih_b"], p["bih_b"])

    def cell(gi, h, whh, bhh):
        gh = jnp.dot(h.astype(matmul_dtype), whh.astype(matmul_dtype),
                     preferred_element_type=jnp.float32) + bhh
        r = jax.nn.sigmoid(gi[:, :H] + gh[:, :H])
        z = jax.nn.sigmoid(gi[:, H:2 * H] + gh[:, H:2 * H])
        n = jnp.tanh(gi[:, 2 * H:] + r * gh[:, 2 * H:])
        return (1.0 - z) * n + z * h

    def make_step(whh, bhh):
        def f(h, inp):
            gi, t = inp
            hn = cell(gi, h, whh, bhh)
            valid = t < lens
            h = jnp.where(valid, hn, h)
            return h, jnp.where(valid, h, 0.0)
        return f

    ts = jnp.arange(T)
    h0 = jnp.zeros((B, H), jnp.float32)
    hf, out_f = lax.scan(make_step(p["whh_f"], p["bhh_f"]), h0, (gi_f, ts))
    hb, out_b_rev = lax.scan(make_step(p["whh_b"], p["bhh_b"]), h0, (gi_b[::-1], ts[::-1]))
    out_b = out_b_rev[::-1]
    outputs = jnp.concatenate([out_f, out_b], axis=-1)
    hidden = jnp.tanh(hf @ p["wfc_f"] + hb @ p["wfc_b"] + p["bfc"])
    return outputs, hidden


def init_params(key, vocab, E, H, D):
    ks = jax.random.split(key, 12)
    s = 1.0 / math.sqrt(H)
    u = lambda k, shape: jax.random.uniform(k, shape, jnp.float32, -s, s)
    return dict(
        embedding=jax.random.normal(ks[0], (vocab, E), jnp.float32),
        wih_f=u(ks[1], (E, 3 * H)), whh_f=u(ks[2], (H, 3 * H)),
        bih_f=u(ks[3], (1, 3 * H)), bhh_f=u(ks[4], (1, 3 * H)),
        wih_b=u(ks[5], (E, 3 * H)), whh_b=u(ks[6], (H, 3 * H)),
        bih_b=u(ks[7], (1, 3 * H)), bhh_b=u(ks[8], (1, 3 * H)),
        wfc_f=u(ks[9], (H, D)), wfc_b=u(ks[10], (H, D)),
        bfc=u(ks[11], (1, D)),
    )


if __name__ == "__main__":
    T, B, VOCAB, E, H, D = 16, 8, 50, 32, 128, 64   # seq, batch, vocab, emb, enc_hid, dec_hid
    key = jax.random.PRNGKey(0)
    k_text, k_params = jax.random.split(key)
    params = init_params(k_params, VOCAB, E, H, D)

    text = jax.random.randint(k_text, (T, B), 0, VOCAB, dtype=jnp.int32)      # (T, B)
    # pack_padded_sequence (enforce_sorted=True) requires non-increasing lengths
    text_len = jnp.array([16, 15, 13, 11, 9, 7, 4, 2], dtype=jnp.int32)       # (B,)

    outputs, hidden = jax.block_until_ready(
        jax.jit(encoder_forward)(text, text_len, params))
    assert outputs.shape == (T, B, 2 * H) and hidden.shape == (B, D)

    # tight check vs a reference that mirrors the kernel's bf16 matmul / gi precision
    ref_out, ref_hid = encoder_reference(text, text_len, params,
                                         matmul_dtype=jnp.bfloat16,
                                         gi_store_dtype=jnp.bfloat16)
    assert jnp.allclose(outputs, ref_out, atol=2e-3, rtol=2e-3)
    assert jnp.allclose(hidden, ref_hid, atol=2e-3, rtol=2e-3)

    # loose sanity check vs the pure-f32 (PyTorch-semantics) reference
    ref_out32, ref_hid32 = encoder_reference(text, text_len, params)
    assert jnp.allclose(outputs, ref_out32, atol=5e-2, rtol=5e-2)
    assert jnp.allclose(hidden, ref_hid32, atol=5e-2, rtol=5e-2)

    print("KERNEL_OK")
</pallas_src>

<mosaic_0001>
module attributes {stable_mosaic.version = 11 : i64} {
  func.func @_input_proj_kernel(%arg0: i32, %arg1: memref<128x32xf32, #tpu.memory_space<vmem>>, %arg2: memref<32x768xbf16, #tpu.memory_space<vmem>>, %arg3: memref<1x768xf32, #tpu.memory_space<vmem>>, %arg4: memref<128x384xbf16, #tpu.memory_space<vmem>>, %arg5: memref<128x384xbf16, #tpu.memory_space<vmem>>) attributes {dimension_semantics = [#tpu.dimension_semantics<parallel>], iteration_bounds = array<i64: 1>, scalar_prefetch = 0 : i64, scratch_operands = 0 : i64, tpu.core_type = #tpu.core_type<tc>, window_params = [{transform_indices = @transform_0, window_bounds = array<i64: 128, 32>}, {pipeline_mode = #tpu.pipeline_mode<synchronous>, transform_indices = @transform_1, window_bounds = array<i64: 32, 768>}, {pipeline_mode = #tpu.pipeline_mode<synchronous>, transform_indices = @transform_2, window_bounds = array<i64: 1, 768>}, {transform_indices = @transform_3, window_bounds = array<i64: 128, 384>}, {transform_indices = @transform_4, window_bounds = array<i64: 128, 384>}]} {
    %c0 = arith.constant 0 : index
    %c0_0 = arith.constant 0 : index
    %0 = vector.load %arg1[%c0, %c0_0] : memref<128x32xf32, #tpu.memory_space<vmem>>, vector<128x32xf32>
    %1 = arith.truncf %0 : vector<128x32xf32> to vector<128x32xbf16>
    %c0_1 = arith.constant 0 : index
    %c0_2 = arith.constant 0 : index
    %2 = vector.load %arg2[%c0_1, %c0_2] : memref<32x768xbf16, #tpu.memory_space<vmem>>, vector<32x768xbf16>
    %cst = arith.constant dense<0.000000e+00> : vector<128x768xf32>
    %3 = tpu.matmul %1, %2, %cst {dimension_numbers = #tpu.dot_dimension_numbers<[1], [0], [0], [1], [0, 0, 1, 1], [], []>} : vector<128x32xbf16>, vector<32x768xbf16>, vector<128x768xf32> -> vector<128x768xf32>
    %c0_3 = arith.constant 0 : index
    %c0_4 = arith.constant 0 : index
    %4 = vector.load %arg3[%c0_3, %c0_4] : memref<1x768xf32, #tpu.memory_space<vmem>>, vector<1x768xf32>
    %5 = vector.broadcast %4 : vector<1x768xf32> to vector<128x768xf32>
    %6 = arith.addf %3, %5 : vector<128x768xf32>
    %7 = vector.extract_strided_slice %6 {offsets = [0, 0], sizes = [128, 384], strides = [1, 1]} : vector<128x768xf32> to vector<128x384xf32>
    %8 = arith.truncf %7 : vector<128x384xf32> to vector<128x384xbf16>
    %c0_5 = arith.constant 0 : index
    %c0_6 = arith.constant 0 : index
    %9 = vector.load %arg4[%c0_5, %c0_6] : memref<128x384xbf16, #tpu.memory_space<vmem>>, vector<128x384xbf16>
    tpu.vector_store %arg4[%c0_5, %c0_6], %8 {strides = array<i32>} : memref<128x384xbf16, #tpu.memory_space<vmem>>, vector<128x384xbf16>,
    %10 = vector.extract_strided_slice %6 {offsets = [0, 384], sizes = [128, 384], strides = [1, 1]} : vector<128x768xf32> to vector<128x384xf32>
    %11 = arith.truncf %10 : vector<128x384xf32> to vector<128x384xbf16>
    %c0_7 = arith.constant 0 : index
    %c0_8 = arith.constant 0 : index
    %12 = vector.load %arg5[%c0_7, %c0_8] : memref<128x384xbf16, #tpu.memory_space<vmem>>, vector<128x384xbf16>
    tpu.vector_store %arg5[%c0_7, %c0_8], %11 {strides = array<i32>} : memref<128x384xbf16, #tpu.memory_space<vmem>>, vector<128x384xbf16>,
    return
  }
  func.func @transform_0(%arg0: i32) -> (i32, i32) {
    %c0_i32 = arith.constant 0 : i32
    %c0_i32_0 = arith.constant 0 : i32
    return %arg0, %c0_i32 : i32, i32
  }
  func.func @transform_1(%arg0: i32) -> (i32, i32) {
    %c0_i32 = arith.constant 0 : i32
    %c0_i32_0 = arith.constant 0 : i32
    %c0_i32_1 = arith.constant 0 : i32
    return %c0_i32, %c0_i32_0 : i32, i32
  }
  func.func @transform_2(%arg0: i32) -> (i32, i32) {
    %c0_i32 = arith.constant 0 : i32
    %c0_i32_0 = arith.constant 0 : i32
    %c0_i32_1 = arith.constant 0 : i32
    return %c0_i32, %c0_i32_0 : i32, i32
  }
  func.func @transform_3(%arg0: i32) -> (i32, i32) {
    %c0_i32 = arith.constant 0 : i32
    %c0_i32_0 = arith.constant 0 : i32
    return %arg0, %c0_i32 : i32, i32
  }
  func.func @transform_4(%arg0: i32) -> (i32, i32) {
    %c0_i32 = arith.constant 0 : i32
    %c0_i32_0 = arith.constant 0 : i32
    return %arg0, %c0_i32 : i32, i32
  }
}

module attributes {stable_mosaic.version = 11 : i64} {
  func.func @_bigru_kernel(%arg0: i32, %arg1: memref<8x1xi32, #tpu.memory_space<vmem>>, %arg2: memref<8x8x384xbf16, #tpu.memory_space<vmem>>, %arg3: memref<8x8x384xbf16, #tpu.memory_space<vmem>>, %arg4: memref<256x768xbf16, #tpu.memory_space<vmem>>, %arg5: memref<1x768xf32, #tpu.memory_space<vmem>>, %arg6: memref<256x128xf32, #tpu.memory_space<vmem>>, %arg7: memref<1x128xf32, #tpu.memory_space<vmem>>, %arg8: memref<8x8x128xf32, #tpu.memory_space<vmem>>, %arg9: memref<8x8x128xf32, #tpu.memory_space<vmem>>, %arg10: memref<8x128xf32, #tpu.memory_space<vmem>>, %arg11: memref<8x256xf32, #tpu.memory_space<vmem>>) attributes {dimension_semantics = [#tpu.dimension_semantics<arbitrary>], iteration_bounds = array<i64: 2>, scalar_prefetch = 0 : i64, scratch_operands = 1 : i64, tpu.core_type = #tpu.core_type<tc>, window_params = [{pipeline_mode = #tpu.pipeline_mode<synchronous>, transform_indices = @transform_0, window_bounds = array<i64: 8, 1>}, {transform_indices = @transform_1, window_bounds = array<i64: 8, 8, 384>}, {transform_indices = @transform_2, window_bounds = array<i64: 8, 8, 384>}, {pipeline_mode = #tpu.pipeline_mode<synchronous>, transform_indices = @transform_3, window_bounds = array<i64: 256, 768>}, {pipeline_mode = #tpu.pipeline_mode<synchronous>, transform_indices = @transform_4, window_bounds = array<i64: 1, 768>}, {pipeline_mode = #tpu.pipeline_mode<synchronous>, transform_indices = @transform_5, window_bounds = array<i64: 256, 128>}, {pipeline_mode = #tpu.pipeline_mode<synchronous>, transform_indices = @transform_6, window_bounds = array<i64: 1, 128>}, {transform_indices = @transform_7, window_bounds = array<i64: 8, 8, 128>}, {transform_indices = @transform_8, window_bounds = array<i64: 8, 8, 128>}, {pipeline_mode = #tpu.pipeline_mode<synchronous>, transform_indices = @transform_9, window_bounds = array<i64: 8, 128>}]} {
    %c0_i32 = arith.constant 0 : i32
    %0 = arith.cmpi eq, %arg0, %c0_i32 : i32
    %1 = arith.extui %0 : i1 to i32
    %c0_i32_0 = arith.constant 0 : i32
    %2 = arith.cmpi ne, %1, %c0_i32_0 : i32
    scf.if %2 {
      %cst_218 = arith.constant 0.000000e+00 : f32
      %786 = vector.broadcast %cst_218 : f32 to vector<8x256xf32>
      %c0_219 = arith.constant 0 : index
      %c0_220 = arith.constant 0 : index
      %787 = vector.load %arg11[%c0_219, %c0_220] : memref<8x256xf32, #tpu.memory_space<vmem>>, vector<8x256xf32>
      tpu.vector_store %arg11[%c0_219, %c0_220], %786 {strides = array<i32>} : memref<8x256xf32, #tpu.memory_space<vmem>>, vector<8x256xf32>,
    } else {
    }
    %c0 = arith.constant 0 : index
    %c0_1 = arith.constant 0 : index
    %3 = vector.load %arg1[%c0, %c0_1] : memref<8x1xi32, #tpu.memory_space<vmem>>, vector<8x1xi32>
    %c0_2 = arith.constant 0 : index
    %c0_3 = arith.constant 0 : index
    %4 = vector.load %arg5[%c0_2, %c0_3] : memref<1x768xf32, #tpu.memory_space<vmem>>, vector<1x768xf32>
    %c0_4 = arith.constant 0 : index
    %c0_5 = arith.constant 0 : index
    %5 = vector.load %arg11[%c0_4, %c0_5] : memref<8x256xf32, #tpu.memory_space<vmem>>, vector<8x256xf32>
    %c8_i32 = arith.constant 8 : i32
    %6 = arith.muli %arg0, %c8_i32 : i32
    %c0_i32_6 = arith.constant 0 : i32
    %7 = arith.addi %6, %c0_i32_6 : i32
    %c1_i32 = arith.constant 1 : i32
    %8 = arith.subi %c1_i32, %arg0 : i32
    %c8_i32_7 = arith.constant 8 : i32
    %9 = arith.muli %8, %c8_i32_7 : i32
    %c7_i32 = arith.constant 7 : i32
    %10 = arith.addi %9, %c7_i32 : i32
    %11 = arith.truncf %5 : vector<8x256xf32> to vector<8x256xbf16>
    %c0_8 = arith.constant 0 : index
    %c0_9 = arith.constant 0 : index
    %12 = vector.load %arg4[%c0_8, %c0_9] : memref<256x768xbf16, #tpu.memory_space<vmem>>, vector<256x768xbf16>
    %cst = arith.constant dense<0.000000e+00> : vector<8x768xf32>
    %13 = tpu.matmul %11, %12, %cst {dimension_numbers = #tpu.dot_dimension_numbers<[1], [0], [0], [1], [0, 0, 1, 1], [], []>} : vector<8x256xbf16>, vector<256x768xbf16>, vector<8x768xf32> -> vector<8x768xf32>
    %14 = vector.broadcast %4 : vector<1x768xf32> to vector<8x768xf32>
    %15 = arith.addf %13, %14 : vector<8x768xf32>
    %c0_10 = arith.constant 0 : index
    %c0_11 = arith.constant 0 : index
    %c0_12 = arith.constant 0 : index
    %16 = vector.load %arg2[%c0_10, %c0_11, %c0_12] : memref<8x8x384xbf16, #tpu.memory_space<vmem>>, vector<1x8x384xbf16>
    %17 = vector.shape_cast %16 : vector<1x8x384xbf16> to vector<8x384xbf16>
    %18 = arith.extf %17 : vector<8x384xbf16> to vector<8x384xf32>
    %c7 = arith.constant 7 : index
    %c0_13 = arith.constant 0 : index
    %c0_14 = arith.constant 0 : index
    %19 = vector.load %arg3[%c7, %c0_13, %c0_14] : memref<8x8x384xbf16, #tpu.memory_space<vmem>>, vector<1x8x384xbf16>
    %20 = vector.shape_cast %19 : vector<1x8x384xbf16> to vector<8x384xbf16>
    %21 = arith.extf %20 : vector<8x384xbf16> to vector<8x384xf32>
    %22 = vector.extract_strided_slice %5 {offsets = [0, 0], sizes = [8, 128], strides = [1, 1]} : vector<8x256xf32> to vector<8x128xf32>
    %23 = vector.extract_strided_slice %5 {offsets = [0, 128], sizes = [8, 128], strides = [1, 1]} : vector<8x256xf32> to vector<8x128xf32>
    %24 = vector.extract_strided_slice %15 {offsets = [0, 0], sizes = [8, 384], strides = [1, 1]} : vector<8x768xf32> to vector<8x384xf32>
    %25 = vector.extract_strided_slice %18 {offsets = [0, 0], sizes = [8, 128], strides = [1, 1]} : vector<8x384xf32> to vector<8x128xf32>
    %26 = vector.extract_strided_slice %24 {offsets = [0, 0], sizes = [8, 128], strides = [1, 1]} : vector<8x384xf32> to vector<8x128xf32>
    %27 = arith.addf %25, %26 : vector<8x128xf32>
    %28 = arith.negf %27 : vector<8x128xf32>
    %29 = math.exp %28 : vector<8x128xf32>
    %cst_15 = arith.constant 1.000000e+00 : f32
    %30 = vector.broadcast %cst_15 : f32 to vector<8x128xf32>
    %31 = arith.addf %30, %29 : vector<8x128xf32>
    %32 = arith.divf %30, %31 : vector<8x128xf32>
    %33 = vector.extract_strided_slice %18 {offsets = [0, 128], sizes = [8, 128], strides = [1, 1]} : vector<8x384xf32> to vector<8x128xf32>
    %34 = vector.extract_strided_slice %24 {offsets = [0, 128], sizes = [8, 128], strides = [1, 1]} : vector<8x384xf32> to vector<8x128xf32>
    %35 = arith.addf %33, %34 : vector<8x128xf32>
    %36 = arith.negf %35 : vector<8x128xf32>
    %37 = math.exp %36 : vector<8x128xf32>
    %cst_16 = arith.constant 1.000000e+00 : f32
    %38 = vector.broadcast %cst_16 : f32 to vector<8x128xf32>
    %39 = arith.addf %38, %37 : vector<8x128xf32>
    %40 = arith.divf %38, %39 : vector<8x128xf32>
    %41 = vector.extract_strided_slice %18 {offsets = [0, 256], sizes = [8, 128], strides = [1, 1]} : vector<8x384xf32> to vector<8x128xf32>
    %42 = vector.extract_strided_slice %24 {offsets = [0, 256], sizes = [8, 128], strides = [1, 1]} : vector<8x384xf32> to vector<8x128xf32>
    %43 = arith.mulf %32, %42 : vector<8x128xf32>
    %44 = arith.addf %41, %43 : vector<8x128xf32>
    %45 = math.tanh %44 : vector<8x128xf32>
    %cst_17 = arith.constant 1.000000e+00 : f32
    %46 = vector.broadcast %cst_17 : f32 to vector<8x128xf32>
    %47 = arith.subf %46, %40 : vector<8x128xf32>
    %48 = arith.mulf %47, %45 : vector<8x128xf32>
    %49 = arith.mulf %40, %22 : vector<8x128xf32>
    %50 = arith.addf %48, %49 : vector<8x128xf32>
    %51 = vector.extract_strided_slice %15 {offsets = [0, 384], sizes = [8, 384], strides = [1, 1]} : vector<8x768xf32> to vector<8x384xf32>
    %52 = vector.extract_strided_slice %21 {offsets = [0, 0], sizes = [8, 128], strides = [1, 1]} : vector<8x384xf32> to vector<8x128xf32>
    %53 = vector.extract_strided_slice %51 {offsets = [0, 0], sizes = [8, 128], strides = [1, 1]} : vector<8x384xf32> to vector<8x128xf32>
    %54 = arith.addf %52, %53 : vector<8x128xf32>
    %55 = arith.negf %54 : vector<8x128xf32>
    %56 = math.exp %55 : vector<8x128xf32>
    %cst_18 = arith.constant 1.000000e+00 : f32
    %57 = vector.broadcast %cst_18 : f32 to vector<8x128xf32>
    %58 = arith.addf %57, %56 : vector<8x128xf32>
    %59 = arith.divf %57, %58 : vector<8x128xf32>
    %60 = vector.extract_strided_slice %21 {offsets = [0, 128], sizes = [8, 128], strides = [1, 1]} : vector<8x384xf32> to vector<8x128xf32>
    %61 = vector.extract_strided_slice %51 {offsets = [0, 128], sizes = [8, 128], strides = [1, 1]} : vector<8x384xf32> to vector<8x128xf32>
    %62 = arith.addf %60, %61 : vector<8x128xf32>
    %63 = arith.negf %62 : vector<8x128xf32>
    %64 = math.exp %63 : vector<8x128xf32>
    %cst_19 = arith.constant 1.000000e+00 : f32
    %65 = vector.broadcast %cst_19 : f32 to vector<8x128xf32>
    %66 = arith.addf %65, %64 : vector<8x128xf32>
    %67 = arith.divf %65, %66 : vector<8x128xf32>
    %68 = vector.extract_strided_slice %21 {offsets = [0, 256], sizes = [8, 128], strides = [1, 1]} : vector<8x384xf32> to vector<8x128xf32>
    %69 = vector.extract_strided_slice %51 {offsets = [0, 256], sizes = [8, 128], strides = [1, 1]} : vector<8x384xf32> to vector<8x128xf32>
    %70 = arith.mulf %59, %69 : vector<8x128xf32>
    %71 = arith.addf %68, %70 : vector<8x128xf32>
    %72 = math.tanh %71 : vector<8x128xf32>
    %cst_20 = arith.constant 1.000000e+00 : f32
    %73 = vector.broadcast %cst_20 : f32 to vector<8x128xf32>
    %74 = arith.subf %73, %67 : vector<8x128xf32>
    %75 = arith.mulf %74, %72 : vector<8x128xf32>
    %76 = arith.mulf %67, %23 : vector<8x128xf32>
    %77 = arith.addf %75, %76 : vector<8x128xf32>
    %78 = vector.broadcast %7 : i32 to vector<8x1xi32>
    %79 = arith.cmpi slt, %78, %3 : vector<8x1xi32>
    %80 = vector.broadcast %10 : i32 to vector<8x1xi32>
    %81 = arith.cmpi slt, %80, %3 : vector<8x1xi32>
    %82 = vector.shape_cast %79 : vector<8x1xi1> to vector<8x1xi1>
    %83 = vector.broadcast %82 : vector<8x1xi1> to vector<8x128xi1>
    %84 = arith.select %83, %50, %22 : vector<8x128xi1>, vector<8x128xf32>
    %85 = vector.shape_cast %81 : vector<8x1xi1> to vector<8x1xi1>
    %86 = vector.broadcast %85 : vector<8x1xi1> to vector<8x128xi1>
    %87 = arith.select %86, %77, %23 : vector<8x128xi1>, vector<8x128xf32>
    %cst_21 = arith.constant 0.000000e+00 : f32
    %88 = vector.shape_cast %79 : vector<8x1xi1> to vector<8x1xi1>
    %89 = vector.broadcast %88 : vector<8x1xi1> to vector<8x128xi1>
    %90 = vector.broadcast %cst_21 : f32 to vector<8x128xf32>
    %91 = arith.select %89, %84, %90 : vector<8x128xi1>, vector<8x128xf32>
    %c0_22 = arith.constant 0 : index
    %c0_23 = arith.constant 0 : index
    %c0_24 = arith.constant 0 : index
    %92 = vector.load %arg8[%c0_22, %c0_23, %c0_24] : memref<8x8x128xf32, #tpu.memory_space<vmem>>, vector<1x8x128xf32>
    %93 = vector.shape_cast %92 : vector<1x8x128xf32> to vector<8x128xf32>
    %94 = vector.shape_cast %91 : vector<8x128xf32> to vector<1x8x128xf32>
    tpu.vector_store %arg8[%c0_22, %c0_23, %c0_24], %94 {strides = array<i32>} : memref<8x8x128xf32, #tpu.memory_space<vmem>>, vector<1x8x128xf32>,
    %cst_25 = arith.constant 0.000000e+00 : f32
    %95 = vector.shape_cast %81 : vector<8x1xi1> to vector<8x1xi1>
    %96 = vector.broadcast %95 : vector<8x1xi1> to vector<8x128xi1>
    %97 = vector.broadcast %cst_25 : f32 to vector<8x128xf32>
    %98 = arith.select %96, %87, %97 : vector<8x128xi1>, vector<8x128xf32>
    %c7_26 = arith.constant 7 : index
    %c0_27 = arith.constant 0 : index
    %c0_28 = arith.constant 0 : index
    %99 = vector.load %arg9[%c7_26, %c0_27, %c0_28] : memref<8x8x128xf32, #tpu.memory_space<vmem>>, vector<1x8x128xf32>
    %100 = vector.shape_cast %99 : vector<1x8x128xf32> to vector<8x128xf32>
    %101 = vector.shape_cast %98 : vector<8x128xf32> to vector<1x8x128xf32>
    tpu.vector_store %arg9[%c7_26, %c0_27, %c0_28], %101 {strides = array<i32>} : memref<8x8x128xf32, #tpu.memory_space<vmem>>, vector<1x8x128xf32>,
    %102 = tpu.concatenate %84, %87 in 1 : vector<8x128xf32>, vector<8x128xf32> -> vector<8x256xf32>
    %c8_i32_29 = arith.constant 8 : i32
    %103 = arith.muli %arg0, %c8_i32_29 : i32
    %c1_i32_30 = arith.constant 1 : i32
    %104 = arith.addi %103, %c1_i32_30 : i32
    %c1_i32_31 = arith.constant 1 : i32
    %105 = arith.subi %c1_i32_31, %arg0 : i32
    %c8_i32_32 = arith.constant 8 : i32
    %106 = arith.muli %105, %c8_i32_32 : i32
    %c6_i32 = arith.constant 6 : i32
    %107 = arith.addi %106, %c6_i32 : i32
    %108 = arith.truncf %102 : vector<8x256xf32> to vector<8x256xbf16>
    %c0_33 = arith.constant 0 : index
    %c0_34 = arith.constant 0 : index
    %109 = vector.load %arg4[%c0_33, %c0_34] : memref<256x768xbf16, #tpu.memory_space<vmem>>, vector<256x768xbf16>
    %cst_35 = arith.constant dense<0.000000e+00> : vector<8x768xf32>
    %110 = tpu.matmul %108, %109, %cst_35 {dimension_numbers = #tpu.dot_dimension_numbers<[1], [0], [0], [1], [0, 0, 1, 1], [], []>} : vector<8x256xbf16>, vector<256x768xbf16>, vector<8x768xf32> -> vector<8x768xf32>
    %111 = vector.broadcast %4 : vector<1x768xf32> to vector<8x768xf32>
    %112 = arith.addf %110, %111 : vector<8x768xf32>
    %c1 = arith.constant 1 : index
    %c0_36 = arith.constant 0 : index
    %c0_37 = arith.constant 0 : index
    %113 = vector.load %arg2[%c1, %c0_36, %c0_37] : memref<8x8x384xbf16, #tpu.memory_space<vmem>>, vector<1x8x384xbf16>
    %114 = vector.shape_cast %113 : vector<1x8x384xbf16> to vector<8x384xbf16>
    %115 = arith.extf %114 : vector<8x384xbf16> to vector<8x384xf32>
    %c6 = arith.constant 6 : index
    %c0_38 = arith.constant 0 : index
    %c0_39 = arith.constant 0 : index
    %116 = vector.load %arg3[%c6, %c0_38, %c0_39] : memref<8x8x384xbf16, #tpu.memory_space<vmem>>, vector<1x8x384xbf16>
    %117 = vector.shape_cast %116 : vector<1x8x384xbf16> to vector<8x384xbf16>
    %118 = arith.extf %117 : vector<8x384xbf16> to vector<8x384xf32>
    %119 = vector.extract_strided_slice %102 {offsets = [0, 0], sizes = [8, 128], strides = [1, 1]} : vector<8x256xf32> to vector<8x128xf32>
    %120 = vector.extract_strided_slice %102 {offsets = [0, 128], sizes = [8, 128], strides = [1, 1]} : vector<8x256xf32> to vector<8x128xf32>
    %121 = vector.extract_strided_slice %112 {offsets = [0, 0], sizes = [8, 384], strides = [1, 1]} : vector<8x768xf32> to vector<8x384xf32>
    %122 = vector.extract_strided_slice %115 {offsets = [0, 0], sizes = [8, 128], strides = [1, 1]} : vector<8x384xf32> to vector<8x128xf32>
    %123 = vector.extract_strided_slice %121 {offsets = [0, 0], sizes = [8, 128], strides = [1, 1]} : vector<8x384xf32> to vector<8x128xf32>
    %124 = arith.addf %122, %123 : vector<8x128xf32>
    %125 = arith.negf %124 : vector<8x128xf32>
    %126 = math.exp %125 : vector<8x128xf32>
    %cst_40 = arith.constant 1.000000e+00 : f32
    %127 = vector.broadcast %cst_40 : f32 to vector<8x128xf32>
    %128 = arith.addf %127, %126 : vector<8x128xf32>
    %129 = arith.divf %127, %128 : vector<8x128xf32>
    %130 = vector.extract_strided_slice %115 {offsets = [0, 128], sizes = [8, 128], strides = [1, 1]} : vector<8x384xf32> to vector<8x128xf32>
    %131 = vector.extract_strided_slice %121 {offsets = [0, 128], sizes = [8, 128], strides = [1, 1]} : vector<8x384xf32> to vector<8x128xf32>
    %132 = arith.addf %130, %131 : vector<8x128xf32>
    %133 = arith.negf %132 : vector<8x128xf32>
    %134 = math.exp %133 : vector<8x128xf32>
    %cst_41 = arith.constant 1.000000e+00 : f32
    %135 = vector.broadcast %cst_41 : f32 to vector<8x128xf32>
    %136 = arith.addf %135, %134 : vector<8x128xf32>
    %137 = arith.divf %135, %136 : vector<8x128xf32>
    %138 = vector.extract_strided_slice %115 {offsets = [0, 256], sizes = [8, 128], strides = [1, 1]} : vector<8x384xf32> to vector<8x128xf32>
    %139 = vector.extract_strided_slice %121 {offsets = [0, 256], sizes = [8, 128], strides = [1, 1]} : vector<8x384xf32> to vector<8x128xf32>
    %140 = arith.mulf %129, %139 : vector<8x128xf32>
    %141 = arith.addf %138, %140 : vector<8x128xf32>
    %142 = math.tanh %141 : vector<8x128xf32>
    %cst_42 = arith.constant 1.000000e+00 : f32
    %143 = vector.broadcast %cst_42 : f32 to vector<8x128xf32>
    %144 = arith.subf %143, %137 : vector<8x128xf32>
    %145 = arith.mulf %144, %142 : vector<8x128xf32>
    %146 = arith.mulf %137, %119 : vector<8x128xf32>
    %147 = arith.addf %145, %146 : vector<8x128xf32>
    %148 = vector.extract_strided_slice %112 {offsets = [0, 384], sizes = [8, 384], strides = [1, 1]} : vector<8x768xf32> to vector<8x384xf32>
    %149 = vector.extract_strided_slice %118 {offsets = [0, 0], sizes = [8, 128], strides = [1, 1]} : vector<8x384xf32> to vector<8x128xf32>
    %150 = vector.extract_strided_slice %148 {offsets = [0, 0], sizes = [8, 128], strides = [1, 1]} : vector<8x384xf32> to vector<8x128xf32>
    %151 = arith.addf %149, %150 : vector<8x128xf32>
    %152 = arith.negf %151 : vector<8x128xf32>
    %153 = math.exp %152 : vector<8x128xf32>
    %cst_43 = arith.constant 1.000000e+00 : f32
    %154 = vector.broadcast %cst_43 : f32 to vector<8x128xf32>
    %155 = arith.addf %154, %153 : vector<8x128xf32>
    %156 = arith.divf %154, %155 : vector<8x128xf32>
    %157 = vector.extract_strided_slice %118 {offsets = [0, 128], sizes = [8, 128], strides = [1, 1]} : vector<8x384xf32> to vector<8x128xf32>
    %158 = vector.extract_strided_slice %148 {offsets = [0, 128], sizes = [8, 128], strides = [1, 1]} : vector<8x384xf32> to vector<8x128xf32>
    %159 = arith.addf %157, %158 : vector<8x128xf32>
    %160 = arith.negf %159 : vector<8x128xf32>
    %161 = math.exp %160 : vector<8x128xf32>
    %cst_44 = arith.constant 1.000000e+00 : f32
    %162 = vector.broadcast %cst_44 : f32 to vector<8x128xf32>
    %163 = arith.addf %162, %161 : vector<8x128xf32>
    %164 = arith.divf %162, %163 : vector<8x128xf32>
    %165 = vector.extract_strided_slice %118 {offsets = [0, 256], sizes = [8, 128], strides = [1, 1]} : vector<8x384xf32> to vector<8x128xf32>
    %166 = vector.extract_strided_slice %148 {offsets = [0, 256], sizes = [8, 128], strides = [1, 1]} : vector<8x384xf32> to vector<8x128xf32>
    %167 = arith.mulf %156, %166 : vector<8x128xf32>
    %168 = arith.addf %165, %167 : vector<8x128xf32>
    %169 = math.tanh %168 : vector<8x128xf32>
    %cst_45 = arith.constant 1.000000e+00 : f32
    %170 = vector.broadcast %cst_45 : f32 to vector<8x128xf32>
    %171 = arith.subf %170, %164 : vector<8x128xf32>
    %172 = arith.mulf %171, %169 : vector<8x128xf32>
    %173 = arith.mulf %164, %120 : vector<8x128xf32>
    %174 = arith.addf %172, %173 : vector<8x128xf32>
    %175 = vector.broadcast %104 : i32 to vector<8x1xi32>
    %176 = arith.cmpi slt, %175, %3 : vector<8x1xi32>
    %177 = vector.broadcast %107 : i32 to vector<8x1xi32>
    %178 = arith.cmpi slt, %177, %3 : vector<8x1xi32>
    %179 = vector.shape_cast %176 : vector<8x1xi1> to vector<8x1xi1>
    %180 = vector.broadcast %179 : vector<8x1xi1> to vector<8x128xi1>
    %181 = arith.select %180, %147, %119 : vector<8x128xi1>, vector<8x128xf32>
    %182 = vector.shape_cast %178 : vector<8x1xi1> to vector<8x1xi1>
    %183 = vector.broadcast %182 : vector<8x1xi1> to vector<8x128xi1>
    %184 = arith.select %183, %174, %120 : vector<8x128xi1>, vector<8x128xf32>
    %cst_46 = arith.constant 0.000000e+00 : f32
    %185 = vector.shape_cast %176 : vector<8x1xi1> to vector<8x1xi1>
    %186 = vector.broadcast %185 : vector<8x1xi1> to vector<8x128xi1>
    %187 = vector.broadcast %cst_46 : f32 to vector<8x128xf32>
    %188 = arith.select %186, %181, %187 : vector<8x128xi1>, vector<8x128xf32>
    %c1_47 = arith.constant 1 : index
    %c0_48 = arith.constant 0 : index
    %c0_49 = arith.constant 0 : index
    %189 = vector.load %arg8[%c1_47, %c0_48, %c0_49] : memref<8x8x128xf32, #tpu.memory_space<vmem>>, vector<1x8x128xf32>
    %190 = vector.shape_cast %189 : vector<1x8x128xf32> to vector<8x128xf32>
    %191 = vector.shape_cast %188 : vector<8x128xf32> to vector<1x8x128xf32>
    tpu.vector_store %arg8[%c1_47, %c0_48, %c0_49], %191 {strides = array<i32>} : memref<8x8x128xf32, #tpu.memory_space<vmem>>, vector<1x8x128xf32>,
    %cst_50 = arith.constant 0.000000e+00 : f32
    %192 = vector.shape_cast %178 : vector<8x1xi1> to vector<8x1xi1>
    %193 = vector.broadcast %192 : vector<8x1xi1> to vector<8x128xi1>
    %194 = vector.broadcast %cst_50 : f32 to vector<8x128xf32>
    %195 = arith.select %193, %184, %194 : vector<8x128xi1>, vector<8x128xf32>
    %c6_51 = arith.constant 6 : index
    %c0_52 = arith.constant 0 : index
    %c0_53 = arith.constant 0 : index
    %196 = vector.load %arg9[%c6_51, %c0_52, %c0_53] : memref<8x8x128xf32, #tpu.memory_space<vmem>>, vector<1x8x128xf32>
    %197 = vector.shape_cast %196 : vector<1x8x128xf32> to vector<8x128xf32>
    %198 = vector.shape_cast %195 : vector<8x128xf32> to vector<1x8x128xf32>
    tpu.vector_store %arg9[%c6_51, %c0_52, %c0_53], %198 {strides = array<i32>} : memref<8x8x128xf32, #tpu.memory_space<vmem>>, vector<1x8x128xf32>,
    %199 = tpu.concatenate %181, %184 in 1 : vector<8x128xf32>, vector<8x128xf32> -> vector<8x256xf32>
    %c8_i32_54 = arith.constant 8 : i32
    %200 = arith.muli %arg0, %c8_i32_54 : i32
    %c2_i32 = arith.constant 2 : i32
    %201 = arith.addi %200, %c2_i32 : i32
    %c1_i32_55 = arith.constant 1 : i32
    %202 = arith.subi %c1_i32_55, %arg0 : i32
    %c8_i32_56 = arith.constant 8 : i32
    %203 = arith.muli %202, %c8_i32_56 : i32
    %c5_i32 = arith.constant 5 : i32
    %204 = arith.addi %203, %c5_i32 : i32
    %205 = arith.truncf %199 : vector<8x256xf32> to vector<8x256xbf16>
    %c0_57 = arith.constant 0 : index
    %c0_58 = arith.constant 0 : index
    %206 = vector.load %arg4[%c0_57, %c0_58] : memref<256x768xbf16, #tpu.memory_space<vmem>>, vector<256x768xbf16>
    %cst_59 = arith.constant dense<0.000000e+00> : vector<8x768xf32>
    %207 = tpu.matmul %205, %206, %cst_59 {dimension_numbers = #tpu.dot_dimension_numbers<[1], [0], [0], [1], [0, 0, 1, 1], [], []>} : vector<8x256xbf16>, vector<256x768xbf16>, vector<8x768xf32> -> vector<8x768xf32>
    %208 = vector.broadcast %4 : vector<1x768xf32> to vector<8x768xf32>
    %209 = arith.addf %207, %208 : vector<8x768xf32>
    %c2 = arith.constant 2 : index
    %c0_60 = arith.constant 0 : index
    %c0_61 = arith.constant 0 : index
    %210 = vector.load %arg2[%c2, %c0_60, %c0_61] : memref<8x8x384xbf16, #tpu.memory_space<vmem>>, vector<1x8x384xbf16>
    %211 = vector.shape_cast %210 : vector<1x8x384xbf16> to vector<8x384xbf16>
    %212 = arith.extf %211 : vector<8x384xbf16> to vector<8x384xf32>
    %c5 = arith.constant 5 : index
    %c0_62 = arith.constant 0 : index
    %c0_63 = arith.constant 0 : index
    %213 = vector.load %arg3[%c5, %c0_62, %c0_63] : memref<8x8x384xbf16, #tpu.memory_space<vmem>>, vector<1x8x384xbf16>
    %214 = vector.shape_cast %213 : vector<1x8x384xbf16> to vector<8x384xbf16>
    %215 = arith.extf %214 : vector<8x384xbf16> to vector<8x384xf32>
    %216 = vector.extract_strided_slice %199 {offsets = [0, 0], sizes = [8, 128], strides = [1, 1]} : vector<8x256xf32> to vector<8x128xf32>
    %217 = vector.extract_strided_slice %199 {offsets = [0, 128], sizes = [8, 128], strides = [1, 1]} : vector<8x256xf32> to vector<8x128xf32>
    %218 = vector.extract_strided_slice %209 {offsets = [0, 0], sizes = [8, 384], strides = [1, 1]} : vector<8x768xf32> to vector<8x384xf32>
    %219 = vector.extract_strided_slice %212 {offsets = [0, 0], sizes = [8, 128], strides = [1, 1]} : vector<8x384xf32> to vector<8x128xf32>
    %220 = vector.extract_strided_slice %218 {offsets = [0, 0], sizes = [8, 128], strides = [1, 1]} : vector<8x384xf32> to vector<8x128xf32>
    %221 = arith.addf %219, %220 : vector<8x128xf32>
    %222 = arith.negf %221 : vector<8x128xf32>
    %223 = math.exp %222 : vector<8x128xf32>
    %cst_64 = arith.constant 1.000000e+00 : f32
    %224 = vector.broadcast %cst_64 : f32 to vector<8x128xf32>
    %225 = arith.addf %224, %223 : vector<8x128xf32>
    %226 = arith.divf %224, %225 : vector<8x128xf32>
    %227 = vector.extract_strided_slice %212 {offsets = [0, 128], sizes = [8, 128], strides = [1, 1]} : vector<8x384xf32> to vector<8x128xf32>
    %228 = vector.extract_strided_slice %218 {offsets = [0, 128], sizes = [8, 128], strides = [1, 1]} : vector<8x384xf32> to vector<8x128xf32>
    %229 = arith.addf %227, %228 : vector<8x128xf32>
    %230 = arith.negf %229 : vector<8x128xf32>
    %231 = math.exp %230 : vector<8x128xf32>
    %cst_65 = arith.constant 1.000000e+00 : f32
    %232 = vector.broadcast %cst_65 : f32 to vector<8x128xf32>
    %233 = arith.addf %232, %231 : vector<8x128xf32>
    %234 = arith.divf %232, %233 : vector<8x128xf32>
    %235 = vector.extract_strided_slice %212 {offsets = [0, 256], sizes = [8, 128], strides = [1, 1]} : vector<8x384xf32> to vector<8x128xf32>
    %236 = vector.extract_strided_slice %218 {offsets = [0, 256], sizes = [8, 128], strides = [1, 1]} : vector<8x384xf32> to vector<8x128xf32>
    %237 = arith.mulf %226, %236 : vector<8x128xf32>
    %238 = arith.addf %235, %237 : vector<8x128xf32>
    %239 = math.tanh %238 : vector<8x128xf32>
    %cst_66 = arith.constant 1.000000e+00 : f32
    %240 = vector.broadcast %cst_66 : f32 to vector<8x128xf32>
    %241 = arith.subf %240, %234 : vector<8x128xf32>
    %242 = arith.mulf %241, %239 : vector<8x128xf32>
    %243 = arith.mulf %234, %216 : vector<8x128xf32>
    %244 = arith.addf %242, %243 : vector<8x128xf32>
    %245 = vector.extract_strided_slice %209 {offsets = [0, 384], sizes = [8, 384], strides = [1, 1]} : vector<8x768xf32> to vector<8x384xf32>
    %246 = vector.extract_strided_slice %215 {offsets = [0, 0], sizes = [8, 128], strides = [1, 1]} : vector<8x384xf32> to vector<8x128xf32>
    %247 = vector.extract_strided_slice %245 {offsets = [0, 0], sizes = [8, 128], strides = [1, 1]} : vector<8x384xf32> to vector<8x128xf32>
    %248 = arith.addf %246, %247 : vector<8x128xf32>
    %249 = arith.negf %248 : vector<8x128xf32>
    %250 = math.exp %249 : vector<8x128xf32>
    %cst_67 = arith.constant 1.000000e+00 : f32
    %251 = vector.broadcast %cst_67 : f32 to vector<8x128xf32>
    %252 = arith.addf %251, %250 : vector<8x128xf32>
    %253 = arith.divf %251, %252 : vector<8x128xf32>
    %254 = vector.extract_strided_slice %215 {offsets = [0, 128], sizes = [8, 128], strides = [1, 1]} : vector<8x384xf32> to vector<8x128xf32>
    %255 = vector.extract_strided_slice %245 {offsets = [0, 128], sizes = [8, 128], strides = [1, 1]} : vector<8x384xf32> to vector<8x128xf32>
    %256 = arith.addf %254, %255 : vector<8x128xf32>
    %257 = arith.negf %256 : vector<8x128xf32>
    %258 = math.exp %257 : vector<8x128xf32>
    %cst_68 = arith.constant 1.000000e+00 : f32
    %259 = vector.broadcast %cst_68 : f32 to vector<8x128xf32>
    %260 = arith.addf %259, %258 : vector<8x128xf32>
    %261 = arith.divf %259, %260 : vector<8x128xf32>
    %262 = vector.extract_strided_slice %215 {offsets = [0, 256], sizes = [8, 128], strides = [1, 1]} : vector<8x384xf32> to vector<8x128xf32>
    %263 = vector.extract_strided_slice %245 {offsets = [0, 256], sizes = [8, 128], strides = [1, 1]} : vector<8x384xf32> to vector<8x128xf32>
    %264 = arith.mulf %253, %263 : vector<8x128xf32>
    %265 = arith.addf %262, %264 : vector<8x128xf32>
    %266 = math.tanh %265 : vector<8x128xf32>
    %cst_69 = arith.constant 1.000000e+00 : f32
    %267 = vector.broadcast %cst_69 : f32 to vector<8x128xf32>
    %268 = arith.subf %267, %261 : vector<8x128xf32>
    %269 = arith.mulf %268, %266 : vector<8x128xf32>
    %270 = arith.mulf %261, %217 : vector<8x128xf32>
    %271 = arith.addf %269, %270 : vector<8x128xf32>
    %272 = vector.broadcast %201 : i32 to vector<8x1xi32>
    %273 = arith.cmpi slt, %272, %3 : vector<8x1xi32>
    %274 = vector.broadcast %204 : i32 to vector<8x1xi32>
    %275 = arith.cmpi slt, %274, %3 : vector<8x1xi32>
    %276 = vector.shape_cast %273 : vector<8x1xi1> to vector<8x1xi1>
    %277 = vector.broadcast %276 : vector<8x1xi1> to vector<8x128xi1>
    %278 = arith.select %277, %244, %216 : vector<8x128xi1>, vector<8x128xf32>
    %279 = vector.shape_cast %275 : vector<8x1xi1> to vector<8x1xi1>
    %280 = vector.broadcast %279 : vector<8x1xi1> to vector<8x128xi1>
    %281 = arith.select %280, %271, %217 : vector<8x128xi1>, vector<8x128xf32>
    %cst_70 = arith.constant 0.000000e+00 : f32
    %282 = vector.shape_cast %273 : vector<8x1xi1> to vector<8x1xi1>
    %283 = vector.broadcast %282 : vector<8x1xi1> to vector<8x128xi1>
    %284 = vector.broadcast %cst_70 : f32 to vector<8x128xf32>
    %285 = arith.select %283, %278, %284 : vector<8x128xi1>, vector<8x128xf32>
    %c2_71 = arith.constant 2 : index
    %c0_72 = arith.constant 0 : index
    %c0_73 = arith.constant 0 : index
    %286 = vector.load %arg8[%c2_71, %c0_72, %c0_73] : memref<8x8x128xf32, #tpu.memory_space<vmem>>, vector<1x8x128xf32>
    %287 = vector.shape_cast %286 : vector<1x8x128xf32> to vector<8x128xf32>
    %288 = vector.shape_cast %285 : vector<8x128xf32> to vector<1x8x128xf32>
    tpu.vector_store %arg8[%c2_71, %c0_72, %c0_73], %288 {strides = array<i32>} : memref<8x8x128xf32, #tpu.memory_space<vmem>>, vector<1x8x128xf32>,
    %cst_74 = arith.constant 0.000000e+00 : f32
    %289 = vector.shape_cast %275 : vector<8x1xi1> to vector<8x1xi1>
    %290 = vector.broadcast %289 : vector<8x1xi1> to vector<8x128xi1>
    %291 = vector.broadcast %cst_74 : f32 to vector<8x128xf32>
    %292 = arith.select %290, %281, %291 : vector<8x128xi1>, vector<8x128xf32>
    %c5_75 = arith.constant 5 : index
    %c0_76 = arith.constant 0 : index
    %c0_77 = arith.constant 0 : index
    %293 = vector.load %arg9[%c5_75, %c0_76, %c0_77] : memref<8x8x128xf32, #tpu.memory_space<vmem>>, vector<1x8x128xf32>
    %294 = vector.shape_cast %293 : vector<1x8x128xf32> to vector<8x128xf32>
    %295 = vector.shape_cast %292 : vector<8x128xf32> to vector<1x8x128xf32>
    tpu.vector_store %arg9[%c5_75, %c0_76, %c0_77], %295 {strides = array<i32>} : memref<8x8x128xf32, #tpu.memory_space<vmem>>, vector<1x8x128xf32>,
    %296 = tpu.concatenate %278, %281 in 1 : vector<8x128xf32>, vector<8x128xf32> -> vector<8x256xf32>
    %c8_i32_78 = arith.constant 8 : i32
    %297 = arith.muli %arg0, %c8_i32_78 : i32
    %c3_i32 = arith.constant 3 : i32
    %298 = arith.addi %297, %c3_i32 : i32
    %c1_i32_79 = arith.constant 1 : i32
    %299 = arith.subi %c1_i32_79, %arg0 : i32
    %c8_i32_80 = arith.constant 8 : i32
    %300 = arith.muli %299, %c8_i32_80 : i32
    %c4_i32 = arith.constant 4 : i32
    %301 = arith.addi %300, %c4_i32 : i32
    %302 = arith.truncf %296 : vector<8x256xf32> to vector<8x256xbf16>
    %c0_81 = arith.constant 0 : index
    %c0_82 = arith.constant 0 : index
    %303 = vector.load %arg4[%c0_81, %c0_82] : memref<256x768xbf16, #tpu.memory_space<vmem>>, vector<256x768xbf16>
    %cst_83 = arith.constant dense<0.000000e+00> : vector<8x768xf32>
    %304 = tpu.matmul %302, %303, %cst_83 {dimension_numbers = #tpu.dot_dimension_numbers<[1], [0], [0], [1], [0, 0, 1, 1], [], []>} : vector<8x256xbf16>, vector<256x768xbf16>, vector<8x768xf32> -> vector<8x768xf32>
    %305 = vector.broadcast %4 : vector<1x768xf32> to vector<8x768xf32>
    %306 = arith.addf %304, %305 : vector<8x768xf32>
    %c3 = arith.constant 3 : index
    %c0_84 = arith.constant 0 : index
    %c0_85 = arith.constant 0 : index
    %307 = vector.load %arg2[%c3, %c0_84, %c0_85] : memref<8x8x384xbf16, #tpu.memory_space<vmem>>, vector<1x8x384xbf16>
    %308 = vector.shape_cast %307 : vector<1x8x384xbf16> to vector<8x384xbf16>
    %309 = arith.extf %308 : vector<8x384xbf16> to vector<8x384xf32>
    %c4 = arith.constant 4 : index
    %c0_86 = arith.constant 0 : index
    %c0_87 = arith.constant 0 : index
    %310 = vector.load %arg3[%c4, %c0_86, %c0_87] : memref<8x8x384xbf16, #tpu.memory_space<vmem>>, vector<1x8x384xbf16>
    %311 = vector.shape_cast %310 : vector<1x8x384xbf16> to vector<8x384xbf16>
    %312 = arith.extf %311 : vector<8x384xbf16> to vector<8x384xf32>
    %313 = vector.extract_strided_slice %296 {offsets = [0, 0], sizes = [8, 128], strides = [1, 1]} : vector<8x256xf32> to vector<8x128xf32>
    %314 = vector.extract_strided_slice %296 {offsets = [0, 128], sizes = [8, 128], strides = [1, 1]} : vector<8x256xf32> to vector<8x128xf32>
    %315 = vector.extract_strided_slice %306 {offsets = [0, 0], sizes = [8, 384], strides = [1, 1]} : vector<8x768xf32> to vector<8x384xf32>
    %316 = vector.extract_strided_slice %309 {offsets = [0, 0], sizes = [8, 128], strides = [1, 1]} : vector<8x384xf32> to vector<8x128xf32>
    %317 = vector.extract_strided_slice %315 {offsets = [0, 0], sizes = [8, 128], strides = [1, 1]} : vector<8x384xf32> to vector<8x128xf32>
    %318 = arith.addf %316, %317 : vector<8x128xf32>
    %319 = arith.negf %318 : vector<8x128xf32>
    %320 = math.exp %319 : vector<8x128xf32>
    %cst_88 = arith.constant 1.000000e+00 : f32
    %321 = vector.broadcast %cst_88 : f32 to vector<8x128xf32>
    %322 = arith.addf %321, %320 : vector<8x128xf32>
    %323 = arith.divf %321, %322 : vector<8x128xf32>
    %324 = vector.extract_strided_slice %309 {offsets = [0, 128], sizes = [8, 128], strides = [1, 1]} : vector<8x384xf32> to vector<8x128xf32>
    %325 = vector.extract_strided_slice %315 {offsets = [0, 128], sizes = [8, 128], strides = [1, 1]} : vector<8x384xf32> to vector<8x128xf32>
    %326 = arith.addf %324, %325 : vector<8x128xf32>
    %327 = arith.negf %326 : vector<8x128xf32>
    %328 = math.exp %327 : vector<8x128xf32>
    %cst_89 = arith.constant 1.000000e+00 : f32
    %329 = vector.broadcast %cst_89 : f32 to vector<8x128xf32>
    %330 = arith.addf %329, %328 : vector<8x128xf32>
    %331 = arith.divf %329, %330 : vector<8x128xf32>
    %332 = vector.extract_strided_slice %309 {offsets = [0, 256], sizes = [8, 128], strides = [1, 1]} : vector<8x384xf32> to vector<8x128xf32>
    %333 = vector.extract_strided_slice %315 {offsets = [0, 256], sizes = [8, 128], strides = [1, 1]} : vector<8x384xf32> to vector<8x128xf32>
    %334 = arith.mulf %323, %333 : vector<8x128xf32>
    %335 = arith.addf %332, %334 : vector<8x128xf32>
    %336 = math.tanh %335 : vector<8x128xf32>
    %cst_90 = arith.constant 1.000000e+00 : f32
    %337 = vector.broadcast %cst_90 : f32 to vector<8x128xf32>
    %338 = arith.subf %337, %331 : vector<8x128xf32>
    %339 = arith.mulf %338, %336 : vector<8x128xf32>
    %340 = arith.mulf %331, %313 : vector<8x128xf32>
    %341 = arith.addf %339, %340 : vector<8x128xf32>
    %342 = vector.extract_strided_slice %306 {offsets = [0, 384], sizes = [8, 384], strides = [1, 1]} : vector<8x768xf32> to vector<8x384xf32>
    %343 = vector.extract_strided_slice %312 {offsets = [0, 0], sizes = [8, 128], strides = [1, 1]} : vector<8x384xf32> to vector<8x128xf32>
    %344 = vector.extract_strided_slice %342 {offsets = [0, 0], sizes = [8, 128], strides = [1, 1]} : vector<8x384xf32> to vector<8x128xf32>
    %345 = arith.addf %343, %344 : vector<8x128xf32>
    %346 = arith.negf %345 : vector<8x128xf32>
    %347 = math.exp %346 : vector<8x128xf32>
    %cst_91 = arith.constant 1.000000e+00 : f32
    %348 = vector.broadcast %cst_91 : f32 to vector<8x128xf32>
    %349 = arith.addf %348, %347 : vector<8x128xf32>
    %350 = arith.divf %348, %349 : vector<8x128xf32>
    %351 = vector.extract_strided_slice %312 {offsets = [0, 128], sizes = [8, 128], strides = [1, 1]} : vector<8x384xf32> to vector<8x128xf32>
    %352 = vector.extract_strided_slice %342 {offsets = [0, 128], sizes = [8, 128], strides = [1, 1]} : vector<8x384xf32> to vector<8x128xf32>
    %353 = arith.addf %351, %352 : vector<8x128xf32>
    %354 = arith.negf %353 : vector<8x128xf32>
    %355 = math.exp %354 : vector<8x128xf32>
    %cst_92 = arith.constant 1.000000e+00 : f32
    %356 = vector.broadcast %cst_92 : f32 to vector<8x128xf32>
    %357 = arith.addf %356, %355 : vector<8x128xf32>
    %358 = arith.divf %356, %357 : vector<8x128xf32>
    %359 = vector.extract_strided_slice %312 {offsets = [0, 256], sizes = [8, 128], strides = [1, 1]} : vector<8x384xf32> to vector<8x128xf32>
    %360 = vector.extract_strided_slice %342 {offsets = [0, 256], sizes = [8, 128], strides = [1, 1]} : vector<8x384xf32> to vector<8x128xf32>
    %361 = arith.mulf %350, %360 : vector<8x128xf32>
    %362 = arith.addf %359, %361 : vector<8x128xf32>
    %363 = math.tanh %362 : vector<8x128xf32>
    %cst_93 = arith.constant 1.000000e+00 : f32
    %364 = vector.broadcast %cst_93 : f32 to vector<8x128xf32>
    %365 = arith.subf %364, %358 : vector<8x128xf32>
    %366 = arith.mulf %365, %363 : vector<8x128xf32>
    %367 = arith.mulf %358, %314 : vector<8x128xf32>
    %368 = arith.addf %366, %367 : vector<8x128xf32>
    %369 = vector.broadcast %298 : i32 to vector<8x1xi32>
    %370 = arith.cmpi slt, %369, %3 : vector<8x1xi32>
    %371 = vector.broadcast %301 : i32 to vector<8x1xi32>
    %372 = arith.cmpi slt, %371, %3 : vector<8x1xi32>
    %373 = vector.shape_cast %370 : vector<8x1xi1> to vector<8x1xi1>
    %374 = vector.broadcast %373 : vector<8x1xi1> to vector<8x128xi1>
    %375 = arith.select %374, %341, %313 : vector<8x128xi1>, vector<8x128xf32>
    %376 = vector.shape_cast %372 : vector<8x1xi1> to vector<8x1xi1>
    %377 = vector.broadcast %376 : vector<8x1xi1> to vector<8x128xi1>
    %378 = arith.select %377, %368, %314 : vector<8x128xi1>, vector<8x128xf32>
    %cst_94 = arith.constant 0.000000e+00 : f32
    %379 = vector.shape_cast %370 : vector<8x1xi1> to vector<8x1xi1>
    %380 = vector.broadcast %379 : vector<8x1xi1> to vector<8x128xi1>
    %381 = vector.broadcast %cst_94 : f32 to vector<8x128xf32>
    %382 = arith.select %380, %375, %381 : vector<8x128xi1>, vector<8x128xf32>
    %c3_95 = arith.constant 3 : index
    %c0_96 = arith.constant 0 : index
    %c0_97 = arith.constant 0 : index
    %383 = vector.load %arg8[%c3_95, %c0_96, %c0_97] : memref<8x8x128xf32, #tpu.memory_space<vmem>>, vector<1x8x128xf32>
    %384 = vector.shape_cast %383 : vector<1x8x128xf32> to vector<8x128xf32>
    %385 = vector.shape_cast %382 : vector<8x128xf32> to vector<1x8x128xf32>
    tpu.vector_store %arg8[%c3_95, %c0_96, %c0_97], %385 {strides = array<i32>} : memref<8x8x128xf32, #tpu.memory_space<vmem>>, vector<1x8x128xf32>,
    %cst_98 = arith.constant 0.000000e+00 : f32
    %386 = vector.shape_cast %372 : vector<8x1xi1> to vector<8x1xi1>
    %387 = vector.broadcast %386 : vector<8x1xi1> to vector<8x128xi1>
    %388 = vector.broadcast %cst_98 : f32 to vector<8x128xf32>
    %389 = arith.select %387, %378, %388 : vector<8x128xi1>, vector<8x128xf32>
    %c4_99 = arith.constant 4 : index
    %c0_100 = arith.constant 0 : index
    %c0_101 = arith.constant 0 : index
    %390 = vector.load %arg9[%c4_99, %c0_100, %c0_101] : memref<8x8x128xf32, #tpu.memory_space<vmem>>, vector<1x8x128xf32>
    %391 = vector.shape_cast %390 : vector<1x8x128xf32> to vector<8x128xf32>
    %392 = vector.shape_cast %389 : vector<8x128xf32> to vector<1x8x128xf32>
    tpu.vector_store %arg9[%c4_99, %c0_100, %c0_101], %392 {strides = array<i32>} : memref<8x8x128xf32, #tpu.memory_space<vmem>>, vector<1x8x128xf32>,
    %393 = tpu.concatenate %375, %378 in 1 : vector<8x128xf32>, vector<8x128xf32> -> vector<8x256xf32>
    %c8_i32_102 = arith.constant 8 : i32
    %394 = arith.muli %arg0, %c8_i32_102 : i32
    %c4_i32_103 = arith.constant 4 : i32
    %395 = arith.addi %394, %c4_i32_103 : i32
    %c1_i32_104 = arith.constant 1 : i32
    %396 = arith.subi %c1_i32_104, %arg0 : i32
    %c8_i32_105 = arith.constant 8 : i32
    %397 = arith.muli %396, %c8_i32_105 : i32
    %c3_i32_106 = arith.constant 3 : i32
    %398 = arith.addi %397, %c3_i32_106 : i32
    %399 = arith.truncf %393 : vector<8x256xf32> to vector<8x256xbf16>
    %c0_107 = arith.constant 0 : index
    %c0_108 = arith.constant 0 : index
    %400 = vector.load %arg4[%c0_107, %c0_108] : memref<256x768xbf16, #tpu.memory_space<vmem>>, vector<256x768xbf16>
    %cst_109 = arith.constant dense<0.000000e+00> : vector<8x768xf32>
    %401 = tpu.matmul %399, %400, %cst_109 {dimension_numbers = #tpu.dot_dimension_numbers<[1], [0], [0], [1], [0, 0, 1, 1], [], []>} : vector<8x256xbf16>, vector<256x768xbf16>, vector<8x768xf32> -> vector<8x768xf32>
    %402 = vector.broadcast %4 : vector<1x768xf32> to vector<8x768xf32>
    %403 = arith.addf %401, %402 : vector<8x768xf32>
    %c4_110 = arith.constant 4 : index
    %c0_111 = arith.constant 0 : index
    %c0_112 = arith.constant 0 : index
    %404 = vector.load %arg2[%c4_110, %c0_111, %c0_112] : memref<8x8x384xbf16, #tpu.memory_space<vmem>>, vector<1x8x384xbf16>
    %405 = vector.shape_cast %404 : vector<1x8x384xbf16> to vector<8x384xbf16>
    %406 = arith.extf %405 : vector<8x384xbf16> to vector<8x384xf32>
    %c3_113 = arith.constant 3 : index
    %c0_114 = arith.constant 0 : index
    %c0_115 = arith.constant 0 : index
    %407 = vector.load %arg3[%c3_113, %c0_114, %c0_115] : memref<8x8x384xbf16, #tpu.memory_space<vmem>>, vector<1x8x384xbf16>
    %408 = vector.shape_cast %407 : vector<1x8x384xbf16> to vector<8x384xbf16>
    %409 = arith.extf %408 : vector<8x384xbf16> to vector<8x384xf32>
    %410 = vector.extract_strided_slice %393 {offsets = [0, 0], sizes = [8, 128], strides = [1, 1]} : vector<8x256xf32> to vector<8x128xf32>
    %411 = vector.extract_strided_slice %393 {offsets = [0, 128], sizes = [8, 128], strides = [1, 1]} : vector<8x256xf32> to vector<8x128xf32>
    %412 = vector.extract_strided_slice %403 {offsets = [0, 0], sizes = [8, 384], strides = [1, 1]} : vector<8x768xf32> to vector<8x384xf32>
    %413 = vector.extract_strided_slice %406 {offsets = [0, 0], sizes = [8, 128], strides = [1, 1]} : vector<8x384xf32> to vector<8x128xf32>
    %414 = vector.extract_strided_slice %412 {offsets = [0, 0], sizes = [8, 128], strides = [1, 1]} : vector<8x384xf32> to vector<8x128xf32>
    %415 = arith.addf %413, %414 : vector<8x128xf32>
    %416 = arith.negf %415 : vector<8x128xf32>
    %417 = math.exp %416 : vector<8x128xf32>
    %cst_116 = arith.constant 1.000000e+00 : f32
    %418 = vector.broadcast %cst_116 : f32 to vector<8x128xf32>
    %419 = arith.addf %418, %417 : vector<8x128xf32>
    %420 = arith.divf %418, %419 : vector<8x128xf32>
    %421 = vector.extract_strided_slice %406 {offsets = [0, 128], sizes = [8, 128], strides = [1, 1]} : vector<8x384xf32> to vector<8x128xf32>
    %422 = vector.extract_strided_slice %412 {offsets = [0, 128], sizes = [8, 128], strides = [1, 1]} : vector<8x384xf32> to vector<8x128xf32>
    %423 = arith.addf %421, %422 : vector<8x128xf32>
    %424 = arith.negf %423 : vector<8x128xf32>
    %425 = math.exp %424 : vector<8x128xf32>
    %cst_117 = arith.constant 1.000000e+00 : f32
    %426 = vector.broadcast %cst_117 : f32 to vector<8x128xf32>
    %427 = arith.addf %426, %425 : vector<8x128xf32>
    %428 = arith.divf %426, %427 : vector<8x128xf32>
    %429 = vector.extract_strided_slice %406 {offsets = [0, 256], sizes = [8, 128], strides = [1, 1]} : vector<8x384xf32> to vector<8x128xf32>
    %430 = vector.extract_strided_slice %412 {offsets = [0, 256], sizes = [8, 128], strides = [1, 1]} : vector<8x384xf32> to vector<8x128xf32>
    %431 = arith.mulf %420, %430 : vector<8x128xf32>
    %432 = arith.addf %429, %431 : vector<8x128xf32>
    %433 = math.tanh %432 : vector<8x128xf32>
    %cst_118 = arith.constant 1.000000e+00 : f32
    %434 = vector.broadcast %cst_118 : f32 to vector<8x128xf32>
    %435 = arith.subf %434, %428 : vector<8x128xf32>
    %436 = arith.mulf %435, %433 : vector<8x128xf32>
    %437 = arith.mulf %428, %410 : vector<8x128xf32>
    %438 = arith.addf %436, %437 : vector<8x128xf32>
    %439 = vector.extract_strided_slice %403 {offsets = [0, 384], sizes = [8, 384], strides = [1, 1]} : vector<8x768xf32> to vector<8x384xf32>
    %440 = vector.extract_strided_slice %409 {offsets = [0, 0], sizes = [8, 128], strides = [1, 1]} : vector<8x384xf32> to vector<8x128xf32>
    %441 = vector.extract_strided_slice %439 {offsets = [0, 0], sizes = [8, 128], strides = [1, 1]} : vector<8x384xf32> to vector<8x128xf32>
    %442 = arith.addf %440, %441 : vector<8x128xf32>
    %443 = arith.negf %442 : vector<8x128xf32>
    %444 = math.exp %443 : vector<8x128xf32>
    %cst_119 = arith.constant 1.000000e+00 : f32
    %445 = vector.broadcast %cst_119 : f32 to vector<8x128xf32>
    %446 = arith.addf %445, %444 : vector<8x128xf32>
    %447 = arith.divf %445, %446 : vector<8x128xf32>
    %448 = vector.extract_strided_slice %409 {offsets = [0, 128], sizes = [8, 128], strides = [1, 1]} : vector<8x384xf32> to vector<8x128xf32>
    %449 = vector.extract_strided_slice %439 {offsets = [0, 128], sizes = [8, 128], strides = [1, 1]} : vector<8x384xf32> to vector<8x128xf32>
    %450 = arith.addf %448, %449 : vector<8x128xf32>
    %451 = arith.negf %450 : vector<8x128xf32>
    %452 = math.exp %451 : vector<8x128xf32>
    %cst_120 = arith.constant 1.000000e+00 : f32
    %453 = vector.broadcast %cst_120 : f32 to vector<8x128xf32>
    %454 = arith.addf %453, %452 : vector<8x128xf32>
    %455 = arith.divf %453, %454 : vector<8x128xf32>
    %456 = vector.extract_strided_slice %409 {offsets = [0, 256], sizes = [8, 128], strides = [1, 1]} : vector<8x384xf32> to vector<8x128xf32>
    %457 = vector.extract_strided_slice %439 {offsets = [0, 256], sizes = [8, 128], strides = [1, 1]} : vector<8x384xf32> to vector<8x128xf32>
    %458 = arith.mulf %447, %457 : vector<8x128xf32>
    %459 = arith.addf %456, %458 : vector<8x128xf32>
    %460 = math.tanh %459 : vector<8x128xf32>
    %cst_121 = arith.constant 1.000000e+00 : f32
    %461 = vector.broadcast %cst_121 : f32 to vector<8x128xf32>
    %462 = arith.subf %461, %455 : vector<8x128xf32>
    %463 = arith.mulf %462, %460 : vector<8x128xf32>
    %464 = arith.mulf %455, %411 : vector<8x128xf32>
    %465 = arith.addf %463, %464 : vector<8x128xf32>
    %466 = vector.broadcast %395 : i32 to vector<8x1xi32>
    %467 = arith.cmpi slt, %466, %3 : vector<8x1xi32>
    %468 = vector.broadcast %398 : i32 to vector<8x1xi32>
    %469 = arith.cmpi slt, %468, %3 : vector<8x1xi32>
    %470 = vector.shape_cast %467 : vector<8x1xi1> to vector<8x1xi1>
    %471 = vector.broadcast %470 : vector<8x1xi1> to vector<8x128xi1>
    %472 = arith.select %471, %438, %410 : vector<8x128xi1>, vector<8x128xf32>
    %473 = vector.shape_cast %469 : vector<8x1xi1> to vector<8x1xi1>
    %474 = vector.broadcast %473 : vector<8x1xi1> to vector<8x128xi1>
    %475 = arith.select %474, %465, %411 : vector<8x128xi1>, vector<8x128xf32>
    %cst_122 = arith.constant 0.000000e+00 : f32
    %476 = vector.shape_cast %467 : vector<8x1xi1> to vector<8x1xi1>
    %477 = vector.broadcast %476 : vector<8x1xi1> to vector<8x128xi1>
    %478 = vector.broadcast %cst_122 : f32 to vector<8x128xf32>
    %479 = arith.select %477, %472, %478 : vector<8x128xi1>, vector<8x128xf32>
    %c4_123 = arith.constant 4 : index
    %c0_124 = arith.constant 0 : index
    %c0_125 = arith.constant 0 : index
    %480 = vector.load %arg8[%c4_123, %c0_124, %c0_125] : memref<8x8x128xf32, #tpu.memory_space<vmem>>, vector<1x8x128xf32>
    %481 = vector.shape_cast %480 : vector<1x8x128xf32> to vector<8x128xf32>
    %482 = vector.shape_cast %479 : vector<8x128xf32> to vector<1x8x128xf32>
    tpu.vector_store %arg8[%c4_123, %c0_124, %c0_125], %482 {strides = array<i32>} : memref<8x8x128xf32, #tpu.memory_space<vmem>>, vector<1x8x128xf32>,
    %cst_126 = arith.constant 0.000000e+00 : f32
    %483 = vector.shape_cast %469 : vector<8x1xi1> to vector<8x1xi1>
    %484 = vector.broadcast %483 : vector<8x1xi1> to vector<8x128xi1>
    %485 = vector.broadcast %cst_126 : f32 to vector<8x128xf32>
    %486 = arith.select %484, %475, %485 : vector<8x128xi1>, vector<8x128xf32>
    %c3_127 = arith.constant 3 : index
    %c0_128 = arith.constant 0 : index
    %c0_129 = arith.constant 0 : index
    %487 = vector.load %arg9[%c3_127, %c0_128, %c0_129] : memref<8x8x128xf32, #tpu.memory_space<vmem>>, vector<1x8x128xf32>
    %488 = vector.shape_cast %487 : vector<1x8x128xf32> to vector<8x128xf32>
    %489 = vector.shape_cast %486 : vector<8x128xf32> to vector<1x8x128xf32>
    tpu.vector_store %arg9[%c3_127, %c0_128, %c0_129], %489 {strides = array<i32>} : memref<8x8x128xf32, #tpu.memory_space<vmem>>, vector<1x8x128xf32>,
    %490 = tpu.concatenate %472, %475 in 1 : vector<8x128xf32>, vector<8x128xf32> -> vector<8x256xf32>
    %c8_i32_130 = arith.constant 8 : i32
    %491 = arith.muli %arg0, %c8_i32_130 : i32
    %c5_i32_131 = arith.constant 5 : i32
    %492 = arith.addi %491, %c5_i32_131 : i32
    %c1_i32_132 = arith.constant 1 : i32
    %493 = arith.subi %c1_i32_132, %arg0 : i32
    %c8_i32_133 = arith.constant 8 : i32
    %494 = arith.muli %493, %c8_i32_133 : i32
    %c2_i32_134 = arith.constant 2 : i32
    %495 = arith.addi %494, %c2_i32_134 : i32
    %496 = arith.truncf %490 : vector<8x256xf32> to vector<8x256xbf16>
    %c0_135 = arith.constant 0 : index
    %c0_136 = arith.constant 0 : index
    %497 = vector.load %arg4[%c0_135, %c0_136] : memref<256x768xbf16, #tpu.memory_space<vmem>>, vector<256x768xbf16>
    %cst_137 = arith.constant dense<0.000000e+00> : vector<8x768xf32>
    %498 = tpu.matmul %496, %497, %cst_137 {dimension_numbers = #tpu.dot_dimension_numbers<[1], [0], [0], [1], [0, 0, 1, 1], [], []>} : vector<8x256xbf16>, vector<256x768xbf16>, vector<8x768xf32> -> vector<8x768xf32>
    %499 = vector.broadcast %4 : vector<1x768xf32> to vector<8x768xf32>
    %500 = arith.addf %498, %499 : vector<8x768xf32>
    %c5_138 = arith.constant 5 : index
    %c0_139 = arith.constant 0 : index
    %c0_140 = arith.constant 0 : index
    %501 = vector.load %arg2[%c5_138, %c0_139, %c0_140] : memref<8x8x384xbf16, #tpu.memory_space<vmem>>, vector<1x8x384xbf16>
    %502 = vector.shape_cast %501 : vector<1x8x384xbf16> to vector<8x384xbf16>
    %503 = arith.extf %502 : vector<8x384xbf16> to vector<8x384xf32>
    %c2_141 = arith.constant 2 : index
    %c0_142 = arith.constant 0 : index
    %c0_143 = arith.constant 0 : index
    %504 = vector.load %arg3[%c2_141, %c0_142, %c0_143] : memref<8x8x384xbf16, #tpu.memory_space<vmem>>, vector<1x8x384xbf16>
    %505 = vector.shape_cast %504 : vector<1x8x384xbf16> to vector<8x384xbf16>
    %506 = arith.extf %505 : vector<8x384xbf16> to vector<8x384xf32>
    %507 = vector.extract_strided_slice %490 {offsets = [0, 0], sizes = [8, 128], strides = [1, 1]} : vector<8x256xf32> to vector<8x128xf32>
    %508 = vector.extract_strided_slice %490 {offsets = [0, 128], sizes = [8, 128], strides = [1, 1]} : vector<8x256xf32> to vector<8x128xf32>
    %509 = vector.extract_strided_slice %500 {offsets = [0, 0], sizes = [8, 384], strides = [1, 1]} : vector<8x768xf32> to vector<8x384xf32>
    %510 = vector.extract_strided_slice %503 {offsets = [0, 0], sizes = [8, 128], strides = [1, 1]} : vector<8x384xf32> to vector<8x128xf32>
    %511 = vector.extract_strided_slice %509 {offsets = [0, 0], sizes = [8, 128], strides = [1, 1]} : vector<8x384xf32> to vector<8x128xf32>
    %512 = arith.addf %510, %511 : vector<8x128xf32>
    %513 = arith.negf %512 : vector<8x128xf32>
    %514 = math.exp %513 : vector<8x128xf32>
    %cst_144 = arith.constant 1.000000e+00 : f32
    %515 = vector.broadcast %cst_144 : f32 to vector<8x128xf32>
    %516 = arith.addf %515, %514 : vector<8x128xf32>
    %517 = arith.divf %515, %516 : vector<8x128xf32>
    %518 = vector.extract_strided_slice %503 {offsets = [0, 128], sizes = [8, 128], strides = [1, 1]} : vector<8x384xf32> to vector<8x128xf32>
    %519 = vector.extract_strided_slice %509 {offsets = [0, 128], sizes = [8, 128], strides = [1, 1]} : vector<8x384xf32> to vector<8x128xf32>
    %520 = arith.addf %518, %519 : vector<8x128xf32>
    %521 = arith.negf %520 : vector<8x128xf32>
    %522 = math.exp %521 : vector<8x128xf32>
    %cst_145 = arith.constant 1.000000e+00 : f32
    %523 = vector.broadcast %cst_145 : f32 to vector<8x128xf32>
    %524 = arith.addf %523, %522 : vector<8x128xf32>
    %525 = arith.divf %523, %524 : vector<8x128xf32>
    %526 = vector.extract_strided_slice %503 {offsets = [0, 256], sizes = [8, 128], strides = [1, 1]} : vector<8x384xf32> to vector<8x128xf32>
    %527 = vector.extract_strided_slice %509 {offsets = [0, 256], sizes = [8, 128], strides = [1, 1]} : vector<8x384xf32> to vector<8x128xf32>
    %528 = arith.mulf %517, %527 : vector<8x128xf32>
    %529 = arith.addf %526, %528 : vector<8x128xf32>
    %530 = math.tanh %529 : vector<8x128xf32>
    %cst_146 = arith.constant 1.000000e+00 : f32
    %531 = vector.broadcast %cst_146 : f32 to vector<8x128xf32>
    %532 = arith.subf %531, %525 : vector<8x128xf32>
    %533 = arith.mulf %532, %530 : vector<8x128xf32>
    %534 = arith.mulf %525, %507 : vector<8x128xf32>
    %535 = arith.addf %533, %534 : vector<8x128xf32>
    %536 = vector.extract_strided_slice %500 {offsets = [0, 384], sizes = [8, 384], strides = [1, 1]} : vector<8x768xf32> to vector<8x384xf32>
    %537 = vector.extract_strided_slice %506 {offsets = [0, 0], sizes = [8, 128], strides = [1, 1]} : vector<8x384xf32> to vector<8x128xf32>
    %538 = vector.extract_strided_slice %536 {offsets = [0, 0], sizes = [8, 128], strides = [1, 1]} : vector<8x384xf32> to vector<8x128xf32>
    %539 = arith.addf %537, %538 : vector<8x128xf32>
    %540 = arith.negf %539 : vector<8x128xf32>
    %541 = math.exp %540 : vector<8x128xf32>
    %cst_147 = arith.constant 1.000000e+00 : f32
    %542 = vector.broadcast %cst_147 : f32 to vector<8x128xf32>
    %543 = arith.addf %542, %541 : vector<8x128xf32>
    %544 = arith.divf %542, %543 : vector<8x128xf32>
    %545 = vector.extract_strided_slice %506 {offsets = [0, 128], sizes = [8, 128], strides = [1, 1]} : vector<8x384xf32> to vector<8x128xf32>
    %546 = vector.extract_strided_slice %536 {offsets = [0, 128], sizes = [8, 128], strides = [1, 1]} : vector<8x384xf32> to vector<8x128xf32>
    %547 = arith.addf %545, %546 : vector<8x128xf32>
    %548 = arith.negf %547 : vector<8x128xf32>
    %549 = math.exp %548 : vector<8x128xf32>
    %cst_148 = arith.constant 1.000000e+00 : f32
    %550 = vector.broadcast %cst_148 : f32 to vector<8x128xf32>
    %551 = arith.addf %550, %549 : vector<8x128xf32>
    %552 = arith.divf %550, %551 : vector<8x128xf32>
    %553 = vector.extract_strided_slice %506 {offsets = [0, 256], sizes = [8, 128], strides = [1, 1]} : vector<8x384xf32> to vector<8x128xf32>
    %554 = vector.extract_strided_slice %536 {offsets = [0, 256], sizes = [8, 128], strides = [1, 1]} : vector<8x384xf32> to vector<8x128xf32>
    %555 = arith.mulf %544, %554 : vector<8x128xf32>
    %556 = arith.addf %553, %555 : vector<8x128xf32>
    %557 = math.tanh %556 : vector<8x128xf32>
    %cst_149 = arith.constant 1.000000e+00 : f32
    %558 = vector.broadcast %cst_149 : f32 to vector<8x128xf32>
    %559 = arith.subf %558, %552 : vector<8x128xf32>
    %560 = arith.mulf %559, %557 : vector<8x128xf32>
    %561 = arith.mulf %552, %508 : vector<8x128xf32>
    %562 = arith.addf %560, %561 : vector<8x128xf32>
    %563 = vector.broadcast %492 : i32 to vector<8x1xi32>
    %564 = arith.cmpi slt, %563, %3 : vector<8x1xi32>
    %565 = vector.broadcast %495 : i32 to vector<8x1xi32>
    %566 = arith.cmpi slt, %565, %3 : vector<8x1xi32>
    %567 = vector.shape_cast %564 : vector<8x1xi1> to vector<8x1xi1>
    %568 = vector.broadcast %567 : vector<8x1xi1> to vector<8x128xi1>
    %569 = arith.select %568, %535, %507 : vector<8x128xi1>, vector<8x128xf32>
    %570 = vector.shape_cast %566 : vector<8x1xi1> to vector<8x1xi1>
    %571 = vector.broadcast %570 : vector<8x1xi1> to vector<8x128xi1>
    %572 = arith.select %571, %562, %508 : vector<8x128xi1>, vector<8x128xf32>
    %cst_150 = arith.constant 0.000000e+00 : f32
    %573 = vector.shape_cast %564 : vector<8x1xi1> to vector<8x1xi1>
    %574 = vector.broadcast %573 : vector<8x1xi1> to vector<8x128xi1>
    %575 = vector.broadcast %cst_150 : f32 to vector<8x128xf32>
    %576 = arith.select %574, %569, %575 : vector<8x128xi1>, vector<8x128xf32>
    %c5_151 = arith.constant 5 : index
    %c0_152 = arith.constant 0 : index
    %c0_153 = arith.constant 0 : index
    %577 = vector.load %arg8[%c5_151, %c0_152, %c0_153] : memref<8x8x128xf32, #tpu.memory_space<vmem>>, vector<1x8x128xf32>
    %578 = vector.shape_cast %577 : vector<1x8x128xf32> to vector<8x128xf32>
    %579 = vector.shape_cast %576 : vector<8x128xf32> to vector<1x8x128xf32>
    tpu.vector_store %arg8[%c5_151, %c0_152, %c0_153], %579 {strides = array<i32>} : memref<8x8x128xf32, #tpu.memory_space<vmem>>, vector<1x8x128xf32>,
    %cst_154 = arith.constant 0.000000e+00 : f32
    %580 = vector.shape_cast %566 : vector<8x1xi1> to vector<8x1xi1>
    %581 = vector.broadcast %580 : vector<8x1xi1> to vector<8x128xi1>
    %582 = vector.broadcast %cst_154 : f32 to vector<8x128xf32>
    %583 = arith.select %581, %572, %582 : vector<8x128xi1>, vector<8x128xf32>
    %c2_155 = arith.constant 2 : index
    %c0_156 = arith.constant 0 : index
    %c0_157 = arith.constant 0 : index
    %584 = vector.load %arg9[%c2_155, %c0_156, %c0_157] : memref<8x8x128xf32, #tpu.memory_space<vmem>>, vector<1x8x128xf32>
    %585 = vector.shape_cast %584 : vector<1x8x128xf32> to vector<8x128xf32>
    %586 = vector.shape_cast %583 : vector<8x128xf32> to vector<1x8x128xf32>
    tpu.vector_store %arg9[%c2_155, %c0_156, %c0_157], %586 {strides = array<i32>} : memref<8x8x128xf32, #tpu.memory_space<vmem>>, vector<1x8x128xf32>,
    %587 = tpu.concatenate %569, %572 in 1 : vector<8x128xf32>, vector<8x128xf32> -> vector<8x256xf32>
    %c8_i32_158 = arith.constant 8 : i32
    %588 = arith.muli %arg0, %c8_i32_158 : i32
    %c6_i32_159 = arith.constant 6 : i32
    %589 = arith.addi %588, %c6_i32_159 : i32
    %c1_i32_160 = arith.constant 1 : i32
    %590 = arith.subi %c1_i32_160, %arg0 : i32
    %c8_i32_161 = arith.constant 8 : i32
    %591 = arith.muli %590, %c8_i32_161 : i32
    %c1_i32_162 = arith.constant 1 : i32
    %592 = arith.addi %591, %c1_i32_162 : i32
    %593 = arith.truncf %587 : vector<8x256xf32> to vector<8x256xbf16>
    %c0_163 = arith.constant 0 : index
    %c0_164 = arith.constant 0 : index
    %594 = vector.load %arg4[%c0_163, %c0_164] : memref<256x768xbf16, #tpu.memory_space<vmem>>, vector<256x768xbf16>
    %cst_165 = arith.constant dense<0.000000e+00> : vector<8x768xf32>
    %595 = tpu.matmul %593, %594, %cst_165 {dimension_numbers = #tpu.dot_dimension_numbers<[1], [0], [0], [1], [0, 0, 1, 1], [], []>} : vector<8x256xbf16>, vector<256x768xbf16>, vector<8x768xf32> -> vector<8x768xf32>
    %596 = vector.broadcast %4 : vector<1x768xf32> to vector<8x768xf32>
    %597 = arith.addf %595, %596 : vector<8x768xf32>
    %c6_166 = arith.constant 6 : index
    %c0_167 = arith.constant 0 : index
    %c0_168 = arith.constant 0 : index
    %598 = vector.load %arg2[%c6_166, %c0_167, %c0_168] : memref<8x8x384xbf16, #tpu.memory_space<vmem>>, vector<1x8x384xbf16>
    %599 = vector.shape_cast %598 : vector<1x8x384xbf16> to vector<8x384xbf16>
    %600 = arith.extf %599 : vector<8x384xbf16> to vector<8x384xf32>
    %c1_169 = arith.constant 1 : index
    %c0_170 = arith.constant 0 : index
    %c0_171 = arith.constant 0 : index
    %601 = vector.load %arg3[%c1_169, %c0_170, %c0_171] : memref<8x8x384xbf16, #tpu.memory_space<vmem>>, vector<1x8x384xbf16>
    %602 = vector.shape_cast %601 : vector<1x8x384xbf16> to vector<8x384xbf16>
    %603 = arith.extf %602 : vector<8x384xbf16> to vector<8x384xf32>
    %604 = vector.extract_strided_slice %587 {offsets = [0, 0], sizes = [8, 128], strides = [1, 1]} : vector<8x256xf32> to vector<8x128xf32>
    %605 = vector.extract_strided_slice %587 {offsets = [0, 128], sizes = [8, 128], strides = [1, 1]} : vector<8x256xf32> to vector<8x128xf32>
    %606 = vector.extract_strided_slice %597 {offsets = [0, 0], sizes = [8, 384], strides = [1, 1]} : vector<8x768xf32> to vector<8x384xf32>
    %607 = vector.extract_strided_slice %600 {offsets = [0, 0], sizes = [8, 128], strides = [1, 1]} : vector<8x384xf32> to vector<8x128xf32>
    %608 = vector.extract_strided_slice %606 {offsets = [0, 0], sizes = [8, 128], strides = [1, 1]} : vector<8x384xf32> to vector<8x128xf32>
    %609 = arith.addf %607, %608 : vector<8x128xf32>
    %610 = arith.negf %609 : vector<8x128xf32>
    %611 = math.exp %610 : vector<8x128xf32>
    %cst_172 = arith.constant 1.000000e+00 : f32
    %612 = vector.broadcast %cst_172 : f32 to vector<8x128xf32>
    %613 = arith.addf %612, %611 : vector<8x128xf32>
    %614 = arith.divf %612, %613 : vector<8x128xf32>
    %615 = vector.extract_strided_slice %600 {offsets = [0, 128], sizes = [8, 128], strides = [1, 1]} : vector<8x384xf32> to vector<8x128xf32>
    %616 = vector.extract_strided_slice %606 {offsets = [0, 128], sizes = [8, 128], strides = [1, 1]} : vector<8x384xf32> to vector<8x128xf32>
    %617 = arith.addf %615, %616 : vector<8x128xf32>
    %618 = arith.negf %617 : vector<8x128xf32>
    %619 = math.exp %618 : vector<8x128xf32>
    %cst_173 = arith.constant 1.000000e+00 : f32
    %620 = vector.broadcast %cst_173 : f32 to vector<8x128xf32>
    %621 = arith.addf %620, %619 : vector<8x128xf32>
    %622 = arith.divf %620, %621 : vector<8x128xf32>
    %623 = vector.extract_strided_slice %600 {offsets = [0, 256], sizes = [8, 128], strides = [1, 1]} : vector<8x384xf32> to vector<8x128xf32>
    %624 = vector.extract_strided_slice %606 {offsets = [0, 256], sizes = [8, 128], strides = [1, 1]} : vector<8x384xf32> to vector<8x128xf32>
    %625 = arith.mulf %614, %624 : vector<8x128xf32>
    %626 = arith.addf %623, %625 : vector<8x128xf32>
    %627 = math.tanh %626 : vector<8x128xf32>
    %cst_174 = arith.constant 1.000000e+00 : f32
    %628 = vector.broadcast %cst_174 : f32 to vector<8x128xf32>
    %629 = arith.subf %628, %622 : vector<8x128xf32>
    %630 = arith.mulf %629, %627 : vector<8x128xf32>
    %631 = arith.mulf %622, %604 : vector<8x128xf32>
    %632 = arith.addf %630, %631 : vector<8x128xf32>
    %633 = vector.extract_strided_slice %597 {offsets = [0, 384], sizes = [8, 384], strides = [1, 1]} : vector<8x768xf32> to vector<8x384xf32>
    %634 = vector.extract_strided_slice %603 {offsets = [0, 0], sizes = [8, 128], strides = [1, 1]} : vector<8x384xf32> to vector<8x128xf32>
    %635 = vector.extract_strided_slice %633 {offsets = [0, 0], sizes = [8, 128], strides = [1, 1]} : vector<8x384xf32> to vector<8x128xf32>
    %636 = arith.addf %634, %635 : vector<8x128xf32>
    %637 = arith.negf %636 : vector<8x128xf32>
    %638 = math.exp %637 : vector<8x128xf32>
    %cst_175 = arith.constant 1.000000e+00 : f32
    %639 = vector.broadcast %cst_175 : f32 to vector<8x128xf32>
    %640 = arith.addf %639, %638 : vector<8x128xf32>
    %641 = arith.divf %639, %640 : vector<8x128xf32>
    %642 = vector.extract_strided_slice %603 {offsets = [0, 128], sizes = [8, 128], strides = [1, 1]} : vector<8x384xf32> to vector<8x128xf32>
    %643 = vector.extract_strided_slice %633 {offsets = [0, 128], sizes = [8, 128], strides = [1, 1]} : vector<8x384xf32> to vector<8x128xf32>
    %644 = arith.addf %642, %643 : vector<8x128xf32>
    %645 = arith.negf %644 : vector<8x128xf32>
    %646 = math.exp %645 : vector<8x128xf32>
    %cst_176 = arith.constant 1.000000e+00 : f32
    %647 = vector.broadcast %cst_176 : f32 to vector<8x128xf32>
    %648 = arith.addf %647, %646 : vector<8x128xf32>
    %649 = arith.divf %647, %648 : vector<8x128xf32>
    %650 = vector.extract_strided_slice %603 {offsets = [0, 256], sizes = [8, 128], strides = [1, 1]} : vector<8x384xf32> to vector<8x128xf32>
    %651 = vector.extract_strided_slice %633 {offsets = [0, 256], sizes = [8, 128], strides = [1, 1]} : vector<8x384xf32> to vector<8x128xf32>
    %652 = arith.mulf %641, %651 : vector<8x128xf32>
    %653 = arith.addf %650, %652 : vector<8x128xf32>
    %654 = math.tanh %653 : vector<8x128xf32>
    %cst_177 = arith.constant 1.000000e+00 : f32
    %655 = vector.broadcast %cst_177 : f32 to vector<8x128xf32>
    %656 = arith.subf %655, %649 : vector<8x128xf32>
    %657 = arith.mulf %656, %654 : vector<8x128xf32>
    %658 = arith.mulf %649, %605 : vector<8x128xf32>
    %659 = arith.addf %657, %658 : vector<8x128xf32>
    %660 = vector.broadcast %589 : i32 to vector<8x1xi32>
    %661 = arith.cmpi slt, %660, %3 : vector<8x1xi32>
    %662 = vector.broadcast %592 : i32 to vector<8x1xi32>
    %663 = arith.cmpi slt, %662, %3 : vector<8x1xi32>
    %664 = vector.shape_cast %661 : vector<8x1xi1> to vector<8x1xi1>
    %665 = vector.broadcast %664 : vector<8x1xi1> to vector<8x128xi1>
    %666 = arith.select %665, %632, %604 : vector<8x128xi1>, vector<8x128xf32>
    %667 = vector.shape_cast %663 : vector<8x1xi1> to vector<8x1xi1>
    %668 = vector.broadcast %667 : vector<8x1xi1> to vector<8x128xi1>
    %669 = arith.select %668, %659, %605 : vector<8x128xi1>, vector<8x128xf32>
    %cst_178 = arith.constant 0.000000e+00 : f32
    %670 = vector.shape_cast %661 : vector<8x1xi1> to vector<8x1xi1>
    %671 = vector.broadcast %670 : vector<8x1xi1> to vector<8x128xi1>
    %672 = vector.broadcast %cst_178 : f32 to vector<8x128xf32>
    %673 = arith.select %671, %666, %672 : vector<8x128xi1>, vector<8x128xf32>
    %c6_179 = arith.constant 6 : index
    %c0_180 = arith.constant 0 : index
    %c0_181 = arith.constant 0 : index
    %674 = vector.load %arg8[%c6_179, %c0_180, %c0_181] : memref<8x8x128xf32, #tpu.memory_space<vmem>>, vector<1x8x128xf32>
    %675 = vector.shape_cast %674 : vector<1x8x128xf32> to vector<8x128xf32>
    %676 = vector.shape_cast %673 : vector<8x128xf32> to vector<1x8x128xf32>
    tpu.vector_store %arg8[%c6_179, %c0_180, %c0_181], %676 {strides = array<i32>} : memref<8x8x128xf32, #tpu.memory_space<vmem>>, vector<1x8x128xf32>,
    %cst_182 = arith.constant 0.000000e+00 : f32
    %677 = vector.shape_cast %663 : vector<8x1xi1> to vector<8x1xi1>
    %678 = vector.broadcast %677 : vector<8x1xi1> to vector<8x128xi1>
    %679 = vector.broadcast %cst_182 : f32 to vector<8x128xf32>
    %680 = arith.select %678, %669, %679 : vector<8x128xi1>, vector<8x128xf32>
    %c1_183 = arith.constant 1 : index
    %c0_184 = arith.constant 0 : index
    %c0_185 = arith.constant 0 : index
    %681 = vector.load %arg9[%c1_183, %c0_184, %c0_185] : memref<8x8x128xf32, #tpu.memory_space<vmem>>, vector<1x8x128xf32>
    %682 = vector.shape_cast %681 : vector<1x8x128xf32> to vector<8x128xf32>
    %683 = vector.shape_cast %680 : vector<8x128xf32> to vector<1x8x128xf32>
    tpu.vector_store %arg9[%c1_183, %c0_184, %c0_185], %683 {strides = array<i32>} : memref<8x8x128xf32, #tpu.memory_space<vmem>>, vector<1x8x128xf32>,
    %684 = tpu.concatenate %666, %669 in 1 : vector<8x128xf32>, vector<8x128xf32> -> vector<8x256xf32>
    %c8_i32_186 = arith.constant 8 : i32
    %685 = arith.muli %arg0, %c8_i32_186 : i32
    %c7_i32_187 = arith.constant 7 : i32
    %686 = arith.addi %685, %c7_i32_187 : i32
    %c1_i32_188 = arith.constant 1 : i32
    %687 = arith.subi %c1_i32_188, %arg0 : i32
    %c8_i32_189 = arith.constant 8 : i32
    %688 = arith.muli %687, %c8_i32_189 : i32
    %c0_i32_190 = arith.constant 0 : i32
    %689 = arith.addi %688, %c0_i32_190 : i32
    %690 = arith.truncf %684 : vector<8x256xf32> to vector<8x256xbf16>
    %c0_191 = arith.constant 0 : index
    %c0_192 = arith.constant 0 : index
    %691 = vector.load %arg4[%c0_191, %c0_192] : memref<256x768xbf16, #tpu.memory_space<vmem>>, vector<256x768xbf16>
    %cst_193 = arith.constant dense<0.000000e+00> : vector<8x768xf32>
    %692 = tpu.matmul %690, %691, %cst_193 {dimension_numbers = #tpu.dot_dimension_numbers<[1], [0], [0], [1], [0, 0, 1, 1], [], []>} : vector<8x256xbf16>, vector<256x768xbf16>, vector<8x768xf32> -> vector<8x768xf32>
    %693 = vector.broadcast %4 : vector<1x768xf32> to vector<8x768xf32>
    %694 = arith.addf %692, %693 : vector<8x768xf32>
    %c7_194 = arith.constant 7 : index
    %c0_195 = arith.constant 0 : index
    %c0_196 = arith.constant 0 : index
    %695 = vector.load %arg2[%c7_194, %c0_195, %c0_196] : memref<8x8x384xbf16, #tpu.memory_space<vmem>>, vector<1x8x384xbf16>
    %696 = vector.shape_cast %695 : vector<1x8x384xbf16> to vector<8x384xbf16>
    %697 = arith.extf %696 : vector<8x384xbf16> to vector<8x384xf32>
    %c0_197 = arith.constant 0 : index
    %c0_198 = arith.constant 0 : index
    %c0_199 = arith.constant 0 : index
    %698 = vector.load %arg3[%c0_197, %c0_198, %c0_199] : memref<8x8x384xbf16, #tpu.memory_space<vmem>>, vector<1x8x384xbf16>
    %699 = vector.shape_cast %698 : vector<1x8x384xbf16> to vector<8x384xbf16>
    %700 = arith.extf %699 : vector<8x384xbf16> to vector<8x384xf32>
    %701 = vector.extract_strided_slice %684 {offsets = [0, 0], sizes = [8, 128], strides = [1, 1]} : vector<8x256xf32> to vector<8x128xf32>
    %702 = vector.extract_strided_slice %684 {offsets = [0, 128], sizes = [8, 128], strides = [1, 1]} : vector<8x256xf32> to vector<8x128xf32>
    %703 = vector.extract_strided_slice %694 {offsets = [0, 0], sizes = [8, 384], strides = [1, 1]} : vector<8x768xf32> to vector<8x384xf32>
    %704 = vector.extract_strided_slice %697 {offsets = [0, 0], sizes = [8, 128], strides = [1, 1]} : vector<8x384xf32> to vector<8x128xf32>
    %705 = vector.extract_strided_slice %703 {offsets = [0, 0], sizes = [8, 128], strides = [1, 1]} : vector<8x384xf32> to vector<8x128xf32>
    %706 = arith.addf %704, %705 : vector<8x128xf32>
    %707 = arith.negf %706 : vector<8x128xf32>
    %708 = math.exp %707 : vector<8x128xf32>
    %cst_200 = arith.constant 1.000000e+00 : f32
    %709 = vector.broadcast %cst_200 : f32 to vector<8x128xf32>
    %710 = arith.addf %709, %708 : vector<8x128xf32>
    %711 = arith.divf %709, %710 : vector<8x128xf32>
    %712 = vector.extract_strided_slice %697 {offsets = [0, 128], sizes = [8, 128], strides = [1, 1]} : vector<8x384xf32> to vector<8x128xf32>
    %713 = vector.extract_strided_slice %703 {offsets = [0, 128], sizes = [8, 128], strides = [1, 1]} : vector<8x384xf32> to vector<8x128xf32>
    %714 = arith.addf %712, %713 : vector<8x128xf32>
    %715 = arith.negf %714 : vector<8x128xf32>
    %716 = math.exp %715 : vector<8x128xf32>
    %cst_201 = arith.constant 1.000000e+00 : f32
    %717 = vector.broadcast %cst_201 : f32 to vector<8x128xf32>
    %718 = arith.addf %717, %716 : vector<8x128xf32>
    %719 = arith.divf %717, %718 : vector<8x128xf32>
    %720 = vector.extract_strided_slice %697 {offsets = [0, 256], sizes = [8, 128], strides = [1, 1]} : vector<8x384xf32> to vector<8x128xf32>
    %721 = vector.extract_strided_slice %703 {offsets = [0, 256], sizes = [8, 128], strides = [1, 1]} : vector<8x384xf32> to vector<8x128xf32>
    %722 = arith.mulf %711, %721 : vector<8x128xf32>
    %723 = arith.addf %720, %722 : vector<8x128xf32>
    %724 = math.tanh %723 : vector<8x128xf32>
    %cst_202 = arith.constant 1.000000e+00 : f32
    %725 = vector.broadcast %cst_202 : f32 to vector<8x128xf32>
    %726 = arith.subf %725, %719 : vector<8x128xf32>
    %727 = arith.mulf %726, %724 : vector<8x128xf32>
    %728 = arith.mulf %719, %701 : vector<8x128xf32>
    %729 = arith.addf %727, %728 : vector<8x128xf32>
    %730 = vector.extract_strided_slice %694 {offsets = [0, 384], sizes = [8, 384], strides = [1, 1]} : vector<8x768xf32> to vector<8x384xf32>
    %731 = vector.extract_strided_slice %700 {offsets = [0, 0], sizes = [8, 128], strides = [1, 1]} : vector<8x384xf32> to vector<8x128xf32>
    %732 = vector.extract_strided_slice %730 {offsets = [0, 0], sizes = [8, 128], strides = [1, 1]} : vector<8x384xf32> to vector<8x128xf32>
    %733 = arith.addf %731, %732 : vector<8x128xf32>
    %734 = arith.negf %733 : vector<8x128xf32>
    %735 = math.exp %734 : vector<8x128xf32>
    %cst_203 = arith.constant 1.000000e+00 : f32
    %736 = vector.broadcast %cst_203 : f32 to vector<8x128xf32>
    %737 = arith.addf %736, %735 : vector<8x128xf32>
    %738 = arith.divf %736, %737 : vector<8x128xf32>
    %739 = vector.extract_strided_slice %700 {offsets = [0, 128], sizes = [8, 128], strides = [1, 1]} : vector<8x384xf32> to vector<8x128xf32>
    %740 = vector.extract_strided_slice %730 {offsets = [0, 128], sizes = [8, 128], strides = [1, 1]} : vector<8x384xf32> to vector<8x128xf32>
    %741 = arith.addf %739, %740 : vector<8x128xf32>
    %742 = arith.negf %741 : vector<8x128xf32>
    %743 = math.exp %742 : vector<8x128xf32>
    %cst_204 = arith.constant 1.000000e+00 : f32
    %744 = vector.broadcast %cst_204 : f32 to vector<8x128xf32>
    %745 = arith.addf %744, %743 : vector<8x128xf32>
    %746 = arith.divf %744, %745 : vector<8x128xf32>
    %747 = vector.extract_strided_slice %700 {offsets = [0, 256], sizes = [8, 128], strides = [1, 1]} : vector<8x384xf32> to vector<8x128xf32>
    %748 = vector.extract_strided_slice %730 {offsets = [0, 256], sizes = [8, 128], strides = [1, 1]} : vector<8x384xf32> to vector<8x128xf32>
    %749 = arith.mulf %738, %748 : vector<8x128xf32>
    %750 = arith.addf %747, %749 : vector<8x128xf32>
    %751 = math.tanh %750 : vector<8x128xf32>
    %cst_205 = arith.constant 1.000000e+00 : f32
    %752 = vector.broadcast %cst_205 : f32 to vector<8x128xf32>
    %753 = arith.subf %752, %746 : vector<8x128xf32>
    %754 = arith.mulf %753, %751 : vector<8x128xf32>
    %755 = arith.mulf %746, %702 : vector<8x128xf32>
    %756 = arith.addf %754, %755 : vector<8x128xf32>
    %757 = vector.broadcast %686 : i32 to vector<8x1xi32>
    %758 = arith.cmpi slt, %757, %3 : vector<8x1xi32>
    %759 = vector.broadcast %689 : i32 to vector<8x1xi32>
    %760 = arith.cmpi slt, %759, %3 : vector<8x1xi32>
    %761 = vector.shape_cast %758 : vector<8x1xi1> to vector<8x1xi1>
    %762 = vector.broadcast %761 : vector<8x1xi1> to vector<8x128xi1>
    %763 = arith.select %762, %729, %701 : vector<8x128xi1>, vector<8x128xf32>
    %764 = vector.shape_cast %760 : vector<8x1xi1> to vector<8x1xi1>
    %765 = vector.broadcast %764 : vector<8x1xi1> to vector<8x128xi1>
    %766 = arith.select %765, %756, %702 : vector<8x128xi1>, vector<8x128xf32>
    %cst_206 = arith.constant 0.000000e+00 : f32
    %767 = vector.shape_cast %758 : vector<8x1xi1> to vector<8x1xi1>
    %768 = vector.broadcast %767 : vector<8x1xi1> to vector<8x128xi1>
    %769 = vector.broadcast %cst_206 : f32 to vector<8x128xf32>
    %770 = arith.select %768, %763, %769 : vector<8x128xi1>, vector<8x128xf32>
    %c7_207 = arith.constant 7 : index
    %c0_208 = arith.constant 0 : index
    %c0_209 = arith.constant 0 : index
    %771 = vector.load %arg8[%c7_207, %c0_208, %c0_209] : memref<8x8x128xf32, #tpu.memory_space<vmem>>, vector<1x8x128xf32>
    %772 = vector.shape_cast %771 : vector<1x8x128xf32> to vector<8x128xf32>
    %773 = vector.shape_cast %770 : vector<8x128xf32> to vector<1x8x128xf32>
    tpu.vector_store %arg8[%c7_207, %c0_208, %c0_209], %773 {strides = array<i32>} : memref<8x8x128xf32, #tpu.memory_space<vmem>>, vector<1x8x128xf32>,
    %cst_210 = arith.constant 0.000000e+00 : f32
    %774 = vector.shape_cast %760 : vector<8x1xi1> to vector<8x1xi1>
    %775 = vector.broadcast %774 : vector<8x1xi1> to vector<8x128xi1>
    %776 = vector.broadcast %cst_210 : f32 to vector<8x128xf32>
    %777 = arith.select %775, %766, %776 : vector<8x128xi1>, vector<8x128xf32>
    %c0_211 = arith.constant 0 : index
    %c0_212 = arith.constant 0 : index
    %c0_213 = arith.constant 0 : index
    %778 = vector.load %arg9[%c0_211, %c0_212, %c0_213] : memref<8x8x128xf32, #tpu.memory_space<vmem>>, vector<1x8x128xf32>
    %779 = vector.shape_cast %778 : vector<1x8x128xf32> to vector<8x128xf32>
    %780 = vector.shape_cast %777 : vector<8x128xf32> to vector<1x8x128xf32>
    tpu.vector_store %arg9[%c0_211, %c0_212, %c0_213], %780 {strides = array<i32>} : memref<8x8x128xf32, #tpu.memory_space<vmem>>, vector<1x8x128xf32>,
    %781 = tpu.concatenate %763, %766 in 1 : vector<8x128xf32>, vector<8x128xf32> -> vector<8x256xf32>
    %c0_214 = arith.constant 0 : index
    %c0_215 = arith.constant 0 : index
    %782 = vector.load %arg11[%c0_214, %c0_215] : memref<8x256xf32, #tpu.memory_space<vmem>>, vector<8x256xf32>
    tpu.vector_store %arg11[%c0_214, %c0_215], %781 {strides = array<i32>} : memref<8x256xf32, #tpu.memory_space<vmem>>, vector<8x256xf32>,
    %c1_i32_216 = arith.constant 1 : i32
    %783 = arith.cmpi eq, %arg0, %c1_i32_216 : i32
    %784 = arith.extui %783 : i1 to i32
    %c0_i32_217 = arith.constant 0 : i32
    %785 = arith.cmpi ne, %784, %c0_i32_217 : i32
    scf.if %785 {
      %c0_218 = arith.constant 0 : index
      %c0_219 = arith.constant 0 : index
      %786 = vector.load %arg6[%c0_218, %c0_219] : memref<256x128xf32, #tpu.memory_space<vmem>>, vector<256x128xf32>
      %cst_220 = arith.constant dense<0.000000e+00> : vector<8x128xf32>
      %787 = tpu.matmul %781, %786, %cst_220 {dimension_numbers = #tpu.dot_dimension_numbers<[1], [0], [0], [1], [0, 0, 1, 1], [], []>} : vector<8x256xf32>, vector<256x128xf32>, vector<8x128xf32> -> vector<8x128xf32>
      %c0_221 = arith.constant 0 : index
      %c0_222 = arith.constant 0 : index
      %788 = vector.load %arg7[%c0_221, %c0_222] : memref<1x128xf32, #tpu.memory_space<vmem>>, vector<1x128xf32>
      %789 = vector.broadcast %788 : vector<1x128xf32> to vector<8x128xf32>
      %790 = arith.addf %787, %789 : vector<8x128xf32>
      %791 = math.tanh %790 : vector<8x128xf32>
      %c0_223 = arith.constant 0 : index
      %c0_224 = arith.constant 0 : index
      %792 = vector.load %arg10[%c0_223, %c0_224] : memref<8x128xf32, #tpu.memory_space<vmem>>, vector<8x128xf32>
      tpu.vector_store %arg10[%c0_223, %c0_224], %791 {strides = array<i32>} : memref<8x128xf32, #tpu.memory_space<vmem>>, vector<8x128xf32>,
    } else {
    }
    return
  }
  func.func @transform_0(%arg0: i32) -> (i32, i32) {
    %c0_i32 = arith.constant 0 : i32
    %c0_i32_0 = arith.constant 0 : i32
    %c0_i32_1 = arith.constant 0 : i32
    return %c0_i32, %c0_i32_0 : i32, i32
  }
  func.func @transform_1(%arg0: i32) -> (i32, i32, i32) {
    %c0_i32 = arith.constant 0 : i32
    %c0_i32_0 = arith.constant 0 : i32
    %c0_i32_1 = arith.constant 0 : i32
    return %arg0, %c0_i32, %c0_i32_0 : i32, i32, i32
  }
  func.func @transform_2(%arg0: i32) -> (i32, i32, i32) {
    %c1_i32 = arith.constant 1 : i32
    %0 = arith.subi %c1_i32, %arg0 : i32
    %c0_i32 = arith.constant 0 : i32
    %c0_i32_0 = arith.constant 0 : i32
    %c0_i32_1 = arith.constant 0 : i32
    return %0, %c0_i32, %c0_i32_0 : i32, i32, i32
  }
  func.func @transform_3(%arg0: i32) -> (i32, i32) {
    %c0_i32 = arith.constant 0 : i32
    %c0_i32_0 = arith.constant 0 : i32
    %c0_i32_1 = arith.constant 0 : i32
    return %c0_i32, %c0_i32_0 : i32, i32
  }
  func.func @transform_4(%arg0: i32) -> (i32, i32) {
    %c0_i32 = arith.constant 0 : i32
    %c0_i32_0 = arith.constant 0 : i32
    %c0_i32_1 = arith.constant 0 : i32
    return %c0_i32, %c0_i32_0 : i32, i32
  }
  func.func @transform_5(%arg0: i32) -> (i32, i32) {
    %c0_i32 = arith.constant 0 : i32
    %c0_i32_0 = arith.constant 0 : i32
    %c0_i32_1 = arith.constant 0 : i32
    return %c0_i32, %c0_i32_0 : i32, i32
  }
  func.func @transform_6(%arg0: i32) -> (i32, i32) {
    %c0_i32 = arith.constant 0 : i32
    %c0_i32_0 = arith.constant 0 : i32
    %c0_i32_1 = arith.constant 0 : i32
    return %c0_i32, %c0_i32_0 : i32, i32
  }
  func.func @transform_7(%arg0: i32) -> (i32, i32, i32) {
    %c0_i32 = arith.constant 0 : i32
    %c0_i32_0 = arith.constant 0 : i32
    %c0_i32_1 = arith.constant 0 : i32
    return %arg0, %c0_i32, %c0_i32_0 : i32, i32, i32
  }
  func.func @transform_8(%arg0: i32) -> (i32, i32, i32) {
    %c1_i32 = arith.constant 1 : i32
    %0 = arith.subi %c1_i32, %arg0 : i32
    %c0_i32 = arith.constant 0 : i32
    %c0_i32_0 = arith.constant 0 : i32
    %c0_i32_1 = arith.constant 0 : i32
    return %0, %c0_i32, %c0_i32_0 : i32, i32, i32
  }
  func.func @transform_9(%arg0: i32) -> (i32, i32) {
    %c0_i32 = arith.constant 0 : i32
    %c0_i32_0 = arith.constant 0 : i32
    %c0_i32_1 = arith.constant 0 : i32
    return %c0_i32, %c0_i32_0 : i32, i32
  }
}

</mosaic_0001>

<llo_original>
// kernel: encoder_forward.2
$region0: #{encoder_forward.2}
  #allocation0 [shape = 'u32[]', space=smem, size = 0x4, offset = 0x4, fixed_abs, tag = 'smem constant byte address 0x4 - core index']
  #allocation1 [shape = 'u32[144,128]{1,0:T(1,128)}', space=vmem, size = 0x12000, scoped, tag = 'internal scratch']
  %s0 = inlined_call_operand.vmem [shape: f32[128,32], index: 0, kind: input, shape index: {}]
  %s1 = inlined_call_operand.vmem [shape: bf16[32,768], index: 1, kind: input, shape index: {}]
  %s2 = inlined_call_operand.vmem [shape: f32[1,768], index: 2, kind: input, shape index: {}]
  %s3 = inlined_call_operand.vmem [shape: bf16[128,384], index: 3, kind: output, shape index: {0}]
  %s4 = inlined_call_operand.vmem [shape: bf16[128,384], index: 4, kind: output, shape index: {1}]
  %5 = xla_tuple %s3, %s4
  %s6 = sld [smem:[#allocation0]]
  $region30: #{encoder_forward.2} parent=0
    _
  %s8 = ssub.s32 1, %s6
  %s9 = scalar_select 0, %s8, %s6
  // Predicated region
  $region2: #{encoder_forward.2} parent=0 // pred_check
    _
  $region3: #{encoder_forward.2} parent=0 // pred_check_branch
    %11 = sbr.rel (0) target = $region5
  $region4: #{encoder_forward.2} parent=0 // pred_region
    _
  $region5: #{encoder_forward.2} parent=0 // pred_fallthru
    _
  // Predicated region
  $region6: #{encoder_forward.2} parent=0 // pred_check
    _
  $region7: #{encoder_forward.2} parent=0 // pred_check_branch
    %13 = sbr.rel (0) target = $region9
  $region8: #{encoder_forward.2} parent=0 // pred_region
    _
  $region9: #{encoder_forward.2} parent=0 // pred_fallthru
    _
  // Predicated region
  $region10: #{encoder_forward.2} parent=0 // pred_check
    _
  $region11: #{encoder_forward.2} parent=0 // pred_check_branch
    %15 = sbr.rel (0) target = $region13
  $region12: #{encoder_forward.2} parent=0 // pred_region
    _
  $region13: #{encoder_forward.2} parent=0 // pred_fallthru
    _
  %v17 = vld [vmem:[%s0] sm:$0xff]
  %v18 = vld [vmem:[%s0 + $0x8] sm:$0xff]
  %v19 = vld [vmem:[%s0 + $0x10] sm:$0xff]
  %v20 = vld [vmem:[%s0 + $0x18] sm:$0xff]
  %v21 = vld [vmem:[%s0 + $0x20] sm:$0xff]
  %v22 = vld [vmem:[%s0 + $0x28] sm:$0xff]
  %v23 = vld [vmem:[%s0 + $0x30] sm:$0xff]
  %v24 = vld [vmem:[%s0 + $0x38] sm:$0xff]
  %v25 = vld [vmem:[%s0 + $0x40] sm:$0xff]
  %v26 = vld [vmem:[%s0 + $0x48] sm:$0xff]
  %v27 = vld [vmem:[%s0 + $0x50] sm:$0xff]
  %v28 = vld [vmem:[%s0 + $0x58] sm:$0xff]
  %v29 = vld [vmem:[%s0 + $0x60] sm:$0xff]
  %v30 = vld [vmem:[%s0 + $0x68] sm:$0xff]
  %v31 = vld [vmem:[%s0 + $0x70] sm:$0xff]
  %v32 = vld [vmem:[%s0 + $0x78] sm:$0xff]
  %v33 = vpack.c.bf16 %v18, %v17
  %v34 = vpack.c.bf16 %v20, %v19
  %v35 = vpack.c.bf16 %v22, %v21
  %v36 = vpack.c.bf16 %v24, %v23
  %v37 = vpack.c.bf16 %v26, %v25
  %v38 = vpack.c.bf16 %v28, %v27
  %v39 = vpack.c.bf16 %v30, %v29
  %v40 = vpack.c.bf16 %v32, %v31
  %v41 = vld [vmem:[%s1] sm:$0xff]
  %v42 = vld [vmem:[%s1 + $0x8] sm:$0xff]
  %v43 = vld [vmem:[%s1 + $0x10] sm:$0xff]
  %v44 = vld [vmem:[%s1 + $0x18] sm:$0xff]
  %v45 = vld [vmem:[%s1 + $0x20] sm:$0xff]
  %v46 = vld [vmem:[%s1 + $0x28] sm:$0xff]
  %v47 = vld [vmem:[%s1 + $0x30] sm:$0xff]
  %v48 = vld [vmem:[%s1 + $0x38] sm:$0xff]
  %v49 = vld [vmem:[%s1 + $0x40] sm:$0xff]
  %v50 = vld [vmem:[%s1 + $0x48] sm:$0xff]
  %v51 = vld [vmem:[%s1 + $0x50] sm:$0xff]
  %v52 = vld [vmem:[%s1 + $0x58] sm:$0xff]
  %v53 = vld [vmem:[%s2] sm:$0x3f]
  %v55 = vlaneseq
  %v56 = vshrl.u32 %v55, 7
  %v57 = vsub.s32 0, %v56
  %v58 = vrot.slane %v53, %v57
  %v59 = vlaneseq
  %v60 = vshrl.u32 %v59, 7
  %v61 = vsub.s32 1, %v60
  %v62 = vrot.slane %v53, %v61
  %v63 = vlaneseq
  %v64 = vshrl.u32 %v63, 7
  %v65 = vsub.s32 2, %v64
  %v66 = vrot.slane %v53, %v65
  %v67 = vlaneseq
  %v68 = vshrl.u32 %v67, 7
  %v69 = vsub.s32 3, %v68
  %v70 = vrot.slane %v53, %v69
  %v71 = vlaneseq
  %v72 = vshrl.u32 %v71, 7
  %v73 = vsub.s32 4, %v72
  %v74 = vrot.slane %v53, %v73
  %v75 = vlaneseq
  %v76 = vshrl.u32 %v75, 7
  %v77 = vsub.s32 5, %v76
  %v78 = vrot.slane %v53, %v77
  %v97 = vunpack.c.l.b16 %v41
  %v98 = vunpack.c.h.b16 %v41
  %v99 = vunpack.c.l.b16 %v42
  %v100 = vunpack.c.h.b16 %v42
  %v101 = vunpack.c.l.b16 %v43
  %v102 = vunpack.c.h.b16 %v43
  %v103 = vunpack.c.l.b16 %v44
  %v104 = vunpack.c.h.b16 %v44
  %v105 = vunpack.c.l.b16 %v45
  %v106 = vunpack.c.h.b16 %v45
  %v107 = vunpack.c.l.b16 %v46
  %v108 = vunpack.c.h.b16 %v46
  %v109 = vunpack.c.l.b16 %v47
  %v110 = vunpack.c.h.b16 %v47
  %v111 = vunpack.c.l.b16 %v48
  %v112 = vunpack.c.h.b16 %v48
  %v113 = vunpack.c.l.b16 %v49
  %v114 = vunpack.c.h.b16 %v49
  %v115 = vunpack.c.l.b16 %v50
  %v116 = vunpack.c.h.b16 %v50
  %v117 = vunpack.c.l.b16 %v51
  %v118 = vunpack.c.h.b16 %v51
  %v119 = vunpack.c.l.b16 %v52
  %v120 = vunpack.c.h.b16 %v52
  %v121 = vpack.c.b16 %v103, %v97
  %v122 = vpack.c.b16 %v104, %v98
  %v123 = vpack.c.b16 %v105, %v99
  %v124 = vpack.c.b16 %v106, %v100
  %v125 = vpack.c.b16 %v107, %v101
  %v126 = vpack.c.b16 %v108, %v102
  %v127 = vpack.c.b16 %v115, %v109
  %v128 = vpack.c.b16 %v116, %v110
  %v129 = vpack.c.b16 %v117, %v111
  %v130 = vpack.c.b16 %v118, %v112
  %v131 = vpack.c.b16 %v119, %v113
  %v132 = vpack.c.b16 %v120, %v114
  %vm145 = vcmask 261120
  %v147 = vsel %vm145, %v33, 0
  %v150 = vsel %vm145, %v34, 0
  %v153 = vsel %vm145, %v35, 0
  %v156 = vsel %vm145, %v36, 0
  %v159 = vsel %vm145, %v37, 0
  %v162 = vsel %vm145, %v38, 0
  %v165 = vsel %vm145, %v39, 0
  %v168 = vsel %vm145, %v40, 0
  %170 = vmatprep.subr.bf16.mxu0 %v122
  %171 = vmatpush1.bf16.msra.mxu0 %v121
  %172 = vmatprep.subr.bf16.mxu0 %v128
  %173 = vmatpush1.bf16.msra.mxu0 %v127
  %174 = vmatprep.subr.bf16.mxu0 0
  %175 = vmatpush1.bf16.msra.mxu0 0
  %176 = vmatprep.subr.bf16.mxu0 0
  %177 = vmatpush1.bf16.msra.mxu0 0
  %178 = vmatprep.subr.bf16.mxu0 0
  %179 = vmatpush1.bf16.msra.mxu0 0
  %180 = vmatprep.subr.bf16.mxu0 0
  %181 = vmatpush1.bf16.msra.mxu0 0
  %182 = vmatprep.subr.bf16.mxu0 0
  %183 = vmatpush1.bf16.msra.mxu0 0
  %184 = vmatprep.subr.bf16.mxu0 0
  %185 = vmatpush1.bf16.msra.mxu0 0
  %186 = vmatprep.subr.bf16.mxu0 0
  %187 = vmatpush1.bf16.msra.mxu0 0
  %188 = vmatprep.subr.bf16.mxu0 0
  %189 = vmatpush1.bf16.msra.mxu0 0
  %190 = vmatprep.subr.bf16.mxu0 0
  %191 = vmatpush1.bf16.msra.mxu0 0
  %192 = vmatprep.subr.bf16.mxu0 0
  %193 = vmatpush1.bf16.msra.mxu0 0
  %194 = vmatprep.subr.bf16.mxu0 0
  %195 = vmatpush1.bf16.msra.mxu0 0
  %196 = vmatprep.subr.bf16.mxu0 0
  %197 = vmatpush1.bf16.msra.mxu0 0
  %198 = vmatprep.subr.bf16.mxu0 0
  %199 = vmatpush1.bf16.msra.mxu0 0
  %200 = vmatprep.subr.bf16.mxu0 0
  %201 = vmatpush1.bf16.msra.mxu0 0
  %202 = vmatprep.mubr.bf16.mxu0 0
  %203 = vmatmul.mubr.bf16.gmra.mrb[0].mxu0 %v147
  %v204 = vpop.f32.mrb[0].mxu0
  %v205 = vadd.f32 %v58, %v204
  %v206 = vpop.f32.mrb[0].mxu0
  %v207 = vadd.f32 %v62, %v206
  %v208 = vpop.f32.mrb[0].mxu0
  %v209 = vadd.f32 %v58, %v208
  %v210 = vpop.f32.mrb[0].mxu0
  %v211 = vadd.f32 %v62, %v210
  %212 = vmatprep.mubr.bf16.mxu0 0
  %213 = vmatmul.mubr.bf16.gmra.mrb[0].mxu0 %v150
  %v214 = vpop.f32.mrb[0].mxu0
  %v215 = vadd.f32 %v58, %v214
  %v216 = vpop.f32.mrb[0].mxu0
  %v217 = vadd.f32 %v62, %v216
  %v218 = vpop.f32.mrb[0].mxu0
  %v219 = vadd.f32 %v58, %v218
  %v220 = vpop.f32.mrb[0].mxu0
  %v221 = vadd.f32 %v62, %v220
  %222 = vmatprep.mubr.bf16.mxu0 0
  %223 = vmatmul.mubr.bf16.gmra.mrb[0].mxu0 %v153
  %v224 = vpop.f32.mrb[0].mxu0
  %v225 = vadd.f32 %v58, %v224
  %v226 = vpop.f32.mrb[0].mxu0
  %v227 = vadd.f32 %v62, %v226
  %v228 = vpop.f32.mrb[0].mxu0
  %v229 = vadd.f32 %v58, %v228
  %v230 = vpop.f32.mrb[0].mxu0
  %v231 = vadd.f32 %v62, %v230
  %232 = vmatprep.mubr.bf16.mxu0 0
  %233 = vmatmul.mubr.bf16.gmra.mrb[0].mxu0 %v156
  %v234 = vpop.f32.mrb[0].mxu0
  %v235 = vadd.f32 %v58, %v234
  %v236 = vpop.f32.mrb[0].mxu0
  %v237 = vadd.f32 %v62, %v236
  %v238 = vpop.f32.mrb[0].mxu0
  %v239 = vadd.f32 %v58, %v238
  %v240 = vpop.f32.mrb[0].mxu0
  %v241 = vadd.f32 %v62, %v240
  %242 = vmatprep.mubr.bf16.mxu0 0
  %243 = vmatmul.mubr.bf16.gmra.mrb[0].mxu0 %v159
  %v244 = vpop.f32.mrb[0].mxu0
  %v245 = vadd.f32 %v58, %v244
  %v246 = vpop.f32.mrb[0].mxu0
  %v247 = vadd.f32 %v62, %v246
  %v248 = vpop.f32.mrb[0].mxu0
  %v249 = vadd.f32 %v58, %v248
  %v250 = vpop.f32.mrb[0].mxu0
  %v251 = vadd.f32 %v62, %v250
  %252 = vmatprep.mubr.bf16.mxu0 0
  %253 = vmatmul.mubr.bf16.gmra.mrb[0].mxu0 %v162
  %v254 = vpop.f32.mrb[0].mxu0
  %v255 = vadd.f32 %v58, %v254
  %v256 = vpop.f32.mrb[0].mxu0
  %v257 = vadd.f32 %v62, %v256
  %v258 = vpop.f32.mrb[0].mxu0
  %v259 = vadd.f32 %v58, %v258
  %v260 = vpop.f32.mrb[0].mxu0
  %v261 = vadd.f32 %v62, %v260
  %262 = vmatprep.mubr.bf16.mxu0 0
  %263 = vmatmul.mubr.bf16.gmra.mrb[0].mxu0 %v165
  %v264 = vpop.f32.mrb[0].mxu0
  %v265 = vadd.f32 %v58, %v264
  %v266 = vpop.f32.mrb[0].mxu0
  %v267 = vadd.f32 %v62, %v266
  %v268 = vpop.f32.mrb[0].mxu0
  %v269 = vadd.f32 %v58, %v268
  %v270 = vpop.f32.mrb[0].mxu0
  %v271 = vadd.f32 %v62, %v270
  %272 = vmatprep.mubr.bf16.mxu0 0
  %273 = vmatmul.mubr.bf16.gmra.mrb[0].mxu0 %v168
  %v274 = vpop.f32.mrb[0].mxu0
  %v275 = vadd.f32 %v58, %v274
  %v276 = vpop.f32.mrb[0].mxu0
  %v277 = vadd.f32 %v62, %v276
  %v278 = vpop.f32.mrb[0].mxu0
  %v279 = vadd.f32 %v58, %v278
  %v280 = vpop.f32.mrb[0].mxu0
  %v281 = vadd.f32 %v62, %v280
  %282 = vdwg.mxu0
  %283 = vmatprep.subr.bf16.mxu0 %v124
  %284 = vmatpush1.bf16.msra.mxu0 %v123
  %285 = vmatprep.subr.bf16.mxu0 %v130
  %286 = vmatpush1.bf16.msra.mxu0 %v129
  %287 = vmatprep.subr.bf16.mxu0 0
  %288 = vmatpush1.bf16.msra.mxu0 0
  %289 = vmatprep.subr.bf16.mxu0 0
  %290 = vmatpush1.bf16.msra.mxu0 0
  %291 = vmatprep.subr.bf16.mxu0 0
  %292 = vmatpush1.bf16.msra.mxu0 0
  %293 = vmatprep.subr.bf16.mxu0 0
  %294 = vmatpush1.bf16.msra.mxu0 0
  %295 = vmatprep.subr.bf16.mxu0 0
  %296 = vmatpush1.bf16.msra.mxu0 0
  %297 = vmatprep.subr.bf16.mxu0 0
  %298 = vmatpush1.bf16.msra.mxu0 0
  %299 = vmatprep.subr.bf16.mxu0 0
  %300 = vmatpush1.bf16.msra.mxu0 0
  %301 = vmatprep.subr.bf16.mxu0 0
  %302 = vmatpush1.bf16.msra.mxu0 0
  %303 = vmatprep.subr.bf16.mxu0 0
  %304 = vmatpush1.bf16.msra.mxu0 0
  %305 = vmatprep.subr.bf16.mxu0 0
  %306 = vmatpush1.bf16.msra.mxu0 0
  %307 = vmatprep.subr.bf16.mxu0 0
  %308 = vmatpush1.bf16.msra.mxu0 0
  %309 = vmatprep.subr.bf16.mxu0 0
  %310 = vmatpush1.bf16.msra.mxu0 0
  %311 = vmatprep.subr.bf16.mxu0 0
  %312 = vmatpush1.bf16.msra.mxu0 0
  %313 = vmatprep.subr.bf16.mxu0 0
  %314 = vmatpush1.bf16.msra.mxu0 0
  %315 = vmatprep.mubr.bf16.mxu0 0
  %316 = vmatmul.mubr.bf16.gmra.mrb[0].mxu0 %v147
  %v317 = vpop.f32.mrb[0].mxu0
  %v318 = vadd.f32 %v66, %v317
  %v319 = vpop.f32.mrb[0].mxu0
  %v320 = vadd.f32 %v70, %v319
  %v321 = vpop.f32.mrb[0].mxu0
  %v322 = vadd.f32 %v66, %v321
  %v323 = vpop.f32.mrb[0].mxu0
  %v324 = vadd.f32 %v70, %v323
  %325 = vmatprep.mubr.bf16.mxu0 0
  %326 = vmatmul.mubr.bf16.gmra.mrb[0].mxu0 %v150
  %v327 = vpop.f32.mrb[0].mxu0
  %v328 = vadd.f32 %v66, %v327
  %v329 = vpop.f32.mrb[0].mxu0
  %v330 = vadd.f32 %v70, %v329
  %v331 = vpop.f32.mrb[0].mxu0
  %v332 = vadd.f32 %v66, %v331
  %v333 = vpop.f32.mrb[0].mxu0
  %v334 = vadd.f32 %v70, %v333
  %335 = vmatprep.mubr.bf16.mxu0 0
  %336 = vmatmul.mubr.bf16.gmra.mrb[0].mxu0 %v153
  %v337 = vpop.f32.mrb[0].mxu0
  %v338 = vadd.f32 %v66, %v337
  %v339 = vpop.f32.mrb[0].mxu0
  %v340 = vadd.f32 %v70, %v339
  %v341 = vpop.f32.mrb[0].mxu0
  %v342 = vadd.f32 %v66, %v341
  %v343 = vpop.f32.mrb[0].mxu0
  %v344 = vadd.f32 %v70, %v343
  %345 = vmatprep.mubr.bf16.mxu0 0
  %346 = vmatmul.mubr.bf16.gmra.mrb[0].mxu0 %v156
  %v347 = vpop.f32.mrb[0].mxu0
  %v348 = vadd.f32 %v66, %v347
  %v349 = vpop.f32.mrb[0].mxu0
  %v350 = vadd.f32 %v70, %v349
  %v351 = vpop.f32.mrb[0].mxu0
  %v352 = vadd.f32 %v66, %v351
  %v353 = vpop.f32.mrb[0].mxu0
  %v354 = vadd.f32 %v70, %v353
  %355 = vmatprep.mubr.bf16.mxu0 0
  %356 = vmatmul.mubr.bf16.gmra.mrb[0].mxu0 %v159
  %v357 = vpop.f32.mrb[0].mxu0
  %v358 = vadd.f32 %v66, %v357
  %v359 = vpop.f32.mrb[0].mxu0
  %v360 = vadd.f32 %v70, %v359
  %v361 = vpop.f32.mrb[0].mxu0
  %v362 = vadd.f32 %v66, %v361
  %v363 = vpop.f32.mrb[0].mxu0
  %v364 = vadd.f32 %v70, %v363
  %365 = vmatprep.mubr.bf16.mxu0 0
  %366 = vmatmul.mubr.bf16.gmra.mrb[0].mxu0 %v162
  %v367 = vpop.f32.mrb[0].mxu0
  %v368 = vadd.f32 %v66, %v367
  %v369 = vpop.f32.mrb[0].mxu0
  %v370 = vadd.f32 %v70, %v369
  %v371 = vpop.f32.mrb[0].mxu0
  %v372 = vadd.f32 %v66, %v371
  %v373 = vpop.f32.mrb[0].mxu0
  %v374 = vadd.f32 %v70, %v373
  %375 = vmatprep.mubr.bf16.mxu0 0
  %376 = vmatmul.mubr.bf16.gmra.mrb[0].mxu0 %v165
  %v377 = vpop.f32.mrb[0].mxu0
  %v378 = vadd.f32 %v66, %v377
  %v379 = vpop.f32.mrb[0].mxu0
  %v380 = vadd.f32 %v70, %v379
  %v381 = vpop.f32.mrb[0].mxu0
  %v382 = vadd.f32 %v66, %v381
  %v383 = vpop.f32.mrb[0].mxu0
  %v384 = vadd.f32 %v70, %v383
  %385 = vmatprep.mubr.bf16.mxu0 0
  %386 = vmatmul.mubr.bf16.gmra.mrb[0].mxu0 %v168
  %v387 = vpop.f32.mrb[0].mxu0
  %v388 = vadd.f32 %v66, %v387
  %v389 = vpop.f32.mrb[0].mxu0
  %v390 = vadd.f32 %v70, %v389
  %v391 = vpop.f32.mrb[0].mxu0
  %v392 = vadd.f32 %v66, %v391
  %v393 = vpop.f32.mrb[0].mxu0
  %v394 = vadd.f32 %v70, %v393
  %395 = vdwg.mxu0
  %396 = vmatprep.subr.bf16.mxu0 %v126
  %397 = vmatpush1.bf16.msra.mxu0 %v125
  %398 = vmatprep.subr.bf16.mxu0 %v132
  %399 = vmatpush1.bf16.msra.mxu0 %v131
  %400 = vmatprep.subr.bf16.mxu0 0
  %401 = vmatpush1.bf16.msra.mxu0 0
  %402 = vmatprep.subr.bf16.mxu0 0
  %403 = vmatpush1.bf16.msra.mxu0 0
  %404 = vmatprep.subr.bf16.mxu0 0
  %405 = vmatpush1.bf16.msra.mxu0 0
  %406 = vmatprep.subr.bf16.mxu0 0
  %407 = vmatpush1.bf16.msra.mxu0 0
  %408 = vmatprep.subr.bf16.mxu0 0
  %409 = vmatpush1.bf16.msra.mxu0 0
  %410 = vmatprep.subr.bf16.mxu0 0
  %411 = vmatpush1.bf16.msra.mxu0 0
  %412 = vmatprep.subr.bf16.mxu0 0
  %413 = vmatpush1.bf16.msra.mxu0 0
  %414 = vmatprep.subr.bf16.mxu0 0
  %415 = vmatpush1.bf16.msra.mxu0 0
  %416 = vmatprep.subr.bf16.mxu0 0
  %417 = vmatpush1.bf16.msra.mxu0 0
  %418 = vmatprep.subr.bf16.mxu0 0
  %419 = vmatpush1.bf16.msra.mxu0 0
  %420 = vmatprep.subr.bf16.mxu0 0
  %421 = vmatpush1.bf16.msra.mxu0 0
  %422 = vmatprep.subr.bf16.mxu0 0
  %423 = vmatpush1.bf16.msra.mxu0 0
  %424 = vmatprep.subr.bf16.mxu0 0
  %425 = vmatpush1.bf16.msra.mxu0 0
  %426 = vmatprep.subr.bf16.mxu0 0
  %427 = vmatpush1.bf16.msra.mxu0 0
  %428 = vmatprep.mubr.bf16.mxu0 0
  %429 = vmatmul.mubr.bf16.gmra.mrb[0].mxu0 %v147
  %v430 = vpop.f32.mrb[0].mxu0
  %v431 = vadd.f32 %v74, %v430
  %v432 = vpop.f32.mrb[0].mxu0
  %v433 = vadd.f32 %v78, %v432
  %v434 = vpop.f32.mrb[0].mxu0
  %v435 = vadd.f32 %v74, %v434
  %v436 = vpop.f32.mrb[0].mxu0
  %v437 = vadd.f32 %v78, %v436
  %438 = vmatprep.mubr.bf16.mxu0 0
  %439 = vmatmul.mubr.bf16.gmra.mrb[0].mxu0 %v150
  %v440 = vpop.f32.mrb[0].mxu0
  %v441 = vadd.f32 %v74, %v440
  %v442 = vpop.f32.mrb[0].mxu0
  %v443 = vadd.f32 %v78, %v442
  %v444 = vpop.f32.mrb[0].mxu0
  %v445 = vadd.f32 %v74, %v444
  %v446 = vpop.f32.mrb[0].mxu0
  %v447 = vadd.f32 %v78, %v446
  %448 = vmatprep.mubr.bf16.mxu0 0
  %449 = vmatmul.mubr.bf16.gmra.mrb[0].mxu0 %v153
  %v450 = vpop.f32.mrb[0].mxu0
  %v451 = vadd.f32 %v74, %v450
  %v452 = vpop.f32.mrb[0].mxu0
  %v453 = vadd.f32 %v78, %v452
  %v454 = vpop.f32.mrb[0].mxu0
  %v455 = vadd.f32 %v74, %v454
  %v456 = vpop.f32.mrb[0].mxu0
  %v457 = vadd.f32 %v78, %v456
  %458 = vmatprep.mubr.bf16.mxu0 0
  %459 = vmatmul.mubr.bf16.gmra.mrb[0].mxu0 %v156
  %v460 = vpop.f32.mrb[0].mxu0
  %v461 = vadd.f32 %v74, %v460
  %v462 = vpop.f32.mrb[0].mxu0
  %v463 = vadd.f32 %v78, %v462
  %v464 = vpop.f32.mrb[0].mxu0
  %v465 = vadd.f32 %v74, %v464
  %v466 = vpop.f32.mrb[0].mxu0
  %v467 = vadd.f32 %v78, %v466
  %468 = vmatprep.mubr.bf16.mxu0 0
  %469 = vmatmul.mubr.bf16.gmra.mrb[0].mxu0 %v159
  %v470 = vpop.f32.mrb[0].mxu0
  %v471 = vadd.f32 %v74, %v470
  %v472 = vpop.f32.mrb[0].mxu0
  %v473 = vadd.f32 %v78, %v472
  %v474 = vpop.f32.mrb[0].mxu0
  %v475 = vadd.f32 %v74, %v474
  %v476 = vpop.f32.mrb[0].mxu0
  %v477 = vadd.f32 %v78, %v476
  %478 = vmatprep.mubr.bf16.mxu0 0
  %479 = vmatmul.mubr.bf16.gmra.mrb[0].mxu0 %v162
  %v480 = vpop.f32.mrb[0].mxu0
  %v481 = vadd.f32 %v74, %v480
  %v482 = vpop.f32.mrb[0].mxu0
  %v483 = vadd.f32 %v78, %v482
  %v484 = vpop.f32.mrb[0].mxu0
  %v485 = vadd.f32 %v74, %v484
  %v486 = vpop.f32.mrb[0].mxu0
  %v487 = vadd.f32 %v78, %v486
  %488 = vmatprep.mubr.bf16.mxu0 0
  %489 = vmatmul.mubr.bf16.gmra.mrb[0].mxu0 %v165
  %v490 = vpop.f32.mrb[0].mxu0
  %v491 = vadd.f32 %v74, %v490
  %v492 = vpop.f32.mrb[0].mxu0
  %v493 = vadd.f32 %v78, %v492
  %v494 = vpop.f32.mrb[0].mxu0
  %v495 = vadd.f32 %v74, %v494
  %v496 = vpop.f32.mrb[0].mxu0
  %v497 = vadd.f32 %v78, %v496
  %498 = vmatprep.mubr.bf16.mxu0 0
  %499 = vmatmul.mubr.bf16.gmra.mrb[0].mxu0 %v168
  %v500 = vpop.f32.mrb[0].mxu0
  %v501 = vadd.f32 %v74, %v500
  %v502 = vpop.f32.mrb[0].mxu0
  %v503 = vadd.f32 %v78, %v502
  %v504 = vpop.f32.mrb[0].mxu0
  %v505 = vadd.f32 %v74, %v504
  %v506 = vpop.f32.mrb[0].mxu0
  %v507 = vadd.f32 %v78, %v506
  %508 = vdwg.mxu0
  %v509 = vpack.c.bf16 %v209, %v205
  %v510 = vpack.c.bf16 %v211, %v207
  %v511 = vpack.c.bf16 %v322, %v318
  %v512 = vpack.c.bf16 %v219, %v215
  %v513 = vpack.c.bf16 %v221, %v217
  %v514 = vpack.c.bf16 %v332, %v328
  %v515 = vpack.c.bf16 %v229, %v225
  %v516 = vpack.c.bf16 %v231, %v227
  %v517 = vpack.c.bf16 %v342, %v338
  %v518 = vpack.c.bf16 %v239, %v235
  %v519 = vpack.c.bf16 %v241, %v237
  %v520 = vpack.c.bf16 %v352, %v348
  %v521 = vpack.c.bf16 %v249, %v245
  %v522 = vpack.c.bf16 %v251, %v247
  %v523 = vpack.c.bf16 %v362, %v358
  %v524 = vpack.c.bf16 %v259, %v255
  %v525 = vpack.c.bf16 %v261, %v257
  %v526 = vpack.c.bf16 %v372, %v368
  %v527 = vpack.c.bf16 %v269, %v265
  %v528 = vpack.c.bf16 %v271, %v267
  %v529 = vpack.c.bf16 %v382, %v378
  %v530 = vpack.c.bf16 %v279, %v275
  %v531 = vpack.c.bf16 %v281, %v277
  %v532 = vpack.c.bf16 %v392, %v388
  %v557 = vunpack.c.l.b16 %v509
  %v558 = vunpack.c.l.b16 %v510
  %v559 = vunpack.c.l.b16 %v511
  %v560 = vunpack.c.h.b16 %v509
  %v561 = vunpack.c.h.b16 %v510
  %v562 = vunpack.c.h.b16 %v511
  %v563 = vunpack.c.l.b16 %v512
  %v564 = vunpack.c.l.b16 %v513
  %v565 = vunpack.c.l.b16 %v514
  %v566 = vunpack.c.h.b16 %v512
  %v567 = vunpack.c.h.b16 %v513
  %v568 = vunpack.c.h.b16 %v514
  %v569 = vunpack.c.l.b16 %v515
  %v570 = vunpack.c.l.b16 %v516
  %v571 = vunpack.c.l.b16 %v517
  %v572 = vunpack.c.h.b16 %v515
  %v573 = vunpack.c.h.b16 %v516
  %v574 = vunpack.c.h.b16 %v517
  %v575 = vunpack.c.l.b16 %v518
  %v576 = vunpack.c.l.b16 %v519
  %v577 = vunpack.c.l.b16 %v520
  %v578 = vunpack.c.h.b16 %v518
  %v579 = vunpack.c.h.b16 %v519
  %v580 = vunpack.c.h.b16 %v520
  %v581 = vunpack.c.l.b16 %v521
  %v582 = vunpack.c.l.b16 %v522
  %v583 = vunpack.c.l.b16 %v523
  %v584 = vunpack.c.h.b16 %v521
  %v585 = vunpack.c.h.b16 %v522
  %v586 = vunpack.c.h.b16 %v523
  %v587 = vunpack.c.l.b16 %v524
  %v588 = vunpack.c.l.b16 %v525
  %v589 = vunpack.c.l.b16 %v526
  %v590 = vunpack.c.h.b16 %v524
  %v591 = vunpack.c.h.b16 %v525
  %v592 = vunpack.c.h.b16 %v526
  %v593 = vunpack.c.l.b16 %v527
  %v594 = vunpack.c.l.b16 %v528
  %v595 = vunpack.c.l.b16 %v529
  %v596 = vunpack.c.h.b16 %v527
  %v597 = vunpack.c.h.b16 %v528
  %v598 = vunpack.c.h.b16 %v529
  %v599 = vunpack.c.l.b16 %v530
  %v600 = vunpack.c.l.b16 %v531
  %v601 = vunpack.c.l.b16 %v532
  %v602 = vunpack.c.h.b16 %v530
  %v603 = vunpack.c.h.b16 %v531
  %v604 = vunpack.c.h.b16 %v532
  %v605 = vpack.c.b16 %v558, %v557
  %v606 = vpack.c.b16 %v559, %v559
  %v607 = vpack.c.b16 %v561, %v560
  %v608 = vpack.c.b16 %v562, %v562
  %v609 = vpack.c.b16 %v564, %v563
  %v610 = vpack.c.b16 %v565, %v565
  %v611 = vpack.c.b16 %v567, %v566
  %v612 = vpack.c.b16 %v568, %v568
  %v613 = vpack.c.b16 %v570, %v569
  %v614 = vpack.c.b16 %v571, %v571
  %v615 = vpack.c.b16 %v573, %v572
  %v616 = vpack.c.b16 %v574, %v574
  %v617 = vpack.c.b16 %v576, %v575
  %v618 = vpack.c.b16 %v577, %v577
  %v619 = vpack.c.b16 %v579, %v578
  %v620 = vpack.c.b16 %v580, %v580
  %v621 = vpack.c.b16 %v582, %v581
  %v622 = vpack.c.b16 %v583, %v583
  %v623 = vpack.c.b16 %v585, %v584
  %v624 = vpack.c.b16 %v586, %v586
  %v625 = vpack.c.b16 %v588, %v587
  %v626 = vpack.c.b16 %v589, %v589
  %v627 = vpack.c.b16 %v591, %v590
  %v628 = vpack.c.b16 %v592, %v592
  %v629 = vpack.c.b16 %v594, %v593
  %v630 = vpack.c.b16 %v595, %v595
  %v631 = vpack.c.b16 %v597, %v596
  %v632 = vpack.c.b16 %v598, %v598
  %v633 = vpack.c.b16 %v600, %v599
  %v634 = vpack.c.b16 %v601, %v601
  %v635 = vpack.c.b16 %v603, %v602
  %v636 = vpack.c.b16 %v604, %v604
  %669 = vst [vmem:[%s3] sm:$0xff] %v605
  %670 = vst [vmem:[%s3 + $0x8] sm:$0xf] %v606
  %671 = vst [vmem:[%s3 + $0xc] sm:$0xff] %v607
  %672 = vst [vmem:[%s3 + $0x14] sm:$0xf] %v608
  %673 = vst [vmem:[%s3 + $0x18] sm:$0xff] %v609
  %674 = vst [vmem:[%s3 + $0x20] sm:$0xf] %v610
  %675 = vst [vmem:[%s3 + $0x24] sm:$0xff] %v611
  %676 = vst [vmem:[%s3 + $0x2c] sm:$0xf] %v612
  %677 = vst [vmem:[%s3 + $0x30] sm:$0xff] %v613
  %678 = vst [vmem:[%s3 + $0x38] sm:$0xf] %v614
  %679 = vst [vmem:[%s3 + $0x3c] sm:$0xff] %v615
  %680 = vst [vmem:[%s3 + $0x44] sm:$0xf] %v616
  %681 = vst [vmem:[%s3 + $0x48] sm:$0xff] %v617
  %682 = vst [vmem:[%s3 + $0x50] sm:$0xf] %v618
  %683 = vst [vmem:[%s3 + $0x54] sm:$0xff] %v619
  %684 = vst [vmem:[%s3 + $0x5c] sm:$0xf] %v620
  %685 = vst [vmem:[%s3 + $0x60] sm:$0xff] %v621
  %686 = vst [vmem:[%s3 + $0x68] sm:$0xf] %v622
  %687 = vst [vmem:[%s3 + $0x6c] sm:$0xff] %v623
  %688 = vst [vmem:[%s3 + $0x74] sm:$0xf] %v624
  %689 = vst [vmem:[%s3 + $0x78] sm:$0xff] %v625
  %690 = vst [vmem:[%s3 + $0x80] sm:$0xf] %v626
  %691 = vst [vmem:[%s3 + $0x84] sm:$0xff] %v627
  %692 = vst [vmem:[%s3 + $0x8c] sm:$0xf] %v628
  %693 = vst [vmem:[%s3 + $0x90] sm:$0xff] %v629
  %694 = vst [vmem:[%s3 + $0x98] sm:$0xf] %v630
  %695 = vst [vmem:[%s3 + $0x9c] sm:$0xff] %v631
  %696 = vst [vmem:[%s3 + $0xa4] sm:$0xf] %v632
  %697 = vst [vmem:[%s3 + $0xa8] sm:$0xff] %v633
  %698 = vst [vmem:[%s3 + $0xb0] sm:$0xf] %v634
  %699 = vst [vmem:[%s3 + $0xb4] sm:$0xff] %v635
  %700 = vst [vmem:[%s3 + $0xbc] sm:$0xf] %v636
  %v701 = vpack.c.bf16 %v324, %v320
  %v702 = vpack.c.bf16 %v435, %v431
  %v703 = vpack.c.bf16 %v437, %v433
  %v704 = vpack.c.bf16 %v334, %v330
  %v705 = vpack.c.bf16 %v445, %v441
  %v706 = vpack.c.bf16 %v447, %v443
  %v707 = vpack.c.bf16 %v344, %v340
  %v708 = vpack.c.bf16 %v455, %v451
  %v709 = vpack.c.bf16 %v457, %v453
  %v710 = vpack.c.bf16 %v354, %v350
  %v711 = vpack.c.bf16 %v465, %v461
  %v712 = vpack.c.bf16 %v467, %v463
  %v713 = vpack.c.bf16 %v364, %v360
  %v714 = vpack.c.bf16 %v475, %v471
  %v715 = vpack.c.bf16 %v477, %v473
  %v716 = vpack.c.bf16 %v374, %v370
  %v717 = vpack.c.bf16 %v485, %v481
  %v718 = vpack.c.bf16 %v487, %v483
  %v719 = vpack.c.bf16 %v384, %v380
  %v720 = vpack.c.bf16 %v495, %v491
  %v721 = vpack.c.bf16 %v497, %v493
  %v722 = vpack.c.bf16 %v394, %v390
  %v723 = vpack.c.bf16 %v505, %v501
  %v724 = vpack.c.bf16 %v507, %v503
  %v749 = vunpack.c.l.b16 %v701
  %v750 = vunpack.c.l.b16 %v702
  %v751 = vunpack.c.l.b16 %v703
  %v752 = vunpack.c.h.b16 %v701
  %v753 = vunpack.c.h.b16 %v702
  %v754 = vunpack.c.h.b16 %v703
  %v755 = vunpack.c.l.b16 %v704
  %v756 = vunpack.c.l.b16 %v705
  %v757 = vunpack.c.l.b16 %v706
  %v758 = vunpack.c.h.b16 %v704
  %v759 = vunpack.c.h.b16 %v705
  %v760 = vunpack.c.h.b16 %v706
  %v761 = vunpack.c.l.b16 %v707
  %v762 = vunpack.c.l.b16 %v708
  %v763 = vunpack.c.l.b16 %v709
  %v764 = vunpack.c.h.b16 %v707
  %v765 = vunpack.c.h.b16 %v708
  %v766 = vunpack.c.h.b16 %v709
  %v767 = vunpack.c.l.b16 %v710
  %v768 = vunpack.c.l.b16 %v711
  %v769 = vunpack.c.l.b16 %v712
  %v770 = vunpack.c.h.b16 %v710
  %v771 = vunpack.c.h.b16 %v711
  %v772 = vunpack.c.h.b16 %v712
  %v773 = vunpack.c.l.b16 %v713
  %v774 = vunpack.c.l.b16 %v714
  %v775 = vunpack.c.l.b16 %v715
  %v776 = vunpack.c.h.b16 %v713
  %v777 = vunpack.c.h.b16 %v714
  %v778 = vunpack.c.h.b16 %v715
  %v779 = vunpack.c.l.b16 %v716
  %v780 = vunpack.c.l.b16 %v717
  %v781 = vunpack.c.l.b16 %v718
  %v782 = vunpack.c.h.b16 %v716
  %v783 = vunpack.c.h.b16 %v717
  %v784 = vunpack.c.h.b16 %v718
  %v785 = vunpack.c.l.b16 %v719
  %v786 = vunpack.c.l.b16 %v720
  %v787 = vunpack.c.l.b16 %v721
  %v788 = vunpack.c.h.b16 %v719
  %v789 = vunpack.c.h.b16 %v720
  %v790 = vunpack.c.h.b16 %v721
  %v791 = vunpack.c.l.b16 %v722
  %v792 = vunpack.c.l.b16 %v723
  %v793 = vunpack.c.l.b16 %v724
  %v794 = vunpack.c.h.b16 %v722
  %v795 = vunpack.c.h.b16 %v723
  %v796 = vunpack.c.h.b16 %v724
  %v797 = vpack.c.b16 %v750, %v749
  %v798 = vpack.c.b16 %v751, %v751
  %v799 = vpack.c.b16 %v753, %v752
  %v800 = vpack.c.b16 %v754, %v754
  %v801 = vpack.c.b16 %v756, %v755
  %v802 = vpack.c.b16 %v757, %v757
  %v803 = vpack.c.b16 %v759, %v758
  %v804 = vpack.c.b16 %v760, %v760
  %v805 = vpack.c.b16 %v762, %v761
  %v806 = vpack.c.b16 %v763, %v763
  %v807 = vpack.c.b16 %v765, %v764
  %v808 = vpack.c.b16 %v766, %v766
  %v809 = vpack.c.b16 %v768, %v767
  %v810 = vpack.c.b16 %v769, %v769
  %v811 = vpack.c.b16 %v771, %v770
  %v812 = vpack.c.b16 %v772, %v772
  %v813 = vpack.c.b16 %v774, %v773
  %v814 = vpack.c.b16 %v775, %v775
  %v815 = vpack.c.b16 %v777, %v776
  %v816 = vpack.c.b16 %v778, %v778
  %v817 = vpack.c.b16 %v780, %v779
  %v818 = vpack.c.b16 %v781, %v781
  %v819 = vpack.c.b16 %v783, %v782
  %v820 = vpack.c.b16 %v784, %v784
  %v821 = vpack.c.b16 %v786, %v785
  %v822 = vpack.c.b16 %v787, %v787
  %v823 = vpack.c.b16 %v789, %v788
  %v824 = vpack.c.b16 %v790, %v790
  %v825 = vpack.c.b16 %v792, %v791
  %v826 = vpack.c.b16 %v793, %v793
  %v827 = vpack.c.b16 %v795, %v794
  %v828 = vpack.c.b16 %v796, %v796
  %861 = vst [vmem:[%s4] sm:$0xff] %v797
  %862 = vst [vmem:[%s4 + $0x8] sm:$0xf] %v798
  %863 = vst [vmem:[%s4 + $0xc] sm:$0xff] %v799
  %864 = vst [vmem:[%s4 + $0x14] sm:$0xf] %v800
  %865 = vst [vmem:[%s4 + $0x18] sm:$0xff] %v801
  %866 = vst [vmem:[%s4 + $0x20] sm:$0xf] %v802
  %867 = vst [vmem:[%s4 + $0x24] sm:$0xff] %v803
  %868 = vst [vmem:[%s4 + $0x2c] sm:$0xf] %v804
  %869 = vst [vmem:[%s4 + $0x30] sm:$0xff] %v805
  %870 = vst [vmem:[%s4 + $0x38] sm:$0xf] %v806
  %871 = vst [vmem:[%s4 + $0x3c] sm:$0xff] %v807
  %872 = vst [vmem:[%s4 + $0x44] sm:$0xf] %v808
  %873 = vst [vmem:[%s4 + $0x48] sm:$0xff] %v809
  %874 = vst [vmem:[%s4 + $0x50] sm:$0xf] %v810
  %875 = vst [vmem:[%s4 + $0x54] sm:$0xff] %v811
  %876 = vst [vmem:[%s4 + $0x5c] sm:$0xf] %v812
  %877 = vst [vmem:[%s4 + $0x60] sm:$0xff] %v813
  %878 = vst [vmem:[%s4 + $0x68] sm:$0xf] %v814
  %879 = vst [vmem:[%s4 + $0x6c] sm:$0xff] %v815
  %880 = vst [vmem:[%s4 + $0x74] sm:$0xf] %v816
  %881 = vst [vmem:[%s4 + $0x78] sm:$0xff] %v817
  %882 = vst [vmem:[%s4 + $0x80] sm:$0xf] %v818
  %883 = vst [vmem:[%s4 + $0x84] sm:$0xff] %v819
  %884 = vst [vmem:[%s4 + $0x8c] sm:$0xf] %v820
  %885 = vst [vmem:[%s4 + $0x90] sm:$0xff] %v821
  %886 = vst [vmem:[%s4 + $0x98] sm:$0xf] %v822
  %887 = vst [vmem:[%s4 + $0x9c] sm:$0xff] %v823
  %888 = vst [vmem:[%s4 + $0xa4] sm:$0xf] %v824
  %889 = vst [vmem:[%s4 + $0xa8] sm:$0xff] %v825
  %890 = vst [vmem:[%s4 + $0xb0] sm:$0xf] %v826
  %891 = vst [vmem:[%s4 + $0xb4] sm:$0xff] %v827
  %892 = vst [vmem:[%s4 + $0xbc] sm:$0xf] %v828
  // Predicated region
  $region14: #{encoder_forward.2} parent=0 // pred_check
    _
  $region15: #{encoder_forward.2} parent=0 // pred_check_branch
    %894 = sbr.rel (0) target = $region17
  $region16: #{encoder_forward.2} parent=0 // pred_region
    _
  $region17: #{encoder_forward.2} parent=0 // pred_fallthru
    _
  // Predicated region
  $region18: #{encoder_forward.2} parent=0 // pred_check
    _
  $region19: #{encoder_forward.2} parent=0 // pred_check_branch
    %896 = sbr.rel (0) target = $region21
  $region20: #{encoder_forward.2} parent=0 // pred_region
    _
  $region21: #{encoder_forward.2} parent=0 // pred_fallthru
    _
  // Predicated region
  $region22: #{encoder_forward.2} parent=0 // pred_check
    _
  $region23: #{encoder_forward.2} parent=0 // pred_check_branch
    %898 = sbr.rel (0) target = $region25
  $region24: #{encoder_forward.2} parent=0 // pred_region
    _
  $region25: #{encoder_forward.2} parent=0 // pred_fallthru
    _
  // Predicated region
  $region26: #{encoder_forward.2} parent=0 // pred_check
    _
  $region27: #{encoder_forward.2} parent=0 // pred_check_branch
    %900 = sbr.rel (0) target = $region29
  $region28: #{encoder_forward.2} parent=0 // pred_region
    _
  $region29: #{encoder_forward.2} parent=0 // pred_fallthru
    _

// kernel: encoder_forward.3
$region0: #{encoder_forward.3}
  #allocation0 [shape = 'u32[]', space=smem, size = 0x4, offset = 0x4, fixed_abs, tag = 'smem constant byte address 0x4 - core index']
  #allocation1 [shape = 'u32[144,128]{1,0:T(1,128)}', space=vmem, size = 0x12000, scoped, tag = 'internal scratch']
  #allocation2 [shape = 'f32[8,256]{1,0:T(8,128)}', space=vmem, size = 0x2000, scoped, tag = 'scratch operand']
  %s0 = inlined_call_operand.vmem [shape: s32[8,1], index: 0, kind: input, shape index: {}]
  %s1 = inlined_call_operand.vmem [shape: bf16[16,8,384], index: 1, kind: input, shape index: {}]
  %s2 = inlined_call_operand.vmem [shape: bf16[16,8,384], index: 2, kind: input, shape index: {}]
  %s3 = inlined_call_operand.vmem [shape: bf16[256,768], index: 3, kind: input, shape index: {}]
  %s4 = inlined_call_operand.vmem [shape: f32[1,768], index: 4, kind: input, shape index: {}]
  %s5 = inlined_call_operand.vmem [shape: f32[256,128], index: 5, kind: input, shape index: {}]
  %s6 = inlined_call_operand.vmem [shape: f32[1,128], index: 6, kind: input, shape index: {}]
  %s7 = inlined_call_operand.vmem [shape: f32[16,8,128], index: 7, kind: output, shape index: {0}]
  %s8 = inlined_call_operand.vmem [shape: f32[16,8,128], index: 8, kind: output, shape index: {1}]
  %s9 = inlined_call_operand.hbm [shape: f32[8,128], index: 9, kind: output, shape index: {2}]
  %10 = xla_tuple %s7, %s8, %s9
  %s11 = sld [smem:[#allocation0]]
  $region85: #{encoder_forward.3} parent=0
    _
  %s13 = ssub.s32 1, %s11
  %s14 = scalar_select 0, %s13, %s11
  $region1: #{encoder_forward.3} parent=0
    #allocation3 [shape = 'u8[4096]{0}', space=vmem, size = 0x1000, scoped, tag = 'output window, operand 2, single buffered']
    #allocation4 [shape = 's32[2]{0}', space=sflag, size = 0x8, scoped, tag = 'scoped memory for encoder_forward.3']
    %15 = vsyncpa [#allocation4], 0
    loop: start=0, step=1, limit=4
    $region2: #{encoder_forward.3} parent=1 // loop_pre_header
      _
    $region3: #{encoder_forward.3} parent=1 // loop_header
      %s17 = sphi 0, %s21
      %p18 = scmp.ge.s32.totalorder %s17, 4
      %s25 = sphi 0, %s25
      %s27 = sphi 0, %s25
      %s28 = sphi 0, %s27
      %s42 = sphi 0, %s28
      %s48 = sphi 0, %s50
      %s51 = sphi 0, %s48
      %s52 = sphi 0, %s51
      %s68 = sphi 0, %s52
      %s76 = sphi 0, %s78
      %s79 = sphi 0, %s76
      %s80 = sphi 0, %s79
      %s96 = sphi 0, %s80
      %s100 = sphi 0, %s100
      %s102 = sphi 0, %s100
      %s103 = sphi 0, %s102
      %s117 = sphi 0, %s103
      %s121 = sphi 0, %s121
      %s123 = sphi 0, %s121
      %s124 = sphi 0, %s123
      %s138 = sphi 0, %s124
      %s142 = sphi 0, %s142
      %s144 = sphi 0, %s142
      %s145 = sphi 0, %s144
      %s159 = sphi 0, %s145
      %s163 = sphi 0, %s163
      %s165 = sphi 0, %s163
      %s166 = sphi 0, %s165
      %s180 = sphi 0, %s166
      %s186 = sphi 0, %s188
      %s189 = sphi 0, %s186
      %s190 = sphi 0, %s189
      %s206 = sphi 0, %s190
      %s214 = sphi 0, %s216
      %s217 = sphi 0, %s214
      %s218 = sphi 0, %s217
      %s234 = sphi 0, %s218
      %s238 = sphi 0, %s238
      %s240 = sphi 0, %s238
      %s241 = sphi 0, %s240
      %s255 = sphi 0, %s241
    $region4: #{encoder_forward.3} parent=1 // loop_header_branch
      %20 = sbr.rel (%p18) target = $region8
    $region5: #{encoder_forward.3} parent=1 // loop_body
      %s22 = ssub.s32 %s17, 1
      %s23 = ssub.s32 %s17, 2
      %s24 = sadd.s32 %s17, 1
      %s26 = sadd.s32 %s25, 1
      %p29 = scmp.eq.s32.totalorder %s17, 1
      %p30 = scmp.ne.s32.totalorder %s25, %s27
      %p31 = scmp.eq.s32.totalorder %s17, 0
      %p32 = por %p30, %p31
      %p33 = scmp.ne.s32.totalorder %s25, %s27
      %p34 = scmp.eq.s32.totalorder %s22, 1
      %p35 = por %p33, %p34
      %p36 = scmp.ne.s32.totalorder %s27, %s28
      %p37 = scmp.eq.s32.totalorder %s22, 0
      %p38 = por %p36, %p37
      %p39 = scmp.ne.s32.totalorder %s27, %s28
      %p40 = scmp.eq.s32.totalorder %s23, 1
      %p41 = por %p39, %p40
      %p43 = scmp.ne.s32.totalorder %s28, %s42
      %p44 = scmp.eq.s32.totalorder %s23, 0
      %p45 = por %p43, %p44
      %s46 = ssub.s32 %s17, %s24
      %p47 = scmp.eq.s32.totalorder %s46, 0
      %s49 = sadd.s32 %s48, 1
      %s50 = scalar_select %p47, %s48, %s49
      %p53 = pneg %p47
      %p54 = scmp.eq.s32.totalorder %s17, 1
      %p55 = por %p53, %p54
      %p56 = scmp.ne.s32.totalorder %s48, %s51
      %p57 = scmp.eq.s32.totalorder %s17, 0
      %p58 = por %p56, %p57
      %p59 = scmp.ne.s32.totalorder %s48, %s51
      %p60 = scmp.eq.s32.totalorder %s22, 1
      %p61 = por %p59, %p60
      %p62 = scmp.ne.s32.totalorder %s51, %s52
      %p63 = scmp.eq.s32.totalorder %s22, 0
      %p64 = por %p62, %p63
      %p65 = scmp.ne.s32.totalorder %s51, %s52
      %p66 = scmp.eq.s32.totalorder %s23, 1
      %p67 = por %p65, %p66
      %p69 = scmp.ne.s32.totalorder %s52, %s68
      %p70 = scmp.eq.s32.totalorder %s23, 0
      %p71 = por %p69, %p70
      %s72 = ssub.s32 1, %s17
      %s73 = ssub.s32 1, %s24
      %s74 = ssub.s32 %s72, %s73
      %p75 = scmp.eq.s32.totalorder %s74, 0
      %s77 = sadd.s32 %s76, 1
      %s78 = scalar_select %p75, %s76, %s77
      %p81 = pneg %p75
      %p82 = scmp.eq.s32.totalorder %s17, 1
      %p83 = por %p81, %p82
      %p84 = scmp.ne.s32.totalorder %s76, %s79
      %p85 = scmp.eq.s32.totalorder %s17, 0
      %p86 = por %p84, %p85
      %p87 = scmp.ne.s32.totalorder %s76, %s79
      %p88 = scmp.eq.s32.totalorder %s22, 1
      %p89 = por %p87, %p88
      %p90 = scmp.ne.s32.totalorder %s79, %s80
      %p91 = scmp.eq.s32.totalorder %s22, 0
      %p92 = por %p90, %p91
      %p93 = scmp.ne.s32.totalorder %s79, %s80
      %p94 = scmp.eq.s32.totalorder %s23, 1
      %p95 = por %p93, %p94
      %p97 = scmp.ne.s32.totalorder %s80, %s96
      %p98 = scmp.eq.s32.totalorder %s23, 0
      %p99 = por %p97, %p98
      %s101 = sadd.s32 %s100, 1
      %p104 = scmp.eq.s32.totalorder %s17, 1
      %p105 = scmp.ne.s32.totalorder %s100, %s102
      %p106 = scmp.eq.s32.totalorder %s17, 0
      %p107 = por %p105, %p106
      %p108 = scmp.ne.s32.totalorder %s100, %s102
      %p109 = scmp.eq.s32.totalorder %s22, 1
      %p110 = por %p108, %p109
      %p111 = scmp.ne.s32.totalorder %s102, %s103
      %p112 = scmp.eq.s32.totalorder %s22, 0
      %p113 = por %p111, %p112
      %p114 = scmp.ne.s32.totalorder %s102, %s103
      %p115 = scmp.eq.s32.totalorder %s23, 1
      %p116 = por %p114, %p115
      %p118 = scmp.ne.s32.totalorder %s103, %s117
      %p119 = scmp.eq.s32.totalorder %s23, 0
      %p120 = por %p118, %p119
      %s122 = sadd.s32 %s121, 1
      %p125 = scmp.eq.s32.totalorder %s17, 1
      %p126 = scmp.ne.s32.totalorder %s121, %s123
      %p127 = scmp.eq.s32.totalorder %s17, 0
      %p128 = por %p126, %p127
      %p129 = scmp.ne.s32.totalorder %s121, %s123
      %p130 = scmp.eq.s32.totalorder %s22, 1
      %p131 = por %p129, %p130
      %p132 = scmp.ne.s32.totalorder %s123, %s124
      %p133 = scmp.eq.s32.totalorder %s22, 0
      %p134 = por %p132, %p133
      %p135 = scmp.ne.s32.totalorder %s123, %s124
      %p136 = scmp.eq.s32.totalorder %s23, 1
      %p137 = por %p135, %p136
      %p139 = scmp.ne.s32.totalorder %s124, %s138
      %p140 = scmp.eq.s32.totalorder %s23, 0
      %p141 = por %p139, %p140
      %s143 = sadd.s32 %s142, 1
      %p146 = scmp.eq.s32.totalorder %s17, 1
      %p147 = scmp.ne.s32.totalorder %s142, %s144
      %p148 = scmp.eq.s32.totalorder %s17, 0
      %p149 = por %p147, %p148
      %p150 = scmp.ne.s32.totalorder %s142, %s144
      %p151 = scmp.eq.s32.totalorder %s22, 1
      %p152 = por %p150, %p151
      %p153 = scmp.ne.s32.totalorder %s144, %s145
      %p154 = scmp.eq.s32.totalorder %s22, 0
      %p155 = por %p153, %p154
      %p156 = scmp.ne.s32.totalorder %s144, %s145
      %p157 = scmp.eq.s32.totalorder %s23, 1
      %p158 = por %p156, %p157
      %p160 = scmp.ne.s32.totalorder %s145, %s159
      %p161 = scmp.eq.s32.totalorder %s23, 0
      %p162 = por %p160, %p161
      %s164 = sadd.s32 %s163, 1
      %p167 = scmp.eq.s32.totalorder %s17, 1
      %p168 = scmp.ne.s32.totalorder %s163, %s165
      %p169 = scmp.eq.s32.totalorder %s17, 0
      %p170 = por %p168, %p169
      %p171 = scmp.ne.s32.totalorder %s163, %s165
      %p172 = scmp.eq.s32.totalorder %s22, 1
      %p173 = por %p171, %p172
      %p174 = scmp.ne.s32.totalorder %s165, %s166
      %p175 = scmp.eq.s32.totalorder %s22, 0
      %p176 = por %p174, %p175
      %p177 = scmp.ne.s32.totalorder %s165, %s166
      %p178 = scmp.eq.s32.totalorder %s23, 1
      %p179 = por %p177, %p178
      %p181 = scmp.ne.s32.totalorder %s166, %s180
      %p182 = scmp.eq.s32.totalorder %s23, 0
      %p183 = por %p181, %p182
      %s184 = ssub.s32 %s17, %s24
      %p185 = scmp.eq.s32.totalorder %s184, 0
      %s187 = sadd.s32 %s186, 1
      %s188 = scalar_select %p185, %s186, %s187
      %p191 = pneg %p185
      %p192 = scmp.eq.s32.totalorder %s17, 1
      %p193 = por %p191, %p192
      %p194 = scmp.ne.s32.totalorder %s186, %s189
      %p195 = scmp.eq.s32.totalorder %s17, 0
      %p196 = por %p194, %p195
      %p197 = scmp.ne.s32.totalorder %s186, %s189
      %p198 = scmp.eq.s32.totalorder %s22, 1
      %p199 = por %p197, %p198
      %p200 = scmp.ne.s32.totalorder %s189, %s190
      %p201 = scmp.eq.s32.totalorder %s22, 0
      %p202 = por %p200, %p201
      %p203 = scmp.ne.s32.totalorder %s189, %s190
      %p204 = scmp.eq.s32.totalorder %s23, 1
      %p205 = por %p203, %p204
      %p207 = scmp.ne.s32.totalorder %s190, %s206
      %p208 = scmp.eq.s32.totalorder %s23, 0
      %p209 = por %p207, %p208
      %s210 = ssub.s32 1, %s17
      %s211 = ssub.s32 1, %s24
      %s212 = ssub.s32 %s210, %s211
      %p213 = scmp.eq.s32.totalorder %s212, 0
      %s215 = sadd.s32 %s214, 1
      %s216 = scalar_select %p213, %s214, %s215
      %p219 = pneg %p213
      %p220 = scmp.eq.s32.totalorder %s17, 1
      %p221 = por %p219, %p220
      %p222 = scmp.ne.s32.totalorder %s214, %s217
      %p223 = scmp.eq.s32.totalorder %s17, 0
      %p224 = por %p222, %p223
      %p225 = scmp.ne.s32.totalorder %s214, %s217
      %p226 = scmp.eq.s32.totalorder %s22, 1
      %p227 = por %p225, %p226
      %p228 = scmp.ne.s32.totalorder %s217, %s218
      %p229 = scmp.eq.s32.totalorder %s22, 0
      %p230 = por %p228, %p229
      %p231 = scmp.ne.s32.totalorder %s217, %s218
      %p232 = scmp.eq.s32.totalorder %s23, 1
      %p233 = por %p231, %p232
      %p235 = scmp.ne.s32.totalorder %s218, %s234
      %p236 = scmp.eq.s32.totalorder %s23, 0
      %p237 = por %p235, %p236
      %s239 = sadd.s32 %s238, 1
      %p242 = scmp.eq.s32.totalorder %s17, 1
      %p243 = scmp.ne.s32.totalorder %s238, %s240
      %p244 = scmp.eq.s32.totalorder %s17, 0
      %p245 = por %p243, %p244
      %p246 = scmp.ne.s32.totalorder %s238, %s240
      %p247 = scmp.eq.s32.totalorder %s22, 1
      %p248 = por %p246, %p247
      %p249 = scmp.ne.s32.totalorder %s240, %s241
      %p250 = scmp.eq.s32.totalorder %s22, 0
      %p251 = por %p249, %p250
      %p252 = scmp.ne.s32.totalorder %s240, %s241
      %p253 = scmp.eq.s32.totalorder %s23, 1
      %p254 = por %p252, %p253
      %p256 = scmp.ne.s32.totalorder %s241, %s255
      %p257 = scmp.eq.s32.totalorder %s23, 0
      %p258 = por %p256, %p257
      %p259 = scmp.le.s32.totalorder 1, %s17
      %p260 = scmp.lt.s32.totalorder %s17, 3
      %p261 = pnand %p259, %p260
      %p262 = pneg %p261
      // Predicated region
      $region9: #{encoder_forward.3} parent=5 // pred_check
        _
      $region10: #{encoder_forward.3} parent=5 // pred_check_branch
        %264 = sbr.rel (%p261) target = $region12
      $region11: #{encoder_forward.3} parent=5 // pred_region
        %s265 = ssub.s32 %s17, 1
        // Predicated region
        $region13: #{encoder_forward.3} parent=11 // pred_check
          %p266 = pneg %p38
        $region14: #{encoder_forward.3} parent=11 // pred_check_branch
          %268 = sbr.rel (%p266) target = $region16
        $region15: #{encoder_forward.3} parent=11 // pred_region
          _
        $region16: #{encoder_forward.3} parent=11 // pred_fallthru
          _
        // Predicated region
        $region17: #{encoder_forward.3} parent=11 // pred_check
          %p269 = pneg %p113
        $region18: #{encoder_forward.3} parent=11 // pred_check_branch
          %271 = sbr.rel (%p269) target = $region20
        $region19: #{encoder_forward.3} parent=11 // pred_region
          _
        $region20: #{encoder_forward.3} parent=11 // pred_fallthru
          _
        // Predicated region
        $region21: #{encoder_forward.3} parent=11 // pred_check
          %p272 = pneg %p134
        $region22: #{encoder_forward.3} parent=11 // pred_check_branch
          %274 = sbr.rel (%p272) target = $region24
        $region23: #{encoder_forward.3} parent=11 // pred_region
          _
        $region24: #{encoder_forward.3} parent=11 // pred_fallthru
          _
        // Predicated region
        $region25: #{encoder_forward.3} parent=11 // pred_check
          %p275 = pneg %p155
        $region26: #{encoder_forward.3} parent=11 // pred_check_branch
          %277 = sbr.rel (%p275) target = $region28
        $region27: #{encoder_forward.3} parent=11 // pred_region
          _
        $region28: #{encoder_forward.3} parent=11 // pred_fallthru
          _
        // Predicated region
        $region29: #{encoder_forward.3} parent=11 // pred_check
          %p278 = pneg %p176
        $region30: #{encoder_forward.3} parent=11 // pred_check_branch
          %280 = sbr.rel (%p278) target = $region32
        $region31: #{encoder_forward.3} parent=11 // pred_region
          _
        $region32: #{encoder_forward.3} parent=11 // pred_fallthru
          _
      $region12: #{encoder_forward.3} parent=5 // pred_fallthru
        _
      %p281 = scmp.lt.s32.totalorder %s17, 2
      // Predicated region
      $region33: #{encoder_forward.3} parent=5 // pred_check
        %p282 = pneg %p281
      $region34: #{encoder_forward.3} parent=5 // pred_check_branch
        %284 = sbr.rel (%p282) target = $region36
      $region35: #{encoder_forward.3} parent=5 // pred_region
        // Predicated region
        $region37: #{encoder_forward.3} parent=35 // pred_check
          %p285 = pneg %p58
        $region38: #{encoder_forward.3} parent=35 // pred_check_branch
          %287 = sbr.rel (%p285) target = $region40
        $region39: #{encoder_forward.3} parent=35 // pred_region
          %s288 = smul.u32 8, %s17
          %p289 = scmp.lt.s32.totalorder %s288, 15
          %s290 = scalar_select %p289, %s288, 15
          %s291 = smul.addr %s290, 3
          %s292 = smul.addr %s291, 4
          %s293 = scalar_lea.vmem %s1, %s292
          %s294 = smul.u32 8, %s17
        $region40: #{encoder_forward.3} parent=35 // pred_fallthru
          _
        // Predicated region
        $region41: #{encoder_forward.3} parent=35 // pred_check
          %p295 = pneg %p86
        $region42: #{encoder_forward.3} parent=35 // pred_check_branch
          %297 = sbr.rel (%p295) target = $region44
        $region43: #{encoder_forward.3} parent=35 // pred_region
          %s298 = ssub.s32 1, %s17
          %s299 = smul.u32 8, %s298
          %p300 = scmp.lt.s32.totalorder %s299, 15
          %s301 = scalar_select %p300, %s299, 15
          %s302 = smul.addr %s301, 3
          %s303 = smul.addr %s302, 4
          %s304 = scalar_lea.vmem %s2, %s303
          %s305 = ssub.s32 1, %s17
          %s306 = smul.u32 8, %s305
        $region44: #{encoder_forward.3} parent=35 // pred_fallthru
          _
      $region36: #{encoder_forward.3} parent=5 // pred_fallthru
        _
      %p307 = scmp.le.s32.totalorder 1, %s17
      %p308 = scmp.lt.s32.totalorder %s17, 3
      %p309 = pnand %p307, %p308
      %p310 = pneg %p309
      // Predicated region
      $region45: #{encoder_forward.3} parent=5 // pred_check
        _
      $region46: #{encoder_forward.3} parent=5 // pred_check_branch
        %312 = sbr.rel (%p309) target = $region48
      $region47: #{encoder_forward.3} parent=5 // pred_region
        %s313 = ssub.s32 %s17, 1
        %p314 = pneg %p38
        %p315 = pneg %p35
        %s316 = smul.u32 8, %s22
        %p317 = scmp.lt.s32.totalorder %s316, 15
        %s318 = scalar_select %p317, %s316, 15
        %s319 = smul.addr %s318, 3
        %s320 = smul.addr %s319, 4
        %s321 = scalar_lea.vmem %s1, %s320
        %p322 = pneg %p64
        %p323 = pneg %p61
        %s324 = ssub.s32 1, %s22
        %s325 = smul.u32 8, %s324
        %p326 = scmp.lt.s32.totalorder %s325, 15
        %s327 = scalar_select %p326, %s325, 15
        %s328 = smul.addr %s327, 3
        %s329 = smul.addr %s328, 4
        %s330 = scalar_lea.vmem %s2, %s329
        %p331 = pneg %p92
        %p332 = pneg %p89
        %p333 = pneg %p113
        %p334 = pneg %p110
        %p335 = pneg %p134
        %p336 = pneg %p131
        %p337 = pneg %p155
        %p338 = pneg %p152
        %p339 = pneg %p176
        %p340 = pneg %p173
        %p341 = pneg %p202
        %p342 = pneg %p199
        %s343 = smul.u32 8, %s22
        %p344 = scmp.lt.s32.totalorder %s343, 15
        %s345 = scalar_select %p344, %s343, 15
        %s346 = smul.addr %s345, 8
        %s347 = scalar_lea.vmem %s7, %s346
        %p348 = pneg %p230
        %p349 = pneg %p227
        %s350 = ssub.s32 1, %s22
        %s351 = smul.u32 8, %s350
        %p352 = scmp.lt.s32.totalorder %s351, 15
        %s353 = scalar_select %p352, %s351, 15
        %s354 = smul.addr %s353, 8
        %s355 = scalar_lea.vmem %s8, %s354
        %p356 = pneg %p251
        %p357 = pneg %p248
        %s358 = smul.u32 8, %s22
        %p359 = scmp.lt.s32.totalorder %s358, 15
        %s360 = scalar_select %p359, %s358, 15
        %s361 = smul.addr %s360, 3
        %s362 = smul.addr %s361, 4
        %s363 = scalar_lea.vmem %s1, %s362
        %s364 = smul.u32 8, %s22
        %s365 = ssub.s32 1, %s22
        %s366 = smul.u32 8, %s365
        %p367 = scmp.lt.s32.totalorder %s366, 15
        %s368 = scalar_select %p367, %s366, 15
        %s369 = smul.addr %s368, 3
        %s370 = smul.addr %s369, 4
        %s371 = scalar_lea.vmem %s2, %s370
        %s372 = ssub.s32 1, %s22
        %s373 = smul.u32 8, %s372
        %s374 = smul.u32 8, %s22
        %p375 = scmp.lt.s32.totalorder %s374, 15
        %s376 = scalar_select %p375, %s374, 15
        %s377 = smul.addr %s376, 8
        %s378 = scalar_lea.vmem %s7, %s377
        %s379 = smul.u32 8, %s22
        %s380 = ssub.s32 1, %s22
        %s381 = smul.u32 8, %s380
        %p382 = scmp.lt.s32.totalorder %s381, 15
        %s383 = scalar_select %p382, %s381, 15
        %s384 = smul.addr %s383, 8
        %s385 = scalar_lea.vmem %s8, %s384
        %s386 = ssub.s32 1, %s22
        %s387 = smul.u32 8, %s386
        %p388 = scmp.eq.s32.totalorder %s22, 0
        // Predicated region
        $region49: #{encoder_forward.3} parent=47 // pred_check
          %p389 = pneg %p388
        $region50: #{encoder_forward.3} parent=47 // pred_check_branch
          %391 = sbr.rel (%p389) target = $region52
        $region51: #{encoder_forward.3} parent=47 // pred_region
          %392 = vst [vmem:[#allocation2] sm:$0xff] 0.0
          %393 = vst [vmem:[#allocation2 + $0x8] sm:$0xff] 0.0
        $region52: #{encoder_forward.3} parent=47 // pred_fallthru
          _
        %v394 = vld [vmem:[%s0] sm:$0xff]
        %v395 = vld [vmem:[%s4] sm:$0x3f]
        %v396 = vld [vmem:[#allocation2] sm:$0xff]
        %v397 = vld [vmem:[#allocation2 + $0x8] sm:$0xff]
        %s398 = smul.u32 %s22, 8
        %s399 = ssub.s32 1, %s22
        %s400 = smul.u32 %s399, 8
        %s401 = sadd.s32 %s400, 7
        %v402 = vpack.c.bf16 %v396, %v396
        %v403 = vpack.c.bf16 %v397, %v397
        %v404 = vld [vmem:[%s3] sm:$0xff]
        %v405 = vld [vmem:[%s3 + $0x8] sm:$0xff]
        %v406 = vld [vmem:[%s3 + $0x10] sm:$0xff]
        %v407 = vld [vmem:[%s3 + $0x18] sm:$0xff]
        %v408 = vld [vmem:[%s3 + $0x20] sm:$0xff]
        %v409 = vld [vmem:[%s3 + $0x28] sm:$0xff]
        %v410 = vld [vmem:[%s3 + $0x30] sm:$0xff]
        %v411 = vld [vmem:[%s3 + $0x38] sm:$0xff]
        %v412 = vld [vmem:[%s3 + $0x40] sm:$0xff]
        %v413 = vld [vmem:[%s3 + $0x48] sm:$0xff]
        %v414 = vld [vmem:[%s3 + $0x50] sm:$0xff]
        %v415 = vld [vmem:[%s3 + $0x58] sm:$0xff]
        %v416 = vld [vmem:[%s3 + $0x60] sm:$0xff]
        %v417 = vld [vmem:[%s3 + $0x68] sm:$0xff]
        %v418 = vld [vmem:[%s3 + $0x70] sm:$0xff]
        %v419 = vld [vmem:[%s3 + $0x78] sm:$0xff]
        %v420 = vld [vmem:[%s3 + $0x80] sm:$0xff]
        %v421 = vld [vmem:[%s3 + $0x88] sm:$0xff]
        %v422 = vld [vmem:[%s3 + $0x90] sm:$0xff]
        %v423 = vld [vmem:[%s3 + $0x98] sm:$0xff]
        %v424 = vld [vmem:[%s3 + $0xa0] sm:$0xff]
        %v425 = vld [vmem:[%s3 + $0xa8] sm:$0xff]
        %v426 = vld [vmem:[%s3 + $0xb0] sm:$0xff]
        %v427 = vld [vmem:[%s3 + $0xb8] sm:$0xff]
        %v428 = vld [vmem:[%s3 + $0xc0] sm:$0xff]
        %v429 = vld [vmem:[%s3 + $0xc8] sm:$0xff]
        %v430 = vld [vmem:[%s3 + $0xd0] sm:$0xff]
        %v431 = vld [vmem:[%s3 + $0xd8] sm:$0xff]
        %v432 = vld [vmem:[%s3 + $0xe0] sm:$0xff]
        %v433 = vld [vmem:[%s3 + $0xe8] sm:$0xff]
        %v434 = vld [vmem:[%s3 + $0xf0] sm:$0xff]
        %v435 = vld [vmem:[%s3 + $0xf8] sm:$0xff]
        %v436 = vld [vmem:[%s3 + $0x100] sm:$0xff]
        %v437 = vld [vmem:[%s3 + $0x108] sm:$0xff]
        %v438 = vld [vmem:[%s3 + $0x110] sm:$0xff]
        %v439 = vld [vmem:[%s3 + $0x118] sm:$0xff]
        %v440 = vld [vmem:[%s3 + $0x120] sm:$0xff]
        %v441 = vld [vmem:[%s3 + $0x128] sm:$0xff]
        %v442 = vld [vmem:[%s3 + $0x130] sm:$0xff]
        %v443 = vld [vmem:[%s3 + $0x138] sm:$0xff]
        %v444 = vld [vmem:[%s3 + $0x140] sm:$0xff]
        %v445 = vld [vmem:[%s3 + $0x148] sm:$0xff]
        %v446 = vld [vmem:[%s3 + $0x150] sm:$0xff]
        %v447 = vld [vmem:[%s3 + $0x158] sm:$0xff]
        %v448 = vld [vmem:[%s3 + $0x160] sm:$0xff]
        %v449 = vld [vmem:[%s3 + $0x168] sm:$0xff]
        %v450 = vld [vmem:[%s3 + $0x170] sm:$0xff]
        %v451 = vld [vmem:[%s3 + $0x178] sm:$0xff]
        %v452 = vld [vmem:[%s3 + $0x180] sm:$0xff]
        %v453 = vld [vmem:[%s3 + $0x188] sm:$0xff]
        %v454 = vld [vmem:[%s3 + $0x190] sm:$0xff]
        %v455 = vld [vmem:[%s3 + $0x198] sm:$0xff]
        %v456 = vld [vmem:[%s3 + $0x1a0] sm:$0xff]
        %v457 = vld [vmem:[%s3 + $0x1a8] sm:$0xff]
        %v458 = vld [vmem:[%s3 + $0x1b0] sm:$0xff]
        %v459 = vld [vmem:[%s3 + $0x1b8] sm:$0xff]
        %v460 = vld [vmem:[%s3 + $0x1c0] sm:$0xff]
        %v461 = vld [vmem:[%s3 + $0x1c8] sm:$0xff]
        %v462 = vld [vmem:[%s3 + $0x1d0] sm:$0xff]
        %v463 = vld [vmem:[%s3 + $0x1d8] sm:$0xff]
        %v464 = vld [vmem:[%s3 + $0x1e0] sm:$0xff]
        %v465 = vld [vmem:[%s3 + $0x1e8] sm:$0xff]
        %v466 = vld [vmem:[%s3 + $0x1f0] sm:$0xff]
        %v467 = vld [vmem:[%s3 + $0x1f8] sm:$0xff]
        %v468 = vld [vmem:[%s3 + $0x200] sm:$0xff]
        %v469 = vld [vmem:[%s3 + $0x208] sm:$0xff]
        %v470 = vld [vmem:[%s3 + $0x210] sm:$0xff]
        %v471 = vld [vmem:[%s3 + $0x218] sm:$0xff]
        %v472 = vld [vmem:[%s3 + $0x220] sm:$0xff]
        %v473 = vld [vmem:[%s3 + $0x228] sm:$0xff]
        %v474 = vld [vmem:[%s3 + $0x230] sm:$0xff]
        %v475 = vld [vmem:[%s3 + $0x238] sm:$0xff]
        %v476 = vld [vmem:[%s3 + $0x240] sm:$0xff]
        %v477 = vld [vmem:[%s3 + $0x248] sm:$0xff]
        %v478 = vld [vmem:[%s3 + $0x250] sm:$0xff]
        %v479 = vld [vmem:[%s3 + $0x258] sm:$0xff]
        %v480 = vld [vmem:[%s3 + $0x260] sm:$0xff]
        %v481 = vld [vmem:[%s3 + $0x268] sm:$0xff]
        %v482 = vld [vmem:[%s3 + $0x270] sm:$0xff]
        %v483 = vld [vmem:[%s3 + $0x278] sm:$0xff]
        %v484 = vld [vmem:[%s3 + $0x280] sm:$0xff]
        %v485 = vld [vmem:[%s3 + $0x288] sm:$0xff]
        %v486 = vld [vmem:[%s3 + $0x290] sm:$0xff]
        %v487 = vld [vmem:[%s3 + $0x298] sm:$0xff]
        %v488 = vld [vmem:[%s3 + $0x2a0] sm:$0xff]
        %v489 = vld [vmem:[%s3 + $0x2a8] sm:$0xff]
        %v490 = vld [vmem:[%s3 + $0x2b0] sm:$0xff]
        %v491 = vld [vmem:[%s3 + $0x2b8] sm:$0xff]
        %v492 = vld [vmem:[%s3 + $0x2c0] sm:$0xff]
        %v493 = vld [vmem:[%s3 + $0x2c8] sm:$0xff]
        %v494 = vld [vmem:[%s3 + $0x2d0] sm:$0xff]
        %v495 = vld [vmem:[%s3 + $0x2d8] sm:$0xff]
        %v496 = vld [vmem:[%s3 + $0x2e0] sm:$0xff]
        %v497 = vld [vmem:[%s3 + $0x2e8] sm:$0xff]
        %v498 = vld [vmem:[%s3 + $0x2f0] sm:$0xff]
        %v499 = vld [vmem:[%s3 + $0x2f8] sm:$0xff]
        %v501 = vlaneseq
        %v502 = vshrl.u32 %v501, 7
        %v503 = vsub.s32 0, %v502
        %v504 = vrot.slane %v395, %v503
        %v505 = vlaneseq
        %v506 = vshrl.u32 %v505, 7
        %v507 = vsub.s32 1, %v506
        %v508 = vrot.slane %v395, %v507
        %v509 = vlaneseq
        %v510 = vshrl.u32 %v509, 7
        %v511 = vsub.s32 2, %v510
        %v512 = vrot.slane %v395, %v511
        %v513 = vlaneseq
        %v514 = vshrl.u32 %v513, 7
        %v515 = vsub.s32 3, %v514
        %v516 = vrot.slane %v395, %v515
        %v517 = vlaneseq
        %v518 = vshrl.u32 %v517, 7
        %v519 = vsub.s32 4, %v518
        %v520 = vrot.slane %v395, %v519
        %v521 = vlaneseq
        %v522 = vshrl.u32 %v521, 7
        %v523 = vsub.s32 5, %v522
        %v524 = vrot.slane %v395, %v523
        %v627 = vunpack.c.l.b16 %v404
        %v628 = vunpack.c.h.b16 %v404
        %v629 = vunpack.c.l.b16 %v405
        %v630 = vunpack.c.h.b16 %v405
        %v631 = vunpack.c.l.b16 %v406
        %v632 = vunpack.c.h.b16 %v406
        %v633 = vunpack.c.l.b16 %v407
        %v634 = vunpack.c.h.b16 %v407
        %v635 = vunpack.c.l.b16 %v408
        %v636 = vunpack.c.h.b16 %v408
        %v637 = vunpack.c.l.b16 %v409
        %v638 = vunpack.c.h.b16 %v409
        %v639 = vunpack.c.l.b16 %v410
        %v640 = vunpack.c.h.b16 %v410
        %v641 = vunpack.c.l.b16 %v411
        %v642 = vunpack.c.h.b16 %v411
        %v643 = vunpack.c.l.b16 %v412
        %v644 = vunpack.c.h.b16 %v412
        %v645 = vunpack.c.l.b16 %v413
        %v646 = vunpack.c.h.b16 %v413
        %v647 = vunpack.c.l.b16 %v414
        %v648 = vunpack.c.h.b16 %v414
        %v649 = vunpack.c.l.b16 %v415
        %v650 = vunpack.c.h.b16 %v415
        %v651 = vunpack.c.l.b16 %v416
        %v652 = vunpack.c.h.b16 %v416
        %v653 = vunpack.c.l.b16 %v417
        %v654 = vunpack.c.h.b16 %v417
        %v655 = vunpack.c.l.b16 %v418
        %v656 = vunpack.c.h.b16 %v418
        %v657 = vunpack.c.l.b16 %v419
        %v658 = vunpack.c.h.b16 %v419
        %v659 = vunpack.c.l.b16 %v420
        %v660 = vunpack.c.h.b16 %v420
        %v661 = vunpack.c.l.b16 %v421
        %v662 = vunpack.c.h.b16 %v421
        %v663 = vunpack.c.l.b16 %v422
        %v664 = vunpack.c.h.b16 %v422
        %v665 = vunpack.c.l.b16 %v423
        %v666 = vunpack.c.h.b16 %v423
        %v667 = vunpack.c.l.b16 %v424
        %v668 = vunpack.c.h.b16 %v424
        %v669 = vunpack.c.l.b16 %v425
        %v670 = vunpack.c.h.b16 %v425
        %v671 = vunpack.c.l.b16 %v426
        %v672 = vunpack.c.h.b16 %v426
        %v673 = vunpack.c.l.b16 %v427
        %v674 = vunpack.c.h.b16 %v427
        %v675 = vunpack.c.l.b16 %v428
        %v676 = vunpack.c.h.b16 %v428
        %v677 = vunpack.c.l.b16 %v429
        %v678 = vunpack.c.h.b16 %v429
        %v679 = vunpack.c.l.b16 %v430
        %v680 = vunpack.c.h.b16 %v430
        %v681 = vunpack.c.l.b16 %v431
        %v682 = vunpack.c.h.b16 %v431
        %v683 = vunpack.c.l.b16 %v432
        %v684 = vunpack.c.h.b16 %v432
        %v685 = vunpack.c.l.b16 %v433
        %v686 = vunpack.c.h.b16 %v433
        %v687 = vunpack.c.l.b16 %v434
        %v688 = vunpack.c.h.b16 %v434
        %v689 = vunpack.c.l.b16 %v435
        %v690 = vunpack.c.h.b16 %v435
        %v691 = vunpack.c.l.b16 %v436
        %v692 = vunpack.c.h.b16 %v436
        %v693 = vunpack.c.l.b16 %v437
        %v694 = vunpack.c.h.b16 %v437
        %v695 = vunpack.c.l.b16 %v438
        %v696 = vunpack.c.h.b16 %v438
        %v697 = vunpack.c.l.b16 %v439
        %v698 = vunpack.c.h.b16 %v439
        %v699 = vunpack.c.l.b16 %v440
        %v700 = vunpack.c.h.b16 %v440
        %v701 = vunpack.c.l.b16 %v441
        %v702 = vunpack.c.h.b16 %v441
        %v703 = vunpack.c.l.b16 %v442
        %v704 = vunpack.c.h.b16 %v442
        %v705 = vunpack.c.l.b16 %v443
        %v706 = vunpack.c.h.b16 %v443
        %v707 = vunpack.c.l.b16 %v444
        %v708 = vunpack.c.h.b16 %v444
        %v709 = vunpack.c.l.b16 %v445
        %v710 = vunpack.c.h.b16 %v445
        %v711 = vunpack.c.l.b16 %v446
        %v712 = vunpack.c.h.b16 %v446
        %v713 = vunpack.c.l.b16 %v447
        %v714 = vunpack.c.h.b16 %v447
        %v715 = vunpack.c.l.b16 %v448
        %v716 = vunpack.c.h.b16 %v448
        %v717 = vunpack.c.l.b16 %v449
        %v718 = vunpack.c.h.b16 %v449
        %v719 = vunpack.c.l.b16 %v450
        %v720 = vunpack.c.h.b16 %v450
        %v721 = vunpack.c.l.b16 %v451
        %v722 = vunpack.c.h.b16 %v451
        %v723 = vunpack.c.l.b16 %v452
        %v724 = vunpack.c.h.b16 %v452
        %v725 = vunpack.c.l.b16 %v453
        %v726 = vunpack.c.h.b16 %v453
        %v727 = vunpack.c.l.b16 %v454
        %v728 = vunpack.c.h.b16 %v454
        %v729 = vunpack.c.l.b16 %v455
        %v730 = vunpack.c.h.b16 %v455
        %v731 = vunpack.c.l.b16 %v456
        %v732 = vunpack.c.h.b16 %v456
        %v733 = vunpack.c.l.b16 %v457
        %v734 = vunpack.c.h.b16 %v457
        %v735 = vunpack.c.l.b16 %v458
        %v736 = vunpack.c.h.b16 %v458
        %v737 = vunpack.c.l.b16 %v459
        %v738 = vunpack.c.h.b16 %v459
        %v739 = vunpack.c.l.b16 %v460
        %v740 = vunpack.c.h.b16 %v460
        %v741 = vunpack.c.l.b16 %v461
        %v742 = vunpack.c.h.b16 %v461
        %v743 = vunpack.c.l.b16 %v462
        %v744 = vunpack.c.h.b16 %v462
        %v745 = vunpack.c.l.b16 %v463
        %v746 = vunpack.c.h.b16 %v463
        %v747 = vunpack.c.l.b16 %v464
        %v748 = vunpack.c.h.b16 %v464
        %v749 = vunpack.c.l.b16 %v465
        %v750 = vunpack.c.h.b16 %v465
        %v751 = vunpack.c.l.b16 %v466
        %v752 = vunpack.c.h.b16 %v466
        %v753 = vunpack.c.l.b16 %v467
        %v754 = vunpack.c.h.b16 %v467
        %v755 = vunpack.c.l.b16 %v468
        %v756 = vunpack.c.h.b16 %v468
        %v757 = vunpack.c.l.b16 %v469
        %v758 = vunpack.c.h.b16 %v469
        %v759 = vunpack.c.l.b16 %v470
        %v760 = vunpack.c.h.b16 %v470
        %v761 = vunpack.c.l.b16 %v471
        %v762 = vunpack.c.h.b16 %v471
        %v763 = vunpack.c.l.b16 %v472
        %v764 = vunpack.c.h.b16 %v472
        %v765 = vunpack.c.l.b16 %v473
        %v766 = vunpack.c.h.b16 %v473
        %v767 = vunpack.c.l.b16 %v474
        %v768 = vunpack.c.h.b16 %v474
        %v769 = vunpack.c.l.b16 %v475
        %v770 = vunpack.c.h.b16 %v475
        %v771 = vunpack.c.l.b16 %v476
        %v772 = vunpack.c.h.b16 %v476
        %v773 = vunpack.c.l.b16 %v477
        %v774 = vunpack.c.h.b16 %v477
        %v775 = vunpack.c.l.b16 %v478
        %v776 = vunpack.c.h.b16 %v478
        %v777 = vunpack.c.l.b16 %v479
        %v778 = vunpack.c.h.b16 %v479
        %v779 = vunpack.c.l.b16 %v480
        %v780 = vunpack.c.h.b16 %v480
        %v781 = vunpack.c.l.b16 %v481
        %v782 = vunpack.c.h.b16 %v481
        %v783 = vunpack.c.l.b16 %v482
        %v784 = vunpack.c.h.b16 %v482
        %v785 = vunpack.c.l.b16 %v483
        %v786 = vunpack.c.h.b16 %v483
        %v787 = vunpack.c.l.b16 %v484
        %v788 = vunpack.c.h.b16 %v484
        %v789 = vunpack.c.l.b16 %v485
        %v790 = vunpack.c.h.b16 %v485
        %v791 = vunpack.c.l.b16 %v486
        %v792 = vunpack.c.h.b16 %v486
        %v793 = vunpack.c.l.b16 %v487
        %v794 = vunpack.c.h.b16 %v487
        %v795 = vunpack.c.l.b16 %v488
        %v796 = vunpack.c.h.b16 %v488
        %v797 = vunpack.c.l.b16 %v489
        %v798 = vunpack.c.h.b16 %v489
        %v799 = vunpack.c.l.b16 %v490
        %v800 = vunpack.c.h.b16 %v490
        %v801 = vunpack.c.l.b16 %v491
        %v802 = vunpack.c.h.b16 %v491
        %v803 = vunpack.c.l.b16 %v492
        %v804 = vunpack.c.h.b16 %v492
        %v805 = vunpack.c.l.b16 %v493
        %v806 = vunpack.c.h.b16 %v493
        %v807 = vunpack.c.l.b16 %v494
        %v808 = vunpack.c.h.b16 %v494
        %v809 = vunpack.c.l.b16 %v495
        %v810 = vunpack.c.h.b16 %v495
        %v811 = vunpack.c.l.b16 %v496
        %v812 = vunpack.c.h.b16 %v496
        %v813 = vunpack.c.l.b16 %v497
        %v814 = vunpack.c.h.b16 %v497
        %v815 = vunpack.c.l.b16 %v498
        %v816 = vunpack.c.h.b16 %v498
        %v817 = vunpack.c.l.b16 %v499
        %v818 = vunpack.c.h.b16 %v499
        %v819 = vpack.c.b16 %v633, %v627
        %v820 = vpack.c.b16 %v634, %v628
        %v821 = vpack.c.b16 %v635, %v629
        %v822 = vpack.c.b16 %v636, %v630
        %v823 = vpack.c.b16 %v637, %v631
        %v824 = vpack.c.b16 %v638, %v632
        %v825 = vpack.c.b16 %v645, %v639
        %v826 = vpack.c.b16 %v646, %v640
        %v827 = vpack.c.b16 %v647, %v641
        %v828 = vpack.c.b16 %v648, %v642
        %v829 = vpack.c.b16 %v649, %v643
        %v830 = vpack.c.b16 %v650, %v644
        %v831 = vpack.c.b16 %v657, %v651
        %v832 = vpack.c.b16 %v658, %v652
        %v833 = vpack.c.b16 %v659, %v653
        %v834 = vpack.c.b16 %v660, %v654
        %v835 = vpack.c.b16 %v661, %v655
        %v836 = vpack.c.b16 %v662, %v656
        %v837 = vpack.c.b16 %v669, %v663
        %v838 = vpack.c.b16 %v670, %v664
        %v839 = vpack.c.b16 %v671, %v665
        %v840 = vpack.c.b16 %v672, %v666
        %v841 = vpack.c.b16 %v673, %v667
        %v842 = vpack.c.b16 %v674, %v668
        %v843 = vpack.c.b16 %v681, %v675
        %v844 = vpack.c.b16 %v682, %v676
        %v845 = vpack.c.b16 %v683, %v677
        %v846 = vpack.c.b16 %v684, %v678
        %v847 = vpack.c.b16 %v685, %v679
        %v848 = vpack.c.b16 %v686, %v680
        %v849 = vpack.c.b16 %v693, %v687
        %v850 = vpack.c.b16 %v694, %v688
        %v851 = vpack.c.b16 %v695, %v689
        %v852 = vpack.c.b16 %v696, %v690
        %v853 = vpack.c.b16 %v697, %v691
        %v854 = vpack.c.b16 %v698, %v692
        %v855 = vpack.c.b16 %v705, %v699
        %v856 = vpack.c.b16 %v706, %v700
        %v857 = vpack.c.b16 %v707, %v701
        %v858 = vpack.c.b16 %v708, %v702
        %v859 = vpack.c.b16 %v709, %v703
        %v860 = vpack.c.b16 %v710, %v704
        %v861 = vpack.c.b16 %v717, %v711
        %v862 = vpack.c.b16 %v718, %v712
        %v863 = vpack.c.b16 %v719, %v713
        %v864 = vpack.c.b16 %v720, %v714
        %v865 = vpack.c.b16 %v721, %v715
        %v866 = vpack.c.b16 %v722, %v716
        %v867 = vpack.c.b16 %v729, %v723
        %v868 = vpack.c.b16 %v730, %v724
        %v869 = vpack.c.b16 %v731, %v725
        %v870 = vpack.c.b16 %v732, %v726
        %v871 = vpack.c.b16 %v733, %v727
        %v872 = vpack.c.b16 %v734, %v728
        %v873 = vpack.c.b16 %v741, %v735
        %v874 = vpack.c.b16 %v742, %v736
        %v875 = vpack.c.b16 %v743, %v737
        %v876 = vpack.c.b16 %v744, %v738
        %v877 = vpack.c.b16 %v745, %v739
        %v878 = vpack.c.b16 %v746, %v740
        %v879 = vpack.c.b16 %v753, %v747
        %v880 = vpack.c.b16 %v754, %v748
        %v881 = vpack.c.b16 %v755, %v749
        %v882 = vpack.c.b16 %v756, %v750
        %v883 = vpack.c.b16 %v757, %v751
        %v884 = vpack.c.b16 %v758, %v752
        %v885 = vpack.c.b16 %v765, %v759
        %v886 = vpack.c.b16 %v766, %v760
        %v887 = vpack.c.b16 %v767, %v761
        %v888 = vpack.c.b16 %v768, %v762
        %v889 = vpack.c.b16 %v769, %v763
        %v890 = vpack.c.b16 %v770, %v764
        %v891 = vpack.c.b16 %v777, %v771
        %v892 = vpack.c.b16 %v778, %v772
        %v893 = vpack.c.b16 %v779, %v773
        %v894 = vpack.c.b16 %v780, %v774
        %v895 = vpack.c.b16 %v781, %v775
        %v896 = vpack.c.b16 %v782, %v776
        %v897 = vpack.c.b16 %v789, %v783
        %v898 = vpack.c.b16 %v790, %v784
        %v899 = vpack.c.b16 %v791, %v785
        %v900 = vpack.c.b16 %v792, %v786
        %v901 = vpack.c.b16 %v793, %v787
        %v902 = vpack.c.b16 %v794, %v788
        %v903 = vpack.c.b16 %v801, %v795
        %v904 = vpack.c.b16 %v802, %v796
        %v905 = vpack.c.b16 %v803, %v797
        %v906 = vpack.c.b16 %v804, %v798
        %v907 = vpack.c.b16 %v805, %v799
        %v908 = vpack.c.b16 %v806, %v800
        %v909 = vpack.c.b16 %v813, %v807
        %v910 = vpack.c.b16 %v814, %v808
        %v911 = vpack.c.b16 %v815, %v809
        %v912 = vpack.c.b16 %v816, %v810
        %v913 = vpack.c.b16 %v817, %v811
        %v914 = vpack.c.b16 %v818, %v812
        %1011 = vmatprep.subr.bf16.mxu0 %v820
        %1012 = vmatpush1.bf16.msra.mxu0 %v819
        %1013 = vmatprep.subr.bf16.mxu0 %v826
        %1014 = vmatpush1.bf16.msra.mxu0 %v825
        %1015 = vmatprep.subr.bf16.mxu0 %v832
        %1016 = vmatpush1.bf16.msra.mxu0 %v831
        %1017 = vmatprep.subr.bf16.mxu0 %v838
        %1018 = vmatpush1.bf16.msra.mxu0 %v837
        %1019 = vmatprep.subr.bf16.mxu0 %v844
        %1020 = vmatpush1.bf16.msra.mxu0 %v843
        %1021 = vmatprep.subr.bf16.mxu0 %v850
        %1022 = vmatpush1.bf16.msra.mxu0 %v849
        %1023 = vmatprep.subr.bf16.mxu0 %v856
        %1024 = vmatpush1.bf16.msra.mxu0 %v855
        %1025 = vmatprep.subr.bf16.mxu0 %v862
        %1026 = vmatpush1.bf16.msra.mxu0 %v861
        %1027 = vmatprep.subr.bf16.mxu0 %v868
        %1028 = vmatpush1.bf16.msra.mxu0 %v867
        %1029 = vmatprep.subr.bf16.mxu0 %v874
        %1030 = vmatpush1.bf16.msra.mxu0 %v873
        %1031 = vmatprep.subr.bf16.mxu0 %v880
        %1032 = vmatpush1.bf16.msra.mxu0 %v879
        %1033 = vmatprep.subr.bf16.mxu0 %v886
        %1034 = vmatpush1.bf16.msra.mxu0 %v885
        %1035 = vmatprep.subr.bf16.mxu0 %v892
        %1036 = vmatpush1.bf16.msra.mxu0 %v891
        %1037 = vmatprep.subr.bf16.mxu0 %v898
        %1038 = vmatpush1.bf16.msra.mxu0 %v897
        %1039 = vmatprep.subr.bf16.mxu0 %v904
        %1040 = vmatpush1.bf16.msra.mxu0 %v903
        %1041 = vmatprep.subr.bf16.mxu0 %v910
        %1042 = vmatpush1.bf16.msra.mxu0 %v909
        %1043 = vmatprep.mubr.bf16.mxu0 %v403
        %1044 = vmatmul.mubr.bf16.gmra.mrb[0].mxu0 %v402
        %v1045 = vpop.f32.mrb[0].mxu0
        %v1046 = vadd.f32 %v504, %v1045
        %v1047 = vpop.f32.mrb[0].mxu0
        %v1048 = vadd.f32 %v508, %v1047
        %v1049 = vpop.f32.mrb[0].mxu0
        %v1050 = vpop.f32.mrb[0].mxu0
        %1051 = vdwg.mxu0
        %1052 = vmatprep.subr.bf16.mxu0 %v822
        %1053 = vmatpush1.bf16.msra.mxu0 %v821
        %1054 = vmatprep.subr.bf16.mxu0 %v828
        %1055 = vmatpush1.bf16.msra.mxu0 %v827
        %1056 = vmatprep.subr.bf16.mxu0 %v834
        %1057 = vmatpush1.bf16.msra.mxu0 %v833
        %1058 = vmatprep.subr.bf16.mxu0 %v840
        %1059 = vmatpush1.bf16.msra.mxu0 %v839
        %1060 = vmatprep.subr.bf16.mxu0 %v846
        %1061 = vmatpush1.bf16.msra.mxu0 %v845
        %1062 = vmatprep.subr.bf16.mxu0 %v852
        %1063 = vmatpush1.bf16.msra.mxu0 %v851
        %1064 = vmatprep.subr.bf16.mxu0 %v858
        %1065 = vmatpush1.bf16.msra.mxu0 %v857
        %1066 = vmatprep.subr.bf16.mxu0 %v864
        %1067 = vmatpush1.bf16.msra.mxu0 %v863
        %1068 = vmatprep.subr.bf16.mxu0 %v870
        %1069 = vmatpush1.bf16.msra.mxu0 %v869
        %1070 = vmatprep.subr.bf16.mxu0 %v876
        %1071 = vmatpush1.bf16.msra.mxu0 %v875
        %1072 = vmatprep.subr.bf16.mxu0 %v882
        %1073 = vmatpush1.bf16.msra.mxu0 %v881
        %1074 = vmatprep.subr.bf16.mxu0 %v888
        %1075 = vmatpush1.bf16.msra.mxu0 %v887
        %1076 = vmatprep.subr.bf16.mxu0 %v894
        %1077 = vmatpush1.bf16.msra.mxu0 %v893
        %1078 = vmatprep.subr.bf16.mxu0 %v900
        %1079 = vmatpush1.bf16.msra.mxu0 %v899
        %1080 = vmatprep.subr.bf16.mxu0 %v906
        %1081 = vmatpush1.bf16.msra.mxu0 %v905
        %1082 = vmatprep.subr.bf16.mxu0 %v912
        %1083 = vmatpush1.bf16.msra.mxu0 %v911
        %1084 = vmatprep.mubr.bf16.mxu0 %v403
        %1085 = vmatmul.mubr.bf16.gmra.mrb[0].mxu0 %v402
        %v1086 = vpop.f32.mrb[0].mxu0
        %v1087 = vadd.f32 %v512, %v1086
        %v1088 = vpop.f32.mrb[0].mxu0
        %v1089 = vadd.f32 %v516, %v1088
        %v1090 = vpop.f32.mrb[0].mxu0
        %v1091 = vpop.f32.mrb[0].mxu0
        %1092 = vdwg.mxu0
        %1093 = vmatprep.subr.bf16.mxu0 %v824
        %1094 = vmatpush1.bf16.msra.mxu0 %v823
        %1095 = vmatprep.subr.bf16.mxu0 %v830
        %1096 = vmatpush1.bf16.msra.mxu0 %v829
        %1097 = vmatprep.subr.bf16.mxu0 %v836
        %1098 = vmatpush1.bf16.msra.mxu0 %v835
        %1099 = vmatprep.subr.bf16.mxu0 %v842
        %1100 = vmatpush1.bf16.msra.mxu0 %v841
        %1101 = vmatprep.subr.bf16.mxu0 %v848
        %1102 = vmatpush1.bf16.msra.mxu0 %v847
        %1103 = vmatprep.subr.bf16.mxu0 %v854
        %1104 = vmatpush1.bf16.msra.mxu0 %v853
        %1105 = vmatprep.subr.bf16.mxu0 %v860
        %1106 = vmatpush1.bf16.msra.mxu0 %v859
        %1107 = vmatprep.subr.bf16.mxu0 %v866
        %1108 = vmatpush1.bf16.msra.mxu0 %v865
        %1109 = vmatprep.subr.bf16.mxu0 %v872
        %1110 = vmatpush1.bf16.msra.mxu0 %v871
        %1111 = vmatprep.subr.bf16.mxu0 %v878
        %1112 = vmatpush1.bf16.msra.mxu0 %v877
        %1113 = vmatprep.subr.bf16.mxu0 %v884
        %1114 = vmatpush1.bf16.msra.mxu0 %v883
        %1115 = vmatprep.subr.bf16.mxu0 %v890
        %1116 = vmatpush1.bf16.msra.mxu0 %v889
        %1117 = vmatprep.subr.bf16.mxu0 %v896
        %1118 = vmatpush1.bf16.msra.mxu0 %v895
        %1119 = vmatprep.subr.bf16.mxu0 %v902
        %1120 = vmatpush1.bf16.msra.mxu0 %v901
        %1121 = vmatprep.subr.bf16.mxu0 %v908
        %1122 = vmatpush1.bf16.msra.mxu0 %v907
        %1123 = vmatprep.subr.bf16.mxu0 %v914
        %1124 = vmatpush1.bf16.msra.mxu0 %v913
        %1125 = vmatprep.mubr.bf16.mxu0 %v403
        %1126 = vmatmul.mubr.bf16.gmra.mrb[0].mxu0 %v402
        %v1127 = vpop.f32.mrb[0].mxu0
        %v1128 = vadd.f32 %v520, %v1127
        %v1129 = vpop.f32.mrb[0].mxu0
        %v1130 = vadd.f32 %v524, %v1129
        %v1131 = vpop.f32.mrb[0].mxu0
        %v1132 = vpop.f32.mrb[0].mxu0
        %1133 = vdwg.mxu0
        %v1134 = vld [vmem:[%s363] sm:$0xff]
        %v1135 = vld [vmem:[%s363 + $0x8] sm:$0xf]
        %v1136 = vunpack.c.l.bf16 %v1134
        %v1137 = vunpack.c.h.bf16 %v1134
        %v1138 = vunpack.c.l.bf16 %v1135
        %s1139 = scalar_lea.vmem %s371, 84
        %v1140 = vld [vmem:[%s1139] sm:$0xff]
        %v1141 = vld [vmem:[%s1139 + $0x8] sm:$0xf]
        %v1142 = vunpack.c.l.bf16 %v1140
        %v1143 = vunpack.c.h.bf16 %v1140
        %v1144 = vunpack.c.l.bf16 %v1141
        %v1145 = vadd.f32 %v1136, %v1046
        %v1146 = vxor.u32 %v1145, 2147483648
        %v1147 = vmul.f32 %v1146, 1.442695
        %v1148 = vpow.pop %v1147
        %v1149 = vadd.f32 %v1148, 1.0
        %v1150 = vrcp.pop %v1149
        %v1151 = vmul.f32 1.0, %v1150
        %v1152 = vadd.f32 %v1137, %v1048
        %v1153 = vxor.u32 %v1152, 2147483648
        %v1154 = vmul.f32 %v1153, 1.442695
        %v1155 = vpow.pop %v1154
        %v1156 = vadd.f32 %v1155, 1.0
        %v1157 = vrcp.pop %v1156
        %v1158 = vmul.f32 1.0, %v1157
        %v1159 = vmul.f32 %v1151, %v1087
        %v1160 = vadd.f32 %v1138, %v1159
        %v1161 = vtanh.pop %v1160
        %v1162 = vsub.f32 1.0, %v1158
        %v1163 = vmul.f32 %v1162, %v1161
        %v1164 = vmul.f32 %v1158, %v396
        %v1165 = vadd.f32 %v1163, %v1164
        %v1166 = vadd.f32 %v1142, %v1089
        %v1167 = vxor.u32 %v1166, 2147483648
        %v1168 = vmul.f32 %v1167, 1.442695
        %v1169 = vpow.pop %v1168
        %v1170 = vadd.f32 %v1169, 1.0
        %v1171 = vrcp.pop %v1170
        %v1172 = vmul.f32 1.0, %v1171
        %v1173 = vadd.f32 %v1143, %v1128
        %v1174 = vxor.u32 %v1173, 2147483648
        %v1175 = vmul.f32 %v1174, 1.442695
        %v1176 = vpow.pop %v1175
        %v1177 = vadd.f32 %v1176, 1.0
        %v1178 = vrcp.pop %v1177
        %v1179 = vmul.f32 1.0, %v1178
        %v1180 = vmul.f32 %v1172, %v1130
        %v1181 = vadd.f32 %v1144, %v1180
        %v1182 = vtanh.pop %v1181
        %v1183 = vsub.f32 1.0, %v1179
        %v1184 = vmul.f32 %v1183, %v1182
        %v1185 = vmul.f32 %v1179, %v397
        %v1186 = vadd.f32 %v1184, %v1185
        %v1187 = vstv %s398
        %vm1188 = vcmp.lt.s32.totalorder %v1187, %v394
        %v1189 = vstv %s401
        %vm1190 = vcmp.lt.s32.totalorder %v1189, %v394
        %v1191 = vsel %vm1188, 1, 0
        %1192 = vset.pattern.permute.xlu0 0
        %1193 = vperm.xlu0 %1192, %v1191
        %v1194 = vpop.permute.xlu0 %1193
        %vm1195 = vcmp.eq.s32.totalorder %v1194, 1
        %v1196 = vsel %vm1195, %v1165, %v396
        %v1197 = vsel %vm1190, 1, 0
        %1198 = vset.pattern.permute.xlu0 0
        %1199 = vperm.xlu0 %1198, %v1197
        %v1200 = vpop.permute.xlu0 %1199
        %vm1201 = vcmp.eq.s32.totalorder %v1200, 1
        %v1202 = vsel %vm1201, %v1186, %v397
        %v1203 = vsel %vm1195, %v1165, 0.0
        %1204 = vst [vmem:[%s378] sm:$0xff] %v1203
        %v1205 = vsel %vm1201, %v1186, 0.0
        %s1206 = scalar_lea.vmem %s385, 56
        %1207 = vst [vmem:[%s1206] sm:$0xff] %v1205
        %s1208 = sadd.s32 %s398, 1
        %s1209 = sadd.s32 %s400, 6
        %v1210 = vpack.c.bf16 %v1196, %v1196
        %v1211 = vpack.c.bf16 %v1202, %v1202
        %v1212 = vld [vmem:[%s3] sm:$0xff]
        %v1213 = vld [vmem:[%s3 + $0x8] sm:$0xff]
        %v1214 = vld [vmem:[%s3 + $0x10] sm:$0xff]
        %v1215 = vld [vmem:[%s3 + $0x18] sm:$0xff]
        %v1216 = vld [vmem:[%s3 + $0x20] sm:$0xff]
        %v1217 = vld [vmem:[%s3 + $0x28] sm:$0xff]
        %v1218 = vld [vmem:[%s3 + $0x30] sm:$0xff]
        %v1219 = vld [vmem:[%s3 + $0x38] sm:$0xff]
        %v1220 = vld [vmem:[%s3 + $0x40] sm:$0xff]
        %v1221 = vld [vmem:[%s3 + $0x48] sm:$0xff]
        %v1222 = vld [vmem:[%s3 + $0x50] sm:$0xff]
        %v1223 = vld [vmem:[%s3 + $0x58] sm:$0xff]
        %v1224 = vld [vmem:[%s3 + $0x60] sm:$0xff]
        %v1225 = vld [vmem:[%s3 + $0x68] sm:$0xff]
        %v1226 = vld [vmem:[%s3 + $0x70] sm:$0xff]
        %v1227 = vld [vmem:[%s3 + $0x78] sm:$0xff]
        %v1228 = vld [vmem:[%s3 + $0x80] sm:$0xff]
        %v1229 = vld [vmem:[%s3 + $0x88] sm:$0xff]
        %v1230 = vld [vmem:[%s3 + $0x90] sm:$0xff]
        %v1231 = vld [vmem:[%s3 + $0x98] sm:$0xff]
        %v1232 = vld [vmem:[%s3 + $0xa0] sm:$0xff]
        %v1233 = vld [vmem:[%s3 + $0xa8] sm:$0xff]
        %v1234 = vld [vmem:[%s3 + $0xb0] sm:$0xff]
        %v1235 = vld [vmem:[%s3 + $0xb8] sm:$0xff]
        %v1236 = vld [vmem:[%s3 + $0xc0] sm:$0xff]
        %v1237 = vld [vmem:[%s3 + $0xc8] sm:$0xff]
        %v1238 = vld [vmem:[%s3 + $0xd0] sm:$0xff]
        %v1239 = vld [vmem:[%s3 + $0xd8] sm:$0xff]
        %v1240 = vld [vmem:[%s3 + $0xe0] sm:$0xff]
        %v1241 = vld [vmem:[%s3 + $0xe8] sm:$0xff]
        %v1242 = vld [vmem:[%s3 + $0xf0] sm:$0xff]
        %v1243 = vld [vmem:[%s3 + $0xf8] sm:$0xff]
        %v1244 = vld [vmem:[%s3 + $0x100] sm:$0xff]
        %v1245 = vld [vmem:[%s3 + $0x108] sm:$0xff]
        %v1246 = vld [vmem:[%s3 + $0x110] sm:$0xff]
        %v1247 = vld [vmem:[%s3 + $0x118] sm:$0xff]
        %v1248 = vld [vmem:[%s3 + $0x120] sm:$0xff]
        %v1249 = vld [vmem:[%s3 + $0x128] sm:$0xff]
        %v1250 = vld [vmem:[%s3 + $0x130] sm:$0xff]
        %v1251 = vld [vmem:[%s3 + $0x138] sm:$0xff]
        %v1252 = vld [vmem:[%s3 + $0x140] sm:$0xff]
        %v1253 = vld [vmem:[%s3 + $0x148] sm:$0xff]
        %v1254 = vld [vmem:[%s3 + $0x150] sm:$0xff]
        %v1255 = vld [vmem:[%s3 + $0x158] sm:$0xff]
        %v1256 = vld [vmem:[%s3 + $0x160] sm:$0xff]
        %v1257 = vld [vmem:[%s3 + $0x168] sm:$0xff]
        %v1258 = vld [vmem:[%s3 + $0x170] sm:$0xff]
        %v1259 = vld [vmem:[%s3 + $0x178] sm:$0xff]
        %v1260 = vld [vmem:[%s3 + $0x180] sm:$0xff]
        %v1261 = vld [vmem:[%s3 + $0x188] sm:$0xff]
        %v1262 = vld [vmem:[%s3 + $0x190] sm:$0xff]
        %v1263 = vld [vmem:[%s3 + $0x198] sm:$0xff]
        %v1264 = vld [vmem:[%s3 + $0x1a0] sm:$0xff]
        %v1265 = vld [vmem:[%s3 + $0x1a8] sm:$0xff]
        %v1266 = vld [vmem:[%s3 + $0x1b0] sm:$0xff]
        %v1267 = vld [vmem:[%s3 + $0x1b8] sm:$0xff]
        %v1268 = vld [vmem:[%s3 + $0x1c0] sm:$0xff]
        %v1269 = vld [vmem:[%s3 + $0x1c8] sm:$0xff]
        %v1270 = vld [vmem:[%s3 + $0x1d0] sm:$0xff]
        %v1271 = vld [vmem:[%s3 + $0x1d8] sm:$0xff]
        %v1272 = vld [vmem:[%s3 + $0x1e0] sm:$0xff]
        %v1273 = vld [vmem:[%s3 + $0x1e8] sm:$0xff]
        %v1274 = vld [vmem:[%s3 + $0x1f0] sm:$0xff]
        %v1275 = vld [vmem:[%s3 + $0x1f8] sm:$0xff]
        %v1276 = vld [vmem:[%s3 + $0x200] sm:$0xff]
        %v1277 = vld [vmem:[%s3 + $0x208] sm:$0xff]
        %v1278 = vld [vmem:[%s3 + $0x210] sm:$0xff]
        %v1279 = vld [vmem:[%s3 + $0x218] sm:$0xff]
        %v1280 = vld [vmem:[%s3 + $0x220] sm:$0xff]
        %v1281 = vld [vmem:[%s3 + $0x228] sm:$0xff]
        %v1282 = vld [vmem:[%s3 + $0x230] sm:$0xff]
        %v1283 = vld [vmem:[%s3 + $0x238] sm:$0xff]
        %v1284 = vld [vmem:[%s3 + $0x240] sm:$0xff]
        %v1285 = vld [vmem:[%s3 + $0x248] sm:$0xff]
        %v1286 = vld [vmem:[%s3 + $0x250] sm:$0xff]
        %v1287 = vld [vmem:[%s3 + $0x258] sm:$0xff]
        %v1288 = vld [vmem:[%s3 + $0x260] sm:$0xff]
        %v1289 = vld [vmem:[%s3 + $0x268] sm:$0xff]
        %v1290 = vld [vmem:[%s3 + $0x270] sm:$0xff]
        %v1291 = vld [vmem:[%s3 + $0x278] sm:$0xff]
        %v1292 = vld [vmem:[%s3 + $0x280] sm:$0xff]
        %v1293 = vld [vmem:[%s3 + $0x288] sm:$0xff]
        %v1294 = vld [vmem:[%s3 + $0x290] sm:$0xff]
        %v1295 = vld [vmem:[%s3 + $0x298] sm:$0xff]
        %v1296 = vld [vmem:[%s3 + $0x2a0] sm:$0xff]
        %v1297 = vld [vmem:[%s3 + $0x2a8] sm:$0xff]
        %v1298 = vld [vmem:[%s3 + $0x2b0] sm:$0xff]
        %v1299 = vld [vmem:[%s3 + $0x2b8] sm:$0xff]
        %v1300 = vld [vmem:[%s3 + $0x2c0] sm:$0xff]
        %v1301 = vld [vmem:[%s3 + $0x2c8] sm:$0xff]
        %v1302 = vld [vmem:[%s3 + $0x2d0] sm:$0xff]
        %v1303 = vld [vmem:[%s3 + $0x2d8] sm:$0xff]
        %v1304 = vld [vmem:[%s3 + $0x2e0] sm:$0xff]
        %v1305 = vld [vmem:[%s3 + $0x2e8] sm:$0xff]
        %v1306 = vld [vmem:[%s3 + $0x2f0] sm:$0xff]
        %v1307 = vld [vmem:[%s3 + $0x2f8] sm:$0xff]
        %v1404 = vunpack.c.l.b16 %v1212
        %v1405 = vunpack.c.h.b16 %v1212
        %v1406 = vunpack.c.l.b16 %v1213
        %v1407 = vunpack.c.h.b16 %v1213
        %v1408 = vunpack.c.l.b16 %v1214
        %v1409 = vunpack.c.h.b16 %v1214
        %v1410 = vunpack.c.l.b16 %v1215
        %v1411 = vunpack.c.h.b16 %v1215
        %v1412 = vunpack.c.l.b16 %v1216
        %v1413 = vunpack.c.h.b16 %v1216
        %v1414 = vunpack.c.l.b16 %v1217
        %v1415 = vunpack.c.h.b16 %v1217
        %v1416 = vunpack.c.l.b16 %v1218
        %v1417 = vunpack.c.h.b16 %v1218
        %v1418 = vunpack.c.l.b16 %v1219
        %v1419 = vunpack.c.h.b16 %v1219
        %v1420 = vunpack.c.l.b16 %v1220
        %v1421 = vunpack.c.h.b16 %v1220
        %v1422 = vunpack.c.l.b16 %v1221
        %v1423 = vunpack.c.h.b16 %v1221
        %v1424 = vunpack.c.l.b16 %v1222
        %v1425 = vunpack.c.h.b16 %v1222
        %v1426 = vunpack.c.l.b16 %v1223
        %v1427 = vunpack.c.h.b16 %v1223
        %v1428 = vunpack.c.l.b16 %v1224
        %v1429 = vunpack.c.h.b16 %v1224
        %v1430 = vunpack.c.l.b16 %v1225
        %v1431 = vunpack.c.h.b16 %v1225
        %v1432 = vunpack.c.l.b16 %v1226
        %v1433 = vunpack.c.h.b16 %v1226
        %v1434 = vunpack.c.l.b16 %v1227
        %v1435 = vunpack.c.h.b16 %v1227
        %v1436 = vunpack.c.l.b16 %v1228
        %v1437 = vunpack.c.h.b16 %v1228
        %v1438 = vunpack.c.l.b16 %v1229
        %v1439 = vunpack.c.h.b16 %v1229
        %v1440 = vunpack.c.l.b16 %v1230
        %v1441 = vunpack.c.h.b16 %v1230
        %v1442 = vunpack.c.l.b16 %v1231
        %v1443 = vunpack.c.h.b16 %v1231
        %v1444 = vunpack.c.l.b16 %v1232
        %v1445 = vunpack.c.h.b16 %v1232
        %v1446 = vunpack.c.l.b16 %v1233
        %v1447 = vunpack.c.h.b16 %v1233
        %v1448 = vunpack.c.l.b16 %v1234
        %v1449 = vunpack.c.h.b16 %v1234
        %v1450 = vunpack.c.l.b16 %v1235
        %v1451 = vunpack.c.h.b16 %v1235
        %v1452 = vunpack.c.l.b16 %v1236
        %v1453 = vunpack.c.h.b16 %v1236
        %v1454 = vunpack.c.l.b16 %v1237
        %v1455 = vunpack.c.h.b16 %v1237
        %v1456 = vunpack.c.l.b16 %v1238
        %v1457 = vunpack.c.h.b16 %v1238
        %v1458 = vunpack.c.l.b16 %v1239
        %v1459 = vunpack.c.h.b16 %v1239
        %v1460 = vunpack.c.l.b16 %v1240
        %v1461 = vunpack.c.h.b16 %v1240
        %v1462 = vunpack.c.l.b16 %v1241
        %v1463 = vunpack.c.h.b16 %v1241
        %v1464 = vunpack.c.l.b16 %v1242
        %v1465 = vunpack.c.h.b16 %v1242
        %v1466 = vunpack.c.l.b16 %v1243
        %v1467 = vunpack.c.h.b16 %v1243
        %v1468 = vunpack.c.l.b16 %v1244
        %v1469 = vunpack.c.h.b16 %v1244
        %v1470 = vunpack.c.l.b16 %v1245
        %v1471 = vunpack.c.h.b16 %v1245
        %v1472 = vunpack.c.l.b16 %v1246
        %v1473 = vunpack.c.h.b16 %v1246
        %v1474 = vunpack.c.l.b16 %v1247
        %v1475 = vunpack.c.h.b16 %v1247
        %v1476 = vunpack.c.l.b16 %v1248
        %v1477 = vunpack.c.h.b16 %v1248
        %v1478 = vunpack.c.l.b16 %v1249
        %v1479 = vunpack.c.h.b16 %v1249
        %v1480 = vunpack.c.l.b16 %v1250
        %v1481 = vunpack.c.h.b16 %v1250
        %v1482 = vunpack.c.l.b16 %v1251
        %v1483 = vunpack.c.h.b16 %v1251
        %v1484 = vunpack.c.l.b16 %v1252
        %v1485 = vunpack.c.h.b16 %v1252
        %v1486 = vunpack.c.l.b16 %v1253
        %v1487 = vunpack.c.h.b16 %v1253
        %v1488 = vunpack.c.l.b16 %v1254
        %v1489 = vunpack.c.h.b16 %v1254
        %v1490 = vunpack.c.l.b16 %v1255
        %v1491 = vunpack.c.h.b16 %v1255
        %v1492 = vunpack.c.l.b16 %v1256
        %v1493 = vunpack.c.h.b16 %v1256
        %v1494 = vunpack.c.l.b16 %v1257
        %v1495 = vunpack.c.h.b16 %v1257
        %v1496 = vunpack.c.l.b16 %v1258
        %v1497 = vunpack.c.h.b16 %v1258
        %v1498 = vunpack.c.l.b16 %v1259
        %v1499 = vunpack.c.h.b16 %v1259
        %v1500 = vunpack.c.l.b16 %v1260
        %v1501 = vunpack.c.h.b16 %v1260
        %v1502 = vunpack.c.l.b16 %v1261
        %v1503 = vunpack.c.h.b16 %v1261
        %v1504 = vunpack.c.l.b16 %v1262
        %v1505 = vunpack.c.h.b16 %v1262
        %v1506 = vunpack.c.l.b16 %v1263
        %v1507 = vunpack.c.h.b16 %v1263
        %v1508 = vunpack.c.l.b16 %v1264
        %v1509 = vunpack.c.h.b16 %v1264
        %v1510 = vunpack.c.l.b16 %v1265
        %v1511 = vunpack.c.h.b16 %v1265
        %v1512 = vunpack.c.l.b16 %v1266
        %v1513 = vunpack.c.h.b16 %v1266
        %v1514 = vunpack.c.l.b16 %v1267
        %v1515 = vunpack.c.h.b16 %v1267
        %v1516 = vunpack.c.l.b16 %v1268
        %v1517 = vunpack.c.h.b16 %v1268
        %v1518 = vunpack.c.l.b16 %v1269
        %v1519 = vunpack.c.h.b16 %v1269
        %v1520 = vunpack.c.l.b16 %v1270
        %v1521 = vunpack.c.h.b16 %v1270
        %v1522 = vunpack.c.l.b16 %v1271
        %v1523 = vunpack.c.h.b16 %v1271
        %v1524 = vunpack.c.l.b16 %v1272
        %v1525 = vunpack.c.h.b16 %v1272
        %v1526 = vunpack.c.l.b16 %v1273
        %v1527 = vunpack.c.h.b16 %v1273
        %v1528 = vunpack.c.l.b16 %v1274
        %v1529 = vunpack.c.h.b16 %v1274
        %v1530 = vunpack.c.l.b16 %v1275
        %v1531 = vunpack.c.h.b16 %v1275
        %v1532 = vunpack.c.l.b16 %v1276
        %v1533 = vunpack.c.h.b16 %v1276
        %v1534 = vunpack.c.l.b16 %v1277
        %v1535 = vunpack.c.h.b16 %v1277
        %v1536 = vunpack.c.l.b16 %v1278
        %v1537 = vunpack.c.h.b16 %v1278
        %v1538 = vunpack.c.l.b16 %v1279
        %v1539 = vunpack.c.h.b16 %v1279
        %v1540 = vunpack.c.l.b16 %v1280
        %v1541 = vunpack.c.h.b16 %v1280
        %v1542 = vunpack.c.l.b16 %v1281
        %v1543 = vunpack.c.h.b16 %v1281
        %v1544 = vunpack.c.l.b16 %v1282
        %v1545 = vunpack.c.h.b16 %v1282
        %v1546 = vunpack.c.l.b16 %v1283
        %v1547 = vunpack.c.h.b16 %v1283
        %v1548 = vunpack.c.l.b16 %v1284
        %v1549 = vunpack.c.h.b16 %v1284
        %v1550 = vunpack.c.l.b16 %v1285
        %v1551 = vunpack.c.h.b16 %v1285
        %v1552 = vunpack.c.l.b16 %v1286
        %v1553 = vunpack.c.h.b16 %v1286
        %v1554 = vunpack.c.l.b16 %v1287
        %v1555 = vunpack.c.h.b16 %v1287
        %v1556 = vunpack.c.l.b16 %v1288
        %v1557 = vunpack.c.h.b16 %v1288
        %v1558 = vunpack.c.l.b16 %v1289
        %v1559 = vunpack.c.h.b16 %v1289
        %v1560 = vunpack.c.l.b16 %v1290
        %v1561 = vunpack.c.h.b16 %v1290
        %v1562 = vunpack.c.l.b16 %v1291
        %v1563 = vunpack.c.h.b16 %v1291
        %v1564 = vunpack.c.l.b16 %v1292
        %v1565 = vunpack.c.h.b16 %v1292
        %v1566 = vunpack.c.l.b16 %v1293
        %v1567 = vunpack.c.h.b16 %v1293
        %v1568 = vunpack.c.l.b16 %v1294
        %v1569 = vunpack.c.h.b16 %v1294
        %v1570 = vunpack.c.l.b16 %v1295
        %v1571 = vunpack.c.h.b16 %v1295
        %v1572 = vunpack.c.l.b16 %v1296
        %v1573 = vunpack.c.h.b16 %v1296
        %v1574 = vunpack.c.l.b16 %v1297
        %v1575 = vunpack.c.h.b16 %v1297
        %v1576 = vunpack.c.l.b16 %v1298
        %v1577 = vunpack.c.h.b16 %v1298
        %v1578 = vunpack.c.l.b16 %v1299
        %v1579 = vunpack.c.h.b16 %v1299
        %v1580 = vunpack.c.l.b16 %v1300
        %v1581 = vunpack.c.h.b16 %v1300
        %v1582 = vunpack.c.l.b16 %v1301
        %v1583 = vunpack.c.h.b16 %v1301
        %v1584 = vunpack.c.l.b16 %v1302
        %v1585 = vunpack.c.h.b16 %v1302
        %v1586 = vunpack.c.l.b16 %v1303
        %v1587 = vunpack.c.h.b16 %v1303
        %v1588 = vunpack.c.l.b16 %v1304
        %v1589 = vunpack.c.h.b16 %v1304
        %v1590 = vunpack.c.l.b16 %v1305
        %v1591 = vunpack.c.h.b16 %v1305
        %v1592 = vunpack.c.l.b16 %v1306
        %v1593 = vunpack.c.h.b16 %v1306
        %v1594 = vunpack.c.l.b16 %v1307
        %v1595 = vunpack.c.h.b16 %v1307
        %v1596 = vpack.c.b16 %v1410, %v1404
        %v1597 = vpack.c.b16 %v1411, %v1405
        %v1598 = vpack.c.b16 %v1412, %v1406
        %v1599 = vpack.c.b16 %v1413, %v1407
        %v1600 = vpack.c.b16 %v1414, %v1408
        %v1601 = vpack.c.b16 %v1415, %v1409
        %v1602 = vpack.c.b16 %v1422, %v1416
        %v1603 = vpack.c.b16 %v1423, %v1417
        %v1604 = vpack.c.b16 %v1424, %v1418
        %v1605 = vpack.c.b16 %v1425, %v1419
        %v1606 = vpack.c.b16 %v1426, %v1420
        %v1607 = vpack.c.b16 %v1427, %v1421
        %v1608 = vpack.c.b16 %v1434, %v1428
        %v1609 = vpack.c.b16 %v1435, %v1429
        %v1610 = vpack.c.b16 %v1436, %v1430
        %v1611 = vpack.c.b16 %v1437, %v1431
        %v1612 = vpack.c.b16 %v1438, %v1432
        %v1613 = vpack.c.b16 %v1439, %v1433
        %v1614 = vpack.c.b16 %v1446, %v1440
        %v1615 = vpack.c.b16 %v1447, %v1441
        %v1616 = vpack.c.b16 %v1448, %v1442
        %v1617 = vpack.c.b16 %v1449, %v1443
        %v1618 = vpack.c.b16 %v1450, %v1444
        %v1619 = vpack.c.b16 %v1451, %v1445
        %v1620 = vpack.c.b16 %v1458, %v1452
        %v1621 = vpack.c.b16 %v1459, %v1453
        %v1622 = vpack.c.b16 %v1460, %v1454
        %v1623 = vpack.c.b16 %v1461, %v1455
        %v1624 = vpack.c.b16 %v1462, %v1456
        %v1625 = vpack.c.b16 %v1463, %v1457
        %v1626 = vpack.c.b16 %v1470, %v1464
        %v1627 = vpack.c.b16 %v1471, %v1465
        %v1628 = vpack.c.b16 %v1472, %v1466
        %v1629 = vpack.c.b16 %v1473, %v1467
        %v1630 = vpack.c.b16 %v1474, %v1468
        %v1631 = vpack.c.b16 %v1475, %v1469
        %v1632 = vpack.c.b16 %v1482, %v1476
        %v1633 = vpack.c.b16 %v1483, %v1477
        %v1634 = vpack.c.b16 %v1484, %v1478
        %v1635 = vpack.c.b16 %v1485, %v1479
        %v1636 = vpack.c.b16 %v1486, %v1480
        %v1637 = vpack.c.b16 %v1487, %v1481
        %v1638 = vpack.c.b16 %v1494, %v1488
        %v1639 = vpack.c.b16 %v1495, %v1489
        %v1640 = vpack.c.b16 %v1496, %v1490
        %v1641 = vpack.c.b16 %v1497, %v1491
        %v1642 = vpack.c.b16 %v1498, %v1492
        %v1643 = vpack.c.b16 %v1499, %v1493
        %v1644 = vpack.c.b16 %v1506, %v1500
        %v1645 = vpack.c.b16 %v1507, %v1501
        %v1646 = vpack.c.b16 %v1508, %v1502
        %v1647 = vpack.c.b16 %v1509, %v1503
        %v1648 = vpack.c.b16 %v1510, %v1504
        %v1649 = vpack.c.b16 %v1511, %v1505
        %v1650 = vpack.c.b16 %v1518, %v1512
        %v1651 = vpack.c.b16 %v1519, %v1513
        %v1652 = vpack.c.b16 %v1520, %v1514
        %v1653 = vpack.c.b16 %v1521, %v1515
        %v1654 = vpack.c.b16 %v1522, %v1516
        %v1655 = vpack.c.b16 %v1523, %v1517
        %v1656 = vpack.c.b16 %v1530, %v1524
        %v1657 = vpack.c.b16 %v1531, %v1525
        %v1658 = vpack.c.b16 %v1532, %v1526
        %v1659 = vpack.c.b16 %v1533, %v1527
        %v1660 = vpack.c.b16 %v1534, %v1528
        %v1661 = vpack.c.b16 %v1535, %v1529
        %v1662 = vpack.c.b16 %v1542, %v1536
        %v1663 = vpack.c.b16 %v1543, %v1537
        %v1664 = vpack.c.b16 %v1544, %v1538
        %v1665 = vpack.c.b16 %v1545, %v1539
        %v1666 = vpack.c.b16 %v1546, %v1540
        %v1667 = vpack.c.b16 %v1547, %v1541
        %v1668 = vpack.c.b16 %v1554, %v1548
        %v1669 = vpack.c.b16 %v1555, %v1549
        %v1670 = vpack.c.b16 %v1556, %v1550
        %v1671 = vpack.c.b16 %v1557, %v1551
        %v1672 = vpack.c.b16 %v1558, %v1552
        %v1673 = vpack.c.b16 %v1559, %v1553
        %v1674 = vpack.c.b16 %v1566, %v1560
        %v1675 = vpack.c.b16 %v1567, %v1561
        %v1676 = vpack.c.b16 %v1568, %v1562
        %v1677 = vpack.c.b16 %v1569, %v1563
        %v1678 = vpack.c.b16 %v1570, %v1564
        %v1679 = vpack.c.b16 %v1571, %v1565
        %v1680 = vpack.c.b16 %v1578, %v1572
        %v1681 = vpack.c.b16 %v1579, %v1573
        %v1682 = vpack.c.b16 %v1580, %v1574
        %v1683 = vpack.c.b16 %v1581, %v1575
        %v1684 = vpack.c.b16 %v1582, %v1576
        %v1685 = vpack.c.b16 %v1583, %v1577
        %v1686 = vpack.c.b16 %v1590, %v1584
        %v1687 = vpack.c.b16 %v1591, %v1585
        %v1688 = vpack.c.b16 %v1592, %v1586
        %v1689 = vpack.c.b16 %v1593, %v1587
        %v1690 = vpack.c.b16 %v1594, %v1588
        %v1691 = vpack.c.b16 %v1595, %v1589
        %1788 = vmatprep.subr.bf16.mxu0 %v1597
        %1789 = vmatpush1.bf16.msra.mxu0 %v1596
        %1790 = vmatprep.subr.bf16.mxu0 %v1603
        %1791 = vmatpush1.bf16.msra.mxu0 %v1602
        %1792 = vmatprep.subr.bf16.mxu0 %v1609
        %1793 = vmatpush1.bf16.msra.mxu0 %v1608
        %1794 = vmatprep.subr.bf16.mxu0 %v1615
        %1795 = vmatpush1.bf16.msra.mxu0 %v1614
        %1796 = vmatprep.subr.bf16.mxu0 %v1621
        %1797 = vmatpush1.bf16.msra.mxu0 %v1620
        %1798 = vmatprep.subr.bf16.mxu0 %v1627
        %1799 = vmatpush1.bf16.msra.mxu0 %v1626
        %1800 = vmatprep.subr.bf16.mxu0 %v1633
        %1801 = vmatpush1.bf16.msra.mxu0 %v1632
        %1802 = vmatprep.subr.bf16.mxu0 %v1639
        %1803 = vmatpush1.bf16.msra.mxu0 %v1638
        %1804 = vmatprep.subr.bf16.mxu0 %v1645
        %1805 = vmatpush1.bf16.msra.mxu0 %v1644
        %1806 = vmatprep.subr.bf16.mxu0 %v1651
        %1807 = vmatpush1.bf16.msra.mxu0 %v1650
        %1808 = vmatprep.subr.bf16.mxu0 %v1657
        %1809 = vmatpush1.bf16.msra.mxu0 %v1656
        %1810 = vmatprep.subr.bf16.mxu0 %v1663
        %1811 = vmatpush1.bf16.msra.mxu0 %v1662
        %1812 = vmatprep.subr.bf16.mxu0 %v1669
        %1813 = vmatpush1.bf16.msra.mxu0 %v1668
        %1814 = vmatprep.subr.bf16.mxu0 %v1675
        %1815 = vmatpush1.bf16.msra.mxu0 %v1674
        %1816 = vmatprep.subr.bf16.mxu0 %v1681
        %1817 = vmatpush1.bf16.msra.mxu0 %v1680
        %1818 = vmatprep.subr.bf16.mxu0 %v1687
        %1819 = vmatpush1.bf16.msra.mxu0 %v1686
        %1820 = vmatprep.mubr.bf16.mxu0 %v1211
        %1821 = vmatmul.mubr.bf16.gmra.mrb[0].mxu0 %v1210
        %v1822 = vpop.f32.mrb[0].mxu0
        %v1823 = vadd.f32 %v504, %v1822
        %v1824 = vpop.f32.mrb[0].mxu0
        %v1825 = vadd.f32 %v508, %v1824
        %v1826 = vpop.f32.mrb[0].mxu0
        %v1827 = vpop.f32.mrb[0].mxu0
        %1828 = vdwg.mxu0
        %1829 = vmatprep.subr.bf16.mxu0 %v1599
        %1830 = vmatpush1.bf16.msra.mxu0 %v1598
        %1831 = vmatprep.subr.bf16.mxu0 %v1605
        %1832 = vmatpush1.bf16.msra.mxu0 %v1604
        %1833 = vmatprep.subr.bf16.mxu0 %v1611
        %1834 = vmatpush1.bf16.msra.mxu0 %v1610
        %1835 = vmatprep.subr.bf16.mxu0 %v1617
        %1836 = vmatpush1.bf16.msra.mxu0 %v1616
        %1837 = vmatprep.subr.bf16.mxu0 %v1623
        %1838 = vmatpush1.bf16.msra.mxu0 %v1622
        %1839 = vmatprep.subr.bf16.mxu0 %v1629
        %1840 = vmatpush1.bf16.msra.mxu0 %v1628
        %1841 = vmatprep.subr.bf16.mxu0 %v1635
        %1842 = vmatpush1.bf16.msra.mxu0 %v1634
        %1843 = vmatprep.subr.bf16.mxu0 %v1641
        %1844 = vmatpush1.bf16.msra.mxu0 %v1640
        %1845 = vmatprep.subr.bf16.mxu0 %v1647
        %1846 = vmatpush1.bf16.msra.mxu0 %v1646
        %1847 = vmatprep.subr.bf16.mxu0 %v1653
        %1848 = vmatpush1.bf16.msra.mxu0 %v1652
        %1849 = vmatprep.subr.bf16.mxu0 %v1659
        %1850 = vmatpush1.bf16.msra.mxu0 %v1658
        %1851 = vmatprep.subr.bf16.mxu0 %v1665
        %1852 = vmatpush1.bf16.msra.mxu0 %v1664
        %1853 = vmatprep.subr.bf16.mxu0 %v1671
        %1854 = vmatpush1.bf16.msra.mxu0 %v1670
        %1855 = vmatprep.subr.bf16.mxu0 %v1677
        %1856 = vmatpush1.bf16.msra.mxu0 %v1676
        %1857 = vmatprep.subr.bf16.mxu0 %v1683
        %1858 = vmatpush1.bf16.msra.mxu0 %v1682
        %1859 = vmatprep.subr.bf16.mxu0 %v1689
        %1860 = vmatpush1.bf16.msra.mxu0 %v1688
        %1861 = vmatprep.mubr.bf16.mxu0 %v1211
        %1862 = vmatmul.mubr.bf16.gmra.mrb[0].mxu0 %v1210
        %v1863 = vpop.f32.mrb[0].mxu0
        %v1864 = vadd.f32 %v512, %v1863
        %v1865 = vpop.f32.mrb[0].mxu0
        %v1866 = vadd.f32 %v516, %v1865
        %v1867 = vpop.f32.mrb[0].mxu0
        %v1868 = vpop.f32.mrb[0].mxu0
        %1869 = vdwg.mxu0
        %1870 = vmatprep.subr.bf16.mxu0 %v1601
        %1871 = vmatpush1.bf16.msra.mxu0 %v1600
        %1872 = vmatprep.subr.bf16.mxu0 %v1607
        %1873 = vmatpush1.bf16.msra.mxu0 %v1606
        %1874 = vmatprep.subr.bf16.mxu0 %v1613
        %1875 = vmatpush1.bf16.msra.mxu0 %v1612
        %1876 = vmatprep.subr.bf16.mxu0 %v1619
        %1877 = vmatpush1.bf16.msra.mxu0 %v1618
        %1878 = vmatprep.subr.bf16.mxu0 %v1625
        %1879 = vmatpush1.bf16.msra.mxu0 %v1624
        %1880 = vmatprep.subr.bf16.mxu0 %v1631
        %1881 = vmatpush1.bf16.msra.mxu0 %v1630
        %1882 = vmatprep.subr.bf16.mxu0 %v1637
        %1883 = vmatpush1.bf16.msra.mxu0 %v1636
        %1884 = vmatprep.subr.bf16.mxu0 %v1643
        %1885 = vmatpush1.bf16.msra.mxu0 %v1642
        %1886 = vmatprep.subr.bf16.mxu0 %v1649
        %1887 = vmatpush1.bf16.msra.mxu0 %v1648
        %1888 = vmatprep.subr.bf16.mxu0 %v1655
        %1889 = vmatpush1.bf16.msra.mxu0 %v1654
        %1890 = vmatprep.subr.bf16.mxu0 %v1661
        %1891 = vmatpush1.bf16.msra.mxu0 %v1660
        %1892 = vmatprep.subr.bf16.mxu0 %v1667
        %1893 = vmatpush1.bf16.msra.mxu0 %v1666
        %1894 = vmatprep.subr.bf16.mxu0 %v1673
        %1895 = vmatpush1.bf16.msra.mxu0 %v1672
        %1896 = vmatprep.subr.bf16.mxu0 %v1679
        %1897 = vmatpush1.bf16.msra.mxu0 %v1678
        %1898 = vmatprep.subr.bf16.mxu0 %v1685
        %1899 = vmatpush1.bf16.msra.mxu0 %v1684
        %1900 = vmatprep.subr.bf16.mxu0 %v1691
        %1901 = vmatpush1.bf16.msra.mxu0 %v1690
        %1902 = vmatprep.mubr.bf16.mxu0 %v1211
        %1903 = vmatmul.mubr.bf16.gmra.mrb[0].mxu0 %v1210
        %v1904 = vpop.f32.mrb[0].mxu0
        %v1905 = vadd.f32 %v520, %v1904
        %v1906 = vpop.f32.mrb[0].mxu0
        %v1907 = vadd.f32 %v524, %v1906
        %v1908 = vpop.f32.mrb[0].mxu0
        %v1909 = vpop.f32.mrb[0].mxu0
        %1910 = vdwg.mxu0
        %s1911 = scalar_lea.vmem %s363, 12
        %v1912 = vld [vmem:[%s1911] sm:$0xff]
        %v1913 = vld [vmem:[%s1911 + $0x8] sm:$0xf]
        %v1914 = vunpack.c.l.bf16 %v1912
        %v1915 = vunpack.c.h.bf16 %v1912
        %v1916 = vunpack.c.l.bf16 %v1913
        %s1917 = scalar_lea.vmem %s371, 72
        %v1918 = vld [vmem:[%s1917] sm:$0xff]
        %v1919 = vld [vmem:[%s1917 + $0x8] sm:$0xf]
        %v1920 = vunpack.c.l.bf16 %v1918
        %v1921 = vunpack.c.h.bf16 %v1918
        %v1922 = vunpack.c.l.bf16 %v1919
        %v1923 = vadd.f32 %v1914, %v1823
        %v1924 = vxor.u32 %v1923, 2147483648
        %v1925 = vmul.f32 %v1924, 1.442695
        %v1926 = vpow.pop %v1925
        %v1927 = vadd.f32 %v1926, 1.0
        %v1928 = vrcp.pop %v1927
        %v1929 = vmul.f32 1.0, %v1928
        %v1930 = vadd.f32 %v1915, %v1825
        %v1931 = vxor.u32 %v1930, 2147483648
        %v1932 = vmul.f32 %v1931, 1.442695
        %v1933 = vpow.pop %v1932
        %v1934 = vadd.f32 %v1933, 1.0
        %v1935 = vrcp.pop %v1934
        %v1936 = vmul.f32 1.0, %v1935
        %v1937 = vmul.f32 %v1929, %v1864
        %v1938 = vadd.f32 %v1916, %v1937
        %v1939 = vtanh.pop %v1938
        %v1940 = vsub.f32 1.0, %v1936
        %v1941 = vmul.f32 %v1940, %v1939
        %v1942 = vmul.f32 %v1936, %v1196
        %v1943 = vadd.f32 %v1941, %v1942
        %v1944 = vadd.f32 %v1920, %v1866
        %v1945 = vxor.u32 %v1944, 2147483648
        %v1946 = vmul.f32 %v1945, 1.442695
        %v1947 = vpow.pop %v1946
        %v1948 = vadd.f32 %v1947, 1.0
        %v1949 = vrcp.pop %v1948
        %v1950 = vmul.f32 1.0, %v1949
        %v1951 = vadd.f32 %v1921, %v1905
        %v1952 = vxor.u32 %v1951, 2147483648
        %v1953 = vmul.f32 %v1952, 1.442695
        %v1954 = vpow.pop %v1953
        %v1955 = vadd.f32 %v1954, 1.0
        %v1956 = vrcp.pop %v1955
        %v1957 = vmul.f32 1.0, %v1956
        %v1958 = vmul.f32 %v1950, %v1907
        %v1959 = vadd.f32 %v1922, %v1958
        %v1960 = vtanh.pop %v1959
        %v1961 = vsub.f32 1.0, %v1957
        %v1962 = vmul.f32 %v1961, %v1960
        %v1963 = vmul.f32 %v1957, %v1202
        %v1964 = vadd.f32 %v1962, %v1963
        %v1965 = vstv %s1208
        %vm1966 = vcmp.lt.s32.totalorder %v1965, %v394
        %v1967 = vstv %s1209
        %vm1968 = vcmp.lt.s32.totalorder %v1967, %v394
        %v1969 = vsel %vm1966, 1, 0
        %1970 = vset.pattern.permute.xlu0 0
        %1971 = vperm.xlu0 %1970, %v1969
        %v1972 = vpop.permute.xlu0 %1971
        %vm1973 = vcmp.eq.s32.totalorder %v1972, 1
        %v1974 = vsel %vm1973, %v1943, %v1196
        %v1975 = vsel %vm1968, 1, 0
        %1976 = vset.pattern.permute.xlu0 0
        %1977 = vperm.xlu0 %1976, %v1975
        %v1978 = vpop.permute.xlu0 %1977
        %vm1979 = vcmp.eq.s32.totalorder %v1978, 1
        %v1980 = vsel %vm1979, %v1964, %v1202
        %v1981 = vsel %vm1973, %v1943, 0.0
        %s1982 = scalar_lea.vmem %s378, 8
        %1983 = vst [vmem:[%s1982] sm:$0xff] %v1981
        %v1984 = vsel %vm1979, %v1964, 0.0
        %s1985 = scalar_lea.vmem %s385, 48
        %1986 = vst [vmem:[%s1985] sm:$0xff] %v1984
        %s1987 = sadd.s32 %s398, 2
        %s1988 = sadd.s32 %s400, 5
        %v1989 = vpack.c.bf16 %v1974, %v1974
        %v1990 = vpack.c.bf16 %v1980, %v1980
        %v1991 = vld [vmem:[%s3] sm:$0xff]
        %v1992 = vld [vmem:[%s3 + $0x8] sm:$0xff]
        %v1993 = vld [vmem:[%s3 + $0x10] sm:$0xff]
        %v1994 = vld [vmem:[%s3 + $0x18] sm:$0xff]
        %v1995 = vld [vmem:[%s3 + $0x20] sm:$0xff]
        %v1996 = vld [vmem:[%s3 + $0x28] sm:$0xff]
        %v1997 = vld [vmem:[%s3 + $0x30] sm:$0xff]
        %v1998 = vld [vmem:[%s3 + $0x38] sm:$0xff]
        %v1999 = vld [vmem:[%s3 + $0x40] sm:$0xff]
        %v2000 = vld [vmem:[%s3 + $0x48] sm:$0xff]
        %v2001 = vld [vmem:[%s3 + $0x50] sm:$0xff]
        %v2002 = vld [vmem:[%s3 + $0x58] sm:$0xff]
        %v2003 = vld [vmem:[%s3 + $0x60] sm:$0xff]
        %v2004 = vld [vmem:[%s3 + $0x68] sm:$0xff]
        %v2005 = vld [vmem:[%s3 + $0x70] sm:$0xff]
        %v2006 = vld [vmem:[%s3 + $0x78] sm:$0xff]
        %v2007 = vld [vmem:[%s3 + $0x80] sm:$0xff]
        %v2008 = vld [vmem:[%s3 + $0x88] sm:$0xff]
        %v2009 = vld [vmem:[%s3 + $0x90] sm:$0xff]
        %v2010 = vld [vmem:[%s3 + $0x98] sm:$0xff]
        %v2011 = vld [vmem:[%s3 + $0xa0] sm:$0xff]
        %v2012 = vld [vmem:[%s3 + $0xa8] sm:$0xff]
        %v2013 = vld [vmem:[%s3 + $0xb0] sm:$0xff]
        %v2014 = vld [vmem:[%s3 + $0xb8] sm:$0xff]
        %v2015 = vld [vmem:[%s3 + $0xc0] sm:$0xff]
        %v2016 = vld [vmem:[%s3 + $0xc8] sm:$0xff]
        %v2017 = vld [vmem:[%s3 + $0xd0] sm:$0xff]
        %v2018 = vld [vmem:[%s3 + $0xd8] sm:$0xff]
        %v2019 = vld [vmem:[%s3 + $0xe0] sm:$0xff]
        %v2020 = vld [vmem:[%s3 + $0xe8] sm:$0xff]
        %v2021 = vld [vmem:[%s3 + $0xf0] sm:$0xff]
        %v2022 = vld [vmem:[%s3 + $0xf8] sm:$0xff]
        %v2023 = vld [vmem:[%s3 + $0x100] sm:$0xff]
        %v2024 = vld [vmem:[%s3 + $0x108] sm:$0xff]
        %v2025 = vld [vmem:[%s3 + $0x110] sm:$0xff]
        %v2026 = vld [vmem:[%s3 + $0x118] sm:$0xff]
        %v2027 = vld [vmem:[%s3 + $0x120] sm:$0xff]
        %v2028 = vld [vmem:[%s3 + $0x128] sm:$0xff]
        %v2029 = vld [vmem:[%s3 + $0x130] sm:$0xff]
        %v2030 = vld [vmem:[%s3 + $0x138] sm:$0xff]
        %v2031 = vld [vmem:[%s3 + $0x140] sm:$0xff]
        %v2032 = vld [vmem:[%s3 + $0x148] sm:$0xff]
        %v2033 = vld [vmem:[%s3 + $0x150] sm:$0xff]
        %v2034 = vld [vmem:[%s3 + $0x158] sm:$0xff]
        %v2035 = vld [vmem:[%s3 + $0x160] sm:$0xff]
        %v2036 = vld [vmem:[%s3 + $0x168] sm:$0xff]
        %v2037 = vld [vmem:[%s3 + $0x170] sm:$0xff]
        %v2038 = vld [vmem:[%s3 + $0x178] sm:$0xff]
        %v2039 = vld [vmem:[%s3 + $0x180] sm:$0xff]
        %v2040 = vld [vmem:[%s3 + $0x188] sm:$0xff]
        %v2041 = vld [vmem:[%s3 + $0x190] sm:$0xff]
        %v2042 = vld [vmem:[%s3 + $0x198] sm:$0xff]
        %v2043 = vld [vmem:[%s3 + $0x1a0] sm:$0xff]
        %v2044 = vld [vmem:[%s3 + $0x1a8] sm:$0xff]
        %v2045 = vld [vmem:[%s3 + $0x1b0] sm:$0xff]
        %v2046 = vld [vmem:[%s3 + $0x1b8] sm:$0xff]
        %v2047 = vld [vmem:[%s3 + $0x1c0] sm:$0xff]
        %v2048 = vld [vmem:[%s3 + $0x1c8] sm:$0xff]
        %v2049 = vld [vmem:[%s3 + $0x1d0] sm:$0xff]
        %v2050 = vld [vmem:[%s3 + $0x1d8] sm:$0xff]
        %v2051 = vld [vmem:[%s3 + $0x1e0] sm:$0xff]
        %v2052 = vld [vmem:[%s3 + $0x1e8] sm:$0xff]
        %v2053 = vld [vmem:[%s3 + $0x1f0] sm:$0xff]
        %v2054 = vld [vmem:[%s3 + $0x1f8] sm:$0xff]
        %v2055 = vld [vmem:[%s3 + $0x200] sm:$0xff]
        %v2056 = vld [vmem:[%s3 + $0x208] sm:$0xff]
        %v2057 = vld [vmem:[%s3 + $0x210] sm:$0xff]
        %v2058 = vld [vmem:[%s3 + $0x218] sm:$0xff]
        %v2059 = vld [vmem:[%s3 + $0x220] sm:$0xff]
        %v2060 = vld [vmem:[%s3 + $0x228] sm:$0xff]
        %v2061 = vld [vmem:[%s3 + $0x230] sm:$0xff]
        %v2062 = vld [vmem:[%s3 + $0x238] sm:$0xff]
        %v2063 = vld [vmem:[%s3 + $0x240] sm:$0xff]
        %v2064 = vld [vmem:[%s3 + $0x248] sm:$0xff]
        %v2065 = vld [vmem:[%s3 + $0x250] sm:$0xff]
        %v2066 = vld [vmem:[%s3 + $0x258] sm:$0xff]
        %v2067 = vld [vmem:[%s3 + $0x260] sm:$0xff]
        %v2068 = vld [vmem:[%s3 + $0x268] sm:$0xff]
        %v2069 = vld [vmem:[%s3 + $0x270] sm:$0xff]
        %v2070 = vld [vmem:[%s3 + $0x278] sm:$0xff]
        %v2071 = vld [vmem:[%s3 + $0x280] sm:$0xff]
        %v2072 = vld [vmem:[%s3 + $0x288] sm:$0xff]
        %v2073 = vld [vmem:[%s3 + $0x290] sm:$0xff]
        %v2074 = vld [vmem:[%s3 + $0x298] sm:$0xff]
        %v2075 = vld [vmem:[%s3 + $0x2a0] sm:$0xff]
        %v2076 = vld [vmem:[%s3 + $0x2a8] sm:$0xff]
        %v2077 = vld [vmem:[%s3 + $0x2b0] sm:$0xff]
        %v2078 = vld [vmem:[%s3 + $0x2b8] sm:$0xff]
        %v2079 = vld [vmem:[%s3 + $0x2c0] sm:$0xff]
        %v2080 = vld [vmem:[%s3 + $0x2c8] sm:$0xff]
        %v2081 = vld [vmem:[%s3 + $0x2d0] sm:$0xff]
        %v2082 = vld [vmem:[%s3 + $0x2d8] sm:$0xff]
        %v2083 = vld [vmem:[%s3 + $0x2e0] sm:$0xff]
        %v2084 = vld [vmem:[%s3 + $0x2e8] sm:$0xff]
        %v2085 = vld [vmem:[%s3 + $0x2f0] sm:$0xff]
        %v2086 = vld [vmem:[%s3 + $0x2f8] sm:$0xff]
        %v2183 = vunpack.c.l.b16 %v1991
        %v2184 = vunpack.c.h.b16 %v1991
        %v2185 = vunpack.c.l.b16 %v1992
        %v2186 = vunpack.c.h.b16 %v1992
        %v2187 = vunpack.c.l.b16 %v1993
        %v2188 = vunpack.c.h.b16 %v1993
        %v2189 = vunpack.c.l.b16 %v1994
        %v2190 = vunpack.c.h.b16 %v1994
        %v2191 = vunpack.c.l.b16 %v1995
        %v2192 = vunpack.c.h.b16 %v1995
        %v2193 = vunpack.c.l.b16 %v1996
        %v2194 = vunpack.c.h.b16 %v1996
        %v2195 = vunpack.c.l.b16 %v1997
        %v2196 = vunpack.c.h.b16 %v1997
        %v2197 = vunpack.c.l.b16 %v1998
        %v2198 = vunpack.c.h.b16 %v1998
        %v2199 = vunpack.c.l.b16 %v1999
        %v2200 = vunpack.c.h.b16 %v1999
        %v2201 = vunpack.c.l.b16 %v2000
        %v2202 = vunpack.c.h.b16 %v2000
        %v2203 = vunpack.c.l.b16 %v2001
        %v2204 = vunpack.c.h.b16 %v2001
        %v2205 = vunpack.c.l.b16 %v2002
        %v2206 = vunpack.c.h.b16 %v2002
        %v2207 = vunpack.c.l.b16 %v2003
        %v2208 = vunpack.c.h.b16 %v2003
        %v2209 = vunpack.c.l.b16 %v2004
        %v2210 = vunpack.c.h.b16 %v2004
        %v2211 = vunpack.c.l.b16 %v2005
        %v2212 = vunpack.c.h.b16 %v2005
        %v2213 = vunpack.c.l.b16 %v2006
        %v2214 = vunpack.c.h.b16 %v2006
        %v2215 = vunpack.c.l.b16 %v2007
        %v2216 = vunpack.c.h.b16 %v2007
        %v2217 = vunpack.c.l.b16 %v2008
        %v2218 = vunpack.c.h.b16 %v2008
        %v2219 = vunpack.c.l.b16 %v2009
        %v2220 = vunpack.c.h.b16 %v2009
        %v2221 = vunpack.c.l.b16 %v2010
        %v2222 = vunpack.c.h.b16 %v2010
        %v2223 = vunpack.c.l.b16 %v2011
        %v2224 = vunpack.c.h.b16 %v2011
        %v2225 = vunpack.c.l.b16 %v2012
        %v2226 = vunpack.c.h.b16 %v2012
        %v2227 = vunpack.c.l.b16 %v2013
        %v2228 = vunpack.c.h.b16 %v2013
        %v2229 = vunpack.c.l.b16 %v2014
        %v2230 = vunpack.c.h.b16 %v2014
        %v2231 = vunpack.c.l.b16 %v2015
        %v2232 = vunpack.c.h.b16 %v2015
        %v2233 = vunpack.c.l.b16 %v2016
        %v2234 = vunpack.c.h.b16 %v2016
        %v2235 = vunpack.c.l.b16 %v2017
        %v2236 = vunpack.c.h.b16 %v2017
        %v2237 = vunpack.c.l.b16 %v2018
        %v2238 = vunpack.c.h.b16 %v2018
        %v2239 = vunpack.c.l.b16 %v2019
        %v2240 = vunpack.c.h.b16 %v2019
        %v2241 = vunpack.c.l.b16 %v2020
        %v2242 = vunpack.c.h.b16 %v2020
        %v2243 = vunpack.c.l.b16 %v2021
        %v2244 = vunpack.c.h.b16 %v2021
        %v2245 = vunpack.c.l.b16 %v2022
        %v2246 = vunpack.c.h.b16 %v2022
        %v2247 = vunpack.c.l.b16 %v2023
        %v2248 = vunpack.c.h.b16 %v2023
        %v2249 = vunpack.c.l.b16 %v2024
        %v2250 = vunpack.c.h.b16 %v2024
        %v2251 = vunpack.c.l.b16 %v2025
        %v2252 = vunpack.c.h.b16 %v2025
        %v2253 = vunpack.c.l.b16 %v2026
        %v2254 = vunpack.c.h.b16 %v2026
        %v2255 = vunpack.c.l.b16 %v2027
        %v2256 = vunpack.c.h.b16 %v2027
        %v2257 = vunpack.c.l.b16 %v2028
        %v2258 = vunpack.c.h.b16 %v2028
        %v2259 = vunpack.c.l.b16 %v2029
        %v2260 = vunpack.c.h.b16 %v2029
        %v2261 = vunpack.c.l.b16 %v2030
        %v2262 = vunpack.c.h.b16 %v2030
        %v2263 = vunpack.c.l.b16 %v2031
        %v2264 = vunpack.c.h.b16 %v2031
        %v2265 = vunpack.c.l.b16 %v2032
        %v2266 = vunpack.c.h.b16 %v2032
        %v2267 = vunpack.c.l.b16 %v2033
        %v2268 = vunpack.c.h.b16 %v2033
        %v2269 = vunpack.c.l.b16 %v2034
        %v2270 = vunpack.c.h.b16 %v2034
        %v2271 = vunpack.c.l.b16 %v2035
        %v2272 = vunpack.c.h.b16 %v2035
        %v2273 = vunpack.c.l.b16 %v2036
        %v2274 = vunpack.c.h.b16 %v2036
        %v2275 = vunpack.c.l.b16 %v2037
        %v2276 = vunpack.c.h.b16 %v2037
        %v2277 = vunpack.c.l.b16 %v2038
        %v2278 = vunpack.c.h.b16 %v2038
        %v2279 = vunpack.c.l.b16 %v2039
        %v2280 = vunpack.c.h.b16 %v2039
        %v2281 = vunpack.c.l.b16 %v2040
        %v2282 = vunpack.c.h.b16 %v2040
        %v2283 = vunpack.c.l.b16 %v2041
        %v2284 = vunpack.c.h.b16 %v2041
        %v2285 = vunpack.c.l.b16 %v2042
        %v2286 = vunpack.c.h.b16 %v2042
        %v2287 = vunpack.c.l.b16 %v2043
        %v2288 = vunpack.c.h.b16 %v2043
        %v2289 = vunpack.c.l.b16 %v2044
        %v2290 = vunpack.c.h.b16 %v2044
        %v2291 = vunpack.c.l.b16 %v2045
        %v2292 = vunpack.c.h.b16 %v2045
        %v2293 = vunpack.c.l.b16 %v2046
        %v2294 = vunpack.c.h.b16 %v2046
        %v2295 = vunpack.c.l.b16 %v2047
        %v2296 = vunpack.c.h.b16 %v2047
        %v2297 = vunpack.c.l.b16 %v2048
        %v2298 = vunpack.c.h.b16 %v2048
        %v2299 = vunpack.c.l.b16 %v2049
        %v2300 = vunpack.c.h.b16 %v2049
        %v2301 = vunpack.c.l.b16 %v2050
        %v2302 = vunpack.c.h.b16 %v2050
        %v2303 = vunpack.c.l.b16 %v2051
        %v2304 = vunpack.c.h.b16 %v2051
        %v2305 = vunpack.c.l.b16 %v2052
        %v2306 = vunpack.c.h.b16 %v2052
        %v2307 = vunpack.c.l.b16 %v2053
        %v2308 = vunpack.c.h.b16 %v2053
        %v2309 = vunpack.c.l.b16 %v2054
        %v2310 = vunpack.c.h.b16 %v2054
        %v2311 = vunpack.c.l.b16 %v2055
        %v2312 = vunpack.c.h.b16 %v2055
        %v2313 = vunpack.c.l.b16 %v2056
        %v2314 = vunpack.c.h.b16 %v2056
        %v2315 = vunpack.c.l.b16 %v2057
        %v2316 = vunpack.c.h.b16 %v2057
        %v2317 = vunpack.c.l.b16 %v2058
        %v2318 = vunpack.c.h.b16 %v2058
        %v2319 = vunpack.c.l.b16 %v2059
        %v2320 = vunpack.c.h.b16 %v2059
        %v2321 = vunpack.c.l.b16 %v2060
        %v2322 = vunpack.c.h.b16 %v2060
        %v2323 = vunpack.c.l.b16 %v2061
        %v2324 = vunpack.c.h.b16 %v2061
        %v2325 = vunpack.c.l.b16 %v2062
        %v2326 = vunpack.c.h.b16 %v2062
        %v2327 = vunpack.c.l.b16 %v2063
        %v2328 = vunpack.c.h.b16 %v2063
        %v2329 = vunpack.c.l.b16 %v2064
        %v2330 = vunpack.c.h.b16 %v2064
        %v2331 = vunpack.c.l.b16 %v2065
        %v2332 = vunpack.c.h.b16 %v2065
        %v2333 = vunpack.c.l.b16 %v2066
        %v2334 = vunpack.c.h.b16 %v2066
        %v2335 = vunpack.c.l.b16 %v2067
        %v2336 = vunpack.c.h.b16 %v2067
        %v2337 = vunpack.c.l.b16 %v2068
        %v2338 = vunpack.c.h.b16 %v2068
        %v2339 = vunpack.c.l.b16 %v2069
        %v2340 = vunpack.c.h.b16 %v2069
        %v2341 = vunpack.c.l.b16 %v2070
        %v2342 = vunpack.c.h.b16 %v2070
        %v2343 = vunpack.c.l.b16 %v2071
        %v2344 = vunpack.c.h.b16 %v2071
        %v2345 = vunpack.c.l.b16 %v2072
        %v2346 = vunpack.c.h.b16 %v2072
        %v2347 = vunpack.c.l.b16 %v2073
        %v2348 = vunpack.c.h.b16 %v2073
        %v2349 = vunpack.c.l.b16 %v2074
        %v2350 = vunpack.c.h.b16 %v2074
        %v2351 = vunpack.c.l.b16 %v2075
        %v2352 = vunpack.c.h.b16 %v2075
        %v2353 = vunpack.c.l.b16 %v2076
        %v2354 = vunpack.c.h.b16 %v2076
        %v2355 = vunpack.c.l.b16 %v2077
        %v2356 = vunpack.c.h.b16 %v2077
        %v2357 = vunpack.c.l.b16 %v2078
        %v2358 = vunpack.c.h.b16 %v2078
        %v2359 = vunpack.c.l.b16 %v2079
        %v2360 = vunpack.c.h.b16 %v2079
        %v2361 = vunpack.c.l.b16 %v2080
        %v2362 = vunpack.c.h.b16 %v2080
        %v2363 = vunpack.c.l.b16 %v2081
        %v2364 = vunpack.c.h.b16 %v2081
        %v2365 = vunpack.c.l.b16 %v2082
        %v2366 = vunpack.c.h.b16 %v2082
        %v2367 = vunpack.c.l.b16 %v2083
        %v2368 = vunpack.c.h.b16 %v2083
        %v2369 = vunpack.c.l.b16 %v2084
        %v2370 = vunpack.c.h.b16 %v2084
        %v2371 = vunpack.c.l.b16 %v2085
        %v2372 = vunpack.c.h.b16 %v2085
        %v2373 = vunpack.c.l.b16 %v2086
        %v2374 = vunpack.c.h.b16 %v2086
        %v2375 = vpack.c.b16 %v2189, %v2183
        %v2376 = vpack.c.b16 %v2190, %v2184
        %v2377 = vpack.c.b16 %v2191, %v2185
        %v2378 = vpack.c.b16 %v2192, %v2186
        %v2379 = vpack.c.b16 %v2193, %v2187
        %v2380 = vpack.c.b16 %v2194, %v2188
        %v2381 = vpack.c.b16 %v2201, %v2195
        %v2382 = vpack.c.b16 %v2202, %v2196
        %v2383 = vpack.c.b16 %v2203, %v2197
        %v2384 = vpack.c.b16 %v2204, %v2198
        %v2385 = vpack.c.b16 %v2205, %v2199
        %v2386 = vpack.c.b16 %v2206, %v2200
        %v2387 = vpack.c.b16 %v2213, %v2207
        %v2388 = vpack.c.b16 %v2214, %v2208
        %v2389 = vpack.c.b16 %v2215, %v2209
        %v2390 = vpack.c.b16 %v2216, %v2210
        %v2391 = vpack.c.b16 %v2217, %v2211
        %v2392 = vpack.c.b16 %v2218, %v2212
        %v2393 = vpack.c.b16 %v2225, %v2219
        %v2394 = vpack.c.b16 %v2226, %v2220
        %v2395 = vpack.c.b16 %v2227, %v2221
        %v2396 = vpack.c.b16 %v2228, %v2222
        %v2397 = vpack.c.b16 %v2229, %v2223
        %v2398 = vpack.c.b16 %v2230, %v2224
        %v2399 = vpack.c.b16 %v2237, %v2231
        %v2400 = vpack.c.b16 %v2238, %v2232
        %v2401 = vpack.c.b16 %v2239, %v2233
        %v2402 = vpack.c.b16 %v2240, %v2234
        %v2403 = vpack.c.b16 %v2241, %v2235
        %v2404 = vpack.c.b16 %v2242, %v2236
        %v2405 = vpack.c.b16 %v2249, %v2243
        %v2406 = vpack.c.b16 %v2250, %v2244
        %v2407 = vpack.c.b16 %v2251, %v2245
        %v2408 = vpack.c.b16 %v2252, %v2246
        %v2409 = vpack.c.b16 %v2253, %v2247
        %v2410 = vpack.c.b16 %v2254, %v2248
        %v2411 = vpack.c.b16 %v2261, %v2255
        %v2412 = vpack.c.b16 %v2262, %v2256
        %v2413 = vpack.c.b16 %v2263, %v2257
        %v2414 = vpack.c.b16 %v2264, %v2258
        %v2415 = vpack.c.b16 %v2265, %v2259
        %v2416 = vpack.c.b16 %v2266, %v2260
        %v2417 = vpack.c.b16 %v2273, %v2267
        %v2418 = vpack.c.b16 %v2274, %v2268
        %v2419 = vpack.c.b16 %v2275, %v2269
        %v2420 = vpack.c.b16 %v2276, %v2270
        %v2421 = vpack.c.b16 %v2277, %v2271
        %v2422 = vpack.c.b16 %v2278, %v2272
        %v2423 = vpack.c.b16 %v2285, %v2279
        %v2424 = vpack.c.b16 %v2286, %v2280
        %v2425 = vpack.c.b16 %v2287, %v2281
        %v2426 = vpack.c.b16 %v2288, %v2282
        %v2427 = vpack.c.b16 %v2289, %v2283
        %v2428 = vpack.c.b16 %v2290, %v2284
        %v2429 = vpack.c.b16 %v2297, %v2291
        %v2430 = vpack.c.b16 %v2298, %v2292
        %v2431 = vpack.c.b16 %v2299, %v2293
        %v2432 = vpack.c.b16 %v2300, %v2294
        %v2433 = vpack.c.b16 %v2301, %v2295
        %v2434 = vpack.c.b16 %v2302, %v2296
        %v2435 = vpack.c.b16 %v2309, %v2303
        %v2436 = vpack.c.b16 %v2310, %v2304
        %v2437 = vpack.c.b16 %v2311, %v2305
        %v2438 = vpack.c.b16 %v2312, %v2306
        %v2439 = vpack.c.b16 %v2313, %v2307
        %v2440 = vpack.c.b16 %v2314, %v2308
        %v2441 = vpack.c.b16 %v2321, %v2315
        %v2442 = vpack.c.b16 %v2322, %v2316
        %v2443 = vpack.c.b16 %v2323, %v2317
        %v2444 = vpack.c.b16 %v2324, %v2318
        %v2445 = vpack.c.b16 %v2325, %v2319
        %v2446 = vpack.c.b16 %v2326, %v2320
        %v2447 = vpack.c.b16 %v2333, %v2327
        %v2448 = vpack.c.b16 %v2334, %v2328
        %v2449 = vpack.c.b16 %v2335, %v2329
        %v2450 = vpack.c.b16 %v2336, %v2330
        %v2451 = vpack.c.b16 %v2337, %v2331
        %v2452 = vpack.c.b16 %v2338, %v2332
        %v2453 = vpack.c.b16 %v2345, %v2339
        %v2454 = vpack.c.b16 %v2346, %v2340
        %v2455 = vpack.c.b16 %v2347, %v2341
        %v2456 = vpack.c.b16 %v2348, %v2342
        %v2457 = vpack.c.b16 %v2349, %v2343
        %v2458 = vpack.c.b16 %v2350, %v2344
        %v2459 = vpack.c.b16 %v2357, %v2351
        %v2460 = vpack.c.b16 %v2358, %v2352
        %v2461 = vpack.c.b16 %v2359, %v2353
        %v2462 = vpack.c.b16 %v2360, %v2354
        %v2463 = vpack.c.b16 %v2361, %v2355
        %v2464 = vpack.c.b16 %v2362, %v2356
        %v2465 = vpack.c.b16 %v2369, %v2363
        %v2466 = vpack.c.b16 %v2370, %v2364
        %v2467 = vpack.c.b16 %v2371, %v2365
        %v2468 = vpack.c.b16 %v2372, %v2366
        %v2469 = vpack.c.b16 %v2373, %v2367
        %v2470 = vpack.c.b16 %v2374, %v2368
        %2567 = vmatprep.subr.bf16.mxu0 %v2376
        %2568 = vmatpush1.bf16.msra.mxu0 %v2375
        %2569 = vmatprep.subr.bf16.mxu0 %v2382
        %2570 = vmatpush1.bf16.msra.mxu0 %v2381
        %2571 = vmatprep.subr.bf16.mxu0 %v2388
        %2572 = vmatpush1.bf16.msra.mxu0 %v2387
        %2573 = vmatprep.subr.bf16.mxu0 %v2394
        %2574 = vmatpush1.bf16.msra.mxu0 %v2393
        %2575 = vmatprep.subr.bf16.mxu0 %v2400
        %2576 = vmatpush1.bf16.msra.mxu0 %v2399
        %2577 = vmatprep.subr.bf16.mxu0 %v2406
        %2578 = vmatpush1.bf16.msra.mxu0 %v2405
        %2579 = vmatprep.subr.bf16.mxu0 %v2412
        %2580 = vmatpush1.bf16.msra.mxu0 %v2411
        %2581 = vmatprep.subr.bf16.mxu0 %v2418
        %2582 = vmatpush1.bf16.msra.mxu0 %v2417
        %2583 = vmatprep.subr.bf16.mxu0 %v2424
        %2584 = vmatpush1.bf16.msra.mxu0 %v2423
        %2585 = vmatprep.subr.bf16.mxu0 %v2430
        %2586 = vmatpush1.bf16.msra.mxu0 %v2429
        %2587 = vmatprep.subr.bf16.mxu0 %v2436
        %2588 = vmatpush1.bf16.msra.mxu0 %v2435
        %2589 = vmatprep.subr.bf16.mxu0 %v2442
        %2590 = vmatpush1.bf16.msra.mxu0 %v2441
        %2591 = vmatprep.subr.bf16.mxu0 %v2448
        %2592 = vmatpush1.bf16.msra.mxu0 %v2447
        %2593 = vmatprep.subr.bf16.mxu0 %v2454
        %2594 = vmatpush1.bf16.msra.mxu0 %v2453
        %2595 = vmatprep.subr.bf16.mxu0 %v2460
        %2596 = vmatpush1.bf16.msra.mxu0 %v2459
        %2597 = vmatprep.subr.bf16.mxu0 %v2466
        %2598 = vmatpush1.bf16.msra.mxu0 %v2465
        %2599 = vmatprep.mubr.bf16.mxu0 %v1990
        %2600 = vmatmul.mubr.bf16.gmra.mrb[0].mxu0 %v1989
        %v2601 = vpop.f32.mrb[0].mxu0
        %v2602 = vadd.f32 %v504, %v2601
        %v2603 = vpop.f32.mrb[0].mxu0
        %v2604 = vadd.f32 %v508, %v2603
        %v2605 = vpop.f32.mrb[0].mxu0
        %v2606 = vpop.f32.mrb[0].mxu0
        %2607 = vdwg.mxu0
        %2608 = vmatprep.subr.bf16.mxu0 %v2378
        %2609 = vmatpush1.bf16.msra.mxu0 %v2377
        %2610 = vmatprep.subr.bf16.mxu0 %v2384
        %2611 = vmatpush1.bf16.msra.mxu0 %v2383
        %2612 = vmatprep.subr.bf16.mxu0 %v2390
        %2613 = vmatpush1.bf16.msra.mxu0 %v2389
        %2614 = vmatprep.subr.bf16.mxu0 %v2396
        %2615 = vmatpush1.bf16.msra.mxu0 %v2395
        %2616 = vmatprep.subr.bf16.mxu0 %v2402
        %2617 = vmatpush1.bf16.msra.mxu0 %v2401
        %2618 = vmatprep.subr.bf16.mxu0 %v2408
        %2619 = vmatpush1.bf16.msra.mxu0 %v2407
        %2620 = vmatprep.subr.bf16.mxu0 %v2414
        %2621 = vmatpush1.bf16.msra.mxu0 %v2413
        %2622 = vmatprep.subr.bf16.mxu0 %v2420
        %2623 = vmatpush1.bf16.msra.mxu0 %v2419
        %2624 = vmatprep.subr.bf16.mxu0 %v2426
        %2625 = vmatpush1.bf16.msra.mxu0 %v2425
        %2626 = vmatprep.subr.bf16.mxu0 %v2432
        %2627 = vmatpush1.bf16.msra.mxu0 %v2431
        %2628 = vmatprep.subr.bf16.mxu0 %v2438
        %2629 = vmatpush1.bf16.msra.mxu0 %v2437
        %2630 = vmatprep.subr.bf16.mxu0 %v2444
        %2631 = vmatpush1.bf16.msra.mxu0 %v2443
        %2632 = vmatprep.subr.bf16.mxu0 %v2450
        %2633 = vmatpush1.bf16.msra.mxu0 %v2449
        %2634 = vmatprep.subr.bf16.mxu0 %v2456
        %2635 = vmatpush1.bf16.msra.mxu0 %v2455
        %2636 = vmatprep.subr.bf16.mxu0 %v2462
        %2637 = vmatpush1.bf16.msra.mxu0 %v2461
        %2638 = vmatprep.subr.bf16.mxu0 %v2468
        %2639 = vmatpush1.bf16.msra.mxu0 %v2467
        %2640 = vmatprep.mubr.bf16.mxu0 %v1990
        %2641 = vmatmul.mubr.bf16.gmra.mrb[0].mxu0 %v1989
        %v2642 = vpop.f32.mrb[0].mxu0
        %v2643 = vadd.f32 %v512, %v2642
        %v2644 = vpop.f32.mrb[0].mxu0
        %v2645 = vadd.f32 %v516, %v2644
        %v2646 = vpop.f32.mrb[0].mxu0
        %v2647 = vpop.f32.mrb[0].mxu0
        %2648 = vdwg.mxu0
        %2649 = vmatprep.subr.bf16.mxu0 %v2380
        %2650 = vmatpush1.bf16.msra.mxu0 %v2379
        %2651 = vmatprep.subr.bf16.mxu0 %v2386
        %2652 = vmatpush1.bf16.msra.mxu0 %v2385
        %2653 = vmatprep.subr.bf16.mxu0 %v2392
        %2654 = vmatpush1.bf16.msra.mxu0 %v2391
        %2655 = vmatprep.subr.bf16.mxu0 %v2398
        %2656 = vmatpush1.bf16.msra.mxu0 %v2397
        %2657 = vmatprep.subr.bf16.mxu0 %v2404
        %2658 = vmatpush1.bf16.msra.mxu0 %v2403
        %2659 = vmatprep.subr.bf16.mxu0 %v2410
        %2660 = vmatpush1.bf16.msra.mxu0 %v2409
        %2661 = vmatprep.subr.bf16.mxu0 %v2416
        %2662 = vmatpush1.bf16.msra.mxu0 %v2415
        %2663 = vmatprep.subr.bf16.mxu0 %v2422
        %2664 = vmatpush1.bf16.msra.mxu0 %v2421
        %2665 = vmatprep.subr.bf16.mxu0 %v2428
        %2666 = vmatpush1.bf16.msra.mxu0 %v2427
        %2667 = vmatprep.subr.bf16.mxu0 %v2434
        %2668 = vmatpush1.bf16.msra.mxu0 %v2433
        %2669 = vmatprep.subr.bf16.mxu0 %v2440
        %2670 = vmatpush1.bf16.msra.mxu0 %v2439
        %2671 = vmatprep.subr.bf16.mxu0 %v2446
        %2672 = vmatpush1.bf16.msra.mxu0 %v2445
        %2673 = vmatprep.subr.bf16.mxu0 %v2452
        %2674 = vmatpush1.bf16.msra.mxu0 %v2451
        %2675 = vmatprep.subr.bf16.mxu0 %v2458
        %2676 = vmatpush1.bf16.msra.mxu0 %v2457
        %2677 = vmatprep.subr.bf16.mxu0 %v2464
        %2678 = vmatpush1.bf16.msra.mxu0 %v2463
        %2679 = vmatprep.subr.bf16.mxu0 %v2470
        %2680 = vmatpush1.bf16.msra.mxu0 %v2469
        %2681 = vmatprep.mubr.bf16.mxu0 %v1990
        %2682 = vmatmul.mubr.bf16.gmra.mrb[0].mxu0 %v1989
        %v2683 = vpop.f32.mrb[0].mxu0
        %v2684 = vadd.f32 %v520, %v2683
        %v2685 = vpop.f32.mrb[0].mxu0
        %v2686 = vadd.f32 %v524, %v2685
        %v2687 = vpop.f32.mrb[0].mxu0
        %v2688 = vpop.f32.mrb[0].mxu0
        %2689 = vdwg.mxu0
        %s2690 = scalar_lea.vmem %s363, 24
        %v2691 = vld [vmem:[%s2690] sm:$0xff]
        %v2692 = vld [vmem:[%s2690 + $0x8] sm:$0xf]
        %v2693 = vunpack.c.l.bf16 %v2691
        %v2694 = vunpack.c.h.bf16 %v2691
        %v2695 = vunpack.c.l.bf16 %v2692
        %s2696 = scalar_lea.vmem %s371, 60
        %v2697 = vld [vmem:[%s2696] sm:$0xff]
        %v2698 = vld [vmem:[%s2696 + $0x8] sm:$0xf]
        %v2699 = vunpack.c.l.bf16 %v2697
        %v2700 = vunpack.c.h.bf16 %v2697
        %v2701 = vunpack.c.l.bf16 %v2698
        %v2702 = vadd.f32 %v2693, %v2602
        %v2703 = vxor.u32 %v2702, 2147483648
        %v2704 = vmul.f32 %v2703, 1.442695
        %v2705 = vpow.pop %v2704
        %v2706 = vadd.f32 %v2705, 1.0
        %v2707 = vrcp.pop %v2706
        %v2708 = vmul.f32 1.0, %v2707
        %v2709 = vadd.f32 %v2694, %v2604
        %v2710 = vxor.u32 %v2709, 2147483648
        %v2711 = vmul.f32 %v2710, 1.442695
        %v2712 = vpow.pop %v2711
        %v2713 = vadd.f32 %v2712, 1.0
        %v2714 = vrcp.pop %v2713
        %v2715 = vmul.f32 1.0, %v2714
        %v2716 = vmul.f32 %v2708, %v2643
        %v2717 = vadd.f32 %v2695, %v2716
        %v2718 = vtanh.pop %v2717
        %v2719 = vsub.f32 1.0, %v2715
        %v2720 = vmul.f32 %v2719, %v2718
        %v2721 = vmul.f32 %v2715, %v1974
        %v2722 = vadd.f32 %v2720, %v2721
        %v2723 = vadd.f32 %v2699, %v2645
        %v2724 = vxor.u32 %v2723, 2147483648
        %v2725 = vmul.f32 %v2724, 1.442695
        %v2726 = vpow.pop %v2725
        %v2727 = vadd.f32 %v2726, 1.0
        %v2728 = vrcp.pop %v2727
        %v2729 = vmul.f32 1.0, %v2728
        %v2730 = vadd.f32 %v2700, %v2684
        %v2731 = vxor.u32 %v2730, 2147483648
        %v2732 = vmul.f32 %v2731, 1.442695
        %v2733 = vpow.pop %v2732
        %v2734 = vadd.f32 %v2733, 1.0
        %v2735 = vrcp.pop %v2734
        %v2736 = vmul.f32 1.0, %v2735
        %v2737 = vmul.f32 %v2729, %v2686
        %v2738 = vadd.f32 %v2701, %v2737
        %v2739 = vtanh.pop %v2738
        %v2740 = vsub.f32 1.0, %v2736
        %v2741 = vmul.f32 %v2740, %v2739
        %v2742 = vmul.f32 %v2736, %v1980
        %v2743 = vadd.f32 %v2741, %v2742
        %v2744 = vstv %s1987
        %vm2745 = vcmp.lt.s32.totalorder %v2744, %v394
        %v2746 = vstv %s1988
        %vm2747 = vcmp.lt.s32.totalorder %v2746, %v394
        %v2748 = vsel %vm2745, 1, 0
        %2749 = vset.pattern.permute.xlu0 0
        %2750 = vperm.xlu0 %2749, %v2748
        %v2751 = vpop.permute.xlu0 %2750
        %vm2752 = vcmp.eq.s32.totalorder %v2751, 1
        %v2753 = vsel %vm2752, %v2722, %v1974
        %v2754 = vsel %vm2747, 1, 0
        %2755 = vset.pattern.permute.xlu0 0
        %2756 = vperm.xlu0 %2755, %v2754
        %v2757 = vpop.permute.xlu0 %2756
        %vm2758 = vcmp.eq.s32.totalorder %v2757, 1
        %v2759 = vsel %vm2758, %v2743, %v1980
        %v2760 = vsel %vm2752, %v2722, 0.0
        %s2761 = scalar_lea.vmem %s378, 16
        %2762 = vst [vmem:[%s2761] sm:$0xff] %v2760
        %v2763 = vsel %vm2758, %v2743, 0.0
        %s2764 = scalar_lea.vmem %s385, 40
        %2765 = vst [vmem:[%s2764] sm:$0xff] %v2763
        %s2766 = sadd.s32 %s398, 3
        %s2767 = sadd.s32 %s400, 4
        %v2768 = vpack.c.bf16 %v2753, %v2753
        %v2769 = vpack.c.bf16 %v2759, %v2759
        %v2770 = vld [vmem:[%s3] sm:$0xff]
        %v2771 = vld [vmem:[%s3 + $0x8] sm:$0xff]
        %v2772 = vld [vmem:[%s3 + $0x10] sm:$0xff]
        %v2773 = vld [vmem:[%s3 + $0x18] sm:$0xff]
        %v2774 = vld [vmem:[%s3 + $0x20] sm:$0xff]
        %v2775 = vld [vmem:[%s3 + $0x28] sm:$0xff]
        %v2776 = vld [vmem:[%s3 + $0x30] sm:$0xff]
        %v2777 = vld [vmem:[%s3 + $0x38] sm:$0xff]
        %v2778 = vld [vmem:[%s3 + $0x40] sm:$0xff]
        %v2779 = vld [vmem:[%s3 + $0x48] sm:$0xff]
        %v2780 = vld [vmem:[%s3 + $0x50] sm:$0xff]
        %v2781 = vld [vmem:[%s3 + $0x58] sm:$0xff]
        %v2782 = vld [vmem:[%s3 + $0x60] sm:$0xff]
        %v2783 = vld [vmem:[%s3 + $0x68] sm:$0xff]
        %v2784 = vld [vmem:[%s3 + $0x70] sm:$0xff]
        %v2785 = vld [vmem:[%s3 + $0x78] sm:$0xff]
        %v2786 = vld [vmem:[%s3 + $0x80] sm:$0xff]
        %v2787 = vld [vmem:[%s3 + $0x88] sm:$0xff]
        %v2788 = vld [vmem:[%s3 + $0x90] sm:$0xff]
        %v2789 = vld [vmem:[%s3 + $0x98] sm:$0xff]
        %v2790 = vld [vmem:[%s3 + $0xa0] sm:$0xff]
        %v2791 = vld [vmem:[%s3 + $0xa8] sm:$0xff]
        %v2792 = vld [vmem:[%s3 + $0xb0] sm:$0xff]
        %v2793 = vld [vmem:[%s3 + $0xb8] sm:$0xff]
        %v2794 = vld [vmem:[%s3 + $0xc0] sm:$0xff]
        %v2795 = vld [vmem:[%s3 + $0xc8] sm:$0xff]
        %v2796 = vld [vmem:[%s3 + $0xd0] sm:$0xff]
        %v2797 = vld [vmem:[%s3 + $0xd8] sm:$0xff]
        %v2798 = vld [vmem:[%s3 + $0xe0] sm:$0xff]
        %v2799 = vld [vmem:[%s3 + $0xe8] sm:$0xff]
        %v2800 = vld [vmem:[%s3 + $0xf0] sm:$0xff]
        %v2801 = vld [vmem:[%s3 + $0xf8] sm:$0xff]
        %v2802 = vld [vmem:[%s3 + $0x100] sm:$0xff]
        %v2803 = vld [vmem:[%s3 + $0x108] sm:$0xff]
        %v2804 = vld [vmem:[%s3 + $0x110] sm:$0xff]
        %v2805 = vld [vmem:[%s3 + $0x118] sm:$0xff]
        %v2806 = vld [vmem:[%s3 + $0x120] sm:$0xff]
        %v2807 = vld [vmem:[%s3 + $0x128] sm:$0xff]
        %v2808 = vld [vmem:[%s3 + $0x130] sm:$0xff]
        %v2809 = vld [vmem:[%s3 + $0x138] sm:$0xff]
        %v2810 = vld [vmem:[%s3 + $0x140] sm:$0xff]
        %v2811 = vld [vmem:[%s3 + $0x148] sm:$0xff]
        %v2812 = vld [vmem:[%s3 + $0x150] sm:$0xff]
        %v2813 = vld [vmem:[%s3 + $0x158] sm:$0xff]
        %v2814 = vld [vmem:[%s3 + $0x160] sm:$0xff]
        %v2815 = vld [vmem:[%s3 + $0x168] sm:$0xff]
        %v2816 = vld [vmem:[%s3 + $0x170] sm:$0xff]
        %v2817 = vld [vmem:[%s3 + $0x178] sm:$0xff]
        %v2818 = vld [vmem:[%s3 + $0x180] sm:$0xff]
        %v2819 = vld [vmem:[%s3 + $0x188] sm:$0xff]
        %v2820 = vld [vmem:[%s3 + $0x190] sm:$0xff]
        %v2821 = vld [vmem:[%s3 + $0x198] sm:$0xff]
        %v2822 = vld [vmem:[%s3 + $0x1a0] sm:$0xff]
        %v2823 = vld [vmem:[%s3 + $0x1a8] sm:$0xff]
        %v2824 = vld [vmem:[%s3 + $0x1b0] sm:$0xff]
        %v2825 = vld [vmem:[%s3 + $0x1b8] sm:$0xff]
        %v2826 = vld [vmem:[%s3 + $0x1c0] sm:$0xff]
        %v2827 = vld [vmem:[%s3 + $0x1c8] sm:$0xff]
        %v2828 = vld [vmem:[%s3 + $0x1d0] sm:$0xff]
        %v2829 = vld [vmem:[%s3 + $0x1d8] sm:$0xff]
        %v2830 = vld [vmem:[%s3 + $0x1e0] sm:$0xff]
        %v2831 = vld [vmem:[%s3 + $0x1e8] sm:$0xff]
        %v2832 = vld [vmem:[%s3 + $0x1f0] sm:$0xff]
        %v2833 = vld [vmem:[%s3 + $0x1f8] sm:$0xff]
        %v2834 = vld [vmem:[%s3 + $0x200] sm:$0xff]
        %v2835 = vld [vmem:[%s3 + $0x208] sm:$0xff]
        %v2836 = vld [vmem:[%s3 + $0x210] sm:$0xff]
        %v2837 = vld [vmem:[%s3 + $0x218] sm:$0xff]
        %v2838 = vld [vmem:[%s3 + $0x220] sm:$0xff]
        %v2839 = vld [vmem:[%s3 + $0x228] sm:$0xff]
        %v2840 = vld [vmem:[%s3 + $0x230] sm:$0xff]
        %v2841 = vld [vmem:[%s3 + $0x238] sm:$0xff]
        %v2842 = vld [vmem:[%s3 + $0x240] sm:$0xff]
        %v2843 = vld [vmem:[%s3 + $0x248] sm:$0xff]
        %v2844 = vld [vmem:[%s3 + $0x250] sm:$0xff]
        %v2845 = vld [vmem:[%s3 + $0x258] sm:$0xff]
        %v2846 = vld [vmem:[%s3 + $0x260] sm:$0xff]
        %v2847 = vld [vmem:[%s3 + $0x268] sm:$0xff]
        %v2848 = vld [vmem:[%s3 + $0x270] sm:$0xff]
        %v2849 = vld [vmem:[%s3 + $0x278] sm:$0xff]
        %v2850 = vld [vmem:[%s3 + $0x280] sm:$0xff]
        %v2851 = vld [vmem:[%s3 + $0x288] sm:$0xff]
        %v2852 = vld [vmem:[%s3 + $0x290] sm:$0xff]
        %v2853 = vld [vmem:[%s3 + $0x298] sm:$0xff]
        %v2854 = vld [vmem:[%s3 + $0x2a0] sm:$0xff]
        %v2855 = vld [vmem:[%s3 + $0x2a8] sm:$0xff]
        %v2856 = vld [vmem:[%s3 + $0x2b0] sm:$0xff]
        %v2857 = vld [vmem:[%s3 + $0x2b8] sm:$0xff]
        %v2858 = vld [vmem:[%s3 + $0x2c0] sm:$0xff]
        %v2859 = vld [vmem:[%s3 + $0x2c8] sm:$0xff]
        %v2860 = vld [vmem:[%s3 + $0x2d0] sm:$0xff]
        %v2861 = vld [vmem:[%s3 + $0x2d8] sm:$0xff]
        %v2862 = vld [vmem:[%s3 + $0x2e0] sm:$0xff]
        %v2863 = vld [vmem:[%s3 + $0x2e8] sm:$0xff]
        %v2864 = vld [vmem:[%s3 + $0x2f0] sm:$0xff]
        %v2865 = vld [vmem:[%s3 + $0x2f8] sm:$0xff]
        %v2962 = vunpack.c.l.b16 %v2770
        %v2963 = vunpack.c.h.b16 %v2770
        %v2964 = vunpack.c.l.b16 %v2771
        %v2965 = vunpack.c.h.b16 %v2771
        %v2966 = vunpack.c.l.b16 %v2772
        %v2967 = vunpack.c.h.b16 %v2772
        %v2968 = vunpack.c.l.b16 %v2773
        %v2969 = vunpack.c.h.b16 %v2773
        %v2970 = vunpack.c.l.b16 %v2774
        %v2971 = vunpack.c.h.b16 %v2774
        %v2972 = vunpack.c.l.b16 %v2775
        %v2973 = vunpack.c.h.b16 %v2775
        %v2974 = vunpack.c.l.b16 %v2776
        %v2975 = vunpack.c.h.b16 %v2776
        %v2976 = vunpack.c.l.b16 %v2777
        %v2977 = vunpack.c.h.b16 %v2777
        %v2978 = vunpack.c.l.b16 %v2778
        %v2979 = vunpack.c.h.b16 %v2778
        %v2980 = vunpack.c.l.b16 %v2779
        %v2981 = vunpack.c.h.b16 %v2779
        %v2982 = vunpack.c.l.b16 %v2780
        %v2983 = vunpack.c.h.b16 %v2780
        %v2984 = vunpack.c.l.b16 %v2781
        %v2985 = vunpack.c.h.b16 %v2781
        %v2986 = vunpack.c.l.b16 %v2782
        %v2987 = vunpack.c.h.b16 %v2782
        %v2988 = vunpack.c.l.b16 %v2783
        %v2989 = vunpack.c.h.b16 %v2783
        %v2990 = vunpack.c.l.b16 %v2784
        %v2991 = vunpack.c.h.b16 %v2784
        %v2992 = vunpack.c.l.b16 %v2785
        %v2993 = vunpack.c.h.b16 %v2785
        %v2994 = vunpack.c.l.b16 %v2786
        %v2995 = vunpack.c.h.b16 %v2786
        %v2996 = vunpack.c.l.b16 %v2787
        %v2997 = vunpack.c.h.b16 %v2787
        %v2998 = vunpack.c.l.b16 %v2788
        %v2999 = vunpack.c.h.b16 %v2788
        %v3000 = vunpack.c.l.b16 %v2789
        %v3001 = vunpack.c.h.b16 %v2789
        %v3002 = vunpack.c.l.b16 %v2790
        %v3003 = vunpack.c.h.b16 %v2790
        %v3004 = vunpack.c.l.b16 %v2791
        %v3005 = vunpack.c.h.b16 %v2791
        %v3006 = vunpack.c.l.b16 %v2792
        %v3007 = vunpack.c.h.b16 %v2792
        %v3008 = vunpack.c.l.b16 %v2793
        %v3009 = vunpack.c.h.b16 %v2793
        %v3010 = vunpack.c.l.b16 %v2794
        %v3011 = vunpack.c.h.b16 %v2794
        %v3012 = vunpack.c.l.b16 %v2795
        %v3013 = vunpack.c.h.b16 %v2795
        %v3014 = vunpack.c.l.b16 %v2796
        %v3015 = vunpack.c.h.b16 %v2796
        %v3016 = vunpack.c.l.b16 %v2797
        %v3017 = vunpack.c.h.b16 %v2797
        %v3018 = vunpack.c.l.b16 %v2798
        %v3019 = vunpack.c.h.b16 %v2798
        %v3020 = vunpack.c.l.b16 %v2799
        %v3021 = vunpack.c.h.b16 %v2799
        %v3022 = vunpack.c.l.b16 %v2800
        %v3023 = vunpack.c.h.b16 %v2800
        %v3024 = vunpack.c.l.b16 %v2801
        %v3025 = vunpack.c.h.b16 %v2801
        %v3026 = vunpack.c.l.b16 %v2802
        %v3027 = vunpack.c.h.b16 %v2802
        %v3028 = vunpack.c.l.b16 %v2803
        %v3029 = vunpack.c.h.b16 %v2803
        %v3030 = vunpack.c.l.b16 %v2804
        %v3031 = vunpack.c.h.b16 %v2804
        %v3032 = vunpack.c.l.b16 %v2805
        %v3033 = vunpack.c.h.b16 %v2805
        %v3034 = vunpack.c.l.b16 %v2806
        %v3035 = vunpack.c.h.b16 %v2806
        %v3036 = vunpack.c.l.b16 %v2807
        %v3037 = vunpack.c.h.b16 %v2807
        %v3038 = vunpack.c.l.b16 %v2808
        %v3039 = vunpack.c.h.b16 %v2808
        %v3040 = vunpack.c.l.b16 %v2809
        %v3041 = vunpack.c.h.b16 %v2809
        %v3042 = vunpack.c.l.b16 %v2810
        %v3043 = vunpack.c.h.b16 %v2810
        %v3044 = vunpack.c.l.b16 %v2811
        %v3045 = vunpack.c.h.b16 %v2811
        %v3046 = vunpack.c.l.b16 %v2812
        %v3047 = vunpack.c.h.b16 %v2812
        %v3048 = vunpack.c.l.b16 %v2813
        %v3049 = vunpack.c.h.b16 %v2813
        %v3050 = vunpack.c.l.b16 %v2814
        %v3051 = vunpack.c.h.b16 %v2814
        %v3052 = vunpack.c.l.b16 %v2815
        %v3053 = vunpack.c.h.b16 %v2815
        %v3054 = vunpack.c.l.b16 %v2816
        %v3055 = vunpack.c.h.b16 %v2816
        %v3056 = vunpack.c.l.b16 %v2817
        %v3057 = vunpack.c.h.b16 %v2817
        %v3058 = vunpack.c.l.b16 %v2818
        %v3059 = vunpack.c.h.b16 %v2818
        %v3060 = vunpack.c.l.b16 %v2819
        %v3061 = vunpack.c.h.b16 %v2819
        %v3062 = vunpack.c.l.b16 %v2820
        %v3063 = vunpack.c.h.b16 %v2820
        %v3064 = vunpack.c.l.b16 %v2821
        %v3065 = vunpack.c.h.b16 %v2821
        %v3066 = vunpack.c.l.b16 %v2822
        %v3067 = vunpack.c.h.b16 %v2822
        %v3068 = vunpack.c.l.b16 %v2823
        %v3069 = vunpack.c.h.b16 %v2823
        %v3070 = vunpack.c.l.b16 %v2824
        %v3071 = vunpack.c.h.b16 %v2824
        %v3072 = vunpack.c.l.b16 %v2825
        %v3073 = vunpack.c.h.b16 %v2825
        %v3074 = vunpack.c.l.b16 %v2826
        %v3075 = vunpack.c.h.b16 %v2826
        %v3076 = vunpack.c.l.b16 %v2827
        %v3077 = vunpack.c.h.b16 %v2827
        %v3078 = vunpack.c.l.b16 %v2828
        %v3079 = vunpack.c.h.b16 %v2828
        %v3080 = vunpack.c.l.b16 %v2829
        %v3081 = vunpack.c.h.b16 %v2829
        %v3082 = vunpack.c.l.b16 %v2830
        %v3083 = vunpack.c.h.b16 %v2830
        %v3084 = vunpack.c.l.b16 %v2831
        %v3085 = vunpack.c.h.b16 %v2831
        %v3086 = vunpack.c.l.b16 %v2832
        %v3087 = vunpack.c.h.b16 %v2832
        %v3088 = vunpack.c.l.b16 %v2833
        %v3089 = vunpack.c.h.b16 %v2833
        %v3090 = vunpack.c.l.b16 %v2834
        %v3091 = vunpack.c.h.b16 %v2834
        %v3092 = vunpack.c.l.b16 %v2835
        %v3093 = vunpack.c.h.b16 %v2835
        %v3094 = vunpack.c.l.b16 %v2836
        %v3095 = vunpack.c.h.b16 %v2836
        %v3096 = vunpack.c.l.b16 %v2837
        %v3097 = vunpack.c.h.b16 %v2837
        %v3098 = vunpack.c.l.b16 %v2838
        %v3099 = vunpack.c.h.b16 %v2838
        %v3100 = vunpack.c.l.b16 %v2839
        %v3101 = vunpack.c.h.b16 %v2839
        %v3102 = vunpack.c.l.b16 %v2840
        %v3103 = vunpack.c.h.b16 %v2840
        %v3104 = vunpack.c.l.b16 %v2841
        %v3105 = vunpack.c.h.b16 %v2841
        %v3106 = vunpack.c.l.b16 %v2842
        %v3107 = vunpack.c.h.b16 %v2842
        %v3108 = vunpack.c.l.b16 %v2843
        %v3109 = vunpack.c.h.b16 %v2843
        %v3110 = vunpack.c.l.b16 %v2844
        %v3111 = vunpack.c.h.b16 %v2844
        %v3112 = vunpack.c.l.b16 %v2845
        %v3113 = vunpack.c.h.b16 %v2845
        %v3114 = vunpack.c.l.b16 %v2846
        %v3115 = vunpack.c.h.b16 %v2846
        %v3116 = vunpack.c.l.b16 %v2847
        %v3117 = vunpack.c.h.b16 %v2847
        %v3118 = vunpack.c.l.b16 %v2848
        %v3119 = vunpack.c.h.b16 %v2848
        %v3120 = vunpack.c.l.b16 %v2849
        %v3121 = vunpack.c.h.b16 %v2849
        %v3122 = vunpack.c.l.b16 %v2850
        %v3123 = vunpack.c.h.b16 %v2850
        %v3124 = vunpack.c.l.b16 %v2851
        %v3125 = vunpack.c.h.b16 %v2851
        %v3126 = vunpack.c.l.b16 %v2852
        %v3127 = vunpack.c.h.b16 %v2852
        %v3128 = vunpack.c.l.b16 %v2853
        %v3129 = vunpack.c.h.b16 %v2853
        %v3130 = vunpack.c.l.b16 %v2854
        %v3131 = vunpack.c.h.b16 %v2854
        %v3132 = vunpack.c.l.b16 %v2855
        %v3133 = vunpack.c.h.b16 %v2855
        %v3134 = vunpack.c.l.b16 %v2856
        %v3135 = vunpack.c.h.b16 %v2856
        %v3136 = vunpack.c.l.b16 %v2857
        %v3137 = vunpack.c.h.b16 %v2857
        %v3138 = vunpack.c.l.b16 %v2858
        %v3139 = vunpack.c.h.b16 %v2858
        %v3140 = vunpack.c.l.b16 %v2859
        %v3141 = vunpack.c.h.b16 %v2859
        %v3142 = vunpack.c.l.b16 %v2860
        %v3143 = vunpack.c.h.b16 %v2860
        %v3144 = vunpack.c.l.b16 %v2861
        %v3145 = vunpack.c.h.b16 %v2861
        %v3146 = vunpack.c.l.b16 %v2862
        %v3147 = vunpack.c.h.b16 %v2862
        %v3148 = vunpack.c.l.b16 %v2863
        %v3149 = vunpack.c.h.b16 %v2863
        %v3150 = vunpack.c.l.b16 %v2864
        %v3151 = vunpack.c.h.b16 %v2864
        %v3152 = vunpack.c.l.b16 %v2865
        %v3153 = vunpack.c.h.b16 %v2865
        %v3154 = vpack.c.b16 %v2968, %v2962
        %v3155 = vpack.c.b16 %v2969, %v2963
        %v3156 = vpack.c.b16 %v2970, %v2964
        %v3157 = vpack.c.b16 %v2971, %v2965
        %v3158 = vpack.c.b16 %v2972, %v2966
        %v3159 = vpack.c.b16 %v2973, %v2967
        %v3160 = vpack.c.b16 %v2980, %v2974
        %v3161 = vpack.c.b16 %v2981, %v2975
        %v3162 = vpack.c.b16 %v2982, %v2976
        %v3163 = vpack.c.b16 %v2983, %v2977
        %v3164 = vpack.c.b16 %v2984, %v2978
        %v3165 = vpack.c.b16 %v2985, %v2979
        %v3166 = vpack.c.b16 %v2992, %v2986
        %v3167 = vpack.c.b16 %v2993, %v2987
        %v3168 = vpack.c.b16 %v2994, %v2988
        %v3169 = vpack.c.b16 %v2995, %v2989
        %v3170 = vpack.c.b16 %v2996, %v2990
        %v3171 = vpack.c.b16 %v2997, %v2991
        %v3172 = vpack.c.b16 %v3004, %v2998
        %v3173 = vpack.c.b16 %v3005, %v2999
        %v3174 = vpack.c.b16 %v3006, %v3000
        %v3175 = vpack.c.b16 %v3007, %v3001
        %v3176 = vpack.c.b16 %v3008, %v3002
        %v3177 = vpack.c.b16 %v3009, %v3003
        %v3178 = vpack.c.b16 %v3016, %v3010
        %v3179 = vpack.c.b16 %v3017, %v3011
        %v3180 = vpack.c.b16 %v3018, %v3012
        %v3181 = vpack.c.b16 %v3019, %v3013
        %v3182 = vpack.c.b16 %v3020, %v3014
        %v3183 = vpack.c.b16 %v3021, %v3015
        %v3184 = vpack.c.b16 %v3028, %v3022
        %v3185 = vpack.c.b16 %v3029, %v3023
        %v3186 = vpack.c.b16 %v3030, %v3024
        %v3187 = vpack.c.b16 %v3031, %v3025
        %v3188 = vpack.c.b16 %v3032, %v3026
        %v3189 = vpack.c.b16 %v3033, %v3027
        %v3190 = vpack.c.b16 %v3040, %v3034
        %v3191 = vpack.c.b16 %v3041, %v3035
        %v3192 = vpack.c.b16 %v3042, %v3036
        %v3193 = vpack.c.b16 %v3043, %v3037
        %v3194 = vpack.c.b16 %v3044, %v3038
        %v3195 = vpack.c.b16 %v3045, %v3039
        %v3196 = vpack.c.b16 %v3052, %v3046
        %v3197 = vpack.c.b16 %v3053, %v3047
        %v3198 = vpack.c.b16 %v3054, %v3048
        %v3199 = vpack.c.b16 %v3055, %v3049
        %v3200 = vpack.c.b16 %v3056, %v3050
        %v3201 = vpack.c.b16 %v3057, %v3051
        %v3202 = vpack.c.b16 %v3064, %v3058
        %v3203 = vpack.c.b16 %v3065, %v3059
        %v3204 = vpack.c.b16 %v3066, %v3060
        %v3205 = vpack.c.b16 %v3067, %v3061
        %v3206 = vpack.c.b16 %v3068, %v3062
        %v3207 = vpack.c.b16 %v3069, %v3063
        %v3208 = vpack.c.b16 %v3076, %v3070
        %v3209 = vpack.c.b16 %v3077, %v3071
        %v3210 = vpack.c.b16 %v3078, %v3072
        %v3211 = vpack.c.b16 %v3079, %v3073
        %v3212 = vpack.c.b16 %v3080, %v3074
        %v3213 = vpack.c.b16 %v3081, %v3075
        %v3214 = vpack.c.b16 %v3088, %v3082
        %v3215 = vpack.c.b16 %v3089, %v3083
        %v3216 = vpack.c.b16 %v3090, %v3084
        %v3217 = vpack.c.b16 %v3091, %v3085
        %v3218 = vpack.c.b16 %v3092, %v3086
        %v3219 = vpack.c.b16 %v3093, %v3087
        %v3220 = vpack.c.b16 %v3100, %v3094
        %v3221 = vpack.c.b16 %v3101, %v3095
        %v3222 = vpack.c.b16 %v3102, %v3096
        %v3223 = vpack.c.b16 %v3103, %v3097
        %v3224 = vpack.c.b16 %v3104, %v3098
        %v3225 = vpack.c.b16 %v3105, %v3099
        %v3226 = vpack.c.b16 %v3112, %v3106
        %v3227 = vpack.c.b16 %v3113, %v3107
        %v3228 = vpack.c.b16 %v3114, %v3108
        %v3229 = vpack.c.b16 %v3115, %v3109
        %v3230 = vpack.c.b16 %v3116, %v3110
        %v3231 = vpack.c.b16 %v3117, %v3111
        %v3232 = vpack.c.b16 %v3124, %v3118
        %v3233 = vpack.c.b16 %v3125, %v3119
        %v3234 = vpack.c.b16 %v3126, %v3120
        %v3235 = vpack.c.b16 %v3127, %v3121
        %v3236 = vpack.c.b16 %v3128, %v3122
        %v3237 = vpack.c.b16 %v3129, %v3123
        %v3238 = vpack.c.b16 %v3136, %v3130
        %v3239 = vpack.c.b16 %v3137, %v3131
        %v3240 = vpack.c.b16 %v3138, %v3132
        %v3241 = vpack.c.b16 %v3139, %v3133
        %v3242 = vpack.c.b16 %v3140, %v3134
        %v3243 = vpack.c.b16 %v3141, %v3135
        %v3244 = vpack.c.b16 %v3148, %v3142
        %v3245 = vpack.c.b16 %v3149, %v3143
        %v3246 = vpack.c.b16 %v3150, %v3144
        %v3247 = vpack.c.b16 %v3151, %v3145
        %v3248 = vpack.c.b16 %v3152, %v3146
        %v3249 = vpack.c.b16 %v3153, %v3147
        %3346 = vmatprep.subr.bf16.mxu0 %v3155
        %3347 = vmatpush1.bf16.msra.mxu0 %v3154
        %3348 = vmatprep.subr.bf16.mxu0 %v3161
        %3349 = vmatpush1.bf16.msra.mxu0 %v3160
        %3350 = vmatprep.subr.bf16.mxu0 %v3167
        %3351 = vmatpush1.bf16.msra.mxu0 %v3166
        %3352 = vmatprep.subr.bf16.mxu0 %v3173
        %3353 = vmatpush1.bf16.msra.mxu0 %v3172
        %3354 = vmatprep.subr.bf16.mxu0 %v3179
        %3355 = vmatpush1.bf16.msra.mxu0 %v3178
        %3356 = vmatprep.subr.bf16.mxu0 %v3185
        %3357 = vmatpush1.bf16.msra.mxu0 %v3184
        %3358 = vmatprep.subr.bf16.mxu0 %v3191
        %3359 = vmatpush1.bf16.msra.mxu0 %v3190
        %3360 = vmatprep.subr.bf16.mxu0 %v3197
        %3361 = vmatpush1.bf16.msra.mxu0 %v3196
        %3362 = vmatprep.subr.bf16.mxu0 %v3203
        %3363 = vmatpush1.bf16.msra.mxu0 %v3202
        %3364 = vmatprep.subr.bf16.mxu0 %v3209
        %3365 = vmatpush1.bf16.msra.mxu0 %v3208
        %3366 = vmatprep.subr.bf16.mxu0 %v3215
        %3367 = vmatpush1.bf16.msra.mxu0 %v3214
        %3368 = vmatprep.subr.bf16.mxu0 %v3221
        %3369 = vmatpush1.bf16.msra.mxu0 %v3220
        %3370 = vmatprep.subr.bf16.mxu0 %v3227
        %3371 = vmatpush1.bf16.msra.mxu0 %v3226
        %3372 = vmatprep.subr.bf16.mxu0 %v3233
        %3373 = vmatpush1.bf16.msra.mxu0 %v3232
        %3374 = vmatprep.subr.bf16.mxu0 %v3239
        %3375 = vmatpush1.bf16.msra.mxu0 %v3238
        %3376 = vmatprep.subr.bf16.mxu0 %v3245
        %3377 = vmatpush1.bf16.msra.mxu0 %v3244
        %3378 = vmatprep.mubr.bf16.mxu0 %v2769
        %3379 = vmatmul.mubr.bf16.gmra.mrb[0].mxu0 %v2768
        %v3380 = vpop.f32.mrb[0].mxu0
        %v3381 = vadd.f32 %v504, %v3380
        %v3382 = vpop.f32.mrb[0].mxu0
        %v3383 = vadd.f32 %v508, %v3382
        %v3384 = vpop.f32.mrb[0].mxu0
        %v3385 = vpop.f32.mrb[0].mxu0
        %3386 = vdwg.mxu0
        %3387 = vmatprep.subr.bf16.mxu0 %v3157
        %3388 = vmatpush1.bf16.msra.mxu0 %v3156
        %3389 = vmatprep.subr.bf16.mxu0 %v3163
        %3390 = vmatpush1.bf16.msra.mxu0 %v3162
        %3391 = vmatprep.subr.bf16.mxu0 %v3169
        %3392 = vmatpush1.bf16.msra.mxu0 %v3168
        %3393 = vmatprep.subr.bf16.mxu0 %v3175
        %3394 = vmatpush1.bf16.msra.mxu0 %v3174
        %3395 = vmatprep.subr.bf16.mxu0 %v3181
        %3396 = vmatpush1.bf16.msra.mxu0 %v3180
        %3397 = vmatprep.subr.bf16.mxu0 %v3187
        %3398 = vmatpush1.bf16.msra.mxu0 %v3186
        %3399 = vmatprep.subr.bf16.mxu0 %v3193
        %3400 = vmatpush1.bf16.msra.mxu0 %v3192
        %3401 = vmatprep.subr.bf16.mxu0 %v3199
        %3402 = vmatpush1.bf16.msra.mxu0 %v3198
        %3403 = vmatprep.subr.bf16.mxu0 %v3205
        %3404 = vmatpush1.bf16.msra.mxu0 %v3204
        %3405 = vmatprep.subr.bf16.mxu0 %v3211
        %3406 = vmatpush1.bf16.msra.mxu0 %v3210
        %3407 = vmatprep.subr.bf16.mxu0 %v3217
        %3408 = vmatpush1.bf16.msra.mxu0 %v3216
        %3409 = vmatprep.subr.bf16.mxu0 %v3223
        %3410 = vmatpush1.bf16.msra.mxu0 %v3222
        %3411 = vmatprep.subr.bf16.mxu0 %v3229
        %3412 = vmatpush1.bf16.msra.mxu0 %v3228
        %3413 = vmatprep.subr.bf16.mxu0 %v3235
        %3414 = vmatpush1.bf16.msra.mxu0 %v3234
        %3415 = vmatprep.subr.bf16.mxu0 %v3241
        %3416 = vmatpush1.bf16.msra.mxu0 %v3240
        %3417 = vmatprep.subr.bf16.mxu0 %v3247
        %3418 = vmatpush1.bf16.msra.mxu0 %v3246
        %3419 = vmatprep.mubr.bf16.mxu0 %v2769
        %3420 = vmatmul.mubr.bf16.gmra.mrb[0].mxu0 %v2768
        %v3421 = vpop.f32.mrb[0].mxu0
        %v3422 = vadd.f32 %v512, %v3421
        %v3423 = vpop.f32.mrb[0].mxu0
        %v3424 = vadd.f32 %v516, %v3423
        %v3425 = vpop.f32.mrb[0].mxu0
        %v3426 = vpop.f32.mrb[0].mxu0
        %3427 = vdwg.mxu0
        %3428 = vmatprep.subr.bf16.mxu0 %v3159
        %3429 = vmatpush1.bf16.msra.mxu0 %v3158
        %3430 = vmatprep.subr.bf16.mxu0 %v3165
        %3431 = vmatpush1.bf16.msra.mxu0 %v3164
        %3432 = vmatprep.subr.bf16.mxu0 %v3171
        %3433 = vmatpush1.bf16.msra.mxu0 %v3170
        %3434 = vmatprep.subr.bf16.mxu0 %v3177
        %3435 = vmatpush1.bf16.msra.mxu0 %v3176
        %3436 = vmatprep.subr.bf16.mxu0 %v3183
        %3437 = vmatpush1.bf16.msra.mxu0 %v3182
        %3438 = vmatprep.subr.bf16.mxu0 %v3189
        %3439 = vmatpush1.bf16.msra.mxu0 %v3188
        %3440 = vmatprep.subr.bf16.mxu0 %v3195
        %3441 = vmatpush1.bf16.msra.mxu0 %v3194
        %3442 = vmatprep.subr.bf16.mxu0 %v3201
        %3443 = vmatpush1.bf16.msra.mxu0 %v3200
        %3444 = vmatprep.subr.bf16.mxu0 %v3207
        %3445 = vmatpush1.bf16.msra.mxu0 %v3206
        %3446 = vmatprep.subr.bf16.mxu0 %v3213
        %3447 = vmatpush1.bf16.msra.mxu0 %v3212
        %3448 = vmatprep.subr.bf16.mxu0 %v3219
        %3449 = vmatpush1.bf16.msra.mxu0 %v3218
        %3450 = vmatprep.subr.bf16.mxu0 %v3225
        %3451 = vmatpush1.bf16.msra.mxu0 %v3224
        %3452 = vmatprep.subr.bf16.mxu0 %v3231
        %3453 = vmatpush1.bf16.msra.mxu0 %v3230
        %3454 = vmatprep.subr.bf16.mxu0 %v3237
        %3455 = vmatpush1.bf16.msra.mxu0 %v3236
        %3456 = vmatprep.subr.bf16.mxu0 %v3243
        %3457 = vmatpush1.bf16.msra.mxu0 %v3242
        %3458 = vmatprep.subr.bf16.mxu0 %v3249
        %3459 = vmatpush1.bf16.msra.mxu0 %v3248
        %3460 = vmatprep.mubr.bf16.mxu0 %v2769
        %3461 = vmatmul.mubr.bf16.gmra.mrb[0].mxu0 %v2768
        %v3462 = vpop.f32.mrb[0].mxu0
        %v3463 = vadd.f32 %v520, %v3462
        %v3464 = vpop.f32.mrb[0].mxu0
        %v3465 = vadd.f32 %v524, %v3464
        %v3466 = vpop.f32.mrb[0].mxu0
        %v3467 = vpop.f32.mrb[0].mxu0
        %3468 = vdwg.mxu0
        %s3469 = scalar_lea.vmem %s363, 36
        %v3470 = vld [vmem:[%s3469] sm:$0xff]
        %v3471 = vld [vmem:[%s3469 + $0x8] sm:$0xf]
        %v3472 = vunpack.c.l.bf16 %v3470
        %v3473 = vunpack.c.h.bf16 %v3470
        %v3474 = vunpack.c.l.bf16 %v3471
        %s3475 = scalar_lea.vmem %s371, 48
        %v3476 = vld [vmem:[%s3475] sm:$0xff]
        %v3477 = vld [vmem:[%s3475 + $0x8] sm:$0xf]
        %v3478 = vunpack.c.l.bf16 %v3476
        %v3479 = vunpack.c.h.bf16 %v3476
        %v3480 = vunpack.c.l.bf16 %v3477
        %v3481 = vadd.f32 %v3472, %v3381
        %v3482 = vxor.u32 %v3481, 2147483648
        %v3483 = vmul.f32 %v3482, 1.442695
        %v3484 = vpow.pop %v3483
        %v3485 = vadd.f32 %v3484, 1.0
        %v3486 = vrcp.pop %v3485
        %v3487 = vmul.f32 1.0, %v3486
        %v3488 = vadd.f32 %v3473, %v3383
        %v3489 = vxor.u32 %v3488, 2147483648
        %v3490 = vmul.f32 %v3489, 1.442695
        %v3491 = vpow.pop %v3490
        %v3492 = vadd.f32 %v3491, 1.0
        %v3493 = vrcp.pop %v3492
        %v3494 = vmul.f32 1.0, %v3493
        %v3495 = vmul.f32 %v3487, %v3422
        %v3496 = vadd.f32 %v3474, %v3495
        %v3497 = vtanh.pop %v3496
        %v3498 = vsub.f32 1.0, %v3494
        %v3499 = vmul.f32 %v3498, %v3497
        %v3500 = vmul.f32 %v3494, %v2753
        %v3501 = vadd.f32 %v3499, %v3500
        %v3502 = vadd.f32 %v3478, %v3424
        %v3503 = vxor.u32 %v3502, 2147483648
        %v3504 = vmul.f32 %v3503, 1.442695
        %v3505 = vpow.pop %v3504
        %v3506 = vadd.f32 %v3505, 1.0
        %v3507 = vrcp.pop %v3506
        %v3508 = vmul.f32 1.0, %v3507
        %v3509 = vadd.f32 %v3479, %v3463
        %v3510 = vxor.u32 %v3509, 2147483648
        %v3511 = vmul.f32 %v3510, 1.442695
        %v3512 = vpow.pop %v3511
        %v3513 = vadd.f32 %v3512, 1.0
        %v3514 = vrcp.pop %v3513
        %v3515 = vmul.f32 1.0, %v3514
        %v3516 = vmul.f32 %v3508, %v3465
        %v3517 = vadd.f32 %v3480, %v3516
        %v3518 = vtanh.pop %v3517
        %v3519 = vsub.f32 1.0, %v3515
        %v3520 = vmul.f32 %v3519, %v3518
        %v3521 = vmul.f32 %v3515, %v2759
        %v3522 = vadd.f32 %v3520, %v3521
        %v3523 = vstv %s2766
        %vm3524 = vcmp.lt.s32.totalorder %v3523, %v394
        %v3525 = vstv %s2767
        %vm3526 = vcmp.lt.s32.totalorder %v3525, %v394
        %v3527 = vsel %vm3524, 1, 0
        %3528 = vset.pattern.permute.xlu0 0
        %3529 = vperm.xlu0 %3528, %v3527
        %v3530 = vpop.permute.xlu0 %3529
        %vm3531 = vcmp.eq.s32.totalorder %v3530, 1
        %v3532 = vsel %vm3531, %v3501, %v2753
        %v3533 = vsel %vm3526, 1, 0
        %3534 = vset.pattern.permute.xlu0 0
        %3535 = vperm.xlu0 %3534, %v3533
        %v3536 = vpop.permute.xlu0 %3535
        %vm3537 = vcmp.eq.s32.totalorder %v3536, 1
        %v3538 = vsel %vm3537, %v3522, %v2759
        %v3539 = vsel %vm3531, %v3501, 0.0
        %s3540 = scalar_lea.vmem %s378, 24
        %3541 = vst [vmem:[%s3540] sm:$0xff] %v3539
        %v3542 = vsel %vm3537, %v3522, 0.0
        %s3543 = scalar_lea.vmem %s385, 32
        %3544 = vst [vmem:[%s3543] sm:$0xff] %v3542
        %s3545 = sadd.s32 %s398, 4
        %s3546 = sadd.s32 %s400, 3
        %v3547 = vpack.c.bf16 %v3532, %v3532
        %v3548 = vpack.c.bf16 %v3538, %v3538
        %v3549 = vld [vmem:[%s3] sm:$0xff]
        %v3550 = vld [vmem:[%s3 + $0x8] sm:$0xff]
        %v3551 = vld [vmem:[%s3 + $0x10] sm:$0xff]
        %v3552 = vld [vmem:[%s3 + $0x18] sm:$0xff]
        %v3553 = vld [vmem:[%s3 + $0x20] sm:$0xff]
        %v3554 = vld [vmem:[%s3 + $0x28] sm:$0xff]
        %v3555 = vld [vmem:[%s3 + $0x30] sm:$0xff]
        %v3556 = vld [vmem:[%s3 + $0x38] sm:$0xff]
        %v3557 = vld [vmem:[%s3 + $0x40] sm:$0xff]
        %v3558 = vld [vmem:[%s3 + $0x48] sm:$0xff]
        %v3559 = vld [vmem:[%s3 + $0x50] sm:$0xff]
        %v3560 = vld [vmem:[%s3 + $0x58] sm:$0xff]
        %v3561 = vld [vmem:[%s3 + $0x60] sm:$0xff]
        %v3562 = vld [vmem:[%s3 + $0x68] sm:$0xff]
        %v3563 = vld [vmem:[%s3 + $0x70] sm:$0xff]
        %v3564 = vld [vmem:[%s3 + $0x78] sm:$0xff]
        %v3565 = vld [vmem:[%s3 + $0x80] sm:$0xff]
        %v3566 = vld [vmem:[%s3 + $0x88] sm:$0xff]
        %v3567 = vld [vmem:[%s3 + $0x90] sm:$0xff]
        %v3568 = vld [vmem:[%s3 + $0x98] sm:$0xff]
        %v3569 = vld [vmem:[%s3 + $0xa0] sm:$0xff]
        %v3570 = vld [vmem:[%s3 + $0xa8] sm:$0xff]
        %v3571 = vld [vmem:[%s3 + $0xb0] sm:$0xff]
        %v3572 = vld [vmem:[%s3 + $0xb8] sm:$0xff]
        %v3573 = vld [vmem:[%s3 + $0xc0] sm:$0xff]
        %v3574 = vld [vmem:[%s3 + $0xc8] sm:$0xff]
        %v3575 = vld [vmem:[%s3 + $0xd0] sm:$0xff]
        %v3576 = vld [vmem:[%s3 + $0xd8] sm:$0xff]
        %v3577 = vld [vmem:[%s3 + $0xe0] sm:$0xff]
        %v3578 = vld [vmem:[%s3 + $0xe8] sm:$0xff]
        %v3579 = vld [vmem:[%s3 + $0xf0] sm:$0xff]
        %v3580 = vld [vmem:[%s3 + $0xf8] sm:$0xff]
        %v3581 = vld [vmem:[%s3 + $0x100] sm:$0xff]
        %v3582 = vld [vmem:[%s3 + $0x108] sm:$0xff]
        %v3583 = vld [vmem:[%s3 + $0x110] sm:$0xff]
        %v3584 = vld [vmem:[%s3 + $0x118] sm:$0xff]
        %v3585 = vld [vmem:[%s3 + $0x120] sm:$0xff]
        %v3586 = vld [vmem:[%s3 + $0x128] sm:$0xff]
        %v3587 = vld [vmem:[%s3 + $0x130] sm:$0xff]
        %v3588 = vld [vmem:[%s3 + $0x138] sm:$0xff]
        %v3589 = vld [vmem:[%s3 + $0x140] sm:$0xff]
        %v3590 = vld [vmem:[%s3 + $0x148] sm:$0xff]
        %v3591 = vld [vmem:[%s3 + $0x150] sm:$0xff]
        %v3592 = vld [vmem:[%s3 + $0x158] sm:$0xff]
        %v3593 = vld [vmem:[%s3 + $0x160] sm:$0xff]
        %v3594 = vld [vmem:[%s3 + $0x168] sm:$0xff]
        %v3595 = vld [vmem:[%s3 + $0x170] sm:$0xff]
        %v3596 = vld [vmem:[%s3 + $0x178] sm:$0xff]
        %v3597 = vld [vmem:[%s3 + $0x180] sm:$0xff]
        %v3598 = vld [vmem:[%s3 + $0x188] sm:$0xff]
        %v3599 = vld [vmem:[%s3 + $0x190] sm:$0xff]
        %v3600 = vld [vmem:[%s3 + $0x198] sm:$0xff]
        %v3601 = vld [vmem:[%s3 + $0x1a0] sm:$0xff]
        %v3602 = vld [vmem:[%s3 + $0x1a8] sm:$0xff]
        %v3603 = vld [vmem:[%s3 + $0x1b0] sm:$0xff]
        %v3604 = vld [vmem:[%s3 + $0x1b8] sm:$0xff]
        %v3605 = vld [vmem:[%s3 + $0x1c0] sm:$0xff]
        %v3606 = vld [vmem:[%s3 + $0x1c8] sm:$0xff]
        %v3607 = vld [vmem:[%s3 + $0x1d0] sm:$0xff]
        %v3608 = vld [vmem:[%s3 + $0x1d8] sm:$0xff]
        %v3609 = vld [vmem:[%s3 + $0x1e0] sm:$0xff]
        %v3610 = vld [vmem:[%s3 + $0x1e8] sm:$0xff]
        %v3611 = vld [vmem:[%s3 + $0x1f0] sm:$0xff]
        %v3612 = vld [vmem:[%s3 + $0x1f8] sm:$0xff]
        %v3613 = vld [vmem:[%s3 + $0x200] sm:$0xff]
        %v3614 = vld [vmem:[%s3 + $0x208] sm:$0xff]
        %v3615 = vld [vmem:[%s3 + $0x210] sm:$0xff]
        %v3616 = vld [vmem:[%s3 + $0x218] sm:$0xff]
        %v3617 = vld [vmem:[%s3 + $0x220] sm:$0xff]
        %v3618 = vld [vmem:[%s3 + $0x228] sm:$0xff]
        %v3619 = vld [vmem:[%s3 + $0x230] sm:$0xff]
        %v3620 = vld [vmem:[%s3 + $0x238] sm:$0xff]
        %v3621 = vld [vmem:[%s3 + $0x240] sm:$0xff]
        %v3622 = vld [vmem:[%s3 + $0x248] sm:$0xff]
        %v3623 = vld [vmem:[%s3 + $0x250] sm:$0xff]
        %v3624 = vld [vmem:[%s3 + $0x258] sm:$0xff]
        %v3625 = vld [vmem:[%s3 + $0x260] sm:$0xff]
        %v3626 = vld [vmem:[%s3 + $0x268] sm:$0xff]
        %v3627 = vld [vmem:[%s3 + $0x270] sm:$0xff]
        %v3628 = vld [vmem:[%s3 + $0x278] sm:$0xff]
        %v3629 = vld [vmem:[%s3 + $0x280] sm:$0xff]
        %v3630 = vld [vmem:[%s3 + $0x288] sm:$0xff]
        %v3631 = vld [vmem:[%s3 + $0x290] sm:$0xff]
        %v3632 = vld [vmem:[%s3 + $0x298] sm:$0xff]
        %v3633 = vld [vmem:[%s3 + $0x2a0] sm:$0xff]
        %v3634 = vld [vmem:[%s3 + $0x2a8] sm:$0xff]
        %v3635 = vld [vmem:[%s3 + $0x2b0] sm:$0xff]
        %v3636 = vld [vmem:[%s3 + $0x2b8] sm:$0xff]
        %v3637 = vld [vmem:[%s3 + $0x2c0] sm:$0xff]
        %v3638 = vld [vmem:[%s3 + $0x2c8] sm:$0xff]
        %v3639 = vld [vmem:[%s3 + $0x2d0] sm:$0xff]
        %v3640 = vld [vmem:[%s3 + $0x2d8] sm:$0xff]
        %v3641 = vld [vmem:[%s3 + $0x2e0] sm:$0xff]
        %v3642 = vld [vmem:[%s3 + $0x2e8] sm:$0xff]
        %v3643 = vld [vmem:[%s3 + $0x2f0] sm:$0xff]
        %v3644 = vld [vmem:[%s3 + $0x2f8] sm:$0xff]
        %v3741 = vunpack.c.l.b16 %v3549
        %v3742 = vunpack.c.h.b16 %v3549
        %v3743 = vunpack.c.l.b16 %v3550
        %v3744 = vunpack.c.h.b16 %v3550
        %v3745 = vunpack.c.l.b16 %v3551
        %v3746 = vunpack.c.h.b16 %v3551
        %v3747 = vunpack.c.l.b16 %v3552
        %v3748 = vunpack.c.h.b16 %v3552
        %v3749 = vunpack.c.l.b16 %v3553
        %v3750 = vunpack.c.h.b16 %v3553
        %v3751 = vunpack.c.l.b16 %v3554
        %v3752 = vunpack.c.h.b16 %v3554
        %v3753 = vunpack.c.l.b16 %v3555
        %v3754 = vunpack.c.h.b16 %v3555
        %v3755 = vunpack.c.l.b16 %v3556
        %v3756 = vunpack.c.h.b16 %v3556
        %v3757 = vunpack.c.l.b16 %v3557
        %v3758 = vunpack.c.h.b16 %v3557
        %v3759 = vunpack.c.l.b16 %v3558
        %v3760 = vunpack.c.h.b16 %v3558
        %v3761 = vunpack.c.l.b16 %v3559
        %v3762 = vunpack.c.h.b16 %v3559
        %v3763 = vunpack.c.l.b16 %v3560
        %v3764 = vunpack.c.h.b16 %v3560
        %v3765 = vunpack.c.l.b16 %v3561
        %v3766 = vunpack.c.h.b16 %v3561
        %v3767 = vunpack.c.l.b16 %v3562
        %v3768 = vunpack.c.h.b16 %v3562
        %v3769 = vunpack.c.l.b16 %v3563
        %v3770 = vunpack.c.h.b16 %v3563
        %v3771 = vunpack.c.l.b16 %v3564
        %v3772 = vunpack.c.h.b16 %v3564
        %v3773 = vunpack.c.l.b16 %v3565
        %v3774 = vunpack.c.h.b16 %v3565
        %v3775 = vunpack.c.l.b16 %v3566
        %v3776 = vunpack.c.h.b16 %v3566
        %v3777 = vunpack.c.l.b16 %v3567
        %v3778 = vunpack.c.h.b16 %v3567
        %v3779 = vunpack.c.l.b16 %v3568
        %v3780 = vunpack.c.h.b16 %v3568
        %v3781 = vunpack.c.l.b16 %v3569
        %v3782 = vunpack.c.h.b16 %v3569
        %v3783 = vunpack.c.l.b16 %v3570
        %v3784 = vunpack.c.h.b16 %v3570
        %v3785 = vunpack.c.l.b16 %v3571
        %v3786 = vunpack.c.h.b16 %v3571
        %v3787 = vunpack.c.l.b16 %v3572
        %v3788 = vunpack.c.h.b16 %v3572
        %v3789 = vunpack.c.l.b16 %v3573
        %v3790 = vunpack.c.h.b16 %v3573
        %v3791 = vunpack.c.l.b16 %v3574
        %v3792 = vunpack.c.h.b16 %v3574
        %v3793 = vunpack.c.l.b16 %v3575
        %v3794 = vunpack.c.h.b16 %v3575
        %v3795 = vunpack.c.l.b16 %v3576
        %v3796 = vunpack.c.h.b16 %v3576
        %v3797 = vunpack.c.l.b16 %v3577
        %v3798 = vunpack.c.h.b16 %v3577
        %v3799 = vunpack.c.l.b16 %v3578
        %v3800 = vunpack.c.h.b16 %v3578
        %v3801 = vunpack.c.l.b16 %v3579
        %v3802 = vunpack.c.h.b16 %v3579
        %v3803 = vunpack.c.l.b16 %v3580
        %v3804 = vunpack.c.h.b16 %v3580
        %v3805 = vunpack.c.l.b16 %v3581
        %v3806 = vunpack.c.h.b16 %v3581
        %v3807 = vunpack.c.l.b16 %v3582
        %v3808 = vunpack.c.h.b16 %v3582
        %v3809 = vunpack.c.l.b16 %v3583
        %v3810 = vunpack.c.h.b16 %v3583
        %v3811 = vunpack.c.l.b16 %v3584
        %v3812 = vunpack.c.h.b16 %v3584
        %v3813 = vunpack.c.l.b16 %v3585
        %v3814 = vunpack.c.h.b16 %v3585
        %v3815 = vunpack.c.l.b16 %v3586
        %v3816 = vunpack.c.h.b16 %v3586
        %v3817 = vunpack.c.l.b16 %v3587
        %v3818 = vunpack.c.h.b16 %v3587
        %v3819 = vunpack.c.l.b16 %v3588
        %v3820 = vunpack.c.h.b16 %v3588
        %v3821 = vunpack.c.l.b16 %v3589
        %v3822 = vunpack.c.h.b16 %v3589
        %v3823 = vunpack.c.l.b16 %v3590
        %v3824 = vunpack.c.h.b16 %v3590
        %v3825 = vunpack.c.l.b16 %v3591
        %v3826 = vunpack.c.h.b16 %v3591
        %v3827 = vunpack.c.l.b16 %v3592
        %v3828 = vunpack.c.h.b16 %v3592
        %v3829 = vunpack.c.l.b16 %v3593
        %v3830 = vunpack.c.h.b16 %v3593
        %v3831 = vunpack.c.l.b16 %v3594
        %v3832 = vunpack.c.h.b16 %v3594
        %v3833 = vunpack.c.l.b16 %v3595
        %v3834 = vunpack.c.h.b16 %v3595
        %v3835 = vunpack.c.l.b16 %v3596
        %v3836 = vunpack.c.h.b16 %v3596
        %v3837 = vunpack.c.l.b16 %v3597
        %v3838 = vunpack.c.h.b16 %v3597
        %v3839 = vunpack.c.l.b16 %v3598
        %v3840 = vunpack.c.h.b16 %v3598
        %v3841 = vunpack.c.l.b16 %v3599
        %v3842 = vunpack.c.h.b16 %v3599
        %v3843 = vunpack.c.l.b16 %v3600
        %v3844 = vunpack.c.h.b16 %v3600
        %v3845 = vunpack.c.l.b16 %v3601
        %v3846 = vunpack.c.h.b16 %v3601
        %v3847 = vunpack.c.l.b16 %v3602
        %v3848 = vunpack.c.h.b16 %v3602
        %v3849 = vunpack.c.l.b16 %v3603
        %v3850 = vunpack.c.h.b16 %v3603
        %v3851 = vunpack.c.l.b16 %v3604
        %v3852 = vunpack.c.h.b16 %v3604
        %v3853 = vunpack.c.l.b16 %v3605
        %v3854 = vunpack.c.h.b16 %v3605
        %v3855 = vunpack.c.l.b16 %v3606
        %v3856 = vunpack.c.h.b16 %v3606
        %v3857 = vunpack.c.l.b16 %v3607
        %v3858 = vunpack.c.h.b16 %v3607
        %v3859 = vunpack.c.l.b16 %v3608
        %v3860 = vunpack.c.h.b16 %v3608
        %v3861 = vunpack.c.l.b16 %v3609
        %v3862 = vunpack.c.h.b16 %v3609
        %v3863 = vunpack.c.l.b16 %v3610
        %v3864 = vunpack.c.h.b16 %v3610
        %v3865 = vunpack.c.l.b16 %v3611
        %v3866 = vunpack.c.h.b16 %v3611
        %v3867 = vunpack.c.l.b16 %v3612
        %v3868 = vunpack.c.h.b16 %v3612
        %v3869 = vunpack.c.l.b16 %v3613
        %v3870 = vunpack.c.h.b16 %v3613
        %v3871 = vunpack.c.l.b16 %v3614
        %v3872 = vunpack.c.h.b16 %v3614
        %v3873 = vunpack.c.l.b16 %v3615
        %v3874 = vunpack.c.h.b16 %v3615
        %v3875 = vunpack.c.l.b16 %v3616
        %v3876 = vunpack.c.h.b16 %v3616
        %v3877 = vunpack.c.l.b16 %v3617
        %v3878 = vunpack.c.h.b16 %v3617
        %v3879 = vunpack.c.l.b16 %v3618
        %v3880 = vunpack.c.h.b16 %v3618
        %v3881 = vunpack.c.l.b16 %v3619
        %v3882 = vunpack.c.h.b16 %v3619
        %v3883 = vunpack.c.l.b16 %v3620
        %v3884 = vunpack.c.h.b16 %v3620
        %v3885 = vunpack.c.l.b16 %v3621
        %v3886 = vunpack.c.h.b16 %v3621
        %v3887 = vunpack.c.l.b16 %v3622
        %v3888 = vunpack.c.h.b16 %v3622
        %v3889 = vunpack.c.l.b16 %v3623
        %v3890 = vunpack.c.h.b16 %v3623
        %v3891 = vunpack.c.l.b16 %v3624
        %v3892 = vunpack.c.h.b16 %v3624
        %v3893 = vunpack.c.l.b16 %v3625
        %v3894 = vunpack.c.h.b16 %v3625
        %v3895 = vunpack.c.l.b16 %v3626
        %v3896 = vunpack.c.h.b16 %v3626
        %v3897 = vunpack.c.l.b16 %v3627
        %v3898 = vunpack.c.h.b16 %v3627
        %v3899 = vunpack.c.l.b16 %v3628
        %v3900 = vunpack.c.h.b16 %v3628
        %v3901 = vunpack.c.l.b16 %v3629
        %v3902 = vunpack.c.h.b16 %v3629
        %v3903 = vunpack.c.l.b16 %v3630
        %v3904 = vunpack.c.h.b16 %v3630
        %v3905 = vunpack.c.l.b16 %v3631
        %v3906 = vunpack.c.h.b16 %v3631
        %v3907 = vunpack.c.l.b16 %v3632
        %v3908 = vunpack.c.h.b16 %v3632
        %v3909 = vunpack.c.l.b16 %v3633
        %v3910 = vunpack.c.h.b16 %v3633
        %v3911 = vunpack.c.l.b16 %v3634
        %v3912 = vunpack.c.h.b16 %v3634
        %v3913 = vunpack.c.l.b16 %v3635
        %v3914 = vunpack.c.h.b16 %v3635
        %v3915 = vunpack.c.l.b16 %v3636
        %v3916 = vunpack.c.h.b16 %v3636
        %v3917 = vunpack.c.l.b16 %v3637
        %v3918 = vunpack.c.h.b16 %v3637
        %v3919 = vunpack.c.l.b16 %v3638
        %v3920 = vunpack.c.h.b16 %v3638
        %v3921 = vunpack.c.l.b16 %v3639
        %v3922 = vunpack.c.h.b16 %v3639
        %v3923 = vunpack.c.l.b16 %v3640
        %v3924 = vunpack.c.h.b16 %v3640
        %v3925 = vunpack.c.l.b16 %v3641
        %v3926 = vunpack.c.h.b16 %v3641
        %v3927 = vunpack.c.l.b16 %v3642
        %v3928 = vunpack.c.h.b16 %v3642
        %v3929 = vunpack.c.l.b16 %v3643
        %v3930 = vunpack.c.h.b16 %v3643
        %v3931 = vunpack.c.l.b16 %v3644
        %v3932 = vunpack.c.h.b16 %v3644
        %v3933 = vpack.c.b16 %v3747, %v3741
        %v3934 = vpack.c.b16 %v3748, %v3742
        %v3935 = vpack.c.b16 %v3749, %v3743
        %v3936 = vpack.c.b16 %v3750, %v3744
        %v3937 = vpack.c.b16 %v3751, %v3745
        %v3938 = vpack.c.b16 %v3752, %v3746
        %v3939 = vpack.c.b16 %v3759, %v3753
        %v3940 = vpack.c.b16 %v3760, %v3754
        %v3941 = vpack.c.b16 %v3761, %v3755
        %v3942 = vpack.c.b16 %v3762, %v3756
        %v3943 = vpack.c.b16 %v3763, %v3757
        %v3944 = vpack.c.b16 %v3764, %v3758
        %v3945 = vpack.c.b16 %v3771, %v3765
        %v3946 = vpack.c.b16 %v3772, %v3766
        %v3947 = vpack.c.b16 %v3773, %v3767
        %v3948 = vpack.c.b16 %v3774, %v3768
        %v3949 = vpack.c.b16 %v3775, %v3769
        %v3950 = vpack.c.b16 %v3776, %v3770
        %v3951 = vpack.c.b16 %v3783, %v3777
        %v3952 = vpack.c.b16 %v3784, %v3778
        %v3953 = vpack.c.b16 %v3785, %v3779
        %v3954 = vpack.c.b16 %v3786, %v3780
        %v3955 = vpack.c.b16 %v3787, %v3781
        %v3956 = vpack.c.b16 %v3788, %v3782
        %v3957 = vpack.c.b16 %v3795, %v3789
        %v3958 = vpack.c.b16 %v3796, %v3790
        %v3959 = vpack.c.b16 %v3797, %v3791
        %v3960 = vpack.c.b16 %v3798, %v3792
        %v3961 = vpack.c.b16 %v3799, %v3793
        %v3962 = vpack.c.b16 %v3800, %v3794
        %v3963 = vpack.c.b16 %v3807, %v3801
        %v3964 = vpack.c.b16 %v3808, %v3802
        %v3965 = vpack.c.b16 %v3809, %v3803
        %v3966 = vpack.c.b16 %v3810, %v3804
        %v3967 = vpack.c.b16 %v3811, %v3805
        %v3968 = vpack.c.b16 %v3812, %v3806
        %v3969 = vpack.c.b16 %v3819, %v3813
        %v3970 = vpack.c.b16 %v3820, %v3814
        %v3971 = vpack.c.b16 %v3821, %v3815
        %v3972 = vpack.c.b16 %v3822, %v3816
        %v3973 = vpack.c.b16 %v3823, %v3817
        %v3974 = vpack.c.b16 %v3824, %v3818
        %v3975 = vpack.c.b16 %v3831, %v3825
        %v3976 = vpack.c.b16 %v3832, %v3826
        %v3977 = vpack.c.b16 %v3833, %v3827
        %v3978 = vpack.c.b16 %v3834, %v3828
        %v3979 = vpack.c.b16 %v3835, %v3829
        %v3980 = vpack.c.b16 %v3836, %v3830
        %v3981 = vpack.c.b16 %v3843, %v3837
        %v3982 = vpack.c.b16 %v3844, %v3838
        %v3983 = vpack.c.b16 %v3845, %v3839
        %v3984 = vpack.c.b16 %v3846, %v3840
        %v3985 = vpack.c.b16 %v3847, %v3841
        %v3986 = vpack.c.b16 %v3848, %v3842
        %v3987 = vpack.c.b16 %v3855, %v3849
        %v3988 = vpack.c.b16 %v3856, %v3850
        %v3989 = vpack.c.b16 %v3857, %v3851
        %v3990 = vpack.c.b16 %v3858, %v3852
        %v3991 = vpack.c.b16 %v3859, %v3853
        %v3992 = vpack.c.b16 %v3860, %v3854
        %v3993 = vpack.c.b16 %v3867, %v3861
        %v3994 = vpack.c.b16 %v3868, %v3862
        %v3995 = vpack.c.b16 %v3869, %v3863
        %v3996 = vpack.c.b16 %v3870, %v3864
        %v3997 = vpack.c.b16 %v3871, %v3865
        %v3998 = vpack.c.b16 %v3872, %v3866
        %v3999 = vpack.c.b16 %v3879, %v3873
        %v4000 = vpack.c.b16 %v3880, %v3874
        %v4001 = vpack.c.b16 %v3881, %v3875
        %v4002 = vpack.c.b16 %v3882, %v3876
        %v4003 = vpack.c.b16 %v3883, %v3877
        %v4004 = vpack.c.b16 %v3884, %v3878
        %v4005 = vpack.c.b16 %v3891, %v3885
        %v4006 = vpack.c.b16 %v3892, %v3886
        %v4007 = vpack.c.b16 %v3893, %v3887
        %v4008 = vpack.c.b16 %v3894, %v3888
        %v4009 = vpack.c.b16 %v3895, %v3889
        %v4010 = vpack.c.b16 %v3896, %v3890
        %v4011 = vpack.c.b16 %v3903, %v3897
        %v4012 = vpack.c.b16 %v3904, %v3898
        %v4013 = vpack.c.b16 %v3905, %v3899
        %v4014 = vpack.c.b16 %v3906, %v3900
        %v4015 = vpack.c.b16 %v3907, %v3901
        %v4016 = vpack.c.b16 %v3908, %v3902
        %v4017 = vpack.c.b16 %v3915, %v3909
        %v4018 = vpack.c.b16 %v3916, %v3910
        %v4019 = vpack.c.b16 %v3917, %v3911
        %v4020 = vpack.c.b16 %v3918, %v3912
        %v4021 = vpack.c.b16 %v3919, %v3913
        %v4022 = vpack.c.b16 %v3920, %v3914
        %v4023 = vpack.c.b16 %v3927, %v3921
        %v4024 = vpack.c.b16 %v3928, %v3922
        %v4025 = vpack.c.b16 %v3929, %v3923
        %v4026 = vpack.c.b16 %v3930, %v3924
        %v4027 = vpack.c.b16 %v3931, %v3925
        %v4028 = vpack.c.b16 %v3932, %v3926
        %4125 = vmatprep.subr.bf16.mxu0 %v3934
        %4126 = vmatpush1.bf16.msra.mxu0 %v3933
        %4127 = vmatprep.subr.bf16.mxu0 %v3940
        %4128 = vmatpush1.bf16.msra.mxu0 %v3939
        %4129 = vmatprep.subr.bf16.mxu0 %v3946
        %4130 = vmatpush1.bf16.msra.mxu0 %v3945
        %4131 = vmatprep.subr.bf16.mxu0 %v3952
        %4132 = vmatpush1.bf16.msra.mxu0 %v3951
        %4133 = vmatprep.subr.bf16.mxu0 %v3958
        %4134 = vmatpush1.bf16.msra.mxu0 %v3957
        %4135 = vmatprep.subr.bf16.mxu0 %v3964
        %4136 = vmatpush1.bf16.msra.mxu0 %v3963
        %4137 = vmatprep.subr.bf16.mxu0 %v3970
        %4138 = vmatpush1.bf16.msra.mxu0 %v3969
        %4139 = vmatprep.subr.bf16.mxu0 %v3976
        %4140 = vmatpush1.bf16.msra.mxu0 %v3975
        %4141 = vmatprep.subr.bf16.mxu0 %v3982
        %4142 = vmatpush1.bf16.msra.mxu0 %v3981
        %4143 = vmatprep.subr.bf16.mxu0 %v3988
        %4144 = vmatpush1.bf16.msra.mxu0 %v3987
        %4145 = vmatprep.subr.bf16.mxu0 %v3994
        %4146 = vmatpush1.bf16.msra.mxu0 %v3993
        %4147 = vmatprep.subr.bf16.mxu0 %v4000
        %4148 = vmatpush1.bf16.msra.mxu0 %v3999
        %4149 = vmatprep.subr.bf16.mxu0 %v4006
        %4150 = vmatpush1.bf16.msra.mxu0 %v4005
        %4151 = vmatprep.subr.bf16.mxu0 %v4012
        %4152 = vmatpush1.bf16.msra.mxu0 %v4011
        %4153 = vmatprep.subr.bf16.mxu0 %v4018
        %4154 = vmatpush1.bf16.msra.mxu0 %v4017
        %4155 = vmatprep.subr.bf16.mxu0 %v4024
        %4156 = vmatpush1.bf16.msra.mxu0 %v4023
        %4157 = vmatprep.mubr.bf16.mxu0 %v3548
        %4158 = vmatmul.mubr.bf16.gmra.mrb[0].mxu0 %v3547
        %v4159 = vpop.f32.mrb[0].mxu0
        %v4160 = vadd.f32 %v504, %v4159
        %v4161 = vpop.f32.mrb[0].mxu0
        %v4162 = vadd.f32 %v508, %v4161
        %v4163 = vpop.f32.mrb[0].mxu0
        %v4164 = vpop.f32.mrb[0].mxu0
        %4165 = vdwg.mxu0
        %4166 = vmatprep.subr.bf16.mxu0 %v3936
        %4167 = vmatpush1.bf16.msra.mxu0 %v3935
        %4168 = vmatprep.subr.bf16.mxu0 %v3942
        %4169 = vmatpush1.bf16.msra.mxu0 %v3941
        %4170 = vmatprep.subr.bf16.mxu0 %v3948
        %4171 = vmatpush1.bf16.msra.mxu0 %v3947
        %4172 = vmatprep.subr.bf16.mxu0 %v3954
        %4173 = vmatpush1.bf16.msra.mxu0 %v3953
        %4174 = vmatprep.subr.bf16.mxu0 %v3960
        %4175 = vmatpush1.bf16.msra.mxu0 %v3959
        %4176 = vmatprep.subr.bf16.mxu0 %v3966
        %4177 = vmatpush1.bf16.msra.mxu0 %v3965
        %4178 = vmatprep.subr.bf16.mxu0 %v3972
        %4179 = vmatpush1.bf16.msra.mxu0 %v3971
        %4180 = vmatprep.subr.bf16.mxu0 %v3978
        %4181 = vmatpush1.bf16.msra.mxu0 %v3977
        %4182 = vmatprep.subr.bf16.mxu0 %v3984
        %4183 = vmatpush1.bf16.msra.mxu0 %v3983
        %4184 = vmatprep.subr.bf16.mxu0 %v3990
        %4185 = vmatpush1.bf16.msra.mxu0 %v3989
        %4186 = vmatprep.subr.bf16.mxu0 %v3996
        %4187 = vmatpush1.bf16.msra.mxu0 %v3995
        %4188 = vmatprep.subr.bf16.mxu0 %v4002
        %4189 = vmatpush1.bf16.msra.mxu0 %v4001
        %4190 = vmatprep.subr.bf16.mxu0 %v4008
        %4191 = vmatpush1.bf16.msra.mxu0 %v4007
        %4192 = vmatprep.subr.bf16.mxu0 %v4014
        %4193 = vmatpush1.bf16.msra.mxu0 %v4013
        %4194 = vmatprep.subr.bf16.mxu0 %v4020
        %4195 = vmatpush1.bf16.msra.mxu0 %v4019
        %4196 = vmatprep.subr.bf16.mxu0 %v4026
        %4197 = vmatpush1.bf16.msra.mxu0 %v4025
        %4198 = vmatprep.mubr.bf16.mxu0 %v3548
        %4199 = vmatmul.mubr.bf16.gmra.mrb[0].mxu0 %v3547
        %v4200 = vpop.f32.mrb[0].mxu0
        %v4201 = vadd.f32 %v512, %v4200
        %v4202 = vpop.f32.mrb[0].mxu0
        %v4203 = vadd.f32 %v516, %v4202
        %v4204 = vpop.f32.mrb[0].mxu0
        %v4205 = vpop.f32.mrb[0].mxu0
        %4206 = vdwg.mxu0
        %4207 = vmatprep.subr.bf16.mxu0 %v3938
        %4208 = vmatpush1.bf16.msra.mxu0 %v3937
        %4209 = vmatprep.subr.bf16.mxu0 %v3944
        %4210 = vmatpush1.bf16.msra.mxu0 %v3943
        %4211 = vmatprep.subr.bf16.mxu0 %v3950
        %4212 = vmatpush1.bf16.msra.mxu0 %v3949
        %4213 = vmatprep.subr.bf16.mxu0 %v3956
        %4214 = vmatpush1.bf16.msra.mxu0 %v3955
        %4215 = vmatprep.subr.bf16.mxu0 %v3962
        %4216 = vmatpush1.bf16.msra.mxu0 %v3961
        %4217 = vmatprep.subr.bf16.mxu0 %v3968
        %4218 = vmatpush1.bf16.msra.mxu0 %v3967
        %4219 = vmatprep.subr.bf16.mxu0 %v3974
        %4220 = vmatpush1.bf16.msra.mxu0 %v3973
        %4221 = vmatprep.subr.bf16.mxu0 %v3980
        %4222 = vmatpush1.bf16.msra.mxu0 %v3979
        %4223 = vmatprep.subr.bf16.mxu0 %v3986
        %4224 = vmatpush1.bf16.msra.mxu0 %v3985
        %4225 = vmatprep.subr.bf16.mxu0 %v3992
        %4226 = vmatpush1.bf16.msra.mxu0 %v3991
        %4227 = vmatprep.subr.bf16.mxu0 %v3998
        %4228 = vmatpush1.bf16.msra.mxu0 %v3997
        %4229 = vmatprep.subr.bf16.mxu0 %v4004
        %4230 = vmatpush1.bf16.msra.mxu0 %v4003
        %4231 = vmatprep.subr.bf16.mxu0 %v4010
        %4232 = vmatpush1.bf16.msra.mxu0 %v4009
        %4233 = vmatprep.subr.bf16.mxu0 %v4016
        %4234 = vmatpush1.bf16.msra.mxu0 %v4015
        %4235 = vmatprep.subr.bf16.mxu0 %v4022
        %4236 = vmatpush1.bf16.msra.mxu0 %v4021
        %4237 = vmatprep.subr.bf16.mxu0 %v4028
        %4238 = vmatpush1.bf16.msra.mxu0 %v4027
        %4239 = vmatprep.mubr.bf16.mxu0 %v3548
        %4240 = vmatmul.mubr.bf16.gmra.mrb[0].mxu0 %v3547
        %v4241 = vpop.f32.mrb[0].mxu0
        %v4242 = vadd.f32 %v520, %v4241
        %v4243 = vpop.f32.mrb[0].mxu0
        %v4244 = vadd.f32 %v524, %v4243
        %v4245 = vpop.f32.mrb[0].mxu0
        %v4246 = vpop.f32.mrb[0].mxu0
        %4247 = vdwg.mxu0
        %s4248 = scalar_lea.vmem %s363, 48
        %v4249 = vld [vmem:[%s4248] sm:$0xff]
        %v4250 = vld [vmem:[%s4248 + $0x8] sm:$0xf]
        %v4251 = vunpack.c.l.bf16 %v4249
        %v4252 = vunpack.c.h.bf16 %v4249
        %v4253 = vunpack.c.l.bf16 %v4250
        %s4254 = scalar_lea.vmem %s371, 36
        %v4255 = vld [vmem:[%s4254] sm:$0xff]
        %v4256 = vld [vmem:[%s4254 + $0x8] sm:$0xf]
        %v4257 = vunpack.c.l.bf16 %v4255
        %v4258 = vunpack.c.h.bf16 %v4255
        %v4259 = vunpack.c.l.bf16 %v4256
        %v4260 = vadd.f32 %v4251, %v4160
        %v4261 = vxor.u32 %v4260, 2147483648
        %v4262 = vmul.f32 %v4261, 1.442695
        %v4263 = vpow.pop %v4262
        %v4264 = vadd.f32 %v4263, 1.0
        %v4265 = vrcp.pop %v4264
        %v4266 = vmul.f32 1.0, %v4265
        %v4267 = vadd.f32 %v4252, %v4162
        %v4268 = vxor.u32 %v4267, 2147483648
        %v4269 = vmul.f32 %v4268, 1.442695
        %v4270 = vpow.pop %v4269
        %v4271 = vadd.f32 %v4270, 1.0
        %v4272 = vrcp.pop %v4271
        %v4273 = vmul.f32 1.0, %v4272
        %v4274 = vmul.f32 %v4266, %v4201
        %v4275 = vadd.f32 %v4253, %v4274
        %v4276 = vtanh.pop %v4275
        %v4277 = vsub.f32 1.0, %v4273
        %v4278 = vmul.f32 %v4277, %v4276
        %v4279 = vmul.f32 %v4273, %v3532
        %v4280 = vadd.f32 %v4278, %v4279
        %v4281 = vadd.f32 %v4257, %v4203
        %v4282 = vxor.u32 %v4281, 2147483648
        %v4283 = vmul.f32 %v4282, 1.442695
        %v4284 = vpow.pop %v4283
        %v4285 = vadd.f32 %v4284, 1.0
        %v4286 = vrcp.pop %v4285
        %v4287 = vmul.f32 1.0, %v4286
        %v4288 = vadd.f32 %v4258, %v4242
        %v4289 = vxor.u32 %v4288, 2147483648
        %v4290 = vmul.f32 %v4289, 1.442695
        %v4291 = vpow.pop %v4290
        %v4292 = vadd.f32 %v4291, 1.0
        %v4293 = vrcp.pop %v4292
        %v4294 = vmul.f32 1.0, %v4293
        %v4295 = vmul.f32 %v4287, %v4244
        %v4296 = vadd.f32 %v4259, %v4295
        %v4297 = vtanh.pop %v4296
        %v4298 = vsub.f32 1.0, %v4294
        %v4299 = vmul.f32 %v4298, %v4297
        %v4300 = vmul.f32 %v4294, %v3538
        %v4301 = vadd.f32 %v4299, %v4300
        %v4302 = vstv %s3545
        %vm4303 = vcmp.lt.s32.totalorder %v4302, %v394
        %v4304 = vstv %s3546
        %vm4305 = vcmp.lt.s32.totalorder %v4304, %v394
        %v4306 = vsel %vm4303, 1, 0
        %4307 = vset.pattern.permute.xlu0 0
        %4308 = vperm.xlu0 %4307, %v4306
        %v4309 = vpop.permute.xlu0 %4308
        %vm4310 = vcmp.eq.s32.totalorder %v4309, 1
        %v4311 = vsel %vm4310, %v4280, %v3532
        %v4312 = vsel %vm4305, 1, 0
        %4313 = vset.pattern.permute.xlu0 0
        %4314 = vperm.xlu0 %4313, %v4312
        %v4315 = vpop.permute.xlu0 %4314
        %vm4316 = vcmp.eq.s32.totalorder %v4315, 1
        %v4317 = vsel %vm4316, %v4301, %v3538
        %v4318 = vsel %vm4310, %v4280, 0.0
        %s4319 = scalar_lea.vmem %s378, 32
        %4320 = vst [vmem:[%s4319] sm:$0xff] %v4318
        %v4321 = vsel %vm4316, %v4301, 0.0
        %s4322 = scalar_lea.vmem %s385, 24
        %4323 = vst [vmem:[%s4322] sm:$0xff] %v4321
        %s4324 = sadd.s32 %s398, 5
        %s4325 = sadd.s32 %s400, 2
        %v4326 = vpack.c.bf16 %v4311, %v4311
        %v4327 = vpack.c.bf16 %v4317, %v4317
        %v4328 = vld [vmem:[%s3] sm:$0xff]
        %v4329 = vld [vmem:[%s3 + $0x8] sm:$0xff]
        %v4330 = vld [vmem:[%s3 + $0x10] sm:$0xff]
        %v4331 = vld [vmem:[%s3 + $0x18] sm:$0xff]
        %v4332 = vld [vmem:[%s3 + $0x20] sm:$0xff]
        %v4333 = vld [vmem:[%s3 + $0x28] sm:$0xff]
        %v4334 = vld [vmem:[%s3 + $0x30] sm:$0xff]
        %v4335 = vld [vmem:[%s3 + $0x38] sm:$0xff]
        %v4336 = vld [vmem:[%s3 + $0x40] sm:$0xff]
        %v4337 = vld [vmem:[%s3 + $0x48] sm:$0xff]
        %v4338 = vld [vmem:[%s3 + $0x50] sm:$0xff]
        %v4339 = vld [vmem:[%s3 + $0x58] sm:$0xff]
        %v4340 = vld [vmem:[%s3 + $0x60] sm:$0xff]
        %v4341 = vld [vmem:[%s3 + $0x68] sm:$0xff]
        %v4342 = vld [vmem:[%s3 + $0x70] sm:$0xff]
        %v4343 = vld [vmem:[%s3 + $0x78] sm:$0xff]
        %v4344 = vld [vmem:[%s3 + $0x80] sm:$0xff]
        %v4345 = vld [vmem:[%s3 + $0x88] sm:$0xff]
        %v4346 = vld [vmem:[%s3 + $0x90] sm:$0xff]
        %v4347 = vld [vmem:[%s3 + $0x98] sm:$0xff]
        %v4348 = vld [vmem:[%s3 + $0xa0] sm:$0xff]
        %v4349 = vld [vmem:[%s3 + $0xa8] sm:$0xff]
        %v4350 = vld [vmem:[%s3 + $0xb0] sm:$0xff]
        %v4351 = vld [vmem:[%s3 + $0xb8] sm:$0xff]
        %v4352 = vld [vmem:[%s3 + $0xc0] sm:$0xff]
        %v4353 = vld [vmem:[%s3 + $0xc8] sm:$0xff]
        %v4354 = vld [vmem:[%s3 + $0xd0] sm:$0xff]
        %v4355 = vld [vmem:[%s3 + $0xd8] sm:$0xff]
        %v4356 = vld [vmem:[%s3 + $0xe0] sm:$0xff]
        %v4357 = vld [vmem:[%s3 + $0xe8] sm:$0xff]
        %v4358 = vld [vmem:[%s3 + $0xf0] sm:$0xff]
        %v4359 = vld [vmem:[%s3 + $0xf8] sm:$0xff]
        %v4360 = vld [vmem:[%s3 + $0x100] sm:$0xff]
        %v4361 = vld [vmem:[%s3 + $0x108] sm:$0xff]
        %v4362 = vld [vmem:[%s3 + $0x110] sm:$0xff]
        %v4363 = vld [vmem:[%s3 + $0x118] sm:$0xff]
        %v4364 = vld [vmem:[%s3 + $0x120] sm:$0xff]
        %v4365 = vld [vmem:[%s3 + $0x128] sm:$0xff]
        %v4366 = vld [vmem:[%s3 + $0x130] sm:$0xff]
        %v4367 = vld [vmem:[%s3 + $0x138] sm:$0xff]
        %v4368 = vld [vmem:[%s3 + $0x140] sm:$0xff]
        %v4369 = vld [vmem:[%s3 + $0x148] sm:$0xff]
        %v4370 = vld [vmem:[%s3 + $0x150] sm:$0xff]
        %v4371 = vld [vmem:[%s3 + $0x158] sm:$0xff]
        %v4372 = vld [vmem:[%s3 + $0x160] sm:$0xff]
        %v4373 = vld [vmem:[%s3 + $0x168] sm:$0xff]
        %v4374 = vld [vmem:[%s3 + $0x170] sm:$0xff]
        %v4375 = vld [vmem:[%s3 + $0x178] sm:$0xff]
        %v4376 = vld [vmem:[%s3 + $0x180] sm:$0xff]
        %v4377 = vld [vmem:[%s3 + $0x188] sm:$0xff]
        %v4378 = vld [vmem:[%s3 + $0x190] sm:$0xff]
        %v4379 = vld [vmem:[%s3 + $0x198] sm:$0xff]
        %v4380 = vld [vmem:[%s3 + $0x1a0] sm:$0xff]
        %v4381 = vld [vmem:[%s3 + $0x1a8] sm:$0xff]
        %v4382 = vld [vmem:[%s3 + $0x1b0] sm:$0xff]
        %v4383 = vld [vmem:[%s3 + $0x1b8] sm:$0xff]
        %v4384 = vld [vmem:[%s3 + $0x1c0] sm:$0xff]
        %v4385 = vld [vmem:[%s3 + $0x1c8] sm:$0xff]
        %v4386 = vld [vmem:[%s3 + $0x1d0] sm:$0xff]
        %v4387 = vld [vmem:[%s3 + $0x1d8] sm:$0xff]
        %v4388 = vld [vmem:[%s3 + $0x1e0] sm:$0xff]
        %v4389 = vld [vmem:[%s3 + $0x1e8] sm:$0xff]
        %v4390 = vld [vmem:[%s3 + $0x1f0] sm:$0xff]
        %v4391 = vld [vmem:[%s3 + $0x1f8] sm:$0xff]
        %v4392 = vld [vmem:[%s3 + $0x200] sm:$0xff]
        %v4393 = vld [vmem:[%s3 + $0x208] sm:$0xff]
        %v4394 = vld [vmem:[%s3 + $0x210] sm:$0xff]
        %v4395 = vld [vmem:[%s3 + $0x218] sm:$0xff]
        %v4396 = vld [vmem:[%s3 + $0x220] sm:$0xff]
        %v4397 = vld [vmem:[%s3 + $0x228] sm:$0xff]
        %v4398 = vld [vmem:[%s3 + $0x230] sm:$0xff]
        %v4399 = vld [vmem:[%s3 + $0x238] sm:$0xff]
        %v4400 = vld [vmem:[%s3 + $0x240] sm:$0xff]
        %v4401 = vld [vmem:[%s3 + $0x248] sm:$0xff]
        %v4402 = vld [vmem:[%s3 + $0x250] sm:$0xff]
        %v4403 = vld [vmem:[%s3 + $0x258] sm:$0xff]
        %v4404 = vld [vmem:[%s3 + $0x260] sm:$0xff]
        %v4405 = vld [vmem:[%s3 + $0x268] sm:$0xff]
        %v4406 = vld [vmem:[%s3 + $0x270] sm:$0xff]
        %v4407 = vld [vmem:[%s3 + $0x278] sm:$0xff]
        %v4408 = vld [vmem:[%s3 + $0x280] sm:$0xff]
        %v4409 = vld [vmem:[%s3 + $0x288] sm:$0xff]
        %v4410 = vld [vmem:[%s3 + $0x290] sm:$0xff]
        %v4411 = vld [vmem:[%s3 + $0x298] sm:$0xff]
        %v4412 = vld [vmem:[%s3 + $0x2a0] sm:$0xff]
        %v4413 = vld [vmem:[%s3 + $0x2a8] sm:$0xff]
        %v4414 = vld [vmem:[%s3 + $0x2b0] sm:$0xff]
        %v4415 = vld [vmem:[%s3 + $0x2b8] sm:$0xff]
        %v4416 = vld [vmem:[%s3 + $0x2c0] sm:$0xff]
        %v4417 = vld [vmem:[%s3 + $0x2c8] sm:$0xff]
        %v4418 = vld [vmem:[%s3 + $0x2d0] sm:$0xff]
        %v4419 = vld [vmem:[%s3 + $0x2d8] sm:$0xff]
        %v4420 = vld [vmem:[%s3 + $0x2e0] sm:$0xff]
        %v4421 = vld [vmem:[%s3 + $0x2e8] sm:$0xff]
        %v4422 = vld [vmem:[%s3 + $0x2f0] sm:$0xff]
        %v4423 = vld [vmem:[%s3 + $0x2f8] sm:$0xff]
        %v4520 = vunpack.c.l.b16 %v4328
        %v4521 = vunpack.c.h.b16 %v4328
        %v4522 = vunpack.c.l.b16 %v4329
        %v4523 = vunpack.c.h.b16 %v4329
        %v4524 = vunpack.c.l.b16 %v4330
        %v4525 = vunpack.c.h.b16 %v4330
        %v4526 = vunpack.c.l.b16 %v4331
        %v4527 = vunpack.c.h.b16 %v4331
        %v4528 = vunpack.c.l.b16 %v4332
        %v4529 = vunpack.c.h.b16 %v4332
        %v4530 = vunpack.c.l.b16 %v4333
        %v4531 = vunpack.c.h.b16 %v4333
        %v4532 = vunpack.c.l.b16 %v4334
        %v4533 = vunpack.c.h.b16 %v4334
        %v4534 = vunpack.c.l.b16 %v4335
        %v4535 = vunpack.c.h.b16 %v4335
        %v4536 = vunpack.c.l.b16 %v4336
        %v4537 = vunpack.c.h.b16 %v4336
        %v4538 = vunpack.c.l.b16 %v4337
        %v4539 = vunpack.c.h.b16 %v4337
        %v4540 = vunpack.c.l.b16 %v4338
        %v4541 = vunpack.c.h.b16 %v4338
        %v4542 = vunpack.c.l.b16 %v4339
        %v4543 = vunpack.c.h.b16 %v4339
        %v4544 = vunpack.c.l.b16 %v4340
        %v4545 = vunpack.c.h.b16 %v4340
        %v4546 = vunpack.c.l.b16 %v4341
        %v4547 = vunpack.c.h.b16 %v4341
        %v4548 = vunpack.c.l.b16 %v4342
        %v4549 = vunpack.c.h.b16 %v4342
        %v4550 = vunpack.c.l.b16 %v4343
        %v4551 = vunpack.c.h.b16 %v4343
        %v4552 = vunpack.c.l.b16 %v4344
        %v4553 = vunpack.c.h.b16 %v4344
        %v4554 = vunpack.c.l.b16 %v4345
        %v4555 = vunpack.c.h.b16 %v4345
        %v4556 = vunpack.c.l.b16 %v4346
        %v4557 = vunpack.c.h.b16 %v4346
        %v4558 = vunpack.c.l.b16 %v4347
        %v4559 = vunpack.c.h.b16 %v4347
        %v4560 = vunpack.c.l.b16 %v4348
        %v4561 = vunpack.c.h.b16 %v4348
        %v4562 = vunpack.c.l.b16 %v4349
        %v4563 = vunpack.c.h.b16 %v4349
        %v4564 = vunpack.c.l.b16 %v4350
        %v4565 = vunpack.c.h.b16 %v4350
        %v4566 = vunpack.c.l.b16 %v4351
        %v4567 = vunpack.c.h.b16 %v4351
        %v4568 = vunpack.c.l.b16 %v4352
        %v4569 = vunpack.c.h.b16 %v4352
        %v4570 = vunpack.c.l.b16 %v4353
        %v4571 = vunpack.c.h.b16 %v4353
        %v4572 = vunpack.c.l.b16 %v4354
        %v4573 = vunpack.c.h.b16 %v4354
        %v4574 = vunpack.c.l.b16 %v4355
        %v4575 = vunpack.c.h.b16 %v4355
        %v4576 = vunpack.c.l.b16 %v4356
        %v4577 = vunpack.c.h.b16 %v4356
        %v4578 = vunpack.c.l.b16 %v4357
        %v4579 = vunpack.c.h.b16 %v4357
        %v4580 = vunpack.c.l.b16 %v4358
        %v4581 = vunpack.c.h.b16 %v4358
        %v4582 = vunpack.c.l.b16 %v4359
        %v4583 = vunpack.c.h.b16 %v4359
        %v4584 = vunpack.c.l.b16 %v4360
        %v4585 = vunpack.c.h.b16 %v4360
        %v4586 = vunpack.c.l.b16 %v4361
        %v4587 = vunpack.c.h.b16 %v4361
        %v4588 = vunpack.c.l.b16 %v4362
        %v4589 = vunpack.c.h.b16 %v4362
        %v4590 = vunpack.c.l.b16 %v4363
        %v4591 = vunpack.c.h.b16 %v4363
        %v4592 = vunpack.c.l.b16 %v4364
        %v4593 = vunpack.c.h.b16 %v4364
        %v4594 = vunpack.c.l.b16 %v4365
        %v4595 = vunpack.c.h.b16 %v4365
        %v4596 = vunpack.c.l.b16 %v4366
        %v4597 = vunpack.c.h.b16 %v4366
        %v4598 = vunpack.c.l.b16 %v4367
        %v4599 = vunpack.c.h.b16 %v4367
        %v4600 = vunpack.c.l.b16 %v4368
        %v4601 = vunpack.c.h.b16 %v4368
        %v4602 = vunpack.c.l.b16 %v4369
        %v4603 = vunpack.c.h.b16 %v4369
        %v4604 = vunpack.c.l.b16 %v4370
        %v4605 = vunpack.c.h.b16 %v4370
        %v4606 = vunpack.c.l.b16 %v4371
        %v4607 = vunpack.c.h.b16 %v4371
        %v4608 = vunpack.c.l.b16 %v4372
        %v4609 = vunpack.c.h.b16 %v4372
        %v4610 = vunpack.c.l.b16 %v4373
        %v4611 = vunpack.c.h.b16 %v4373
        %v4612 = vunpack.c.l.b16 %v4374
        %v4613 = vunpack.c.h.b16 %v4374
        %v4614 = vunpack.c.l.b16 %v4375
        %v4615 = vunpack.c.h.b16 %v4375
        %v4616 = vunpack.c.l.b16 %v4376
        %v4617 = vunpack.c.h.b16 %v4376
        %v4618 = vunpack.c.l.b16 %v4377
        %v4619 = vunpack.c.h.b16 %v4377
        %v4620 = vunpack.c.l.b16 %v4378
        %v4621 = vunpack.c.h.b16 %v4378
        %v4622 = vunpack.c.l.b16 %v4379
        %v4623 = vunpack.c.h.b16 %v4379
        %v4624 = vunpack.c.l.b16 %v4380
        %v4625 = vunpack.c.h.b16 %v4380
        %v4626 = vunpack.c.l.b16 %v4381
        %v4627 = vunpack.c.h.b16 %v4381
        %v4628 = vunpack.c.l.b16 %v4382
        %v4629 = vunpack.c.h.b16 %v4382
        %v4630 = vunpack.c.l.b16 %v4383
        %v4631 = vunpack.c.h.b16 %v4383
        %v4632 = vunpack.c.l.b16 %v4384
        %v4633 = vunpack.c.h.b16 %v4384
        %v4634 = vunpack.c.l.b16 %v4385
        %v4635 = vunpack.c.h.b16 %v4385
        %v4636 = vunpack.c.l.b16 %v4386
        %v4637 = vunpack.c.h.b16 %v4386
        %v4638 = vunpack.c.l.b16 %v4387
        %v4639 = vunpack.c.h.b16 %v4387
        %v4640 = vunpack.c.l.b16 %v4388
        %v4641 = vunpack.c.h.b16 %v4388
        %v4642 = vunpack.c.l.b16 %v4389
        %v4643 = vunpack.c.h.b16 %v4389
        %v4644 = vunpack.c.l.b16 %v4390
        %v4645 = vunpack.c.h.b16 %v4390
        %v4646 = vunpack.c.l.b16 %v4391
        %v4647 = vunpack.c.h.b16 %v4391
        %v4648 = vunpack.c.l.b16 %v4392
        %v4649 = vunpack.c.h.b16 %v4392
        %v4650 = vunpack.c.l.b16 %v4393
        %v4651 = vunpack.c.h.b16 %v4393
        %v4652 = vunpack.c.l.b16 %v4394
        %v4653 = vunpack.c.h.b16 %v4394
        %v4654 = vunpack.c.l.b16 %v4395
        %v4655 = vunpack.c.h.b16 %v4395
        %v4656 = vunpack.c.l.b16 %v4396
        %v4657 = vunpack.c.h.b16 %v4396
        %v4658 = vunpack.c.l.b16 %v4397
        %v4659 = vunpack.c.h.b16 %v4397
        %v4660 = vunpack.c.l.b16 %v4398
        %v4661 = vunpack.c.h.b16 %v4398
        %v4662 = vunpack.c.l.b16 %v4399
        %v4663 = vunpack.c.h.b16 %v4399
        %v4664 = vunpack.c.l.b16 %v4400
        %v4665 = vunpack.c.h.b16 %v4400
        %v4666 = vunpack.c.l.b16 %v4401
        %v4667 = vunpack.c.h.b16 %v4401
        %v4668 = vunpack.c.l.b16 %v4402
        %v4669 = vunpack.c.h.b16 %v4402
        %v4670 = vunpack.c.l.b16 %v4403
        %v4671 = vunpack.c.h.b16 %v4403
        %v4672 = vunpack.c.l.b16 %v4404
        %v4673 = vunpack.c.h.b16 %v4404
        %v4674 = vunpack.c.l.b16 %v4405
        %v4675 = vunpack.c.h.b16 %v4405
        %v4676 = vunpack.c.l.b16 %v4406
        %v4677 = vunpack.c.h.b16 %v4406
        %v4678 = vunpack.c.l.b16 %v4407
        %v4679 = vunpack.c.h.b16 %v4407
        %v4680 = vunpack.c.l.b16 %v4408
        %v4681 = vunpack.c.h.b16 %v4408
        %v4682 = vunpack.c.l.b16 %v4409
        %v4683 = vunpack.c.h.b16 %v4409
        %v4684 = vunpack.c.l.b16 %v4410
        %v4685 = vunpack.c.h.b16 %v4410
        %v4686 = vunpack.c.l.b16 %v4411
        %v4687 = vunpack.c.h.b16 %v4411
        %v4688 = vunpack.c.l.b16 %v4412
        %v4689 = vunpack.c.h.b16 %v4412
        %v4690 = vunpack.c.l.b16 %v4413
        %v4691 = vunpack.c.h.b16 %v4413
        %v4692 = vunpack.c.l.b16 %v4414
        %v4693 = vunpack.c.h.b16 %v4414
        %v4694 = vunpack.c.l.b16 %v4415
        %v4695 = vunpack.c.h.b16 %v4415
        %v4696 = vunpack.c.l.b16 %v4416
        %v4697 = vunpack.c.h.b16 %v4416
        %v4698 = vunpack.c.l.b16 %v4417
        %v4699 = vunpack.c.h.b16 %v4417
        %v4700 = vunpack.c.l.b16 %v4418
        %v4701 = vunpack.c.h.b16 %v4418
        %v4702 = vunpack.c.l.b16 %v4419
        %v4703 = vunpack.c.h.b16 %v4419
        %v4704 = vunpack.c.l.b16 %v4420
        %v4705 = vunpack.c.h.b16 %v4420
        %v4706 = vunpack.c.l.b16 %v4421
        %v4707 = vunpack.c.h.b16 %v4421
        %v4708 = vunpack.c.l.b16 %v4422
        %v4709 = vunpack.c.h.b16 %v4422
        %v4710 = vunpack.c.l.b16 %v4423
        %v4711 = vunpack.c.h.b16 %v4423
        %v4712 = vpack.c.b16 %v4526, %v4520
        %v4713 = vpack.c.b16 %v4527, %v4521
        %v4714 = vpack.c.b16 %v4528, %v4522
        %v4715 = vpack.c.b16 %v4529, %v4523
        %v4716 = vpack.c.b16 %v4530, %v4524
        %v4717 = vpack.c.b16 %v4531, %v4525
        %v4718 = vpack.c.b16 %v4538, %v4532
        %v4719 = vpack.c.b16 %v4539, %v4533
        %v4720 = vpack.c.b16 %v4540, %v4534
        %v4721 = vpack.c.b16 %v4541, %v4535
        %v4722 = vpack.c.b16 %v4542, %v4536
        %v4723 = vpack.c.b16 %v4543, %v4537
        %v4724 = vpack.c.b16 %v4550, %v4544
        %v4725 = vpack.c.b16 %v4551, %v4545
        %v4726 = vpack.c.b16 %v4552, %v4546
        %v4727 = vpack.c.b16 %v4553, %v4547
        %v4728 = vpack.c.b16 %v4554, %v4548
        %v4729 = vpack.c.b16 %v4555, %v4549
        %v4730 = vpack.c.b16 %v4562, %v4556
        %v4731 = vpack.c.b16 %v4563, %v4557
        %v4732 = vpack.c.b16 %v4564, %v4558
        %v4733 = vpack.c.b16 %v4565, %v4559
        %v4734 = vpack.c.b16 %v4566, %v4560
        %v4735 = vpack.c.b16 %v4567, %v4561
        %v4736 = vpack.c.b16 %v4574, %v4568
        %v4737 = vpack.c.b16 %v4575, %v4569
        %v4738 = vpack.c.b16 %v4576, %v4570
        %v4739 = vpack.c.b16 %v4577, %v4571
        %v4740 = vpack.c.b16 %v4578, %v4572
        %v4741 = vpack.c.b16 %v4579, %v4573
        %v4742 = vpack.c.b16 %v4586, %v4580
        %v4743 = vpack.c.b16 %v4587, %v4581
        %v4744 = vpack.c.b16 %v4588, %v4582
        %v4745 = vpack.c.b16 %v4589, %v4583
        %v4746 = vpack.c.b16 %v4590, %v4584
        %v4747 = vpack.c.b16 %v4591, %v4585
        %v4748 = vpack.c.b16 %v4598, %v4592
        %v4749 = vpack.c.b16 %v4599, %v4593
        %v4750 = vpack.c.b16 %v4600, %v4594
        %v4751 = vpack.c.b16 %v4601, %v4595
        %v4752 = vpack.c.b16 %v4602, %v4596
        %v4753 = vpack.c.b16 %v4603, %v4597
        %v4754 = vpack.c.b16 %v4610, %v4604
        %v4755 = vpack.c.b16 %v4611, %v4605
        %v4756 = vpack.c.b16 %v4612, %v4606
        %v4757 = vpack.c.b16 %v4613, %v4607
        %v4758 = vpack.c.b16 %v4614, %v4608
        %v4759 = vpack.c.b16 %v4615, %v4609
        %v4760 = vpack.c.b16 %v4622, %v4616
        %v4761 = vpack.c.b16 %v4623, %v4617
        %v4762 = vpack.c.b16 %v4624, %v4618
        %v4763 = vpack.c.b16 %v4625, %v4619
        %v4764 = vpack.c.b16 %v4626, %v4620
        %v4765 = vpack.c.b16 %v4627, %v4621
        %v4766 = vpack.c.b16 %v4634, %v4628
        %v4767 = vpack.c.b16 %v4635, %v4629
        %v4768 = vpack.c.b16 %v4636, %v4630
        %v4769 = vpack.c.b16 %v4637, %v4631
        %v4770 = vpack.c.b16 %v4638, %v4632
        %v4771 = vpack.c.b16 %v4639, %v4633
        %v4772 = vpack.c.b16 %v4646, %v4640
        %v4773 = vpack.c.b16 %v4647, %v4641
        %v4774 = vpack.c.b16 %v4648, %v4642
        %v4775 = vpack.c.b16 %v4649, %v4643
        %v4776 = vpack.c.b16 %v4650, %v4644
        %v4777 = vpack.c.b16 %v4651, %v4645
        %v4778 = vpack.c.b16 %v4658, %v4652
        %v4779 = vpack.c.b16 %v4659, %v4653
        %v4780 = vpack.c.b16 %v4660, %v4654
        %v4781 = vpack.c.b16 %v4661, %v4655
        %v4782 = vpack.c.b16 %v4662, %v4656
        %v4783 = vpack.c.b16 %v4663, %v4657
        %v4784 = vpack.c.b16 %v4670, %v4664
        %v4785 = vpack.c.b16 %v4671, %v4665
        %v4786 = vpack.c.b16 %v4672, %v4666
        %v4787 = vpack.c.b16 %v4673, %v4667
        %v4788 = vpack.c.b16 %v4674, %v4668
        %v4789 = vpack.c.b16 %v4675, %v4669
        %v4790 = vpack.c.b16 %v4682, %v4676
        %v4791 = vpack.c.b16 %v4683, %v4677
        %v4792 = vpack.c.b16 %v4684, %v4678
        %v4793 = vpack.c.b16 %v4685, %v4679
        %v4794 = vpack.c.b16 %v4686, %v4680
        %v4795 = vpack.c.b16 %v4687, %v4681
        %v4796 = vpack.c.b16 %v4694, %v4688
        %v4797 = vpack.c.b16 %v4695, %v4689
        %v4798 = vpack.c.b16 %v4696, %v4690
        %v4799 = vpack.c.b16 %v4697, %v4691
        %v4800 = vpack.c.b16 %v4698, %v4692
        %v4801 = vpack.c.b16 %v4699, %v4693
        %v4802 = vpack.c.b16 %v4706, %v4700
        %v4803 = vpack.c.b16 %v4707, %v4701
        %v4804 = vpack.c.b16 %v4708, %v4702
        %v4805 = vpack.c.b16 %v4709, %v4703
        %v4806 = vpack.c.b16 %v4710, %v4704
        %v4807 = vpack.c.b16 %v4711, %v4705
        %4904 = vmatprep.subr.bf16.mxu0 %v4713
        %4905 = vmatpush1.bf16.msra.mxu0 %v4712
        %4906 = vmatprep.subr.bf16.mxu0 %v4719
        %4907 = vmatpush1.bf16.msra.mxu0 %v4718
        %4908 = vmatprep.subr.bf16.mxu0 %v4725
        %4909 = vmatpush1.bf16.msra.mxu0 %v4724
        %4910 = vmatprep.subr.bf16.mxu0 %v4731
        %4911 = vmatpush1.bf16.msra.mxu0 %v4730
        %4912 = vmatprep.subr.bf16.mxu0 %v4737
        %4913 = vmatpush1.bf16.msra.mxu0 %v4736
        %4914 = vmatprep.subr.bf16.mxu0 %v4743
        %4915 = vmatpush1.bf16.msra.mxu0 %v4742
        %4916 = vmatprep.subr.bf16.mxu0 %v4749
        %4917 = vmatpush1.bf16.msra.mxu0 %v4748
        %4918 = vmatprep.subr.bf16.mxu0 %v4755
        %4919 = vmatpush1.bf16.msra.mxu0 %v4754
        %4920 = vmatprep.subr.bf16.mxu0 %v4761
        %4921 = vmatpush1.bf16.msra.mxu0 %v4760
        %4922 = vmatprep.subr.bf16.mxu0 %v4767
        %4923 = vmatpush1.bf16.msra.mxu0 %v4766
        %4924 = vmatprep.subr.bf16.mxu0 %v4773
        %4925 = vmatpush1.bf16.msra.mxu0 %v4772
        %4926 = vmatprep.subr.bf16.mxu0 %v4779
        %4927 = vmatpush1.bf16.msra.mxu0 %v4778
        %4928 = vmatprep.subr.bf16.mxu0 %v4785
        %4929 = vmatpush1.bf16.msra.mxu0 %v4784
        %4930 = vmatprep.subr.bf16.mxu0 %v4791
        %4931 = vmatpush1.bf16.msra.mxu0 %v4790
        %4932 = vmatprep.subr.bf16.mxu0 %v4797
        %4933 = vmatpush1.bf16.msra.mxu0 %v4796
        %4934 = vmatprep.subr.bf16.mxu0 %v4803
        %4935 = vmatpush1.bf16.msra.mxu0 %v4802
        %4936 = vmatprep.mubr.bf16.mxu0 %v4327
        %4937 = vmatmul.mubr.bf16.gmra.mrb[0].mxu0 %v4326
        %v4938 = vpop.f32.mrb[0].mxu0
        %v4939 = vadd.f32 %v504, %v4938
        %v4940 = vpop.f32.mrb[0].mxu0
        %v4941 = vadd.f32 %v508, %v4940
        %v4942 = vpop.f32.mrb[0].mxu0
        %v4943 = vpop.f32.mrb[0].mxu0
        %4944 = vdwg.mxu0
        %4945 = vmatprep.subr.bf16.mxu0 %v4715
        %4946 = vmatpush1.bf16.msra.mxu0 %v4714
        %4947 = vmatprep.subr.bf16.mxu0 %v4721
        %4948 = vmatpush1.bf16.msra.mxu0 %v4720
        %4949 = vmatprep.subr.bf16.mxu0 %v4727
        %4950 = vmatpush1.bf16.msra.mxu0 %v4726
        %4951 = vmatprep.subr.bf16.mxu0 %v4733
        %4952 = vmatpush1.bf16.msra.mxu0 %v4732
        %4953 = vmatprep.subr.bf16.mxu0 %v4739
        %4954 = vmatpush1.bf16.msra.mxu0 %v4738
        %4955 = vmatprep.subr.bf16.mxu0 %v4745
        %4956 = vmatpush1.bf16.msra.mxu0 %v4744
        %4957 = vmatprep.subr.bf16.mxu0 %v4751
        %4958 = vmatpush1.bf16.msra.mxu0 %v4750
        %4959 = vmatprep.subr.bf16.mxu0 %v4757
        %4960 = vmatpush1.bf16.msra.mxu0 %v4756
        %4961 = vmatprep.subr.bf16.mxu0 %v4763
        %4962 = vmatpush1.bf16.msra.mxu0 %v4762
        %4963 = vmatprep.subr.bf16.mxu0 %v4769
        %4964 = vmatpush1.bf16.msra.mxu0 %v4768
        %4965 = vmatprep.subr.bf16.mxu0 %v4775
        %4966 = vmatpush1.bf16.msra.mxu0 %v4774
        %4967 = vmatprep.subr.bf16.mxu0 %v4781
        %4968 = vmatpush1.bf16.msra.mxu0 %v4780
        %4969 = vmatprep.subr.bf16.mxu0 %v4787
        %4970 = vmatpush1.bf16.msra.mxu0 %v4786
        %4971 = vmatprep.subr.bf16.mxu0 %v4793
        %4972 = vmatpush1.bf16.msra.mxu0 %v4792
        %4973 = vmatprep.subr.bf16.mxu0 %v4799
        %4974 = vmatpush1.bf16.msra.mxu0 %v4798
        %4975 = vmatprep.subr.bf16.mxu0 %v4805
        %4976 = vmatpush1.bf16.msra.mxu0 %v4804
        %4977 = vmatprep.mubr.bf16.mxu0 %v4327
        %4978 = vmatmul.mubr.bf16.gmra.mrb[0].mxu0 %v4326
        %v4979 = vpop.f32.mrb[0].mxu0
        %v4980 = vadd.f32 %v512, %v4979
        %v4981 = vpop.f32.mrb[0].mxu0
        %v4982 = vadd.f32 %v516, %v4981
        %v4983 = vpop.f32.mrb[0].mxu0
        %v4984 = vpop.f32.mrb[0].mxu0
        %4985 = vdwg.mxu0
        %4986 = vmatprep.subr.bf16.mxu0 %v4717
        %4987 = vmatpush1.bf16.msra.mxu0 %v4716
        %4988 = vmatprep.subr.bf16.mxu0 %v4723
        %4989 = vmatpush1.bf16.msra.mxu0 %v4722
        %4990 = vmatprep.subr.bf16.mxu0 %v4729
        %4991 = vmatpush1.bf16.msra.mxu0 %v4728
        %4992 = vmatprep.subr.bf16.mxu0 %v4735
        %4993 = vmatpush1.bf16.msra.mxu0 %v4734
        %4994 = vmatprep.subr.bf16.mxu0 %v4741
        %4995 = vmatpush1.bf16.msra.mxu0 %v4740
        %4996 = vmatprep.subr.bf16.mxu0 %v4747
        %4997 = vmatpush1.bf16.msra.mxu0 %v4746
        %4998 = vmatprep.subr.bf16.mxu0 %v4753
        %4999 = vmatpush1.bf16.msra.mxu0 %v4752
        %5000 = vmatprep.subr.bf16.mxu0 %v4759
        %5001 = vmatpush1.bf16.msra.mxu0 %v4758
        %5002 = vmatprep.subr.bf16.mxu0 %v4765
        %5003 = vmatpush1.bf16.msra.mxu0 %v4764
        %5004 = vmatprep.subr.bf16.mxu0 %v4771
        %5005 = vmatpush1.bf16.msra.mxu0 %v4770
        %5006 = vmatprep.subr.bf16.mxu0 %v4777
        %5007 = vmatpush1.bf16.msra.mxu0 %v4776
        %5008 = vmatprep.subr.bf16.mxu0 %v4783
        %5009 = vmatpush1.bf16.msra.mxu0 %v4782
        %5010 = vmatprep.subr.bf16.mxu0 %v4789
        %5011 = vmatpush1.bf16.msra.mxu0 %v4788
        %5012 = vmatprep.subr.bf16.mxu0 %v4795
        %5013 = vmatpush1.bf16.msra.mxu0 %v4794
        %5014 = vmatprep.subr.bf16.mxu0 %v4801
        %5015 = vmatpush1.bf16.msra.mxu0 %v4800
        %5016 = vmatprep.subr.bf16.mxu0 %v4807
        %5017 = vmatpush1.bf16.msra.mxu0 %v4806
        %5018 = vmatprep.mubr.bf16.mxu0 %v4327
        %5019 = vmatmul.mubr.bf16.gmra.mrb[0].mxu0 %v4326
        %v5020 = vpop.f32.mrb[0].mxu0
        %v5021 = vadd.f32 %v520, %v5020
        %v5022 = vpop.f32.mrb[0].mxu0
        %v5023 = vadd.f32 %v524, %v5022
        %v5024 = vpop.f32.mrb[0].mxu0
        %v5025 = vpop.f32.mrb[0].mxu0
        %5026 = vdwg.mxu0
        %s5027 = scalar_lea.vmem %s363, 60
        %v5028 = vld [vmem:[%s5027] sm:$0xff]
        %v5029 = vld [vmem:[%s5027 + $0x8] sm:$0xf]
        %v5030 = vunpack.c.l.bf16 %v5028
        %v5031 = vunpack.c.h.bf16 %v5028
        %v5032 = vunpack.c.l.bf16 %v5029
        %s5033 = scalar_lea.vmem %s371, 24
        %v5034 = vld [vmem:[%s5033] sm:$0xff]
        %v5035 = vld [vmem:[%s5033 + $0x8] sm:$0xf]
        %v5036 = vunpack.c.l.bf16 %v5034
        %v5037 = vunpack.c.h.bf16 %v5034
        %v5038 = vunpack.c.l.bf16 %v5035
        %v5039 = vadd.f32 %v5030, %v4939
        %v5040 = vxor.u32 %v5039, 2147483648
        %v5041 = vmul.f32 %v5040, 1.442695
        %v5042 = vpow.pop %v5041
        %v5043 = vadd.f32 %v5042, 1.0
        %v5044 = vrcp.pop %v5043
        %v5045 = vmul.f32 1.0, %v5044
        %v5046 = vadd.f32 %v5031, %v4941
        %v5047 = vxor.u32 %v5046, 2147483648
        %v5048 = vmul.f32 %v5047, 1.442695
        %v5049 = vpow.pop %v5048
        %v5050 = vadd.f32 %v5049, 1.0
        %v5051 = vrcp.pop %v5050
        %v5052 = vmul.f32 1.0, %v5051
        %v5053 = vmul.f32 %v5045, %v4980
        %v5054 = vadd.f32 %v5032, %v5053
        %v5055 = vtanh.pop %v5054
        %v5056 = vsub.f32 1.0, %v5052
        %v5057 = vmul.f32 %v5056, %v5055
        %v5058 = vmul.f32 %v5052, %v4311
        %v5059 = vadd.f32 %v5057, %v5058
        %v5060 = vadd.f32 %v5036, %v4982
        %v5061 = vxor.u32 %v5060, 2147483648
        %v5062 = vmul.f32 %v5061, 1.442695
        %v5063 = vpow.pop %v5062
        %v5064 = vadd.f32 %v5063, 1.0
        %v5065 = vrcp.pop %v5064
        %v5066 = vmul.f32 1.0, %v5065
        %v5067 = vadd.f32 %v5037, %v5021
        %v5068 = vxor.u32 %v5067, 2147483648
        %v5069 = vmul.f32 %v5068, 1.442695
        %v5070 = vpow.pop %v5069
        %v5071 = vadd.f32 %v5070, 1.0
        %v5072 = vrcp.pop %v5071
        %v5073 = vmul.f32 1.0, %v5072
        %v5074 = vmul.f32 %v5066, %v5023
        %v5075 = vadd.f32 %v5038, %v5074
        %v5076 = vtanh.pop %v5075
        %v5077 = vsub.f32 1.0, %v5073
        %v5078 = vmul.f32 %v5077, %v5076
        %v5079 = vmul.f32 %v5073, %v4317
        %v5080 = vadd.f32 %v5078, %v5079
        %v5081 = vstv %s4324
        %vm5082 = vcmp.lt.s32.totalorder %v5081, %v394
        %v5083 = vstv %s4325
        %vm5084 = vcmp.lt.s32.totalorder %v5083, %v394
        %v5085 = vsel %vm5082, 1, 0
        %5086 = vset.pattern.permute.xlu0 0
        %5087 = vperm.xlu0 %5086, %v5085
        %v5088 = vpop.permute.xlu0 %5087
        %vm5089 = vcmp.eq.s32.totalorder %v5088, 1
        %v5090 = vsel %vm5089, %v5059, %v4311
        %v5091 = vsel %vm5084, 1, 0
        %5092 = vset.pattern.permute.xlu0 0
        %5093 = vperm.xlu0 %5092, %v5091
        %v5094 = vpop.permute.xlu0 %5093
        %vm5095 = vcmp.eq.s32.totalorder %v5094, 1
        %v5096 = vsel %vm5095, %v5080, %v4317
        %v5097 = vsel %vm5089, %v5059, 0.0
        %s5098 = scalar_lea.vmem %s378, 40
        %5099 = vst [vmem:[%s5098] sm:$0xff] %v5097
        %v5100 = vsel %vm5095, %v5080, 0.0
        %s5101 = scalar_lea.vmem %s385, 16
        %5102 = vst [vmem:[%s5101] sm:$0xff] %v5100
        %s5103 = sadd.s32 %s398, 6
        %s5104 = sadd.s32 %s400, 1
        %v5105 = vpack.c.bf16 %v5090, %v5090
        %v5106 = vpack.c.bf16 %v5096, %v5096
        %v5107 = vld [vmem:[%s3] sm:$0xff]
        %v5108 = vld [vmem:[%s3 + $0x8] sm:$0xff]
        %v5109 = vld [vmem:[%s3 + $0x10] sm:$0xff]
        %v5110 = vld [vmem:[%s3 + $0x18] sm:$0xff]
        %v5111 = vld [vmem:[%s3 + $0x20] sm:$0xff]
        %v5112 = vld [vmem:[%s3 + $0x28] sm:$0xff]
        %v5113 = vld [vmem:[%s3 + $0x30] sm:$0xff]
        %v5114 = vld [vmem:[%s3 + $0x38] sm:$0xff]
        %v5115 = vld [vmem:[%s3 + $0x40] sm:$0xff]
        %v5116 = vld [vmem:[%s3 + $0x48] sm:$0xff]
        %v5117 = vld [vmem:[%s3 + $0x50] sm:$0xff]
        %v5118 = vld [vmem:[%s3 + $0x58] sm:$0xff]
        %v5119 = vld [vmem:[%s3 + $0x60] sm:$0xff]
        %v5120 = vld [vmem:[%s3 + $0x68] sm:$0xff]
        %v5121 = vld [vmem:[%s3 + $0x70] sm:$0xff]
        %v5122 = vld [vmem:[%s3 + $0x78] sm:$0xff]
        %v5123 = vld [vmem:[%s3 + $0x80] sm:$0xff]
        %v5124 = vld [vmem:[%s3 + $0x88] sm:$0xff]
        %v5125 = vld [vmem:[%s3 + $0x90] sm:$0xff]
        %v5126 = vld [vmem:[%s3 + $0x98] sm:$0xff]
        %v5127 = vld [vmem:[%s3 + $0xa0] sm:$0xff]
        %v5128 = vld [vmem:[%s3 + $0xa8] sm:$0xff]
        %v5129 = vld [vmem:[%s3 + $0xb0] sm:$0xff]
        %v5130 = vld [vmem:[%s3 + $0xb8] sm:$0xff]
        %v5131 = vld [vmem:[%s3 + $0xc0] sm:$0xff]
        %v5132 = vld [vmem:[%s3 + $0xc8] sm:$0xff]
        %v5133 = vld [vmem:[%s3 + $0xd0] sm:$0xff]
        %v5134 = vld [vmem:[%s3 + $0xd8] sm:$0xff]
        %v5135 = vld [vmem:[%s3 + $0xe0] sm:$0xff]
        %v5136 = vld [vmem:[%s3 + $0xe8] sm:$0xff]
        %v5137 = vld [vmem:[%s3 + $0xf0] sm:$0xff]
        %v5138 = vld [vmem:[%s3 + $0xf8] sm:$0xff]
        %v5139 = vld [vmem:[%s3 + $0x100] sm:$0xff]
        %v5140 = vld [vmem:[%s3 + $0x108] sm:$0xff]
        %v5141 = vld [vmem:[%s3 + $0x110] sm:$0xff]
        %v5142 = vld [vmem:[%s3 + $0x118] sm:$0xff]
        %v5143 = vld [vmem:[%s3 + $0x120] sm:$0xff]
        %v5144 = vld [vmem:[%s3 + $0x128] sm:$0xff]
        %v5145 = vld [vmem:[%s3 + $0x130] sm:$0xff]
        %v5146 = vld [vmem:[%s3 + $0x138] sm:$0xff]
        %v5147 = vld [vmem:[%s3 + $0x140] sm:$0xff]
        %v5148 = vld [vmem:[%s3 + $0x148] sm:$0xff]
        %v5149 = vld [vmem:[%s3 + $0x150] sm:$0xff]
        %v5150 = vld [vmem:[%s3 + $0x158] sm:$0xff]
        %v5151 = vld [vmem:[%s3 + $0x160] sm:$0xff]
        %v5152 = vld [vmem:[%s3 + $0x168] sm:$0xff]
        %v5153 = vld [vmem:[%s3 + $0x170] sm:$0xff]
        %v5154 = vld [vmem:[%s3 + $0x178] sm:$0xff]
        %v5155 = vld [vmem:[%s3 + $0x180] sm:$0xff]
        %v5156 = vld [vmem:[%s3 + $0x188] sm:$0xff]
        %v5157 = vld [vmem:[%s3 + $0x190] sm:$0xff]
        %v5158 = vld [vmem:[%s3 + $0x198] sm:$0xff]
        %v5159 = vld [vmem:[%s3 + $0x1a0] sm:$0xff]
        %v5160 = vld [vmem:[%s3 + $0x1a8] sm:$0xff]
        %v5161 = vld [vmem:[%s3 + $0x1b0] sm:$0xff]
        %v5162 = vld [vmem:[%s3 + $0x1b8] sm:$0xff]
        %v5163 = vld [vmem:[%s3 + $0x1c0] sm:$0xff]
        %v5164 = vld [vmem:[%s3 + $0x1c8] sm:$0xff]
        %v5165 = vld [vmem:[%s3 + $0x1d0] sm:$0xff]
        %v5166 = vld [vmem:[%s3 + $0x1d8] sm:$0xff]
        %v5167 = vld [vmem:[%s3 + $0x1e0] sm:$0xff]
        %v5168 = vld [vmem:[%s3 + $0x1e8] sm:$0xff]
        %v5169 = vld [vmem:[%s3 + $0x1f0] sm:$0xff]
        %v5170 = vld [vmem:[%s3 + $0x1f8] sm:$0xff]
        %v5171 = vld [vmem:[%s3 + $0x200] sm:$0xff]
        %v5172 = vld [vmem:[%s3 + $0x208] sm:$0xff]
        %v5173 = vld [vmem:[%s3 + $0x210] sm:$0xff]
        %v5174 = vld [vmem:[%s3 + $0x218] sm:$0xff]
        %v5175 = vld [vmem:[%s3 + $0x220] sm:$0xff]
        %v5176 = vld [vmem:[%s3 + $0x228] sm:$0xff]
        %v5177 = vld [vmem:[%s3 + $0x230] sm:$0xff]
        %v5178 = vld [vmem:[%s3 + $0x238] sm:$0xff]
        %v5179 = vld [vmem:[%s3 + $0x240] sm:$0xff]
        %v5180 = vld [vmem:[%s3 + $0x248] sm:$0xff]
        %v5181 = vld [vmem:[%s3 + $0x250] sm:$0xff]
        %v5182 = vld [vmem:[%s3 + $0x258] sm:$0xff]
        %v5183 = vld [vmem:[%s3 + $0x260] sm:$0xff]
        %v5184 = vld [vmem:[%s3 + $0x268] sm:$0xff]
        %v5185 = vld [vmem:[%s3 + $0x270] sm:$0xff]
        %v5186 = vld [vmem:[%s3 + $0x278] sm:$0xff]
        %v5187 = vld [vmem:[%s3 + $0x280] sm:$0xff]
        %v5188 = vld [vmem:[%s3 + $0x288] sm:$0xff]
        %v5189 = vld [vmem:[%s3 + $0x290] sm:$0xff]
        %v5190 = vld [vmem:[%s3 + $0x298] sm:$0xff]
        %v5191 = vld [vmem:[%s3 + $0x2a0] sm:$0xff]
        %v5192 = vld [vmem:[%s3 + $0x2a8] sm:$0xff]
        %v5193 = vld [vmem:[%s3 + $0x2b0] sm:$0xff]
        %v5194 = vld [vmem:[%s3 + $0x2b8] sm:$0xff]
        %v5195 = vld [vmem:[%s3 + $0x2c0] sm:$0xff]
        %v5196 = vld [vmem:[%s3 + $0x2c8] sm:$0xff]
        %v5197 = vld [vmem:[%s3 + $0x2d0] sm:$0xff]
        %v5198 = vld [vmem:[%s3 + $0x2d8] sm:$0xff]
        %v5199 = vld [vmem:[%s3 + $0x2e0] sm:$0xff]
        %v5200 = vld [vmem:[%s3 + $0x2e8] sm:$0xff]
        %v5201 = vld [vmem:[%s3 + $0x2f0] sm:$0xff]
        %v5202 = vld [vmem:[%s3 + $0x2f8] sm:$0xff]
        %v5299 = vunpack.c.l.b16 %v5107
        %v5300 = vunpack.c.h.b16 %v5107
        %v5301 = vunpack.c.l.b16 %v5108
        %v5302 = vunpack.c.h.b16 %v5108
        %v5303 = vunpack.c.l.b16 %v5109
        %v5304 = vunpack.c.h.b16 %v5109
        %v5305 = vunpack.c.l.b16 %v5110
        %v5306 = vunpack.c.h.b16 %v5110
        %v5307 = vunpack.c.l.b16 %v5111
        %v5308 = vunpack.c.h.b16 %v5111
        %v5309 = vunpack.c.l.b16 %v5112
        %v5310 = vunpack.c.h.b16 %v5112
        %v5311 = vunpack.c.l.b16 %v5113
        %v5312 = vunpack.c.h.b16 %v5113
        %v5313 = vunpack.c.l.b16 %v5114
        %v5314 = vunpack.c.h.b16 %v5114
        %v5315 = vunpack.c.l.b16 %v5115
        %v5316 = vunpack.c.h.b16 %v5115
        %v5317 = vunpack.c.l.b16 %v5116
        %v5318 = vunpack.c.h.b16 %v5116
        %v5319 = vunpack.c.l.b16 %v5117
        %v5320 = vunpack.c.h.b16 %v5117
        %v5321 = vunpack.c.l.b16 %v5118
        %v5322 = vunpack.c.h.b16 %v5118
        %v5323 = vunpack.c.l.b16 %v5119
        %v5324 = vunpack.c.h.b16 %v5119
        %v5325 = vunpack.c.l.b16 %v5120
        %v5326 = vunpack.c.h.b16 %v5120
        %v5327 = vunpack.c.l.b16 %v5121
        %v5328 = vunpack.c.h.b16 %v5121
        %v5329 = vunpack.c.l.b16 %v5122
        %v5330 = vunpack.c.h.b16 %v5122
        %v5331 = vunpack.c.l.b16 %v5123
        %v5332 = vunpack.c.h.b16 %v5123
        %v5333 = vunpack.c.l.b16 %v5124
        %v5334 = vunpack.c.h.b16 %v5124
        %v5335 = vunpack.c.l.b16 %v5125
        %v5336 = vunpack.c.h.b16 %v5125
        %v5337 = vunpack.c.l.b16 %v5126
        %v5338 = vunpack.c.h.b16 %v5126
        %v5339 = vunpack.c.l.b16 %v5127
        %v5340 = vunpack.c.h.b16 %v5127
        %v5341 = vunpack.c.l.b16 %v5128
        %v5342 = vunpack.c.h.b16 %v5128
        %v5343 = vunpack.c.l.b16 %v5129
        %v5344 = vunpack.c.h.b16 %v5129
        %v5345 = vunpack.c.l.b16 %v5130
        %v5346 = vunpack.c.h.b16 %v5130
        %v5347 = vunpack.c.l.b16 %v5131
        %v5348 = vunpack.c.h.b16 %v5131
        %v5349 = vunpack.c.l.b16 %v5132
        %v5350 = vunpack.c.h.b16 %v5132
        %v5351 = vunpack.c.l.b16 %v5133
        %v5352 = vunpack.c.h.b16 %v5133
        %v5353 = vunpack.c.l.b16 %v5134
        %v5354 = vunpack.c.h.b16 %v5134
        %v5355 = vunpack.c.l.b16 %v5135
        %v5356 = vunpack.c.h.b16 %v5135
        %v5357 = vunpack.c.l.b16 %v5136
        %v5358 = vunpack.c.h.b16 %v5136
        %v5359 = vunpack.c.l.b16 %v5137
        %v5360 = vunpack.c.h.b16 %v5137
        %v5361 = vunpack.c.l.b16 %v5138
        %v5362 = vunpack.c.h.b16 %v5138
        %v5363 = vunpack.c.l.b16 %v5139
        %v5364 = vunpack.c.h.b16 %v5139
        %v5365 = vunpack.c.l.b16 %v5140
        %v5366 = vunpack.c.h.b16 %v5140
        %v5367 = vunpack.c.l.b16 %v5141
        %v5368 = vunpack.c.h.b16 %v5141
        %v5369 = vunpack.c.l.b16 %v5142
        %v5370 = vunpack.c.h.b16 %v5142
        %v5371 = vunpack.c.l.b16 %v5143
        %v5372 = vunpack.c.h.b16 %v5143
        %v5373 = vunpack.c.l.b16 %v5144
        %v5374 = vunpack.c.h.b16 %v5144
        %v5375 = vunpack.c.l.b16 %v5145
        %v5376 = vunpack.c.h.b16 %v5145
        %v5377 = vunpack.c.l.b16 %v5146
        %v5378 = vunpack.c.h.b16 %v5146
        %v5379 = vunpack.c.l.b16 %v5147
        %v5380 = vunpack.c.h.b16 %v5147
        %v5381 = vunpack.c.l.b16 %v5148
        %v5382 = vunpack.c.h.b16 %v5148
        %v5383 = vunpack.c.l.b16 %v5149
        %v5384 = vunpack.c.h.b16 %v5149
        %v5385 = vunpack.c.l.b16 %v5150
        %v5386 = vunpack.c.h.b16 %v5150
        %v5387 = vunpack.c.l.b16 %v5151
        %v5388 = vunpack.c.h.b16 %v5151
        %v5389 = vunpack.c.l.b16 %v5152
        %v5390 = vunpack.c.h.b16 %v5152
        %v5391 = vunpack.c.l.b16 %v5153
        %v5392 = vunpack.c.h.b16 %v5153
        %v5393 = vunpack.c.l.b16 %v5154
        %v5394 = vunpack.c.h.b16 %v5154
        %v5395 = vunpack.c.l.b16 %v5155
        %v5396 = vunpack.c.h.b16 %v5155
        %v5397 = vunpack.c.l.b16 %v5156
        %v5398 = vunpack.c.h.b16 %v5156
        %v5399 = vunpack.c.l.b16 %v5157
        %v5400 = vunpack.c.h.b16 %v5157
        %v5401 = vunpack.c.l.b16 %v5158
        %v5402 = vunpack.c.h.b16 %v5158
        %v5403 = vunpack.c.l.b16 %v5159
        %v5404 = vunpack.c.h.b16 %v5159
        %v5405 = vunpack.c.l.b16 %v5160
        %v5406 = vunpack.c.h.b16 %v5160
        %v5407 = vunpack.c.l.b16 %v5161
        %v5408 = vunpack.c.h.b16 %v5161
        %v5409 = vunpack.c.l.b16 %v5162
        %v5410 = vunpack.c.h.b16 %v5162
        %v5411 = vunpack.c.l.b16 %v5163
        %v5412 = vunpack.c.h.b16 %v5163
        %v5413 = vunpack.c.l.b16 %v5164
        %v5414 = vunpack.c.h.b16 %v5164
        %v5415 = vunpack.c.l.b16 %v5165
        %v5416 = vunpack.c.h.b16 %v5165
        %v5417 = vunpack.c.l.b16 %v5166
        %v5418 = vunpack.c.h.b16 %v5166
        %v5419 = vunpack.c.l.b16 %v5167
        %v5420 = vunpack.c.h.b16 %v5167
        %v5421 = vunpack.c.l.b16 %v5168
        %v5422 = vunpack.c.h.b16 %v5168
        %v5423 = vunpack.c.l.b16 %v5169
        %v5424 = vunpack.c.h.b16 %v5169
        %v5425 = vunpack.c.l.b16 %v5170
        %v5426 = vunpack.c.h.b16 %v5170
        %v5427 = vunpack.c.l.b16 %v5171
        %v5428 = vunpack.c.h.b16 %v5171
        %v5429 = vunpack.c.l.b16 %v5172
        %v5430 = vunpack.c.h.b16 %v5172
        %v5431 = vunpack.c.l.b16 %v5173
        %v5432 = vunpack.c.h.b16 %v5173
        %v5433 = vunpack.c.l.b16 %v5174
        %v5434 = vunpack.c.h.b16 %v5174
        %v5435 = vunpack.c.l.b16 %v5175
        %v5436 = vunpack.c.h.b16 %v5175
        %v5437 = vunpack.c.l.b16 %v5176
        %v5438 = vunpack.c.h.b16 %v5176
        %v5439 = vunpack.c.l.b16 %v5177
        %v5440 = vunpack.c.h.b16 %v5177
        %v5441 = vunpack.c.l.b16 %v5178
        %v5442 = vunpack.c.h.b16 %v5178
        %v5443 = vunpack.c.l.b16 %v5179
        %v5444 = vunpack.c.h.b16 %v5179
        %v5445 = vunpack.c.l.b16 %v5180
        %v5446 = vunpack.c.h.b16 %v5180
        %v5447 = vunpack.c.l.b16 %v5181
        %v5448 = vunpack.c.h.b16 %v5181
        %v5449 = vunpack.c.l.b16 %v5182
        %v5450 = vunpack.c.h.b16 %v5182
        %v5451 = vunpack.c.l.b16 %v5183
        %v5452 = vunpack.c.h.b16 %v5183
        %v5453 = vunpack.c.l.b16 %v5184
        %v5454 = vunpack.c.h.b16 %v5184
        %v5455 = vunpack.c.l.b16 %v5185
        %v5456 = vunpack.c.h.b16 %v5185
        %v5457 = vunpack.c.l.b16 %v5186
        %v5458 = vunpack.c.h.b16 %v5186
        %v5459 = vunpack.c.l.b16 %v5187
        %v5460 = vunpack.c.h.b16 %v5187
        %v5461 = vunpack.c.l.b16 %v5188
        %v5462 = vunpack.c.h.b16 %v5188
        %v5463 = vunpack.c.l.b16 %v5189
        %v5464 = vunpack.c.h.b16 %v5189
        %v5465 = vunpack.c.l.b16 %v5190
        %v5466 = vunpack.c.h.b16 %v5190
        %v5467 = vunpack.c.l.b16 %v5191
        %v5468 = vunpack.c.h.b16 %v5191
        %v5469 = vunpack.c.l.b16 %v5192
        %v5470 = vunpack.c.h.b16 %v5192
        %v5471 = vunpack.c.l.b16 %v5193
        %v5472 = vunpack.c.h.b16 %v5193
        %v5473 = vunpack.c.l.b16 %v5194
        %v5474 = vunpack.c.h.b16 %v5194
        %v5475 = vunpack.c.l.b16 %v5195
        %v5476 = vunpack.c.h.b16 %v5195
        %v5477 = vunpack.c.l.b16 %v5196
        %v5478 = vunpack.c.h.b16 %v5196
        %v5479 = vunpack.c.l.b16 %v5197
        %v5480 = vunpack.c.h.b16 %v5197
        %v5481 = vunpack.c.l.b16 %v5198
        %v5482 = vunpack.c.h.b16 %v5198
        %v5483 = vunpack.c.l.b16 %v5199
        %v5484 = vunpack.c.h.b16 %v5199
        %v5485 = vunpack.c.l.b16 %v5200
        %v5486 = vunpack.c.h.b16 %v5200
        %v5487 = vunpack.c.l.b16 %v5201
        %v5488 = vunpack.c.h.b16 %v5201
        %v5489 = vunpack.c.l.b16 %v5202
        %v5490 = vunpack.c.h.b16 %v5202
        %v5491 = vpack.c.b16 %v5305, %v5299
        %v5492 = vpack.c.b16 %v5306, %v5300
        %v5493 = vpack.c.b16 %v5307, %v5301
        %v5494 = vpack.c.b16 %v5308, %v5302
        %v5495 = vpack.c.b16 %v5309, %v5303
        %v5496 = vpack.c.b16 %v5310, %v5304
        %v5497 = vpack.c.b16 %v5317, %v5311
        %v5498 = vpack.c.b16 %v5318, %v5312
        %v5499 = vpack.c.b16 %v5319, %v5313
        %v5500 = vpack.c.b16 %v5320, %v5314
        %v5501 = vpack.c.b16 %v5321, %v5315
        %v5502 = vpack.c.b16 %v5322, %v5316
        %v5503 = vpack.c.b16 %v5329, %v5323
        %v5504 = vpack.c.b16 %v5330, %v5324
        %v5505 = vpack.c.b16 %v5331, %v5325
        %v5506 = vpack.c.b16 %v5332, %v5326
        %v5507 = vpack.c.b16 %v5333, %v5327
        %v5508 = vpack.c.b16 %v5334, %v5328
        %v5509 = vpack.c.b16 %v5341, %v5335
        %v5510 = vpack.c.b16 %v5342, %v5336
        %v5511 = vpack.c.b16 %v5343, %v5337
        %v5512 = vpack.c.b16 %v5344, %v5338
        %v5513 = vpack.c.b16 %v5345, %v5339
        %v5514 = vpack.c.b16 %v5346, %v5340
        %v5515 = vpack.c.b16 %v5353, %v5347
        %v5516 = vpack.c.b16 %v5354, %v5348
        %v5517 = vpack.c.b16 %v5355, %v5349
        %v5518 = vpack.c.b16 %v5356, %v5350
        %v5519 = vpack.c.b16 %v5357, %v5351
        %v5520 = vpack.c.b16 %v5358, %v5352
        %v5521 = vpack.c.b16 %v5365, %v5359
        %v5522 = vpack.c.b16 %v5366, %v5360
        %v5523 = vpack.c.b16 %v5367, %v5361
        %v5524 = vpack.c.b16 %v5368, %v5362
        %v5525 = vpack.c.b16 %v5369, %v5363
        %v5526 = vpack.c.b16 %v5370, %v5364
        %v5527 = vpack.c.b16 %v5377, %v5371
        %v5528 = vpack.c.b16 %v5378, %v5372
        %v5529 = vpack.c.b16 %v5379, %v5373
        %v5530 = vpack.c.b16 %v5380, %v5374
        %v5531 = vpack.c.b16 %v5381, %v5375
        %v5532 = vpack.c.b16 %v5382, %v5376
        %v5533 = vpack.c.b16 %v5389, %v5383
        %v5534 = vpack.c.b16 %v5390, %v5384
        %v5535 = vpack.c.b16 %v5391, %v5385
        %v5536 = vpack.c.b16 %v5392, %v5386
        %v5537 = vpack.c.b16 %v5393, %v5387
        %v5538 = vpack.c.b16 %v5394, %v5388
        %v5539 = vpack.c.b16 %v5401, %v5395
        %v5540 = vpack.c.b16 %v5402, %v5396
        %v5541 = vpack.c.b16 %v5403, %v5397
        %v5542 = vpack.c.b16 %v5404, %v5398
        %v5543 = vpack.c.b16 %v5405, %v5399
        %v5544 = vpack.c.b16 %v5406, %v5400
        %v5545 = vpack.c.b16 %v5413, %v5407
        %v5546 = vpack.c.b16 %v5414, %v5408
        %v5547 = vpack.c.b16 %v5415, %v5409
        %v5548 = vpack.c.b16 %v5416, %v5410
        %v5549 = vpack.c.b16 %v5417, %v5411
        %v5550 = vpack.c.b16 %v5418, %v5412
        %v5551 = vpack.c.b16 %v5425, %v5419
        %v5552 = vpack.c.b16 %v5426, %v5420
        %v5553 = vpack.c.b16 %v5427, %v5421
        %v5554 = vpack.c.b16 %v5428, %v5422
        %v5555 = vpack.c.b16 %v5429, %v5423
        %v5556 = vpack.c.b16 %v5430, %v5424
        %v5557 = vpack.c.b16 %v5437, %v5431
        %v5558 = vpack.c.b16 %v5438, %v5432
        %v5559 = vpack.c.b16 %v5439, %v5433
        %v5560 = vpack.c.b16 %v5440, %v5434
        %v5561 = vpack.c.b16 %v5441, %v5435
        %v5562 = vpack.c.b16 %v5442, %v5436
        %v5563 = vpack.c.b16 %v5449, %v5443
        %v5564 = vpack.c.b16 %v5450, %v5444
        %v5565 = vpack.c.b16 %v5451, %v5445
        %v5566 = vpack.c.b16 %v5452, %v5446
        %v5567 = vpack.c.b16 %v5453, %v5447
        %v5568 = vpack.c.b16 %v5454, %v5448
        %v5569 = vpack.c.b16 %v5461, %v5455
        %v5570 = vpack.c.b16 %v5462, %v5456
        %v5571 = vpack.c.b16 %v5463, %v5457
        %v5572 = vpack.c.b16 %v5464, %v5458
        %v5573 = vpack.c.b16 %v5465, %v5459
        %v5574 = vpack.c.b16 %v5466, %v5460
        %v5575 = vpack.c.b16 %v5473, %v5467
        %v5576 = vpack.c.b16 %v5474, %v5468
        %v5577 = vpack.c.b16 %v5475, %v5469
        %v5578 = vpack.c.b16 %v5476, %v5470
        %v5579 = vpack.c.b16 %v5477, %v5471
        %v5580 = vpack.c.b16 %v5478, %v5472
        %v5581 = vpack.c.b16 %v5485, %v5479
        %v5582 = vpack.c.b16 %v5486, %v5480
        %v5583 = vpack.c.b16 %v5487, %v5481
        %v5584 = vpack.c.b16 %v5488, %v5482
        %v5585 = vpack.c.b16 %v5489, %v5483
        %v5586 = vpack.c.b16 %v5490, %v5484
        %5683 = vmatprep.subr.bf16.mxu0 %v5492
        %5684 = vmatpush1.bf16.msra.mxu0 %v5491
        %5685 = vmatprep.subr.bf16.mxu0 %v5498
        %5686 = vmatpush1.bf16.msra.mxu0 %v5497
        %5687 = vmatprep.subr.bf16.mxu0 %v5504
        %5688 = vmatpush1.bf16.msra.mxu0 %v5503
        %5689 = vmatprep.subr.bf16.mxu0 %v5510
        %5690 = vmatpush1.bf16.msra.mxu0 %v5509
        %5691 = vmatprep.subr.bf16.mxu0 %v5516
        %5692 = vmatpush1.bf16.msra.mxu0 %v5515
        %5693 = vmatprep.subr.bf16.mxu0 %v5522
        %5694 = vmatpush1.bf16.msra.mxu0 %v5521
        %5695 = vmatprep.subr.bf16.mxu0 %v5528
        %5696 = vmatpush1.bf16.msra.mxu0 %v5527
        %5697 = vmatprep.subr.bf16.mxu0 %v5534
        %5698 = vmatpush1.bf16.msra.mxu0 %v5533
        %5699 = vmatprep.subr.bf16.mxu0 %v5540
        %5700 = vmatpush1.bf16.msra.mxu0 %v5539
        %5701 = vmatprep.subr.bf16.mxu0 %v5546
        %5702 = vmatpush1.bf16.msra.mxu0 %v5545
        %5703 = vmatprep.subr.bf16.mxu0 %v5552
        %5704 = vmatpush1.bf16.msra.mxu0 %v5551
        %5705 = vmatprep.subr.bf16.mxu0 %v5558
        %5706 = vmatpush1.bf16.msra.mxu0 %v5557
        %5707 = vmatprep.subr.bf16.mxu0 %v5564
        %5708 = vmatpush1.bf16.msra.mxu0 %v5563
        %5709 = vmatprep.subr.bf16.mxu0 %v5570
        %5710 = vmatpush1.bf16.msra.mxu0 %v5569
        %5711 = vmatprep.subr.bf16.mxu0 %v5576
        %5712 = vmatpush1.bf16.msra.mxu0 %v5575
        %5713 = vmatprep.subr.bf16.mxu0 %v5582
        %5714 = vmatpush1.bf16.msra.mxu0 %v5581
        %5715 = vmatprep.mubr.bf16.mxu0 %v5106
        %5716 = vmatmul.mubr.bf16.gmra.mrb[0].mxu0 %v5105
        %v5717 = vpop.f32.mrb[0].mxu0
        %v5718 = vadd.f32 %v504, %v5717
        %v5719 = vpop.f32.mrb[0].mxu0
        %v5720 = vadd.f32 %v508, %v5719
        %v5721 = vpop.f32.mrb[0].mxu0
        %v5722 = vpop.f32.mrb[0].mxu0
        %5723 = vdwg.mxu0
        %5724 = vmatprep.subr.bf16.mxu0 %v5494
        %5725 = vmatpush1.bf16.msra.mxu0 %v5493
        %5726 = vmatprep.subr.bf16.mxu0 %v5500
        %5727 = vmatpush1.bf16.msra.mxu0 %v5499
        %5728 = vmatprep.subr.bf16.mxu0 %v5506
        %5729 = vmatpush1.bf16.msra.mxu0 %v5505
        %5730 = vmatprep.subr.bf16.mxu0 %v5512
        %5731 = vmatpush1.bf16.msra.mxu0 %v5511
        %5732 = vmatprep.subr.bf16.mxu0 %v5518
        %5733 = vmatpush1.bf16.msra.mxu0 %v5517
        %5734 = vmatprep.subr.bf16.mxu0 %v5524
        %5735 = vmatpush1.bf16.msra.mxu0 %v5523
        %5736 = vmatprep.subr.bf16.mxu0 %v5530
        %5737 = vmatpush1.bf16.msra.mxu0 %v5529
        %5738 = vmatprep.subr.bf16.mxu0 %v5536
        %5739 = vmatpush1.bf16.msra.mxu0 %v5535
        %5740 = vmatprep.subr.bf16.mxu0 %v5542
        %5741 = vmatpush1.bf16.msra.mxu0 %v5541
        %5742 = vmatprep.subr.bf16.mxu0 %v5548
        %5743 = vmatpush1.bf16.msra.mxu0 %v5547
        %5744 = vmatprep.subr.bf16.mxu0 %v5554
        %5745 = vmatpush1.bf16.msra.mxu0 %v5553
        %5746 = vmatprep.subr.bf16.mxu0 %v5560
        %5747 = vmatpush1.bf16.msra.mxu0 %v5559
        %5748 = vmatprep.subr.bf16.mxu0 %v5566
        %5749 = vmatpush1.bf16.msra.mxu0 %v5565
        %5750 = vmatprep.subr.bf16.mxu0 %v5572
        %5751 = vmatpush1.bf16.msra.mxu0 %v5571
        %5752 = vmatprep.subr.bf16.mxu0 %v5578
        %5753 = vmatpush1.bf16.msra.mxu0 %v5577
        %5754 = vmatprep.subr.bf16.mxu0 %v5584
        %5755 = vmatpush1.bf16.msra.mxu0 %v5583
        %5756 = vmatprep.mubr.bf16.mxu0 %v5106
        %5757 = vmatmul.mubr.bf16.gmra.mrb[0].mxu0 %v5105
        %v5758 = vpop.f32.mrb[0].mxu0
        %v5759 = vadd.f32 %v512, %v5758
        %v5760 = vpop.f32.mrb[0].mxu0
        %v5761 = vadd.f32 %v516, %v5760
        %v5762 = vpop.f32.mrb[0].mxu0
        %v5763 = vpop.f32.mrb[0].mxu0
        %5764 = vdwg.mxu0
        %5765 = vmatprep.subr.bf16.mxu0 %v5496
        %5766 = vmatpush1.bf16.msra.mxu0 %v5495
        %5767 = vmatprep.subr.bf16.mxu0 %v5502
        %5768 = vmatpush1.bf16.msra.mxu0 %v5501
        %5769 = vmatprep.subr.bf16.mxu0 %v5508
        %5770 = vmatpush1.bf16.msra.mxu0 %v5507
        %5771 = vmatprep.subr.bf16.mxu0 %v5514
        %5772 = vmatpush1.bf16.msra.mxu0 %v5513
        %5773 = vmatprep.subr.bf16.mxu0 %v5520
        %5774 = vmatpush1.bf16.msra.mxu0 %v5519
        %5775 = vmatprep.subr.bf16.mxu0 %v5526
        %5776 = vmatpush1.bf16.msra.mxu0 %v5525
        %5777 = vmatprep.subr.bf16.mxu0 %v5532
        %5778 = vmatpush1.bf16.msra.mxu0 %v5531
        %5779 = vmatprep.subr.bf16.mxu0 %v5538
        %5780 = vmatpush1.bf16.msra.mxu0 %v5537
        %5781 = vmatprep.subr.bf16.mxu0 %v5544
        %5782 = vmatpush1.bf16.msra.mxu0 %v5543
        %5783 = vmatprep.subr.bf16.mxu0 %v5550
        %5784 = vmatpush1.bf16.msra.mxu0 %v5549
        %5785 = vmatprep.subr.bf16.mxu0 %v5556
        %5786 = vmatpush1.bf16.msra.mxu0 %v5555
        %5787 = vmatprep.subr.bf16.mxu0 %v5562
        %5788 = vmatpush1.bf16.msra.mxu0 %v5561
        %5789 = vmatprep.subr.bf16.mxu0 %v5568
        %5790 = vmatpush1.bf16.msra.mxu0 %v5567
        %5791 = vmatprep.subr.bf16.mxu0 %v5574
        %5792 = vmatpush1.bf16.msra.mxu0 %v5573
        %5793 = vmatprep.subr.bf16.mxu0 %v5580
        %5794 = vmatpush1.bf16.msra.mxu0 %v5579
        %5795 = vmatprep.subr.bf16.mxu0 %v5586
        %5796 = vmatpush1.bf16.msra.mxu0 %v5585
        %5797 = vmatprep.mubr.bf16.mxu0 %v5106
        %5798 = vmatmul.mubr.bf16.gmra.mrb[0].mxu0 %v5105
        %v5799 = vpop.f32.mrb[0].mxu0
        %v5800 = vadd.f32 %v520, %v5799
        %v5801 = vpop.f32.mrb[0].mxu0
        %v5802 = vadd.f32 %v524, %v5801
        %v5803 = vpop.f32.mrb[0].mxu0
        %v5804 = vpop.f32.mrb[0].mxu0
        %5805 = vdwg.mxu0
        %s5806 = scalar_lea.vmem %s363, 72
        %v5807 = vld [vmem:[%s5806] sm:$0xff]
        %v5808 = vld [vmem:[%s5806 + $0x8] sm:$0xf]
        %v5809 = vunpack.c.l.bf16 %v5807
        %v5810 = vunpack.c.h.bf16 %v5807
        %v5811 = vunpack.c.l.bf16 %v5808
        %s5812 = scalar_lea.vmem %s371, 12
        %v5813 = vld [vmem:[%s5812] sm:$0xff]
        %v5814 = vld [vmem:[%s5812 + $0x8] sm:$0xf]
        %v5815 = vunpack.c.l.bf16 %v5813
        %v5816 = vunpack.c.h.bf16 %v5813
        %v5817 = vunpack.c.l.bf16 %v5814
        %v5818 = vadd.f32 %v5809, %v5718
        %v5819 = vxor.u32 %v5818, 2147483648
        %v5820 = vmul.f32 %v5819, 1.442695
        %v5821 = vpow.pop %v5820
        %v5822 = vadd.f32 %v5821, 1.0
        %v5823 = vrcp.pop %v5822
        %v5824 = vmul.f32 1.0, %v5823
        %v5825 = vadd.f32 %v5810, %v5720
        %v5826 = vxor.u32 %v5825, 2147483648
        %v5827 = vmul.f32 %v5826, 1.442695
        %v5828 = vpow.pop %v5827
        %v5829 = vadd.f32 %v5828, 1.0
        %v5830 = vrcp.pop %v5829
        %v5831 = vmul.f32 1.0, %v5830
        %v5832 = vmul.f32 %v5824, %v5759
        %v5833 = vadd.f32 %v5811, %v5832
        %v5834 = vtanh.pop %v5833
        %v5835 = vsub.f32 1.0, %v5831
        %v5836 = vmul.f32 %v5835, %v5834
        %v5837 = vmul.f32 %v5831, %v5090
        %v5838 = vadd.f32 %v5836, %v5837
        %v5839 = vadd.f32 %v5815, %v5761
        %v5840 = vxor.u32 %v5839, 2147483648
        %v5841 = vmul.f32 %v5840, 1.442695
        %v5842 = vpow.pop %v5841
        %v5843 = vadd.f32 %v5842, 1.0
        %v5844 = vrcp.pop %v5843
        %v5845 = vmul.f32 1.0, %v5844
        %v5846 = vadd.f32 %v5816, %v5800
        %v5847 = vxor.u32 %v5846, 2147483648
        %v5848 = vmul.f32 %v5847, 1.442695
        %v5849 = vpow.pop %v5848
        %v5850 = vadd.f32 %v5849, 1.0
        %v5851 = vrcp.pop %v5850
        %v5852 = vmul.f32 1.0, %v5851
        %v5853 = vmul.f32 %v5845, %v5802
        %v5854 = vadd.f32 %v5817, %v5853
        %v5855 = vtanh.pop %v5854
        %v5856 = vsub.f32 1.0, %v5852
        %v5857 = vmul.f32 %v5856, %v5855
        %v5858 = vmul.f32 %v5852, %v5096
        %v5859 = vadd.f32 %v5857, %v5858
        %v5860 = vstv %s5103
        %vm5861 = vcmp.lt.s32.totalorder %v5860, %v394
        %v5862 = vstv %s5104
        %vm5863 = vcmp.lt.s32.totalorder %v5862, %v394
        %v5864 = vsel %vm5861, 1, 0
        %5865 = vset.pattern.permute.xlu0 0
        %5866 = vperm.xlu0 %5865, %v5864
        %v5867 = vpop.permute.xlu0 %5866
        %vm5868 = vcmp.eq.s32.totalorder %v5867, 1
        %v5869 = vsel %vm5868, %v5838, %v5090
        %v5870 = vsel %vm5863, 1, 0
        %5871 = vset.pattern.permute.xlu0 0
        %5872 = vperm.xlu0 %5871, %v5870
        %v5873 = vpop.permute.xlu0 %5872
        %vm5874 = vcmp.eq.s32.totalorder %v5873, 1
        %v5875 = vsel %vm5874, %v5859, %v5096
        %v5876 = vsel %vm5868, %v5838, 0.0
        %s5877 = scalar_lea.vmem %s378, 48
        %5878 = vst [vmem:[%s5877] sm:$0xff] %v5876
        %v5879 = vsel %vm5874, %v5859, 0.0
        %s5880 = scalar_lea.vmem %s385, 8
        %5881 = vst [vmem:[%s5880] sm:$0xff] %v5879
        %s5882 = sadd.s32 %s398, 7
        %v5883 = vpack.c.bf16 %v5869, %v5869
        %v5884 = vpack.c.bf16 %v5875, %v5875
        %v5885 = vld [vmem:[%s3] sm:$0xff]
        %v5886 = vld [vmem:[%s3 + $0x8] sm:$0xff]
        %v5887 = vld [vmem:[%s3 + $0x10] sm:$0xff]
        %v5888 = vld [vmem:[%s3 + $0x18] sm:$0xff]
        %v5889 = vld [vmem:[%s3 + $0x20] sm:$0xff]
        %v5890 = vld [vmem:[%s3 + $0x28] sm:$0xff]
        %v5891 = vld [vmem:[%s3 + $0x30] sm:$0xff]
        %v5892 = vld [vmem:[%s3 + $0x38] sm:$0xff]
        %v5893 = vld [vmem:[%s3 + $0x40] sm:$0xff]
        %v5894 = vld [vmem:[%s3 + $0x48] sm:$0xff]
        %v5895 = vld [vmem:[%s3 + $0x50] sm:$0xff]
        %v5896 = vld [vmem:[%s3 + $0x58] sm:$0xff]
        %v5897 = vld [vmem:[%s3 + $0x60] sm:$0xff]
        %v5898 = vld [vmem:[%s3 + $0x68] sm:$0xff]
        %v5899 = vld [vmem:[%s3 + $0x70] sm:$0xff]
        %v5900 = vld [vmem:[%s3 + $0x78] sm:$0xff]
        %v5901 = vld [vmem:[%s3 + $0x80] sm:$0xff]
        %v5902 = vld [vmem:[%s3 + $0x88] sm:$0xff]
        %v5903 = vld [vmem:[%s3 + $0x90] sm:$0xff]
        %v5904 = vld [vmem:[%s3 + $0x98] sm:$0xff]
        %v5905 = vld [vmem:[%s3 + $0xa0] sm:$0xff]
        %v5906 = vld [vmem:[%s3 + $0xa8] sm:$0xff]
        %v5907 = vld [vmem:[%s3 + $0xb0] sm:$0xff]
        %v5908 = vld [vmem:[%s3 + $0xb8] sm:$0xff]
        %v5909 = vld [vmem:[%s3 + $0xc0] sm:$0xff]
        %v5910 = vld [vmem:[%s3 + $0xc8] sm:$0xff]
        %v5911 = vld [vmem:[%s3 + $0xd0] sm:$0xff]
        %v5912 = vld [vmem:[%s3 + $0xd8] sm:$0xff]
        %v5913 = vld [vmem:[%s3 + $0xe0] sm:$0xff]
        %v5914 = vld [vmem:[%s3 + $0xe8] sm:$0xff]
        %v5915 = vld [vmem:[%s3 + $0xf0] sm:$0xff]
        %v5916 = vld [vmem:[%s3 + $0xf8] sm:$0xff]
        %v5917 = vld [vmem:[%s3 + $0x100] sm:$0xff]
        %v5918 = vld [vmem:[%s3 + $0x108] sm:$0xff]
        %v5919 = vld [vmem:[%s3 + $0x110] sm:$0xff]
        %v5920 = vld [vmem:[%s3 + $0x118] sm:$0xff]
        %v5921 = vld [vmem:[%s3 + $0x120] sm:$0xff]
        %v5922 = vld [vmem:[%s3 + $0x128] sm:$0xff]
        %v5923 = vld [vmem:[%s3 + $0x130] sm:$0xff]
        %v5924 = vld [vmem:[%s3 + $0x138] sm:$0xff]
        %v5925 = vld [vmem:[%s3 + $0x140] sm:$0xff]
        %v5926 = vld [vmem:[%s3 + $0x148] sm:$0xff]
        %v5927 = vld [vmem:[%s3 + $0x150] sm:$0xff]
        %v5928 = vld [vmem:[%s3 + $0x158] sm:$0xff]
        %v5929 = vld [vmem:[%s3 + $0x160] sm:$0xff]
        %v5930 = vld [vmem:[%s3 + $0x168] sm:$0xff]
        %v5931 = vld [vmem:[%s3 + $0x170] sm:$0xff]
        %v5932 = vld [vmem:[%s3 + $0x178] sm:$0xff]
        %v5933 = vld [vmem:[%s3 + $0x180] sm:$0xff]
        %v5934 = vld [vmem:[%s3 + $0x188] sm:$0xff]
        %v5935 = vld [vmem:[%s3 + $0x190] sm:$0xff]
        %v5936 = vld [vmem:[%s3 + $0x198] sm:$0xff]
        %v5937 = vld [vmem:[%s3 + $0x1a0] sm:$0xff]
        %v5938 = vld [vmem:[%s3 + $0x1a8] sm:$0xff]
        %v5939 = vld [vmem:[%s3 + $0x1b0] sm:$0xff]
        %v5940 = vld [vmem:[%s3 + $0x1b8] sm:$0xff]
        %v5941 = vld [vmem:[%s3 + $0x1c0] sm:$0xff]
        %v5942 = vld [vmem:[%s3 + $0x1c8] sm:$0xff]
        %v5943 = vld [vmem:[%s3 + $0x1d0] sm:$0xff]
        %v5944 = vld [vmem:[%s3 + $0x1d8] sm:$0xff]
        %v5945 = vld [vmem:[%s3 + $0x1e0] sm:$0xff]
        %v5946 = vld [vmem:[%s3 + $0x1e8] sm:$0xff]
        %v5947 = vld [vmem:[%s3 + $0x1f0] sm:$0xff]
        %v5948 = vld [vmem:[%s3 + $0x1f8] sm:$0xff]
        %v5949 = vld [vmem:[%s3 + $0x200] sm:$0xff]
        %v5950 = vld [vmem:[%s3 + $0x208] sm:$0xff]
        %v5951 = vld [vmem:[%s3 + $0x210] sm:$0xff]
        %v5952 = vld [vmem:[%s3 + $0x218] sm:$0xff]
        %v5953 = vld [vmem:[%s3 + $0x220] sm:$0xff]
        %v5954 = vld [vmem:[%s3 + $0x228] sm:$0xff]
        %v5955 = vld [vmem:[%s3 + $0x230] sm:$0xff]
        %v5956 = vld [vmem:[%s3 + $0x238] sm:$0xff]
        %v5957 = vld [vmem:[%s3 + $0x240] sm:$0xff]
        %v5958 = vld [vmem:[%s3 + $0x248] sm:$0xff]
        %v5959 = vld [vmem:[%s3 + $0x250] sm:$0xff]
        %v5960 = vld [vmem:[%s3 + $0x258] sm:$0xff]
        %v5961 = vld [vmem:[%s3 + $0x260] sm:$0xff]
        %v5962 = vld [vmem:[%s3 + $0x268] sm:$0xff]
        %v5963 = vld [vmem:[%s3 + $0x270] sm:$0xff]
        %v5964 = vld [vmem:[%s3 + $0x278] sm:$0xff]
        %v5965 = vld [vmem:[%s3 + $0x280] sm:$0xff]
        %v5966 = vld [vmem:[%s3 + $0x288] sm:$0xff]
        %v5967 = vld [vmem:[%s3 + $0x290] sm:$0xff]
        %v5968 = vld [vmem:[%s3 + $0x298] sm:$0xff]
        %v5969 = vld [vmem:[%s3 + $0x2a0] sm:$0xff]
        %v5970 = vld [vmem:[%s3 + $0x2a8] sm:$0xff]
        %v5971 = vld [vmem:[%s3 + $0x2b0] sm:$0xff]
        %v5972 = vld [vmem:[%s3 + $0x2b8] sm:$0xff]
        %v5973 = vld [vmem:[%s3 + $0x2c0] sm:$0xff]
        %v5974 = vld [vmem:[%s3 + $0x2c8] sm:$0xff]
        %v5975 = vld [vmem:[%s3 + $0x2d0] sm:$0xff]
        %v5976 = vld [vmem:[%s3 + $0x2d8] sm:$0xff]
        %v5977 = vld [vmem:[%s3 + $0x2e0] sm:$0xff]
        %v5978 = vld [vmem:[%s3 + $0x2e8] sm:$0xff]
        %v5979 = vld [vmem:[%s3 + $0x2f0] sm:$0xff]
        %v5980 = vld [vmem:[%s3 + $0x2f8] sm:$0xff]
        %v6077 = vunpack.c.l.b16 %v5885
        %v6078 = vunpack.c.h.b16 %v5885
        %v6079 = vunpack.c.l.b16 %v5886
        %v6080 = vunpack.c.h.b16 %v5886
        %v6081 = vunpack.c.l.b16 %v5887
        %v6082 = vunpack.c.h.b16 %v5887
        %v6083 = vunpack.c.l.b16 %v5888
        %v6084 = vunpack.c.h.b16 %v5888
        %v6085 = vunpack.c.l.b16 %v5889
        %v6086 = vunpack.c.h.b16 %v5889
        %v6087 = vunpack.c.l.b16 %v5890
        %v6088 = vunpack.c.h.b16 %v5890
        %v6089 = vunpack.c.l.b16 %v5891
        %v6090 = vunpack.c.h.b16 %v5891
        %v6091 = vunpack.c.l.b16 %v5892
        %v6092 = vunpack.c.h.b16 %v5892
        %v6093 = vunpack.c.l.b16 %v5893
        %v6094 = vunpack.c.h.b16 %v5893
        %v6095 = vunpack.c.l.b16 %v5894
        %v6096 = vunpack.c.h.b16 %v5894
        %v6097 = vunpack.c.l.b16 %v5895
        %v6098 = vunpack.c.h.b16 %v5895
        %v6099 = vunpack.c.l.b16 %v5896
        %v6100 = vunpack.c.h.b16 %v5896
        %v6101 = vunpack.c.l.b16 %v5897
        %v6102 = vunpack.c.h.b16 %v5897
        %v6103 = vunpack.c.l.b16 %v5898
        %v6104 = vunpack.c.h.b16 %v5898
        %v6105 = vunpack.c.l.b16 %v5899
        %v6106 = vunpack.c.h.b16 %v5899
        %v6107 = vunpack.c.l.b16 %v5900
        %v6108 = vunpack.c.h.b16 %v5900
        %v6109 = vunpack.c.l.b16 %v5901
        %v6110 = vunpack.c.h.b16 %v5901
        %v6111 = vunpack.c.l.b16 %v5902
        %v6112 = vunpack.c.h.b16 %v5902
        %v6113 = vunpack.c.l.b16 %v5903
        %v6114 = vunpack.c.h.b16 %v5903
        %v6115 = vunpack.c.l.b16 %v5904
        %v6116 = vunpack.c.h.b16 %v5904
        %v6117 = vunpack.c.l.b16 %v5905
        %v6118 = vunpack.c.h.b16 %v5905
        %v6119 = vunpack.c.l.b16 %v5906
        %v6120 = vunpack.c.h.b16 %v5906
        %v6121 = vunpack.c.l.b16 %v5907
        %v6122 = vunpack.c.h.b16 %v5907
        %v6123 = vunpack.c.l.b16 %v5908
        %v6124 = vunpack.c.h.b16 %v5908
        %v6125 = vunpack.c.l.b16 %v5909
        %v6126 = vunpack.c.h.b16 %v5909
        %v6127 = vunpack.c.l.b16 %v5910
        %v6128 = vunpack.c.h.b16 %v5910
        %v6129 = vunpack.c.l.b16 %v5911
        %v6130 = vunpack.c.h.b16 %v5911
        %v6131 = vunpack.c.l.b16 %v5912
        %v6132 = vunpack.c.h.b16 %v5912
        %v6133 = vunpack.c.l.b16 %v5913
        %v6134 = vunpack.c.h.b16 %v5913
        %v6135 = vunpack.c.l.b16 %v5914
        %v6136 = vunpack.c.h.b16 %v5914
        %v6137 = vunpack.c.l.b16 %v5915
        %v6138 = vunpack.c.h.b16 %v5915
        %v6139 = vunpack.c.l.b16 %v5916
        %v6140 = vunpack.c.h.b16 %v5916
        %v6141 = vunpack.c.l.b16 %v5917
        %v6142 = vunpack.c.h.b16 %v5917
        %v6143 = vunpack.c.l.b16 %v5918
        %v6144 = vunpack.c.h.b16 %v5918
        %v6145 = vunpack.c.l.b16 %v5919
        %v6146 = vunpack.c.h.b16 %v5919
        %v6147 = vunpack.c.l.b16 %v5920
        %v6148 = vunpack.c.h.b16 %v5920
        %v6149 = vunpack.c.l.b16 %v5921
        %v6150 = vunpack.c.h.b16 %v5921
        %v6151 = vunpack.c.l.b16 %v5922
        %v6152 = vunpack.c.h.b16 %v5922
        %v6153 = vunpack.c.l.b16 %v5923
        %v6154 = vunpack.c.h.b16 %v5923
        %v6155 = vunpack.c.l.b16 %v5924
        %v6156 = vunpack.c.h.b16 %v5924
        %v6157 = vunpack.c.l.b16 %v5925
        %v6158 = vunpack.c.h.b16 %v5925
        %v6159 = vunpack.c.l.b16 %v5926
        %v6160 = vunpack.c.h.b16 %v5926
        %v6161 = vunpack.c.l.b16 %v5927
        %v6162 = vunpack.c.h.b16 %v5927
        %v6163 = vunpack.c.l.b16 %v5928
        %v6164 = vunpack.c.h.b16 %v5928
        %v6165 = vunpack.c.l.b16 %v5929
        %v6166 = vunpack.c.h.b16 %v5929
        %v6167 = vunpack.c.l.b16 %v5930
        %v6168 = vunpack.c.h.b16 %v5930
        %v6169 = vunpack.c.l.b16 %v5931
        %v6170 = vunpack.c.h.b16 %v5931
        %v6171 = vunpack.c.l.b16 %v5932
        %v6172 = vunpack.c.h.b16 %v5932
        %v6173 = vunpack.c.l.b16 %v5933
        %v6174 = vunpack.c.h.b16 %v5933
        %v6175 = vunpack.c.l.b16 %v5934
        %v6176 = vunpack.c.h.b16 %v5934
        %v6177 = vunpack.c.l.b16 %v5935
        %v6178 = vunpack.c.h.b16 %v5935
        %v6179 = vunpack.c.l.b16 %v5936
        %v6180 = vunpack.c.h.b16 %v5936
        %v6181 = vunpack.c.l.b16 %v5937
        %v6182 = vunpack.c.h.b16 %v5937
        %v6183 = vunpack.c.l.b16 %v5938
        %v6184 = vunpack.c.h.b16 %v5938
        %v6185 = vunpack.c.l.b16 %v5939
        %v6186 = vunpack.c.h.b16 %v5939
        %v6187 = vunpack.c.l.b16 %v5940
        %v6188 = vunpack.c.h.b16 %v5940
        %v6189 = vunpack.c.l.b16 %v5941
        %v6190 = vunpack.c.h.b16 %v5941
        %v6191 = vunpack.c.l.b16 %v5942
        %v6192 = vunpack.c.h.b16 %v5942
        %v6193 = vunpack.c.l.b16 %v5943
        %v6194 = vunpack.c.h.b16 %v5943
        %v6195 = vunpack.c.l.b16 %v5944
        %v6196 = vunpack.c.h.b16 %v5944
        %v6197 = vunpack.c.l.b16 %v5945
        %v6198 = vunpack.c.h.b16 %v5945
        %v6199 = vunpack.c.l.b16 %v5946
        %v6200 = vunpack.c.h.b16 %v5946
        %v6201 = vunpack.c.l.b16 %v5947
        %v6202 = vunpack.c.h.b16 %v5947
        %v6203 = vunpack.c.l.b16 %v5948
        %v6204 = vunpack.c.h.b16 %v5948
        %v6205 = vunpack.c.l.b16 %v5949
        %v6206 = vunpack.c.h.b16 %v5949
        %v6207 = vunpack.c.l.b16 %v5950
        %v6208 = vunpack.c.h.b16 %v5950
        %v6209 = vunpack.c.l.b16 %v5951
        %v6210 = vunpack.c.h.b16 %v5951
        %v6211 = vunpack.c.l.b16 %v5952
        %v6212 = vunpack.c.h.b16 %v5952
        %v6213 = vunpack.c.l.b16 %v5953
        %v6214 = vunpack.c.h.b16 %v5953
        %v6215 = vunpack.c.l.b16 %v5954
        %v6216 = vunpack.c.h.b16 %v5954
        %v6217 = vunpack.c.l.b16 %v5955
        %v6218 = vunpack.c.h.b16 %v5955
        %v6219 = vunpack.c.l.b16 %v5956
        %v6220 = vunpack.c.h.b16 %v5956
        %v6221 = vunpack.c.l.b16 %v5957
        %v6222 = vunpack.c.h.b16 %v5957
        %v6223 = vunpack.c.l.b16 %v5958
        %v6224 = vunpack.c.h.b16 %v5958
        %v6225 = vunpack.c.l.b16 %v5959
        %v6226 = vunpack.c.h.b16 %v5959
        %v6227 = vunpack.c.l.b16 %v5960
        %v6228 = vunpack.c.h.b16 %v5960
        %v6229 = vunpack.c.l.b16 %v5961
        %v6230 = vunpack.c.h.b16 %v5961
        %v6231 = vunpack.c.l.b16 %v5962
        %v6232 = vunpack.c.h.b16 %v5962
        %v6233 = vunpack.c.l.b16 %v5963
        %v6234 = vunpack.c.h.b16 %v5963
        %v6235 = vunpack.c.l.b16 %v5964
        %v6236 = vunpack.c.h.b16 %v5964
        %v6237 = vunpack.c.l.b16 %v5965
        %v6238 = vunpack.c.h.b16 %v5965
        %v6239 = vunpack.c.l.b16 %v5966
        %v6240 = vunpack.c.h.b16 %v5966
        %v6241 = vunpack.c.l.b16 %v5967
        %v6242 = vunpack.c.h.b16 %v5967
        %v6243 = vunpack.c.l.b16 %v5968
        %v6244 = vunpack.c.h.b16 %v5968
        %v6245 = vunpack.c.l.b16 %v5969
        %v6246 = vunpack.c.h.b16 %v5969
        %v6247 = vunpack.c.l.b16 %v5970
        %v6248 = vunpack.c.h.b16 %v5970
        %v6249 = vunpack.c.l.b16 %v5971
        %v6250 = vunpack.c.h.b16 %v5971
        %v6251 = vunpack.c.l.b16 %v5972
        %v6252 = vunpack.c.h.b16 %v5972
        %v6253 = vunpack.c.l.b16 %v5973
        %v6254 = vunpack.c.h.b16 %v5973
        %v6255 = vunpack.c.l.b16 %v5974
        %v6256 = vunpack.c.h.b16 %v5974
        %v6257 = vunpack.c.l.b16 %v5975
        %v6258 = vunpack.c.h.b16 %v5975
        %v6259 = vunpack.c.l.b16 %v5976
        %v6260 = vunpack.c.h.b16 %v5976
        %v6261 = vunpack.c.l.b16 %v5977
        %v6262 = vunpack.c.h.b16 %v5977
        %v6263 = vunpack.c.l.b16 %v5978
        %v6264 = vunpack.c.h.b16 %v5978
        %v6265 = vunpack.c.l.b16 %v5979
        %v6266 = vunpack.c.h.b16 %v5979
        %v6267 = vunpack.c.l.b16 %v5980
        %v6268 = vunpack.c.h.b16 %v5980
        %v6269 = vpack.c.b16 %v6083, %v6077
        %v6270 = vpack.c.b16 %v6084, %v6078
        %v6271 = vpack.c.b16 %v6085, %v6079
        %v6272 = vpack.c.b16 %v6086, %v6080
        %v6273 = vpack.c.b16 %v6087, %v6081
        %v6274 = vpack.c.b16 %v6088, %v6082
        %v6275 = vpack.c.b16 %v6095, %v6089
        %v6276 = vpack.c.b16 %v6096, %v6090
        %v6277 = vpack.c.b16 %v6097, %v6091
        %v6278 = vpack.c.b16 %v6098, %v6092
        %v6279 = vpack.c.b16 %v6099, %v6093
        %v6280 = vpack.c.b16 %v6100, %v6094
        %v6281 = vpack.c.b16 %v6107, %v6101
        %v6282 = vpack.c.b16 %v6108, %v6102
        %v6283 = vpack.c.b16 %v6109, %v6103
        %v6284 = vpack.c.b16 %v6110, %v6104
        %v6285 = vpack.c.b16 %v6111, %v6105
        %v6286 = vpack.c.b16 %v6112, %v6106
        %v6287 = vpack.c.b16 %v6119, %v6113
        %v6288 = vpack.c.b16 %v6120, %v6114
        %v6289 = vpack.c.b16 %v6121, %v6115
        %v6290 = vpack.c.b16 %v6122, %v6116
        %v6291 = vpack.c.b16 %v6123, %v6117
        %v6292 = vpack.c.b16 %v6124, %v6118
        %v6293 = vpack.c.b16 %v6131, %v6125
        %v6294 = vpack.c.b16 %v6132, %v6126
        %v6295 = vpack.c.b16 %v6133, %v6127
        %v6296 = vpack.c.b16 %v6134, %v6128
        %v6297 = vpack.c.b16 %v6135, %v6129
        %v6298 = vpack.c.b16 %v6136, %v6130
        %v6299 = vpack.c.b16 %v6143, %v6137
        %v6300 = vpack.c.b16 %v6144, %v6138
        %v6301 = vpack.c.b16 %v6145, %v6139
        %v6302 = vpack.c.b16 %v6146, %v6140
        %v6303 = vpack.c.b16 %v6147, %v6141
        %v6304 = vpack.c.b16 %v6148, %v6142
        %v6305 = vpack.c.b16 %v6155, %v6149
        %v6306 = vpack.c.b16 %v6156, %v6150
        %v6307 = vpack.c.b16 %v6157, %v6151
        %v6308 = vpack.c.b16 %v6158, %v6152
        %v6309 = vpack.c.b16 %v6159, %v6153
        %v6310 = vpack.c.b16 %v6160, %v6154
        %v6311 = vpack.c.b16 %v6167, %v6161
        %v6312 = vpack.c.b16 %v6168, %v6162
        %v6313 = vpack.c.b16 %v6169, %v6163
        %v6314 = vpack.c.b16 %v6170, %v6164
        %v6315 = vpack.c.b16 %v6171, %v6165
        %v6316 = vpack.c.b16 %v6172, %v6166
        %v6317 = vpack.c.b16 %v6179, %v6173
        %v6318 = vpack.c.b16 %v6180, %v6174
        %v6319 = vpack.c.b16 %v6181, %v6175
        %v6320 = vpack.c.b16 %v6182, %v6176
        %v6321 = vpack.c.b16 %v6183, %v6177
        %v6322 = vpack.c.b16 %v6184, %v6178
        %v6323 = vpack.c.b16 %v6191, %v6185
        %v6324 = vpack.c.b16 %v6192, %v6186
        %v6325 = vpack.c.b16 %v6193, %v6187
        %v6326 = vpack.c.b16 %v6194, %v6188
        %v6327 = vpack.c.b16 %v6195, %v6189
        %v6328 = vpack.c.b16 %v6196, %v6190
        %v6329 = vpack.c.b16 %v6203, %v6197
        %v6330 = vpack.c.b16 %v6204, %v6198
        %v6331 = vpack.c.b16 %v6205, %v6199
        %v6332 = vpack.c.b16 %v6206, %v6200
        %v6333 = vpack.c.b16 %v6207, %v6201
        %v6334 = vpack.c.b16 %v6208, %v6202
        %v6335 = vpack.c.b16 %v6215, %v6209
        %v6336 = vpack.c.b16 %v6216, %v6210
        %v6337 = vpack.c.b16 %v6217, %v6211
        %v6338 = vpack.c.b16 %v6218, %v6212
        %v6339 = vpack.c.b16 %v6219, %v6213
        %v6340 = vpack.c.b16 %v6220, %v6214
        %v6341 = vpack.c.b16 %v6227, %v6221
        %v6342 = vpack.c.b16 %v6228, %v6222
        %v6343 = vpack.c.b16 %v6229, %v6223
        %v6344 = vpack.c.b16 %v6230, %v6224
        %v6345 = vpack.c.b16 %v6231, %v6225
        %v6346 = vpack.c.b16 %v6232, %v6226
        %v6347 = vpack.c.b16 %v6239, %v6233
        %v6348 = vpack.c.b16 %v6240, %v6234
        %v6349 = vpack.c.b16 %v6241, %v6235
        %v6350 = vpack.c.b16 %v6242, %v6236
        %v6351 = vpack.c.b16 %v6243, %v6237
        %v6352 = vpack.c.b16 %v6244, %v6238
        %v6353 = vpack.c.b16 %v6251, %v6245
        %v6354 = vpack.c.b16 %v6252, %v6246
        %v6355 = vpack.c.b16 %v6253, %v6247
        %v6356 = vpack.c.b16 %v6254, %v6248
        %v6357 = vpack.c.b16 %v6255, %v6249
        %v6358 = vpack.c.b16 %v6256, %v6250
        %v6359 = vpack.c.b16 %v6263, %v6257
        %v6360 = vpack.c.b16 %v6264, %v6258
        %v6361 = vpack.c.b16 %v6265, %v6259
        %v6362 = vpack.c.b16 %v6266, %v6260
        %v6363 = vpack.c.b16 %v6267, %v6261
        %v6364 = vpack.c.b16 %v6268, %v6262
        %6461 = vmatprep.subr.bf16.mxu0 %v6270
        %6462 = vmatpush1.bf16.msra.mxu0 %v6269
        %6463 = vmatprep.subr.bf16.mxu0 %v6276
        %6464 = vmatpush1.bf16.msra.mxu0 %v6275
        %6465 = vmatprep.subr.bf16.mxu0 %v6282
        %6466 = vmatpush1.bf16.msra.mxu0 %v6281
        %6467 = vmatprep.subr.bf16.mxu0 %v6288
        %6468 = vmatpush1.bf16.msra.mxu0 %v6287
        %6469 = vmatprep.subr.bf16.mxu0 %v6294
        %6470 = vmatpush1.bf16.msra.mxu0 %v6293
        %6471 = vmatprep.subr.bf16.mxu0 %v6300
        %6472 = vmatpush1.bf16.msra.mxu0 %v6299
        %6473 = vmatprep.subr.bf16.mxu0 %v6306
        %6474 = vmatpush1.bf16.msra.mxu0 %v6305
        %6475 = vmatprep.subr.bf16.mxu0 %v6312
        %6476 = vmatpush1.bf16.msra.mxu0 %v6311
        %6477 = vmatprep.subr.bf16.mxu0 %v6318
        %6478 = vmatpush1.bf16.msra.mxu0 %v6317
        %6479 = vmatprep.subr.bf16.mxu0 %v6324
        %6480 = vmatpush1.bf16.msra.mxu0 %v6323
        %6481 = vmatprep.subr.bf16.mxu0 %v6330
        %6482 = vmatpush1.bf16.msra.mxu0 %v6329
        %6483 = vmatprep.subr.bf16.mxu0 %v6336
        %6484 = vmatpush1.bf16.msra.mxu0 %v6335
        %6485 = vmatprep.subr.bf16.mxu0 %v6342
        %6486 = vmatpush1.bf16.msra.mxu0 %v6341
        %6487 = vmatprep.subr.bf16.mxu0 %v6348
        %6488 = vmatpush1.bf16.msra.mxu0 %v6347
        %6489 = vmatprep.subr.bf16.mxu0 %v6354
        %6490 = vmatpush1.bf16.msra.mxu0 %v6353
        %6491 = vmatprep.subr.bf16.mxu0 %v6360
        %6492 = vmatpush1.bf16.msra.mxu0 %v6359
        %6493 = vmatprep.mubr.bf16.mxu0 %v5884
        %6494 = vmatmul.mubr.bf16.gmra.mrb[0].mxu0 %v5883
        %v6495 = vpop.f32.mrb[0].mxu0
        %v6496 = vadd.f32 %v504, %v6495
        %v6497 = vpop.f32.mrb[0].mxu0
        %v6498 = vadd.f32 %v508, %v6497
        %v6499 = vpop.f32.mrb[0].mxu0
        %v6500 = vpop.f32.mrb[0].mxu0
        %6501 = vdwg.mxu0
        %6502 = vmatprep.subr.bf16.mxu0 %v6272
        %6503 = vmatpush1.bf16.msra.mxu0 %v6271
        %6504 = vmatprep.subr.bf16.mxu0 %v6278
        %6505 = vmatpush1.bf16.msra.mxu0 %v6277
        %6506 = vmatprep.subr.bf16.mxu0 %v6284
        %6507 = vmatpush1.bf16.msra.mxu0 %v6283
        %6508 = vmatprep.subr.bf16.mxu0 %v6290
        %6509 = vmatpush1.bf16.msra.mxu0 %v6289
        %6510 = vmatprep.subr.bf16.mxu0 %v6296
        %6511 = vmatpush1.bf16.msra.mxu0 %v6295
        %6512 = vmatprep.subr.bf16.mxu0 %v6302
        %6513 = vmatpush1.bf16.msra.mxu0 %v6301
        %6514 = vmatprep.subr.bf16.mxu0 %v6308
        %6515 = vmatpush1.bf16.msra.mxu0 %v6307
        %6516 = vmatprep.subr.bf16.mxu0 %v6314
        %6517 = vmatpush1.bf16.msra.mxu0 %v6313
        %6518 = vmatprep.subr.bf16.mxu0 %v6320
        %6519 = vmatpush1.bf16.msra.mxu0 %v6319
        %6520 = vmatprep.subr.bf16.mxu0 %v6326
        %6521 = vmatpush1.bf16.msra.mxu0 %v6325
        %6522 = vmatprep.subr.bf16.mxu0 %v6332
        %6523 = vmatpush1.bf16.msra.mxu0 %v6331
        %6524 = vmatprep.subr.bf16.mxu0 %v6338
        %6525 = vmatpush1.bf16.msra.mxu0 %v6337
        %6526 = vmatprep.subr.bf16.mxu0 %v6344
        %6527 = vmatpush1.bf16.msra.mxu0 %v6343
        %6528 = vmatprep.subr.bf16.mxu0 %v6350
        %6529 = vmatpush1.bf16.msra.mxu0 %v6349
        %6530 = vmatprep.subr.bf16.mxu0 %v6356
        %6531 = vmatpush1.bf16.msra.mxu0 %v6355
        %6532 = vmatprep.subr.bf16.mxu0 %v6362
        %6533 = vmatpush1.bf16.msra.mxu0 %v6361
        %6534 = vmatprep.mubr.bf16.mxu0 %v5884
        %6535 = vmatmul.mubr.bf16.gmra.mrb[0].mxu0 %v5883
        %v6536 = vpop.f32.mrb[0].mxu0
        %v6537 = vadd.f32 %v512, %v6536
        %v6538 = vpop.f32.mrb[0].mxu0
        %v6539 = vadd.f32 %v516, %v6538
        %v6540 = vpop.f32.mrb[0].mxu0
        %v6541 = vpop.f32.mrb[0].mxu0
        %6542 = vdwg.mxu0
        %6543 = vmatprep.subr.bf16.mxu0 %v6274
        %6544 = vmatpush1.bf16.msra.mxu0 %v6273
        %6545 = vmatprep.subr.bf16.mxu0 %v6280
        %6546 = vmatpush1.bf16.msra.mxu0 %v6279
        %6547 = vmatprep.subr.bf16.mxu0 %v6286
        %6548 = vmatpush1.bf16.msra.mxu0 %v6285
        %6549 = vmatprep.subr.bf16.mxu0 %v6292
        %6550 = vmatpush1.bf16.msra.mxu0 %v6291
        %6551 = vmatprep.subr.bf16.mxu0 %v6298
        %6552 = vmatpush1.bf16.msra.mxu0 %v6297
        %6553 = vmatprep.subr.bf16.mxu0 %v6304
        %6554 = vmatpush1.bf16.msra.mxu0 %v6303
        %6555 = vmatprep.subr.bf16.mxu0 %v6310
        %6556 = vmatpush1.bf16.msra.mxu0 %v6309
        %6557 = vmatprep.subr.bf16.mxu0 %v6316
        %6558 = vmatpush1.bf16.msra.mxu0 %v6315
        %6559 = vmatprep.subr.bf16.mxu0 %v6322
        %6560 = vmatpush1.bf16.msra.mxu0 %v6321
        %6561 = vmatprep.subr.bf16.mxu0 %v6328
        %6562 = vmatpush1.bf16.msra.mxu0 %v6327
        %6563 = vmatprep.subr.bf16.mxu0 %v6334
        %6564 = vmatpush1.bf16.msra.mxu0 %v6333
        %6565 = vmatprep.subr.bf16.mxu0 %v6340
        %6566 = vmatpush1.bf16.msra.mxu0 %v6339
        %6567 = vmatprep.subr.bf16.mxu0 %v6346
        %6568 = vmatpush1.bf16.msra.mxu0 %v6345
        %6569 = vmatprep.subr.bf16.mxu0 %v6352
        %6570 = vmatpush1.bf16.msra.mxu0 %v6351
        %6571 = vmatprep.subr.bf16.mxu0 %v6358
        %6572 = vmatpush1.bf16.msra.mxu0 %v6357
        %6573 = vmatprep.subr.bf16.mxu0 %v6364
        %6574 = vmatpush1.bf16.msra.mxu0 %v6363
        %6575 = vmatprep.mubr.bf16.mxu0 %v5884
        %6576 = vmatmul.mubr.bf16.gmra.mrb[0].mxu0 %v5883
        %v6577 = vpop.f32.mrb[0].mxu0
        %v6578 = vadd.f32 %v520, %v6577
        %v6579 = vpop.f32.mrb[0].mxu0
        %v6580 = vadd.f32 %v524, %v6579
        %v6581 = vpop.f32.mrb[0].mxu0
        %v6582 = vpop.f32.mrb[0].mxu0
        %6583 = vdwg.mxu0
        %s6584 = scalar_lea.vmem %s363, 84
        %v6585 = vld [vmem:[%s6584] sm:$0xff]
        %v6586 = vld [vmem:[%s6584 + $0x8] sm:$0xf]
        %v6587 = vunpack.c.l.bf16 %v6585
        %v6588 = vunpack.c.h.bf16 %v6585
        %v6589 = vunpack.c.l.bf16 %v6586
        %v6590 = vld [vmem:[%s371] sm:$0xff]
        %v6591 = vld [vmem:[%s371 + $0x8] sm:$0xf]
        %v6592 = vunpack.c.l.bf16 %v6590
        %v6593 = vunpack.c.h.bf16 %v6590
        %v6594 = vunpack.c.l.bf16 %v6591
        %v6595 = vadd.f32 %v6587, %v6496
        %v6596 = vxor.u32 %v6595, 2147483648
        %v6597 = vmul.f32 %v6596, 1.442695
        %v6598 = vpow.pop %v6597
        %v6599 = vadd.f32 %v6598, 1.0
        %v6600 = vrcp.pop %v6599
        %v6601 = vmul.f32 1.0, %v6600
        %v6602 = vadd.f32 %v6588, %v6498
        %v6603 = vxor.u32 %v6602, 2147483648
        %v6604 = vmul.f32 %v6603, 1.442695
        %v6605 = vpow.pop %v6604
        %v6606 = vadd.f32 %v6605, 1.0
        %v6607 = vrcp.pop %v6606
        %v6608 = vmul.f32 1.0, %v6607
        %v6609 = vmul.f32 %v6601, %v6537
        %v6610 = vadd.f32 %v6589, %v6609
        %v6611 = vtanh.pop %v6610
        %v6612 = vsub.f32 1.0, %v6608
        %v6613 = vmul.f32 %v6612, %v6611
        %v6614 = vmul.f32 %v6608, %v5869
        %v6615 = vadd.f32 %v6613, %v6614
        %v6616 = vadd.f32 %v6592, %v6539
        %v6617 = vxor.u32 %v6616, 2147483648
        %v6618 = vmul.f32 %v6617, 1.442695
        %v6619 = vpow.pop %v6618
        %v6620 = vadd.f32 %v6619, 1.0
        %v6621 = vrcp.pop %v6620
        %v6622 = vmul.f32 1.0, %v6621
        %v6623 = vadd.f32 %v6593, %v6578
        %v6624 = vxor.u32 %v6623, 2147483648
        %v6625 = vmul.f32 %v6624, 1.442695
        %v6626 = vpow.pop %v6625
        %v6627 = vadd.f32 %v6626, 1.0
        %v6628 = vrcp.pop %v6627
        %v6629 = vmul.f32 1.0, %v6628
        %v6630 = vmul.f32 %v6622, %v6580
        %v6631 = vadd.f32 %v6594, %v6630
        %v6632 = vtanh.pop %v6631
        %v6633 = vsub.f32 1.0, %v6629
        %v6634 = vmul.f32 %v6633, %v6632
        %v6635 = vmul.f32 %v6629, %v5875
        %v6636 = vadd.f32 %v6634, %v6635
        %v6637 = vstv %s5882
        %vm6638 = vcmp.lt.s32.totalorder %v6637, %v394
        %v6639 = vstv %s400
        %vm6640 = vcmp.lt.s32.totalorder %v6639, %v394
        %v6641 = vsel %vm6638, 1, 0
        %6642 = vset.pattern.permute.xlu0 0
        %6643 = vperm.xlu0 %6642, %v6641
        %v6644 = vpop.permute.xlu0 %6643
        %vm6645 = vcmp.eq.s32.totalorder %v6644, 1
        %v6646 = vsel %vm6645, %v6615, %v5869
        %v6647 = vsel %vm6640, 1, 0
        %6648 = vset.pattern.permute.xlu0 0
        %6649 = vperm.xlu0 %6648, %v6647
        %v6650 = vpop.permute.xlu0 %6649
        %vm6651 = vcmp.eq.s32.totalorder %v6650, 1
        %v6652 = vsel %vm6651, %v6636, %v5875
        %v6653 = vsel %vm6645, %v6615, 0.0
        %s6654 = scalar_lea.vmem %s378, 56
        %6655 = vst [vmem:[%s6654] sm:$0xff] %v6653
        %v6656 = vsel %vm6651, %v6636, 0.0
        %6657 = vst [vmem:[%s385] sm:$0xff] %v6656
        %6658 = vst [vmem:[#allocation2] sm:$0xff] %v6646
        %6659 = vst [vmem:[#allocation2 + $0x8] sm:$0xff] %v6652
        %p6660 = scmp.eq.s32.totalorder %s22, 1
        // Predicated region
        $region53: #{encoder_forward.3} parent=47 // pred_check
          %p6661 = pneg %p6660
        $region54: #{encoder_forward.3} parent=47 // pred_check_branch
          %6663 = sbr.rel (%p6661) target = $region56
        $region55: #{encoder_forward.3} parent=47 // pred_region
          %v6664 = vld [vmem:[%s5] sm:$0xff]
          %v6665 = vld [vmem:[%s5 + $0x8] sm:$0xff]
          %v6666 = vld [vmem:[%s5 + $0x10] sm:$0xff]
          %v6667 = vld [vmem:[%s5 + $0x18] sm:$0xff]
          %v6668 = vld [vmem:[%s5 + $0x20] sm:$0xff]
          %v6669 = vld [vmem:[%s5 + $0x28] sm:$0xff]
          %v6670 = vld [vmem:[%s5 + $0x30] sm:$0xff]
          %v6671 = vld [vmem:[%s5 + $0x38] sm:$0xff]
          %v6672 = vld [vmem:[%s5 + $0x40] sm:$0xff]
          %v6673 = vld [vmem:[%s5 + $0x48] sm:$0xff]
          %v6674 = vld [vmem:[%s5 + $0x50] sm:$0xff]
          %v6675 = vld [vmem:[%s5 + $0x58] sm:$0xff]
          %v6676 = vld [vmem:[%s5 + $0x60] sm:$0xff]
          %v6677 = vld [vmem:[%s5 + $0x68] sm:$0xff]
          %v6678 = vld [vmem:[%s5 + $0x70] sm:$0xff]
          %v6679 = vld [vmem:[%s5 + $0x78] sm:$0xff]
          %v6680 = vld [vmem:[%s5 + $0x80] sm:$0xff]
          %v6681 = vld [vmem:[%s5 + $0x88] sm:$0xff]
          %v6682 = vld [vmem:[%s5 + $0x90] sm:$0xff]
          %v6683 = vld [vmem:[%s5 + $0x98] sm:$0xff]
          %v6684 = vld [vmem:[%s5 + $0xa0] sm:$0xff]
          %v6685 = vld [vmem:[%s5 + $0xa8] sm:$0xff]
          %v6686 = vld [vmem:[%s5 + $0xb0] sm:$0xff]
          %v6687 = vld [vmem:[%s5 + $0xb8] sm:$0xff]
          %v6688 = vld [vmem:[%s5 + $0xc0] sm:$0xff]
          %v6689 = vld [vmem:[%s5 + $0xc8] sm:$0xff]
          %v6690 = vld [vmem:[%s5 + $0xd0] sm:$0xff]
          %v6691 = vld [vmem:[%s5 + $0xd8] sm:$0xff]
          %v6692 = vld [vmem:[%s5 + $0xe0] sm:$0xff]
          %v6693 = vld [vmem:[%s5 + $0xe8] sm:$0xff]
          %v6694 = vld [vmem:[%s5 + $0xf0] sm:$0xff]
          %v6695 = vld [vmem:[%s5 + $0xf8] sm:$0xff]
          %v6696 = vld [vmem:[%s6] sm:$0x1]
          %v6698 = vlaneseq
          %v6699 = vshrl.u32 %v6698, 7
          %v6700 = vsub.s32 0, %v6699
          %v6701 = vrot.slane %v6696, %v6700
          %6703 = vmatprep.subr.mxu0 0.0
          %6704 = vmatpush1.msra.mxu0 %v6664
          %6705 = vmatprep.subr.mxu0 0.0
          %6706 = vmatpush1.msra.mxu0 %v6665
          %6707 = vmatprep.subr.mxu0 0.0
          %6708 = vmatpush1.msra.mxu0 %v6666
          %6709 = vmatprep.subr.mxu0 0.0
          %6710 = vmatpush1.msra.mxu0 %v6667
          %6711 = vmatprep.subr.mxu0 0.0
          %6712 = vmatpush1.msra.mxu0 %v6668
          %6713 = vmatprep.subr.mxu0 0.0
          %6714 = vmatpush1.msra.mxu0 %v6669
          %6715 = vmatprep.subr.mxu0 0.0
          %6716 = vmatpush1.msra.mxu0 %v6670
          %6717 = vmatprep.subr.mxu0 0.0
          %6718 = vmatpush1.msra.mxu0 %v6671
          %6719 = vmatprep.subr.mxu0 0.0
          %6720 = vmatpush1.msra.mxu0 %v6672
          %6721 = vmatprep.subr.mxu0 0.0
          %6722 = vmatpush1.msra.mxu0 %v6673
          %6723 = vmatprep.subr.mxu0 0.0
          %6724 = vmatpush1.msra.mxu0 %v6674
          %6725 = vmatprep.subr.mxu0 0.0
          %6726 = vmatpush1.msra.mxu0 %v6675
          %6727 = vmatprep.subr.mxu0 0.0
          %6728 = vmatpush1.msra.mxu0 %v6676
          %6729 = vmatprep.subr.mxu0 0.0
          %6730 = vmatpush1.msra.mxu0 %v6677
          %6731 = vmatprep.subr.mxu0 0.0
          %6732 = vmatpush1.msra.mxu0 %v6678
          %6733 = vmatprep.subr.mxu0 0.0
          %6734 = vmatpush1.msra.mxu0 %v6679
          %6735 = vmatprep.subr.mxu0 0.0
          %6736 = vmatpush1.msra.mxu0 %v6680
          %6737 = vmatprep.subr.mxu0 0.0
          %6738 = vmatpush1.msra.mxu0 %v6681
          %6739 = vmatprep.subr.mxu0 0.0
          %6740 = vmatpush1.msra.mxu0 %v6682
          %6741 = vmatprep.subr.mxu0 0.0
          %6742 = vmatpush1.msra.mxu0 %v6683
          %6743 = vmatprep.subr.mxu0 0.0
          %6744 = vmatpush1.msra.mxu0 %v6684
          %6745 = vmatprep.subr.mxu0 0.0
          %6746 = vmatpush1.msra.mxu0 %v6685
          %6747 = vmatprep.subr.mxu0 0.0
          %6748 = vmatpush1.msra.mxu0 %v6686
          %6749 = vmatprep.subr.mxu0 0.0
          %6750 = vmatpush1.msra.mxu0 %v6687
          %6751 = vmatprep.subr.mxu0 0.0
          %6752 = vmatpush1.msra.mxu0 %v6688
          %6753 = vmatprep.subr.mxu0 0.0
          %6754 = vmatpush1.msra.mxu0 %v6689
          %6755 = vmatprep.subr.mxu0 0.0
          %6756 = vmatpush1.msra.mxu0 %v6690
          %6757 = vmatprep.subr.mxu0 0.0
          %6758 = vmatpush1.msra.mxu0 %v6691
          %6759 = vmatprep.subr.mxu0 0.0
          %6760 = vmatpush1.msra.mxu0 %v6692
          %6761 = vmatprep.subr.mxu0 0.0
          %6762 = vmatpush1.msra.mxu0 %v6693
          %6763 = vmatprep.subr.mxu0 0.0
          %6764 = vmatpush1.msra.mxu0 %v6694
          %6765 = vmatprep.subr.mxu0 0.0
          %6766 = vmatpush1.msra.mxu0 %v6695
          %6767 = vmatprep.mubr.f32.mxu0 %v6652
          %6768 = vmatmul.mubr.f32.gmra.mrb[0].mxu0 %v6646
          %v6769 = vpop.f32.mrb[0].mxu0
          %v6770 = vadd.f32 %v6701, %v6769
          %v6771 = vpop.f32.mrb[0].mxu0
          %6772 = vdwg.mxu0
          %v6773 = vtanh.pop %v6770
          %6774 = vst [vmem:[#allocation3] sm:$0xff] %v6773
        $region56: #{encoder_forward.3} parent=47 // pred_fallthru
          _
        %s6775 = smul.u32 8, %s22
        %p6776 = scmp.lt.s32.totalorder %s6775, 15
        %s6777 = scalar_select %p6776, %s6775, 15
        %s6778 = smul.addr %s6777, 8
        %s6779 = scalar_lea.vmem %s7, %s6778
        %s6780 = ssub.s32 1, %s22
        %s6781 = smul.u32 8, %s6780
        %p6782 = scmp.lt.s32.totalorder %s6781, 15
        %s6783 = scalar_select %p6782, %s6781, 15
        %s6784 = smul.addr %s6783, 8
        %s6785 = scalar_lea.vmem %s8, %s6784
        // Predicated region
        $region57: #{encoder_forward.3} parent=47 // pred_check
          %p6786 = pneg %p199
        $region58: #{encoder_forward.3} parent=47 // pred_check_branch
          %6788 = sbr.rel (%p6786) target = $region60
        $region59: #{encoder_forward.3} parent=47 // pred_region
          %s6789 = smul.u32 8, %s22
        $region60: #{encoder_forward.3} parent=47 // pred_fallthru
          _
        // Predicated region
        $region61: #{encoder_forward.3} parent=47 // pred_check
          %p6790 = pneg %p227
        $region62: #{encoder_forward.3} parent=47 // pred_check_branch
          %6792 = sbr.rel (%p6790) target = $region64
        $region63: #{encoder_forward.3} parent=47 // pred_region
          %s6793 = ssub.s32 1, %s22
          %s6794 = smul.u32 8, %s6793
        $region64: #{encoder_forward.3} parent=47 // pred_fallthru
          _
        // Predicated region
        $region65: #{encoder_forward.3} parent=47 // pred_check
          %p6795 = pneg %p248
        $region66: #{encoder_forward.3} parent=47 // pred_check_branch
          %6797 = sbr.rel (%p6795) target = $region68
        $region67: #{encoder_forward.3} parent=47 // pred_region
          %s6799 = ssub.s32 128, 128
          %6800 = vsyncadd [#allocation4], %s6799
          %s6802 = sshll.u32 [#allocation3], 4
          %s6803 = int_to_ptr.vmem [resolvable:$true] %s6802
          %6805 = dma.vmem_to_hbm [thread:$0]  %s6803, 128, %s9, [#allocation4]
        $region68: #{encoder_forward.3} parent=47 // pred_fallthru
          _
        // Predicated region
        $region69: #{encoder_forward.3} parent=47 // pred_check
          %p6806 = pneg %p248
        $region70: #{encoder_forward.3} parent=47 // pred_check_branch
          %6808 = sbr.rel (%p6806) target = $region72
        $region71: #{encoder_forward.3} parent=47 // pred_region
          %6809 = dma.done [#allocation4], 128
        $region72: #{encoder_forward.3} parent=47 // pred_fallthru
          _
      $region48: #{encoder_forward.3} parent=5 // pred_fallthru
        _
      %p6810 = scmp.le.s32.totalorder 2, %s17
      // Predicated region
      $region73: #{encoder_forward.3} parent=5 // pred_check
        %p6811 = pneg %p6810
      $region74: #{encoder_forward.3} parent=5 // pred_check_branch
        %6813 = sbr.rel (%p6811) target = $region76
      $region75: #{encoder_forward.3} parent=5 // pred_region
        %s6814 = ssub.s32 %s17, 2
        // Predicated region
        $region77: #{encoder_forward.3} parent=75 // pred_check
          %p6815 = pneg %p205
        $region78: #{encoder_forward.3} parent=75 // pred_check_branch
          %6817 = sbr.rel (%p6815) target = $region80
        $region79: #{encoder_forward.3} parent=75 // pred_region
          %s6818 = smul.u32 8, %s23
          %p6819 = scmp.lt.s32.totalorder %s6818, 15
          %s6820 = scalar_select %p6819, %s6818, 15
          %s6821 = smul.addr %s6820, 8
          %s6822 = scalar_lea.vmem %s7, %s6821
        $region80: #{encoder_forward.3} parent=75 // pred_fallthru
          _
        // Predicated region
        $region81: #{encoder_forward.3} parent=75 // pred_check
          %p6823 = pneg %p233
        $region82: #{encoder_forward.3} parent=75 // pred_check_branch
          %6825 = sbr.rel (%p6823) target = $region84
        $region83: #{encoder_forward.3} parent=75 // pred_region
          %s6826 = ssub.s32 1, %s23
          %s6827 = smul.u32 8, %s6826
          %p6828 = scmp.lt.s32.totalorder %s6827, 15
          %s6829 = scalar_select %p6828, %s6827, 15
          %s6830 = smul.addr %s6829, 8
          %s6831 = scalar_lea.vmem %s8, %s6830
        $region84: #{encoder_forward.3} parent=75 // pred_fallthru
          _
      $region76: #{encoder_forward.3} parent=5 // pred_fallthru
        _
    $region6: #{encoder_forward.3} parent=1 // loop_footer
      %s21 = sadd.s32 1, %s17
    $region7: #{encoder_forward.3} parent=1 // loop_footer_branch
      %16 = sbr.rel target = $region3
    $region8: #{encoder_forward.3} parent=1 // loop_exit
      _
    %6832 = vsyncpa [#allocation4], 1
    %s6833 = scalar_lea.sflag [#allocation4], 1
    %6834 = vsyncpa %s6833, 1

</llo_original>
